<compile_context>
chip_gen: v7x
topology: tpu7x:2x2x1
jax: 0.10.0
libtpu: 0.0.40
codegen_flags: <defaults>
</compile_context>

<pallas_src>
import functools

import jax
import jax.numpy as jnp
from jax.experimental import pallas as pl
from jax.experimental.pallas import tpu as pltpu


_PER_LAYER = 13                                   # packed arrays per residual block
_LAYER_CH = ((64, 64), (64, 128), (128, 256))     # (C_in, C_out) of layer1..3
_HALO = 8                                         # zero-halo depth (sublane aligned)


# ----------------------------------------------------------------------------
# Fused whole-network kernel (one grid step == one batch element)
# ----------------------------------------------------------------------------
def _backbone_kernel(*refs, n_params):
    x_ref = refs[0]                         # (1, L/2, 2*C_in) paired stem input
    w = refs[1:1 + n_params]                # packed weights (see init_params)
    o_ref = refs[1 + n_params]              # (1, L/32, 256)
    (xp_s, h0_s, a1_s, c1_s, a2_s, c2_s, a3_s, c3_s,
     stem_slab, layer_slab) = refs[2 + n_params:]

    f32, bf16 = jnp.float32, jnp.bfloat16
    lh = x_ref.shape[1]                     # L / 2
    H = _HALO

    def zero_halo(ref, lo, hi):
        c = ref.shape[-1]
        if lo:
            ref[pl.ds(0, lo), :] = jnp.zeros((lo, c), f32)
        if hi:
            ref[pl.ds(ref.shape[0] - hi, hi), :] = jnp.zeros((hi, c), f32)

    # Zero the pad halos every grid step (tiny; keeps steps fully independent,
    # which is required when the batch axis is split across TensorCores).
    zero_halo(xp_s, H, H)
    zero_halo(h0_s, H, 0)
    for r in (a1_s, c1_s, a2_s, c2_s, a3_s, c3_s):
        zero_halo(r, H, H)

    def conv(a_ref, slab_ref, off, l_out, stride, ksize, wf_ref, s_ref, b_ref, relu):
        """One conv as a single (l_out, K*C_in) @ (K*C_in, C_out) MXU matmul."""
        c_in = a_ref.shape[-1]

        def tap(k):
            if stride == 1:
                return a_ref[pl.ds(off + k, l_out), :]
            return a_ref[pl.ds(off + k, l_out, stride=stride), :]

        if ksize == 1:
            slab = tap(0)
        else:
            for k in range(ksize):                         # im2col slab in VMEM
                slab_ref[pl.ds(0, l_out), pl.ds(k * c_in, c_in)] = tap(k)
            slab = slab_ref[pl.ds(0, l_out), pl.ds(0, ksize * c_in)]
        acc = jnp.dot(slab.astype(bf16), wf_ref[...],
                      preferred_element_type=f32)
        acc = acc * s_ref[...] + b_ref[...]                # folded BatchNorm
        if relu:
            acc = jnp.maximum(acc, 0.0)
        return acc

    # ---- stem: Conv1d(C_in, 64, k=7, s=2, p=3) + BN + ReLU (polyphase) ----
    xp_s[pl.ds(H, lh), :] = x_ref[0]                       # aligned bulk store
    h = conv(xp_s, stem_slab, H - 2, lh, 1, 4, w[0], w[1], w[2], relu=True)

    # ---- fused MaxPool1d(kernel=3, stride=2, padding=1) ----
    h0_s[pl.ds(H, lh), :] = h
    l_cur = lh // 2
    mp = h0_s[pl.ds(H - 1, l_cur, stride=2), :]
    mp = jnp.maximum(mp, h0_s[pl.ds(H, l_cur, stride=2), :])
    mp = jnp.maximum(mp, h0_s[pl.ds(H + 1, l_cur, stride=2), :])
    a1_s[pl.ds(H, l_cur), :] = mp

    # ---- residual blocks (BlockV2, stride 2, with 1x1 downsample) ----
    act_refs = (a1_s, a2_s, a3_s)
    mid_refs = (c1_s, c2_s, c3_s)
    for li, (cin, cout) in enumerate(_LAYER_CH):
        base = 3 + li * _PER_LAYER
        (w1f, s1, b1, w2f, s2, b2, wdf, sd, bd,
         mw1, mb1, mw2, mb2) = w[base:base + _PER_LAYER]
        a_ref, c_ref = act_refs[li], mid_refs[li]
        l_out = l_cur // 2

        res = conv(a_ref, layer_slab, H, l_out, 2, 1, wdf, sd, bd, relu=False)
        c1 = conv(a_ref, layer_slab, H - 3, l_out, 2, 7, w1f, s1, b1, relu=True)
        c_ref[pl.ds(H, l_out), :] = c1
        out = conv(c_ref, layer_slab, H - 3, l_out, 1, 7, w2f, s2, b2, relu=False)

        # ChannelMask: shared MLP applied once to stacked [avg; max] rows.
        avg = jnp.mean(out, axis=0, keepdims=True)                    # (1, C)
        mx = jnp.max(out, axis=0, keepdims=True)                      # (1, C)
        rows = jax.lax.broadcasted_iota(jnp.int32, (2, cout), 0)
        pooled = jnp.where(rows == 0,
                           jnp.broadcast_to(avg, (2, cout)),
                           jnp.broadcast_to(mx, (2, cout))).astype(bf16)
        hid = jnp.dot(pooled, mw1[...], preferred_element_type=f32) + mb1[...]
        hid = jnp.maximum(hid, 0.0).astype(bf16)
        y = jnp.dot(hid, mw2[...], preferred_element_type=f32) + mb2[...]
        cm = jax.nn.sigmoid(jnp.sum(y, axis=0, keepdims=True))        # (1, C)
        out = out * cm
        # TemporalMask (forward uses only channel-max + sigmoid), + residual.
        sm = jax.nn.sigmoid(jnp.max(out, axis=1, keepdims=True))      # (L, 1)
        out = out * sm + res

        l_cur = l_out
        if li + 1 < len(_LAYER_CH):
            act_refs[li + 1][pl.ds(H, l_out), :] = out
        else:
            o_ref[0] = out.astype(o_ref.dtype)


# ----------------------------------------------------------------------------
# Wrapper: one fused pallas_call for the whole forward
# ----------------------------------------------------------------------------
@jax.jit
def backbone_forward(x, flat_params):
    """x: (B, L, C_in) -- same layout the torch module receives before permute."""
    b, length, c_in = x.shape
    assert length % 32 == 0 and length >= 32, "sequence length must be a multiple of 32"
    lh = length // 2
    l_final = length // 32
    h2 = 2 * _HALO
    x_p = x.reshape(b, lh, 2 * c_in)          # polyphase pairing (free reshape)

    n_params = len(flat_params)
    kernel = functools.partial(_backbone_kernel, n_params=n_params)

    in_specs = [pl.BlockSpec((1, lh, 2 * c_in), lambda i: (i, 0, 0))]
    for p in flat_params:
        r, c = p.shape
        in_specs.append(pl.BlockSpec((r, c), lambda i: (0, 0)))

    scratch_shapes = [
        pltpu.VMEM((lh + h2, 2 * c_in), jnp.float32),        # paired stem in (+halo)
        pltpu.VMEM((lh + _HALO, 64), jnp.float32),           # stem out (front halo)
        pltpu.VMEM((length // 4 + h2, 64), jnp.float32),     # layer1 input
        pltpu.VMEM((length // 8 + h2, 64), jnp.float32),     # layer1 conv1 out
        pltpu.VMEM((length // 8 + h2, 64), jnp.float32),     # layer2 input
        pltpu.VMEM((length // 16 + h2, 128), jnp.float32),   # layer2 conv1 out
        pltpu.VMEM((length // 16 + h2, 128), jnp.float32),   # layer3 input
        pltpu.VMEM((length // 32 + h2, 256), jnp.float32),   # layer3 conv1 out
        pltpu.VMEM((lh, 8 * c_in), jnp.float32),             # stem im2col slab
        pltpu.VMEM((length // 8, 7 * 256), jnp.float32),     # layer im2col slab
    ]

    # rough cost estimate so XLA schedules around the single fused call
    flops = 2 * b * lh * 64 * (8 * c_in)
    trans = 0
    l_in = length // 4
    for cin, cout in _LAYER_CH:
        lo = l_in // 2
        flops += 2 * b * lo * cout * (cin + 7 * cin + 7 * cout)
        flops += 2 * b * 2 * 2 * cout * (cout // 8)
        trans += b * (cout + lo)
        l_in = lo
    bytes_accessed = (x_p.size * 4 + b * l_final * 256 * 4
                      + sum(p.size * p.dtype.itemsize for p in flat_params))

    out = pl.pallas_call(
        kernel,
        out_shape=jax.ShapeDtypeStruct((b, l_final, 256), jnp.float32),
        grid=(b,),
        in_specs=in_specs,
        out_specs=pl.BlockSpec((1, l_final, 256), lambda i: (i, 0, 0)),
        scratch_shapes=scratch_shapes,
        compiler_params=pltpu.CompilerParams(dimension_semantics=("parallel",)),
        cost_estimate=pl.CostEstimate(flops=flops, transcendentals=trans,
                                      bytes_accessed=bytes_accessed),
    )(x_p, *flat_params)
    # torch returns (B, C, L); transpose from channels-last to match.
    return jnp.transpose(out, (0, 2, 1))


# ----------------------------------------------------------------------------
# Deterministic synthetic parameters, packed for the fused kernel
# ----------------------------------------------------------------------------
def init_params(key, c_in):
    keys = iter(jax.random.split(key, 64))

    def conv_w(cin, cout, k):
        std = 1.0 / float(cin * k) ** 0.5
        return std * jax.random.normal(next(keys), (k, cin, cout), jnp.float32)

    def bn(c):  # eval-mode BN folded to per-channel scale / shift (eps=1e-5)
        gamma = 1.0 + 0.1 * jax.random.normal(next(keys), (c,), jnp.float32)
        beta = 0.1 * jax.random.normal(next(keys), (c,), jnp.float32)
        mean = 0.1 * jax.random.normal(next(keys), (c,), jnp.float32)
        var = 1.0 + 0.1 * jax.random.uniform(next(keys), (c,), jnp.float32)
        s = gamma * jax.lax.rsqrt(var + 1e-5)
        return s.reshape(1, c), (beta - mean * s).reshape(1, c)

    flat = []
    # Stem conv (k7, s2, p3) packed for the polyphase formulation:
    # prepend a zero tap -> (8, C_in, 64) -> (8*C_in, 64).
    w = conv_w(c_in, 64, 7)
    w8 = jnp.concatenate([jnp.zeros((1, c_in, 64), jnp.float32), w], axis=0)
    s, sh = bn(64)
    flat += [w8.reshape(8 * c_in, 64).astype(jnp.bfloat16), s, sh]

    for cin, cout in _LAYER_CH:
        cs = cout // 8                                   # ChannelMask squeeze size
        w1 = conv_w(cin, cout, 7); s1, b1 = bn(cout)     # conv1 (k7 s2 p3) + bn1
        w2 = conv_w(cout, cout, 7); s2, b2 = bn(cout)    # conv2 (k7 s1 p3) + bn2
        wd = conv_w(cin, cout, 1); sd, bd = bn(cout)     # downsample 1x1 s2 + bn
        mw1 = conv_w(cout, cs, 1)[0]                     # ChannelMask fc1 (C, Cs)
        mb1 = 0.1 * jax.random.normal(next(keys), (1, cs), jnp.float32)
        mw2 = conv_w(cs, cout, 1)[0]                     # ChannelMask fc2 (Cs, C)
        mb2 = 0.1 * jax.random.normal(next(keys), (1, cout), jnp.float32)
        flat += [w1.reshape(7 * cin, cout).astype(jnp.bfloat16), s1, b1,
                 w2.reshape(7 * cout, cout).astype(jnp.bfloat16), s2, b2,
                 wd.reshape(cin, cout).astype(jnp.bfloat16), sd, bd,
                 mw1.astype(jnp.bfloat16), mb1, mw2.astype(jnp.bfloat16), mb2]
    # TODO(synk): layer4, bn2, avgpool, Dropout(0.5), fc1, fc2 and
    # TemporalMask.conv1 are defined in __init__ but unused by forward; omitted.
    return flat


if __name__ == "__main__":
    key = jax.random.PRNGKey(0)
    kx, kp = jax.random.split(key)
    B, L, C_IN = 2, 128, 4                 # input length must survive /32
    x = jax.random.normal(kx, (B, L, C_IN), jnp.float32)
    params = init_params(kp, C_IN)
    y = backbone_forward(x, params)
    jax.block_until_ready(y)
    assert y.shape == (B, 256, L // 32), y.shape
    assert bool(jnp.all(jnp.isfinite(y)))
    print("KERNEL_OK")
</pallas_src>

<mosaic_0001>
module attributes {stable_mosaic.version = 11 : i64} {
  func.func @_backbone_kernel(%arg0: i32, %arg1: memref<1x64x8xf32, #tpu.memory_space<vmem>>, %arg2: memref<32x64xbf16, #tpu.memory_space<vmem>>, %arg3: memref<1x64xf32, #tpu.memory_space<vmem>>, %arg4: memref<1x64xf32, #tpu.memory_space<vmem>>, %arg5: memref<448x64xbf16, #tpu.memory_space<vmem>>, %arg6: memref<1x64xf32, #tpu.memory_space<vmem>>, %arg7: memref<1x64xf32, #tpu.memory_space<vmem>>, %arg8: memref<448x64xbf16, #tpu.memory_space<vmem>>, %arg9: memref<1x64xf32, #tpu.memory_space<vmem>>, %arg10: memref<1x64xf32, #tpu.memory_space<vmem>>, %arg11: memref<64x64xbf16, #tpu.memory_space<vmem>>, %arg12: memref<1x64xf32, #tpu.memory_space<vmem>>, %arg13: memref<1x64xf32, #tpu.memory_space<vmem>>, %arg14: memref<64x8xbf16, #tpu.memory_space<vmem>>, %arg15: memref<1x8xf32, #tpu.memory_space<vmem>>, %arg16: memref<8x64xbf16, #tpu.memory_space<vmem>>, %arg17: memref<1x64xf32, #tpu.memory_space<vmem>>, %arg18: memref<448x128xbf16, #tpu.memory_space<vmem>>, %arg19: memref<1x128xf32, #tpu.memory_space<vmem>>, %arg20: memref<1x128xf32, #tpu.memory_space<vmem>>, %arg21: memref<896x128xbf16, #tpu.memory_space<vmem>>, %arg22: memref<1x128xf32, #tpu.memory_space<vmem>>, %arg23: memref<1x128xf32, #tpu.memory_space<vmem>>, %arg24: memref<64x128xbf16, #tpu.memory_space<vmem>>, %arg25: memref<1x128xf32, #tpu.memory_space<vmem>>, %arg26: memref<1x128xf32, #tpu.memory_space<vmem>>, %arg27: memref<128x16xbf16, #tpu.memory_space<vmem>>, %arg28: memref<1x16xf32, #tpu.memory_space<vmem>>, %arg29: memref<16x128xbf16, #tpu.memory_space<vmem>>, %arg30: memref<1x128xf32, #tpu.memory_space<vmem>>, %arg31: memref<896x256xbf16, #tpu.memory_space<vmem>>, %arg32: memref<1x256xf32, #tpu.memory_space<vmem>>, %arg33: memref<1x256xf32, #tpu.memory_space<vmem>>, %arg34: memref<1792x256xbf16, #tpu.memory_space<vmem>>, %arg35: memref<1x256xf32, #tpu.memory_space<vmem>>, %arg36: memref<1x256xf32, #tpu.memory_space<vmem>>, %arg37: memref<128x256xbf16, #tpu.memory_space<vmem>>, %arg38: memref<1x256xf32, #tpu.memory_space<vmem>>, %arg39: memref<1x256xf32, #tpu.memory_space<vmem>>, %arg40: memref<256x32xbf16, #tpu.memory_space<vmem>>, %arg41: memref<1x32xf32, #tpu.memory_space<vmem>>, %arg42: memref<32x256xbf16, #tpu.memory_space<vmem>>, %arg43: memref<1x256xf32, #tpu.memory_space<vmem>>, %arg44: memref<1x4x256xf32, #tpu.memory_space<vmem>>, %arg45: memref<80x8xf32, #tpu.memory_space<vmem>>, %arg46: memref<72x64xf32, #tpu.memory_space<vmem>>, %arg47: memref<48x64xf32, #tpu.memory_space<vmem>>, %arg48: memref<32x64xf32, #tpu.memory_space<vmem>>, %arg49: memref<32x64xf32, #tpu.memory_space<vmem>>, %arg50: memref<24x128xf32, #tpu.memory_space<vmem>>, %arg51: memref<24x128xf32, #tpu.memory_space<vmem>>, %arg52: memref<20x256xf32, #tpu.memory_space<vmem>>, %arg53: memref<64x32xf32, #tpu.memory_space<vmem>>, %arg54: memref<16x1792xf32, #tpu.memory_space<vmem>>) attributes {dimension_semantics = [#tpu.dimension_semantics<parallel>], iteration_bounds = array<i64: 2>, scalar_prefetch = 0 : i64, scratch_operands = 10 : i64, tpu.core_type = #tpu.core_type<tc>, window_params = [{transform_indices = @transform_0, window_bounds = array<i64: 1, 64, 8>}, {pipeline_mode = #tpu.pipeline_mode<synchronous>, transform_indices = @transform_1, window_bounds = array<i64: 32, 64>}, {pipeline_mode = #tpu.pipeline_mode<synchronous>, transform_indices = @transform_2, window_bounds = array<i64: 1, 64>}, {pipeline_mode = #tpu.pipeline_mode<synchronous>, transform_indices = @transform_3, window_bounds = array<i64: 1, 64>}, {pipeline_mode = #tpu.pipeline_mode<synchronous>, transform_indices = @transform_4, window_bounds = array<i64: 448, 64>}, {pipeline_mode = #tpu.pipeline_mode<synchronous>, transform_indices = @transform_5, window_bounds = array<i64: 1, 64>}, {pipeline_mode = #tpu.pipeline_mode<synchronous>, transform_indices = @transform_6, window_bounds = array<i64: 1, 64>}, {pipeline_mode = #tpu.pipeline_mode<synchronous>, transform_indices = @transform_7, window_bounds = array<i64: 448, 64>}, {pipeline_mode = #tpu.pipeline_mode<synchronous>, transform_indices = @transform_8, window_bounds = array<i64: 1, 64>}, {pipeline_mode = #tpu.pipeline_mode<synchronous>, transform_indices = @transform_9, window_bounds = array<i64: 1, 64>}, {pipeline_mode = #tpu.pipeline_mode<synchronous>, transform_indices = @transform_10, window_bounds = array<i64: 64, 64>}, {pipeline_mode = #tpu.pipeline_mode<synchronous>, transform_indices = @transform_11, window_bounds = array<i64: 1, 64>}, {pipeline_mode = #tpu.pipeline_mode<synchronous>, transform_indices = @transform_12, window_bounds = array<i64: 1, 64>}, {pipeline_mode = #tpu.pipeline_mode<synchronous>, transform_indices = @transform_13, window_bounds = array<i64: 64, 8>}, {pipeline_mode = #tpu.pipeline_mode<synchronous>, transform_indices = @transform_14, window_bounds = array<i64: 1, 8>}, {pipeline_mode = #tpu.pipeline_mode<synchronous>, transform_indices = @transform_15, window_bounds = array<i64: 8, 64>}, {pipeline_mode = #tpu.pipeline_mode<synchronous>, transform_indices = @transform_16, window_bounds = array<i64: 1, 64>}, {pipeline_mode = #tpu.pipeline_mode<synchronous>, transform_indices = @transform_17, window_bounds = array<i64: 448, 128>}, {pipeline_mode = #tpu.pipeline_mode<synchronous>, transform_indices = @transform_18, window_bounds = array<i64: 1, 128>}, {pipeline_mode = #tpu.pipeline_mode<synchronous>, transform_indices = @transform_19, window_bounds = array<i64: 1, 128>}, {pipeline_mode = #tpu.pipeline_mode<synchronous>, transform_indices = @transform_20, window_bounds = array<i64: 896, 128>}, {pipeline_mode = #tpu.pipeline_mode<synchronous>, transform_indices = @transform_21, window_bounds = array<i64: 1, 128>}, {pipeline_mode = #tpu.pipeline_mode<synchronous>, transform_indices = @transform_22, window_bounds = array<i64: 1, 128>}, {pipeline_mode = #tpu.pipeline_mode<synchronous>, transform_indices = @transform_23, window_bounds = array<i64: 64, 128>}, {pipeline_mode = #tpu.pipeline_mode<synchronous>, transform_indices = @transform_24, window_bounds = array<i64: 1, 128>}, {pipeline_mode = #tpu.pipeline_mode<synchronous>, transform_indices = @transform_25, window_bounds = array<i64: 1, 128>}, {pipeline_mode = #tpu.pipeline_mode<synchronous>, transform_indices = @transform_26, window_bounds = array<i64: 128, 16>}, {pipeline_mode = #tpu.pipeline_mode<synchronous>, transform_indices = @transform_27, window_bounds = array<i64: 1, 16>}, {pipeline_mode = #tpu.pipeline_mode<synchronous>, transform_indices = @transform_28, window_bounds = array<i64: 16, 128>}, {pipeline_mode = #tpu.pipeline_mode<synchronous>, transform_indices = @transform_29, window_bounds = array<i64: 1, 128>}, {pipeline_mode = #tpu.pipeline_mode<synchronous>, transform_indices = @transform_30, window_bounds = array<i64: 896, 256>}, {pipeline_mode = #tpu.pipeline_mode<synchronous>, transform_indices = @transform_31, window_bounds = array<i64: 1, 256>}, {pipeline_mode = #tpu.pipeline_mode<synchronous>, transform_indices = @transform_32, window_bounds = array<i64: 1, 256>}, {pipeline_mode = #tpu.pipeline_mode<synchronous>, transform_indices = @transform_33, window_bounds = array<i64: 1792, 256>}, {pipeline_mode = #tpu.pipeline_mode<synchronous>, transform_indices = @transform_34, window_bounds = array<i64: 1, 256>}, {pipeline_mode = #tpu.pipeline_mode<synchronous>, transform_indices = @transform_35, window_bounds = array<i64: 1, 256>}, {pipeline_mode = #tpu.pipeline_mode<synchronous>, transform_indices = @transform_36, window_bounds = array<i64: 128, 256>}, {pipeline_mode = #tpu.pipeline_mode<synchronous>, transform_indices = @transform_37, window_bounds = array<i64: 1, 256>}, {pipeline_mode = #tpu.pipeline_mode<synchronous>, transform_indices = @transform_38, window_bounds = array<i64: 1, 256>}, {pipeline_mode = #tpu.pipeline_mode<synchronous>, transform_indices = @transform_39, window_bounds = array<i64: 256, 32>}, {pipeline_mode = #tpu.pipeline_mode<synchronous>, transform_indices = @transform_40, window_bounds = array<i64: 1, 32>}, {pipeline_mode = #tpu.pipeline_mode<synchronous>, transform_indices = @transform_41, window_bounds = array<i64: 32, 256>}, {pipeline_mode = #tpu.pipeline_mode<synchronous>, transform_indices = @transform_42, window_bounds = array<i64: 1, 256>}, {transform_indices = @transform_43, window_bounds = array<i64: 1, 4, 256>}]} {
    %cst = arith.constant 0.000000e+00 : f32
    %0 = vector.broadcast %cst : f32 to vector<8x8xf32>
    %c0 = arith.constant 0 : index
    %c0_0 = arith.constant 0 : index
    %1 = vector.load %arg45[%c0, %c0_0] : memref<80x8xf32, #tpu.memory_space<vmem>>, vector<8x8xf32>
    tpu.vector_store %arg45[%c0, %c0_0], %0 {strides = array<i32>} : memref<80x8xf32, #tpu.memory_space<vmem>>, vector<8x8xf32>,
    %cst_1 = arith.constant 0.000000e+00 : f32
    %2 = vector.broadcast %cst_1 : f32 to vector<8x8xf32>
    %c72 = arith.constant 72 : index
    %c0_2 = arith.constant 0 : index
    %3 = vector.load %arg45[%c72, %c0_2] : memref<80x8xf32, #tpu.memory_space<vmem>>, vector<8x8xf32>
    tpu.vector_store %arg45[%c72, %c0_2], %2 {strides = array<i32>} : memref<80x8xf32, #tpu.memory_space<vmem>>, vector<8x8xf32>,
    %cst_3 = arith.constant 0.000000e+00 : f32
    %4 = vector.broadcast %cst_3 : f32 to vector<8x64xf32>
    %c0_4 = arith.constant 0 : index
    %c0_5 = arith.constant 0 : index
    %5 = vector.load %arg46[%c0_4, %c0_5] : memref<72x64xf32, #tpu.memory_space<vmem>>, vector<8x64xf32>
    tpu.vector_store %arg46[%c0_4, %c0_5], %4 {strides = array<i32>} : memref<72x64xf32, #tpu.memory_space<vmem>>, vector<8x64xf32>,
    %cst_6 = arith.constant 0.000000e+00 : f32
    %6 = vector.broadcast %cst_6 : f32 to vector<8x64xf32>
    %c0_7 = arith.constant 0 : index
    %c0_8 = arith.constant 0 : index
    %7 = vector.load %arg47[%c0_7, %c0_8] : memref<48x64xf32, #tpu.memory_space<vmem>>, vector<8x64xf32>
    tpu.vector_store %arg47[%c0_7, %c0_8], %6 {strides = array<i32>} : memref<48x64xf32, #tpu.memory_space<vmem>>, vector<8x64xf32>,
    %cst_9 = arith.constant 0.000000e+00 : f32
    %8 = vector.broadcast %cst_9 : f32 to vector<8x64xf32>
    %c40 = arith.constant 40 : index
    %c0_10 = arith.constant 0 : index
    %9 = vector.load %arg47[%c40, %c0_10] : memref<48x64xf32, #tpu.memory_space<vmem>>, vector<8x64xf32>
    tpu.vector_store %arg47[%c40, %c0_10], %8 {strides = array<i32>} : memref<48x64xf32, #tpu.memory_space<vmem>>, vector<8x64xf32>,
    %cst_11 = arith.constant 0.000000e+00 : f32
    %10 = vector.broadcast %cst_11 : f32 to vector<8x64xf32>
    %c0_12 = arith.constant 0 : index
    %c0_13 = arith.constant 0 : index
    %11 = vector.load %arg48[%c0_12, %c0_13] : memref<32x64xf32, #tpu.memory_space<vmem>>, vector<8x64xf32>
    tpu.vector_store %arg48[%c0_12, %c0_13], %10 {strides = array<i32>} : memref<32x64xf32, #tpu.memory_space<vmem>>, vector<8x64xf32>,
    %cst_14 = arith.constant 0.000000e+00 : f32
    %12 = vector.broadcast %cst_14 : f32 to vector<8x64xf32>
    %c24 = arith.constant 24 : index
    %c0_15 = arith.constant 0 : index
    %13 = vector.load %arg48[%c24, %c0_15] : memref<32x64xf32, #tpu.memory_space<vmem>>, vector<8x64xf32>
    tpu.vector_store %arg48[%c24, %c0_15], %12 {strides = array<i32>} : memref<32x64xf32, #tpu.memory_space<vmem>>, vector<8x64xf32>,
    %cst_16 = arith.constant 0.000000e+00 : f32
    %14 = vector.broadcast %cst_16 : f32 to vector<8x64xf32>
    %c0_17 = arith.constant 0 : index
    %c0_18 = arith.constant 0 : index
    %15 = vector.load %arg49[%c0_17, %c0_18] : memref<32x64xf32, #tpu.memory_space<vmem>>, vector<8x64xf32>
    tpu.vector_store %arg49[%c0_17, %c0_18], %14 {strides = array<i32>} : memref<32x64xf32, #tpu.memory_space<vmem>>, vector<8x64xf32>,
    %cst_19 = arith.constant 0.000000e+00 : f32
    %16 = vector.broadcast %cst_19 : f32 to vector<8x64xf32>
    %c24_20 = arith.constant 24 : index
    %c0_21 = arith.constant 0 : index
    %17 = vector.load %arg49[%c24_20, %c0_21] : memref<32x64xf32, #tpu.memory_space<vmem>>, vector<8x64xf32>
    tpu.vector_store %arg49[%c24_20, %c0_21], %16 {strides = array<i32>} : memref<32x64xf32, #tpu.memory_space<vmem>>, vector<8x64xf32>,
    %cst_22 = arith.constant 0.000000e+00 : f32
    %18 = vector.broadcast %cst_22 : f32 to vector<8x128xf32>
    %c0_23 = arith.constant 0 : index
    %c0_24 = arith.constant 0 : index
    %19 = vector.load %arg50[%c0_23, %c0_24] : memref<24x128xf32, #tpu.memory_space<vmem>>, vector<8x128xf32>
    tpu.vector_store %arg50[%c0_23, %c0_24], %18 {strides = array<i32>} : memref<24x128xf32, #tpu.memory_space<vmem>>, vector<8x128xf32>,
    %cst_25 = arith.constant 0.000000e+00 : f32
    %20 = vector.broadcast %cst_25 : f32 to vector<8x128xf32>
    %c16 = arith.constant 16 : index
    %c0_26 = arith.constant 0 : index
    %21 = vector.load %arg50[%c16, %c0_26] : memref<24x128xf32, #tpu.memory_space<vmem>>, vector<8x128xf32>
    tpu.vector_store %arg50[%c16, %c0_26], %20 {strides = array<i32>} : memref<24x128xf32, #tpu.memory_space<vmem>>, vector<8x128xf32>,
    %cst_27 = arith.constant 0.000000e+00 : f32
    %22 = vector.broadcast %cst_27 : f32 to vector<8x128xf32>
    %c0_28 = arith.constant 0 : index
    %c0_29 = arith.constant 0 : index
    %23 = vector.load %arg51[%c0_28, %c0_29] : memref<24x128xf32, #tpu.memory_space<vmem>>, vector<8x128xf32>
    tpu.vector_store %arg51[%c0_28, %c0_29], %22 {strides = array<i32>} : memref<24x128xf32, #tpu.memory_space<vmem>>, vector<8x128xf32>,
    %cst_30 = arith.constant 0.000000e+00 : f32
    %24 = vector.broadcast %cst_30 : f32 to vector<8x128xf32>
    %c16_31 = arith.constant 16 : index
    %c0_32 = arith.constant 0 : index
    %25 = vector.load %arg51[%c16_31, %c0_32] : memref<24x128xf32, #tpu.memory_space<vmem>>, vector<8x128xf32>
    tpu.vector_store %arg51[%c16_31, %c0_32], %24 {strides = array<i32>} : memref<24x128xf32, #tpu.memory_space<vmem>>, vector<8x128xf32>,
    %cst_33 = arith.constant 0.000000e+00 : f32
    %26 = vector.broadcast %cst_33 : f32 to vector<8x256xf32>
    %c0_34 = arith.constant 0 : index
    %c0_35 = arith.constant 0 : index
    %27 = vector.load %arg52[%c0_34, %c0_35] : memref<20x256xf32, #tpu.memory_space<vmem>>, vector<8x256xf32>
    tpu.vector_store %arg52[%c0_34, %c0_35], %26 {strides = array<i32>} : memref<20x256xf32, #tpu.memory_space<vmem>>, vector<8x256xf32>,
    %cst_36 = arith.constant 0.000000e+00 : f32
    %28 = vector.broadcast %cst_36 : f32 to vector<8x256xf32>
    %c12 = arith.constant 12 : index
    %c0_37 = arith.constant 0 : index
    %29 = vector.load %arg52[%c12, %c0_37] : memref<20x256xf32, #tpu.memory_space<vmem>>, vector<8x256xf32>
    tpu.vector_store %arg52[%c12, %c0_37], %28 {strides = array<i32>} : memref<20x256xf32, #tpu.memory_space<vmem>>, vector<8x256xf32>,
    %c0_38 = arith.constant 0 : index
    %c0_39 = arith.constant 0 : index
    %c0_40 = arith.constant 0 : index
    %30 = vector.load %arg1[%c0_38, %c0_39, %c0_40] : memref<1x64x8xf32, #tpu.memory_space<vmem>>, vector<1x64x8xf32>
    %31 = vector.shape_cast %30 : vector<1x64x8xf32> to vector<64x8xf32>
    %c8 = arith.constant 8 : index
    %c0_41 = arith.constant 0 : index
    %32 = vector.load %arg45[%c8, %c0_41] : memref<80x8xf32, #tpu.memory_space<vmem>>, vector<64x8xf32>
    tpu.vector_store %arg45[%c8, %c0_41], %31 {strides = array<i32>} : memref<80x8xf32, #tpu.memory_space<vmem>>, vector<64x8xf32>,
    %c6 = arith.constant 6 : index
    %c0_42 = arith.constant 0 : index
    %33 = vector.load %arg45[%c6, %c0_42] : memref<80x8xf32, #tpu.memory_space<vmem>>, vector<64x8xf32>
    %c0_43 = arith.constant 0 : index
    %c0_44 = arith.constant 0 : index
    %34 = vector.load %arg53[%c0_43, %c0_44] : memref<64x32xf32, #tpu.memory_space<vmem>>, vector<64x8xf32>
    tpu.vector_store %arg53[%c0_43, %c0_44], %33 {strides = array<i32>} : memref<64x32xf32, #tpu.memory_space<vmem>>, vector<64x8xf32>,
    %c7 = arith.constant 7 : index
    %c0_45 = arith.constant 0 : index
    %35 = vector.load %arg45[%c7, %c0_45] : memref<80x8xf32, #tpu.memory_space<vmem>>, vector<64x8xf32>
    %c0_46 = arith.constant 0 : index
    %c8_47 = arith.constant 8 : index
    %36 = vector.load %arg53[%c0_46, %c8_47] : memref<64x32xf32, #tpu.memory_space<vmem>>, vector<64x8xf32>
    tpu.vector_store %arg53[%c0_46, %c8_47], %35 {strides = array<i32>} : memref<64x32xf32, #tpu.memory_space<vmem>>, vector<64x8xf32>,
    %c8_48 = arith.constant 8 : index
    %c0_49 = arith.constant 0 : index
    %37 = vector.load %arg45[%c8_48, %c0_49] : memref<80x8xf32, #tpu.memory_space<vmem>>, vector<64x8xf32>
    %c0_50 = arith.constant 0 : index
    %c16_51 = arith.constant 16 : index
    %38 = vector.load %arg53[%c0_50, %c16_51] : memref<64x32xf32, #tpu.memory_space<vmem>>, vector<64x8xf32>
    tpu.vector_store %arg53[%c0_50, %c16_51], %37 {strides = array<i32>} : memref<64x32xf32, #tpu.memory_space<vmem>>, vector<64x8xf32>,
    %c9 = arith.constant 9 : index
    %c0_52 = arith.constant 0 : index
    %39 = vector.load %arg45[%c9, %c0_52] : memref<80x8xf32, #tpu.memory_space<vmem>>, vector<64x8xf32>
    %c0_53 = arith.constant 0 : index
    %c24_54 = arith.constant 24 : index
    %40 = vector.load %arg53[%c0_53, %c24_54] : memref<64x32xf32, #tpu.memory_space<vmem>>, vector<64x8xf32>
    tpu.vector_store %arg53[%c0_53, %c24_54], %39 {strides = array<i32>} : memref<64x32xf32, #tpu.memory_space<vmem>>, vector<64x8xf32>,
    %c0_55 = arith.constant 0 : index
    %c0_56 = arith.constant 0 : index
    %41 = vector.load %arg53[%c0_55, %c0_56] : memref<64x32xf32, #tpu.memory_space<vmem>>, vector<64x32xf32>
    %42 = arith.truncf %41 : vector<64x32xf32> to vector<64x32xbf16>
    %c0_57 = arith.constant 0 : index
    %c0_58 = arith.constant 0 : index
    %43 = vector.load %arg2[%c0_57, %c0_58] : memref<32x64xbf16, #tpu.memory_space<vmem>>, vector<32x64xbf16>
    %cst_59 = arith.constant dense<0.000000e+00> : vector<64x64xf32>
    %44 = tpu.matmul %42, %43, %cst_59 {dimension_numbers = #tpu.dot_dimension_numbers<[1], [0], [0], [1], [0, 0, 1, 1], [], []>} : vector<64x32xbf16>, vector<32x64xbf16>, vector<64x64xf32> -> vector<64x64xf32>
    %c0_60 = arith.constant 0 : index
    %c0_61 = arith.constant 0 : index
    %45 = vector.load %arg3[%c0_60, %c0_61] : memref<1x64xf32, #tpu.memory_space<vmem>>, vector<1x64xf32>
    %46 = vector.broadcast %45 : vector<1x64xf32> to vector<64x64xf32>
    %47 = arith.mulf %44, %46 : vector<64x64xf32>
    %c0_62 = arith.constant 0 : index
    %c0_63 = arith.constant 0 : index
    %48 = vector.load %arg4[%c0_62, %c0_63] : memref<1x64xf32, #tpu.memory_space<vmem>>, vector<1x64xf32>
    %49 = vector.broadcast %48 : vector<1x64xf32> to vector<64x64xf32>
    %50 = arith.addf %47, %49 : vector<64x64xf32>
    %cst_64 = arith.constant 0.000000e+00 : f32
    %51 = vector.broadcast %cst_64 : f32 to vector<64x64xf32>
    %52 = arith.maximumf %50, %51 : vector<64x64xf32>
    %c8_65 = arith.constant 8 : index
    %c0_66 = arith.constant 0 : index
    %53 = vector.load %arg46[%c8_65, %c0_66] : memref<72x64xf32, #tpu.memory_space<vmem>>, vector<64x64xf32>
    tpu.vector_store %arg46[%c8_65, %c0_66], %52 {strides = array<i32>} : memref<72x64xf32, #tpu.memory_space<vmem>>, vector<64x64xf32>,
    %c7_67 = arith.constant 7 : index
    %c0_68 = arith.constant 0 : index
    %54 = tpu.strided_load %arg46[%c7_67, %c0_68] {strides = array<i32: 2, 1>} : memref<72x64xf32, #tpu.memory_space<vmem>>, vector<32x64xf32>
    %c8_69 = arith.constant 8 : index
    %c0_70 = arith.constant 0 : index
    %55 = tpu.strided_load %arg46[%c8_69, %c0_70] {strides = array<i32: 2, 1>} : memref<72x64xf32, #tpu.memory_space<vmem>>, vector<32x64xf32>
    %56 = arith.maximumf %54, %55 : vector<32x64xf32>
    %c9_71 = arith.constant 9 : index
    %c0_72 = arith.constant 0 : index
    %57 = tpu.strided_load %arg46[%c9_71, %c0_72] {strides = array<i32: 2, 1>} : memref<72x64xf32, #tpu.memory_space<vmem>>, vector<32x64xf32>
    %58 = arith.maximumf %56, %57 : vector<32x64xf32>
    %c8_73 = arith.constant 8 : index
    %c0_74 = arith.constant 0 : index
    %59 = vector.load %arg47[%c8_73, %c0_74] : memref<48x64xf32, #tpu.memory_space<vmem>>, vector<32x64xf32>
    tpu.vector_store %arg47[%c8_73, %c0_74], %58 {strides = array<i32>} : memref<48x64xf32, #tpu.memory_space<vmem>>, vector<32x64xf32>,
    %c8_75 = arith.constant 8 : index
    %c0_76 = arith.constant 0 : index
    %60 = tpu.strided_load %arg47[%c8_75, %c0_76] {strides = array<i32: 2, 1>} : memref<48x64xf32, #tpu.memory_space<vmem>>, vector<16x64xf32>
    %61 = arith.truncf %60 : vector<16x64xf32> to vector<16x64xbf16>
    %c0_77 = arith.constant 0 : index
    %c0_78 = arith.constant 0 : index
    %62 = vector.load %arg11[%c0_77, %c0_78] : memref<64x64xbf16, #tpu.memory_space<vmem>>, vector<64x64xbf16>
    %cst_79 = arith.constant dense<0.000000e+00> : vector<16x64xf32>
    %63 = tpu.matmul %61, %62, %cst_79 {dimension_numbers = #tpu.dot_dimension_numbers<[1], [0], [0], [1], [0, 0, 1, 1], [], []>} : vector<16x64xbf16>, vector<64x64xbf16>, vector<16x64xf32> -> vector<16x64xf32>
    %c0_80 = arith.constant 0 : index
    %c0_81 = arith.constant 0 : index
    %64 = vector.load %arg12[%c0_80, %c0_81] : memref<1x64xf32, #tpu.memory_space<vmem>>, vector<1x64xf32>
    %65 = vector.broadcast %64 : vector<1x64xf32> to vector<16x64xf32>
    %66 = arith.mulf %63, %65 : vector<16x64xf32>
    %c0_82 = arith.constant 0 : index
    %c0_83 = arith.constant 0 : index
    %67 = vector.load %arg13[%c0_82, %c0_83] : memref<1x64xf32, #tpu.memory_space<vmem>>, vector<1x64xf32>
    %68 = vector.broadcast %67 : vector<1x64xf32> to vector<16x64xf32>
    %69 = arith.addf %66, %68 : vector<16x64xf32>
    %c5 = arith.constant 5 : index
    %c0_84 = arith.constant 0 : index
    %70 = tpu.strided_load %arg47[%c5, %c0_84] {strides = array<i32: 2, 1>} : memref<48x64xf32, #tpu.memory_space<vmem>>, vector<16x64xf32>
    %c0_85 = arith.constant 0 : index
    %c0_86 = arith.constant 0 : index
    %71 = vector.load %arg54[%c0_85, %c0_86] : memref<16x1792xf32, #tpu.memory_space<vmem>>, vector<16x64xf32>
    tpu.vector_store %arg54[%c0_85, %c0_86], %70 {strides = array<i32>} : memref<16x1792xf32, #tpu.memory_space<vmem>>, vector<16x64xf32>,
    %c6_87 = arith.constant 6 : index
    %c0_88 = arith.constant 0 : index
    %72 = tpu.strided_load %arg47[%c6_87, %c0_88] {strides = array<i32: 2, 1>} : memref<48x64xf32, #tpu.memory_space<vmem>>, vector<16x64xf32>
    %c0_89 = arith.constant 0 : index
    %c64 = arith.constant 64 : index
    %73 = vector.load %arg54[%c0_89, %c64] : memref<16x1792xf32, #tpu.memory_space<vmem>>, vector<16x64xf32>
    tpu.vector_store %arg54[%c0_89, %c64], %72 {strides = array<i32>} : memref<16x1792xf32, #tpu.memory_space<vmem>>, vector<16x64xf32>,
    %c7_90 = arith.constant 7 : index
    %c0_91 = arith.constant 0 : index
    %74 = tpu.strided_load %arg47[%c7_90, %c0_91] {strides = array<i32: 2, 1>} : memref<48x64xf32, #tpu.memory_space<vmem>>, vector<16x64xf32>
    %c0_92 = arith.constant 0 : index
    %c128 = arith.constant 128 : index
    %75 = vector.load %arg54[%c0_92, %c128] : memref<16x1792xf32, #tpu.memory_space<vmem>>, vector<16x64xf32>
    tpu.vector_store %arg54[%c0_92, %c128], %74 {strides = array<i32>} : memref<16x1792xf32, #tpu.memory_space<vmem>>, vector<16x64xf32>,
    %c8_93 = arith.constant 8 : index
    %c0_94 = arith.constant 0 : index
    %76 = tpu.strided_load %arg47[%c8_93, %c0_94] {strides = array<i32: 2, 1>} : memref<48x64xf32, #tpu.memory_space<vmem>>, vector<16x64xf32>
    %c0_95 = arith.constant 0 : index
    %c192 = arith.constant 192 : index
    %77 = vector.load %arg54[%c0_95, %c192] : memref<16x1792xf32, #tpu.memory_space<vmem>>, vector<16x64xf32>
    tpu.vector_store %arg54[%c0_95, %c192], %76 {strides = array<i32>} : memref<16x1792xf32, #tpu.memory_space<vmem>>, vector<16x64xf32>,
    %c9_96 = arith.constant 9 : index
    %c0_97 = arith.constant 0 : index
    %78 = tpu.strided_load %arg47[%c9_96, %c0_97] {strides = array<i32: 2, 1>} : memref<48x64xf32, #tpu.memory_space<vmem>>, vector<16x64xf32>
    %c0_98 = arith.constant 0 : index
    %c256 = arith.constant 256 : index
    %79 = vector.load %arg54[%c0_98, %c256] : memref<16x1792xf32, #tpu.memory_space<vmem>>, vector<16x64xf32>
    tpu.vector_store %arg54[%c0_98, %c256], %78 {strides = array<i32>} : memref<16x1792xf32, #tpu.memory_space<vmem>>, vector<16x64xf32>,
    %c10 = arith.constant 10 : index
    %c0_99 = arith.constant 0 : index
    %80 = tpu.strided_load %arg47[%c10, %c0_99] {strides = array<i32: 2, 1>} : memref<48x64xf32, #tpu.memory_space<vmem>>, vector<16x64xf32>
    %c0_100 = arith.constant 0 : index
    %c320 = arith.constant 320 : index
    %81 = vector.load %arg54[%c0_100, %c320] : memref<16x1792xf32, #tpu.memory_space<vmem>>, vector<16x64xf32>
    tpu.vector_store %arg54[%c0_100, %c320], %80 {strides = array<i32>} : memref<16x1792xf32, #tpu.memory_space<vmem>>, vector<16x64xf32>,
    %c11 = arith.constant 11 : index
    %c0_101 = arith.constant 0 : index
    %82 = tpu.strided_load %arg47[%c11, %c0_101] {strides = array<i32: 2, 1>} : memref<48x64xf32, #tpu.memory_space<vmem>>, vector<16x64xf32>
    %c0_102 = arith.constant 0 : index
    %c384 = arith.constant 384 : index
    %83 = vector.load %arg54[%c0_102, %c384] : memref<16x1792xf32, #tpu.memory_space<vmem>>, vector<16x64xf32>
    tpu.vector_store %arg54[%c0_102, %c384], %82 {strides = array<i32>} : memref<16x1792xf32, #tpu.memory_space<vmem>>, vector<16x64xf32>,
    %c0_103 = arith.constant 0 : index
    %c0_104 = arith.constant 0 : index
    %84 = vector.load %arg54[%c0_103, %c0_104] : memref<16x1792xf32, #tpu.memory_space<vmem>>, vector<16x448xf32>
    %85 = arith.truncf %84 : vector<16x448xf32> to vector<16x448xbf16>
    %c0_105 = arith.constant 0 : index
    %c0_106 = arith.constant 0 : index
    %86 = vector.load %arg5[%c0_105, %c0_106] : memref<448x64xbf16, #tpu.memory_space<vmem>>, vector<448x64xbf16>
    %cst_107 = arith.constant dense<0.000000e+00> : vector<16x64xf32>
    %87 = tpu.matmul %85, %86, %cst_107 {dimension_numbers = #tpu.dot_dimension_numbers<[1], [0], [0], [1], [0, 0, 1, 1], [], []>} : vector<16x448xbf16>, vector<448x64xbf16>, vector<16x64xf32> -> vector<16x64xf32>
    %c0_108 = arith.constant 0 : index
    %c0_109 = arith.constant 0 : index
    %88 = vector.load %arg6[%c0_108, %c0_109] : memref<1x64xf32, #tpu.memory_space<vmem>>, vector<1x64xf32>
    %89 = vector.broadcast %88 : vector<1x64xf32> to vector<16x64xf32>
    %90 = arith.mulf %87, %89 : vector<16x64xf32>
    %c0_110 = arith.constant 0 : index
    %c0_111 = arith.constant 0 : index
    %91 = vector.load %arg7[%c0_110, %c0_111] : memref<1x64xf32, #tpu.memory_space<vmem>>, vector<1x64xf32>
    %92 = vector.broadcast %91 : vector<1x64xf32> to vector<16x64xf32>
    %93 = arith.addf %90, %92 : vector<16x64xf32>
    %cst_112 = arith.constant 0.000000e+00 : f32
    %94 = vector.broadcast %cst_112 : f32 to vector<16x64xf32>
    %95 = arith.maximumf %93, %94 : vector<16x64xf32>
    %c8_113 = arith.constant 8 : index
    %c0_114 = arith.constant 0 : index
    %96 = vector.load %arg48[%c8_113, %c0_114] : memref<32x64xf32, #tpu.memory_space<vmem>>, vector<16x64xf32>
    tpu.vector_store %arg48[%c8_113, %c0_114], %95 {strides = array<i32>} : memref<32x64xf32, #tpu.memory_space<vmem>>, vector<16x64xf32>,
    %c5_115 = arith.constant 5 : index
    %c0_116 = arith.constant 0 : index
    %97 = vector.load %arg48[%c5_115, %c0_116] : memref<32x64xf32, #tpu.memory_space<vmem>>, vector<16x64xf32>
    %c0_117 = arith.constant 0 : index
    %c0_118 = arith.constant 0 : index
    %98 = vector.load %arg54[%c0_117, %c0_118] : memref<16x1792xf32, #tpu.memory_space<vmem>>, vector<16x64xf32>
    tpu.vector_store %arg54[%c0_117, %c0_118], %97 {strides = array<i32>} : memref<16x1792xf32, #tpu.memory_space<vmem>>, vector<16x64xf32>,
    %c6_119 = arith.constant 6 : index
    %c0_120 = arith.constant 0 : index
    %99 = vector.load %arg48[%c6_119, %c0_120] : memref<32x64xf32, #tpu.memory_space<vmem>>, vector<16x64xf32>
    %c0_121 = arith.constant 0 : index
    %c64_122 = arith.constant 64 : index
    %100 = vector.load %arg54[%c0_121, %c64_122] : memref<16x1792xf32, #tpu.memory_space<vmem>>, vector<16x64xf32>
    tpu.vector_store %arg54[%c0_121, %c64_122], %99 {strides = array<i32>} : memref<16x1792xf32, #tpu.memory_space<vmem>>, vector<16x64xf32>,
    %c7_123 = arith.constant 7 : index
    %c0_124 = arith.constant 0 : index
    %101 = vector.load %arg48[%c7_123, %c0_124] : memref<32x64xf32, #tpu.memory_space<vmem>>, vector<16x64xf32>
    %c0_125 = arith.constant 0 : index
    %c128_126 = arith.constant 128 : index
    %102 = vector.load %arg54[%c0_125, %c128_126] : memref<16x1792xf32, #tpu.memory_space<vmem>>, vector<16x64xf32>
    tpu.vector_store %arg54[%c0_125, %c128_126], %101 {strides = array<i32>} : memref<16x1792xf32, #tpu.memory_space<vmem>>, vector<16x64xf32>,
    %c8_127 = arith.constant 8 : index
    %c0_128 = arith.constant 0 : index
    %103 = vector.load %arg48[%c8_127, %c0_128] : memref<32x64xf32, #tpu.memory_space<vmem>>, vector<16x64xf32>
    %c0_129 = arith.constant 0 : index
    %c192_130 = arith.constant 192 : index
    %104 = vector.load %arg54[%c0_129, %c192_130] : memref<16x1792xf32, #tpu.memory_space<vmem>>, vector<16x64xf32>
    tpu.vector_store %arg54[%c0_129, %c192_130], %103 {strides = array<i32>} : memref<16x1792xf32, #tpu.memory_space<vmem>>, vector<16x64xf32>,
    %c9_131 = arith.constant 9 : index
    %c0_132 = arith.constant 0 : index
    %105 = vector.load %arg48[%c9_131, %c0_132] : memref<32x64xf32, #tpu.memory_space<vmem>>, vector<16x64xf32>
    %c0_133 = arith.constant 0 : index
    %c256_134 = arith.constant 256 : index
    %106 = vector.load %arg54[%c0_133, %c256_134] : memref<16x1792xf32, #tpu.memory_space<vmem>>, vector<16x64xf32>
    tpu.vector_store %arg54[%c0_133, %c256_134], %105 {strides = array<i32>} : memref<16x1792xf32, #tpu.memory_space<vmem>>, vector<16x64xf32>,
    %c10_135 = arith.constant 10 : index
    %c0_136 = arith.constant 0 : index
    %107 = vector.load %arg48[%c10_135, %c0_136] : memref<32x64xf32, #tpu.memory_space<vmem>>, vector<16x64xf32>
    %c0_137 = arith.constant 0 : index
    %c320_138 = arith.constant 320 : index
    %108 = vector.load %arg54[%c0_137, %c320_138] : memref<16x1792xf32, #tpu.memory_space<vmem>>, vector<16x64xf32>
    tpu.vector_store %arg54[%c0_137, %c320_138], %107 {strides = array<i32>} : memref<16x1792xf32, #tpu.memory_space<vmem>>, vector<16x64xf32>,
    %c11_139 = arith.constant 11 : index
    %c0_140 = arith.constant 0 : index
    %109 = vector.load %arg48[%c11_139, %c0_140] : memref<32x64xf32, #tpu.memory_space<vmem>>, vector<16x64xf32>
    %c0_141 = arith.constant 0 : index
    %c384_142 = arith.constant 384 : index
    %110 = vector.load %arg54[%c0_141, %c384_142] : memref<16x1792xf32, #tpu.memory_space<vmem>>, vector<16x64xf32>
    tpu.vector_store %arg54[%c0_141, %c384_142], %109 {strides = array<i32>} : memref<16x1792xf32, #tpu.memory_space<vmem>>, vector<16x64xf32>,
    %c0_143 = arith.constant 0 : index
    %c0_144 = arith.constant 0 : index
    %111 = vector.load %arg54[%c0_143, %c0_144] : memref<16x1792xf32, #tpu.memory_space<vmem>>, vector<16x448xf32>
    %112 = arith.truncf %111 : vector<16x448xf32> to vector<16x448xbf16>
    %c0_145 = arith.constant 0 : index
    %c0_146 = arith.constant 0 : index
    %113 = vector.load %arg8[%c0_145, %c0_146] : memref<448x64xbf16, #tpu.memory_space<vmem>>, vector<448x64xbf16>
    %cst_147 = arith.constant dense<0.000000e+00> : vector<16x64xf32>
    %114 = tpu.matmul %112, %113, %cst_147 {dimension_numbers = #tpu.dot_dimension_numbers<[1], [0], [0], [1], [0, 0, 1, 1], [], []>} : vector<16x448xbf16>, vector<448x64xbf16>, vector<16x64xf32> -> vector<16x64xf32>
    %c0_148 = arith.constant 0 : index
    %c0_149 = arith.constant 0 : index
    %115 = vector.load %arg9[%c0_148, %c0_149] : memref<1x64xf32, #tpu.memory_space<vmem>>, vector<1x64xf32>
    %116 = vector.broadcast %115 : vector<1x64xf32> to vector<16x64xf32>
    %117 = arith.mulf %114, %116 : vector<16x64xf32>
    %c0_150 = arith.constant 0 : index
    %c0_151 = arith.constant 0 : index
    %118 = vector.load %arg10[%c0_150, %c0_151] : memref<1x64xf32, #tpu.memory_space<vmem>>, vector<1x64xf32>
    %119 = vector.broadcast %118 : vector<1x64xf32> to vector<16x64xf32>
    %120 = arith.addf %117, %119 : vector<16x64xf32>
    %cst_152 = arith.constant dense<0.000000e+00> : vector<64xf32>
    %121 = vector.multi_reduction <add>, %120, %cst_152 [0] : vector<16x64xf32> to vector<64xf32>
    %122 = vector.shape_cast %121 : vector<64xf32> to vector<1x64xf32>
    %cst_153 = arith.constant 1.600000e+01 : f32
    %123 = vector.broadcast %cst_153 : f32 to vector<1x64xf32>
    %124 = arith.divf %122, %123 : vector<1x64xf32>
    %cst_154 = arith.constant dense<0xFF800000> : vector<64xf32>
    %125 = vector.multi_reduction <maximumf>, %120, %cst_154 [0] : vector<16x64xf32> to vector<64xf32>
    %126 = vector.shape_cast %125 : vector<64xf32> to vector<1x64xf32>
    %127 = tpu.iota {dimensions = array<i32: 0>} : vector<2x64xi32>
    %c0_i32 = arith.constant 0 : i32
    %128 = vector.broadcast %c0_i32 : i32 to vector<2x64xi32>
    %129 = arith.cmpi eq, %127, %128 : vector<2x64xi32>
    %130 = vector.shape_cast %124 : vector<1x64xf32> to vector<1x64xf32>
    %131 = vector.broadcast %130 : vector<1x64xf32> to vector<2x64xf32>
    %132 = vector.shape_cast %126 : vector<1x64xf32> to vector<1x64xf32>
    %133 = vector.broadcast %132 : vector<1x64xf32> to vector<2x64xf32>
    %134 = arith.select %129, %131, %133 : vector<2x64xi1>, vector<2x64xf32>
    %135 = arith.truncf %134 : vector<2x64xf32> to vector<2x64xbf16>
    %c0_155 = arith.constant 0 : index
    %c0_156 = arith.constant 0 : index
    %136 = vector.load %arg14[%c0_155, %c0_156] : memref<64x8xbf16, #tpu.memory_space<vmem>>, vector<64x8xbf16>
    %cst_157 = arith.constant dense<0.000000e+00> : vector<2x8xf32>
    %137 = tpu.matmul %135, %136, %cst_157 {dimension_numbers = #tpu.dot_dimension_numbers<[1], [0], [0], [1], [0, 0, 1, 1], [], []>} : vector<2x64xbf16>, vector<64x8xbf16>, vector<2x8xf32> -> vector<2x8xf32>
    %c0_158 = arith.constant 0 : index
    %c0_159 = arith.constant 0 : index
    %138 = vector.load %arg15[%c0_158, %c0_159] : memref<1x8xf32, #tpu.memory_space<vmem>>, vector<1x8xf32>
    %139 = vector.broadcast %138 : vector<1x8xf32> to vector<2x8xf32>
    %140 = arith.addf %137, %139 : vector<2x8xf32>
    %cst_160 = arith.constant 0.000000e+00 : f32
    %141 = vector.broadcast %cst_160 : f32 to vector<2x8xf32>
    %142 = arith.maximumf %140, %141 : vector<2x8xf32>
    %143 = arith.truncf %142 : vector<2x8xf32> to vector<2x8xbf16>
    %c0_161 = arith.constant 0 : index
    %c0_162 = arith.constant 0 : index
    %144 = vector.load %arg16[%c0_161, %c0_162] : memref<8x64xbf16, #tpu.memory_space<vmem>>, vector<8x64xbf16>
    %cst_163 = arith.constant dense<0.000000e+00> : vector<2x64xf32>
    %145 = tpu.matmul %143, %144, %cst_163 {dimension_numbers = #tpu.dot_dimension_numbers<[1], [0], [0], [1], [0, 0, 1, 1], [], []>} : vector<2x8xbf16>, vector<8x64xbf16>, vector<2x64xf32> -> vector<2x64xf32>
    %c0_164 = arith.constant 0 : index
    %c0_165 = arith.constant 0 : index
    %146 = vector.load %arg17[%c0_164, %c0_165] : memref<1x64xf32, #tpu.memory_space<vmem>>, vector<1x64xf32>
    %147 = vector.broadcast %146 : vector<1x64xf32> to vector<2x64xf32>
    %148 = arith.addf %145, %147 : vector<2x64xf32>
    %cst_166 = arith.constant dense<0.000000e+00> : vector<64xf32>
    %149 = vector.multi_reduction <add>, %148, %cst_166 [0] : vector<2x64xf32> to vector<64xf32>
    %150 = vector.shape_cast %149 : vector<64xf32> to vector<1x64xf32>
    %151 = arith.negf %150 : vector<1x64xf32>
    %152 = math.exp %151 : vector<1x64xf32>
    %cst_167 = arith.constant 1.000000e+00 : f32
    %153 = vector.broadcast %cst_167 : f32 to vector<1x64xf32>
    %154 = arith.addf %153, %152 : vector<1x64xf32>
    %155 = arith.divf %153, %154 : vector<1x64xf32>
    %156 = vector.broadcast %155 : vector<1x64xf32> to vector<16x64xf32>
    %157 = arith.mulf %120, %156 : vector<16x64xf32>
    %cst_168 = arith.constant dense<0xFF800000> : vector<16xf32>
    %158 = vector.multi_reduction <maximumf>, %157, %cst_168 [1] : vector<16x64xf32> to vector<16xf32>
    %159 = vector.shape_cast %158 : vector<16xf32> to vector<16x1xf32>
    %160 = arith.negf %159 : vector<16x1xf32>
    %161 = math.exp %160 : vector<16x1xf32>
    %cst_169 = arith.constant 1.000000e+00 : f32
    %162 = vector.broadcast %cst_169 : f32 to vector<16x1xf32>
    %163 = arith.addf %162, %161 : vector<16x1xf32>
    %164 = arith.divf %162, %163 : vector<16x1xf32>
    %165 = vector.broadcast %164 : vector<16x1xf32> to vector<16x64xf32>
    %166 = arith.mulf %157, %165 : vector<16x64xf32>
    %167 = arith.addf %166, %69 : vector<16x64xf32>
    %c8_170 = arith.constant 8 : index
    %c0_171 = arith.constant 0 : index
    %168 = vector.load %arg49[%c8_170, %c0_171] : memref<32x64xf32, #tpu.memory_space<vmem>>, vector<16x64xf32>
    tpu.vector_store %arg49[%c8_170, %c0_171], %167 {strides = array<i32>} : memref<32x64xf32, #tpu.memory_space<vmem>>, vector<16x64xf32>,
    %c8_172 = arith.constant 8 : index
    %c0_173 = arith.constant 0 : index
    %169 = tpu.strided_load %arg49[%c8_172, %c0_173] {strides = array<i32: 2, 1>} : memref<32x64xf32, #tpu.memory_space<vmem>>, vector<8x64xf32>
    %170 = arith.truncf %169 : vector<8x64xf32> to vector<8x64xbf16>
    %c0_174 = arith.constant 0 : index
    %c0_175 = arith.constant 0 : index
    %171 = vector.load %arg24[%c0_174, %c0_175] : memref<64x128xbf16, #tpu.memory_space<vmem>>, vector<64x128xbf16>
    %cst_176 = arith.constant dense<0.000000e+00> : vector<8x128xf32>
    %172 = tpu.matmul %170, %171, %cst_176 {dimension_numbers = #tpu.dot_dimension_numbers<[1], [0], [0], [1], [0, 0, 1, 1], [], []>} : vector<8x64xbf16>, vector<64x128xbf16>, vector<8x128xf32> -> vector<8x128xf32>
    %c0_177 = arith.constant 0 : index
    %c0_178 = arith.constant 0 : index
    %173 = vector.load %arg25[%c0_177, %c0_178] : memref<1x128xf32, #tpu.memory_space<vmem>>, vector<1x128xf32>
    %174 = vector.broadcast %173 : vector<1x128xf32> to vector<8x128xf32>
    %175 = arith.mulf %172, %174 : vector<8x128xf32>
    %c0_179 = arith.constant 0 : index
    %c0_180 = arith.constant 0 : index
    %176 = vector.load %arg26[%c0_179, %c0_180] : memref<1x128xf32, #tpu.memory_space<vmem>>, vector<1x128xf32>
    %177 = vector.broadcast %176 : vector<1x128xf32> to vector<8x128xf32>
    %178 = arith.addf %175, %177 : vector<8x128xf32>
    %c5_181 = arith.constant 5 : index
    %c0_182 = arith.constant 0 : index
    %179 = tpu.strided_load %arg49[%c5_181, %c0_182] {strides = array<i32: 2, 1>} : memref<32x64xf32, #tpu.memory_space<vmem>>, vector<8x64xf32>
    %c0_183 = arith.constant 0 : index
    %c0_184 = arith.constant 0 : index
    %180 = vector.load %arg54[%c0_183, %c0_184] : memref<16x1792xf32, #tpu.memory_space<vmem>>, vector<8x64xf32>
    tpu.vector_store %arg54[%c0_183, %c0_184], %179 {strides = array<i32>} : memref<16x1792xf32, #tpu.memory_space<vmem>>, vector<8x64xf32>,
    %c6_185 = arith.constant 6 : index
    %c0_186 = arith.constant 0 : index
    %181 = tpu.strided_load %arg49[%c6_185, %c0_186] {strides = array<i32: 2, 1>} : memref<32x64xf32, #tpu.memory_space<vmem>>, vector<8x64xf32>
    %c0_187 = arith.constant 0 : index
    %c64_188 = arith.constant 64 : index
    %182 = vector.load %arg54[%c0_187, %c64_188] : memref<16x1792xf32, #tpu.memory_space<vmem>>, vector<8x64xf32>
    tpu.vector_store %arg54[%c0_187, %c64_188], %181 {strides = array<i32>} : memref<16x1792xf32, #tpu.memory_space<vmem>>, vector<8x64xf32>,
    %c7_189 = arith.constant 7 : index
    %c0_190 = arith.constant 0 : index
    %183 = tpu.strided_load %arg49[%c7_189, %c0_190] {strides = array<i32: 2, 1>} : memref<32x64xf32, #tpu.memory_space<vmem>>, vector<8x64xf32>
    %c0_191 = arith.constant 0 : index
    %c128_192 = arith.constant 128 : index
    %184 = vector.load %arg54[%c0_191, %c128_192] : memref<16x1792xf32, #tpu.memory_space<vmem>>, vector<8x64xf32>
    tpu.vector_store %arg54[%c0_191, %c128_192], %183 {strides = array<i32>} : memref<16x1792xf32, #tpu.memory_space<vmem>>, vector<8x64xf32>,
    %c8_193 = arith.constant 8 : index
    %c0_194 = arith.constant 0 : index
    %185 = tpu.strided_load %arg49[%c8_193, %c0_194] {strides = array<i32: 2, 1>} : memref<32x64xf32, #tpu.memory_space<vmem>>, vector<8x64xf32>
    %c0_195 = arith.constant 0 : index
    %c192_196 = arith.constant 192 : index
    %186 = vector.load %arg54[%c0_195, %c192_196] : memref<16x1792xf32, #tpu.memory_space<vmem>>, vector<8x64xf32>
    tpu.vector_store %arg54[%c0_195, %c192_196], %185 {strides = array<i32>} : memref<16x1792xf32, #tpu.memory_space<vmem>>, vector<8x64xf32>,
    %c9_197 = arith.constant 9 : index
    %c0_198 = arith.constant 0 : index
    %187 = tpu.strided_load %arg49[%c9_197, %c0_198] {strides = array<i32: 2, 1>} : memref<32x64xf32, #tpu.memory_space<vmem>>, vector<8x64xf32>
    %c0_199 = arith.constant 0 : index
    %c256_200 = arith.constant 256 : index
    %188 = vector.load %arg54[%c0_199, %c256_200] : memref<16x1792xf32, #tpu.memory_space<vmem>>, vector<8x64xf32>
    tpu.vector_store %arg54[%c0_199, %c256_200], %187 {strides = array<i32>} : memref<16x1792xf32, #tpu.memory_space<vmem>>, vector<8x64xf32>,
    %c10_201 = arith.constant 10 : index
    %c0_202 = arith.constant 0 : index
    %189 = tpu.strided_load %arg49[%c10_201, %c0_202] {strides = array<i32: 2, 1>} : memref<32x64xf32, #tpu.memory_space<vmem>>, vector<8x64xf32>
    %c0_203 = arith.constant 0 : index
    %c320_204 = arith.constant 320 : index
    %190 = vector.load %arg54[%c0_203, %c320_204] : memref<16x1792xf32, #tpu.memory_space<vmem>>, vector<8x64xf32>
    tpu.vector_store %arg54[%c0_203, %c320_204], %189 {strides = array<i32>} : memref<16x1792xf32, #tpu.memory_space<vmem>>, vector<8x64xf32>,
    %c11_205 = arith.constant 11 : index
    %c0_206 = arith.constant 0 : index
    %191 = tpu.strided_load %arg49[%c11_205, %c0_206] {strides = array<i32: 2, 1>} : memref<32x64xf32, #tpu.memory_space<vmem>>, vector<8x64xf32>
    %c0_207 = arith.constant 0 : index
    %c384_208 = arith.constant 384 : index
    %192 = vector.load %arg54[%c0_207, %c384_208] : memref<16x1792xf32, #tpu.memory_space<vmem>>, vector<8x64xf32>
    tpu.vector_store %arg54[%c0_207, %c384_208], %191 {strides = array<i32>} : memref<16x1792xf32, #tpu.memory_space<vmem>>, vector<8x64xf32>,
    %c0_209 = arith.constant 0 : index
    %c0_210 = arith.constant 0 : index
    %193 = vector.load %arg54[%c0_209, %c0_210] : memref<16x1792xf32, #tpu.memory_space<vmem>>, vector<8x448xf32>
    %194 = arith.truncf %193 : vector<8x448xf32> to vector<8x448xbf16>
    %c0_211 = arith.constant 0 : index
    %c0_212 = arith.constant 0 : index
    %195 = vector.load %arg18[%c0_211, %c0_212] : memref<448x128xbf16, #tpu.memory_space<vmem>>, vector<448x128xbf16>
    %cst_213 = arith.constant dense<0.000000e+00> : vector<8x128xf32>
    %196 = tpu.matmul %194, %195, %cst_213 {dimension_numbers = #tpu.dot_dimension_numbers<[1], [0], [0], [1], [0, 0, 1, 1], [], []>} : vector<8x448xbf16>, vector<448x128xbf16>, vector<8x128xf32> -> vector<8x128xf32>
    %c0_214 = arith.constant 0 : index
    %c0_215 = arith.constant 0 : index
    %197 = vector.load %arg19[%c0_214, %c0_215] : memref<1x128xf32, #tpu.memory_space<vmem>>, vector<1x128xf32>
    %198 = vector.broadcast %197 : vector<1x128xf32> to vector<8x128xf32>
    %199 = arith.mulf %196, %198 : vector<8x128xf32>
    %c0_216 = arith.constant 0 : index
    %c0_217 = arith.constant 0 : index
    %200 = vector.load %arg20[%c0_216, %c0_217] : memref<1x128xf32, #tpu.memory_space<vmem>>, vector<1x128xf32>
    %201 = vector.broadcast %200 : vector<1x128xf32> to vector<8x128xf32>
    %202 = arith.addf %199, %201 : vector<8x128xf32>
    %cst_218 = arith.constant 0.000000e+00 : f32
    %203 = vector.broadcast %cst_218 : f32 to vector<8x128xf32>
    %204 = arith.maximumf %202, %203 : vector<8x128xf32>
    %c8_219 = arith.constant 8 : index
    %c0_220 = arith.constant 0 : index
    %205 = vector.load %arg50[%c8_219, %c0_220] : memref<24x128xf32, #tpu.memory_space<vmem>>, vector<8x128xf32>
    tpu.vector_store %arg50[%c8_219, %c0_220], %204 {strides = array<i32>} : memref<24x128xf32, #tpu.memory_space<vmem>>, vector<8x128xf32>,
    %c5_221 = arith.constant 5 : index
    %c0_222 = arith.constant 0 : index
    %206 = vector.load %arg50[%c5_221, %c0_222] : memref<24x128xf32, #tpu.memory_space<vmem>>, vector<8x128xf32>
    %c0_223 = arith.constant 0 : index
    %c0_224 = arith.constant 0 : index
    %207 = vector.load %arg54[%c0_223, %c0_224] : memref<16x1792xf32, #tpu.memory_space<vmem>>, vector<8x128xf32>
    tpu.vector_store %arg54[%c0_223, %c0_224], %206 {strides = array<i32>} : memref<16x1792xf32, #tpu.memory_space<vmem>>, vector<8x128xf32>,
    %c6_225 = arith.constant 6 : index
    %c0_226 = arith.constant 0 : index
    %208 = vector.load %arg50[%c6_225, %c0_226] : memref<24x128xf32, #tpu.memory_space<vmem>>, vector<8x128xf32>
    %c0_227 = arith.constant 0 : index
    %c128_228 = arith.constant 128 : index
    %209 = vector.load %arg54[%c0_227, %c128_228] : memref<16x1792xf32, #tpu.memory_space<vmem>>, vector<8x128xf32>
    tpu.vector_store %arg54[%c0_227, %c128_228], %208 {strides = array<i32>} : memref<16x1792xf32, #tpu.memory_space<vmem>>, vector<8x128xf32>,
    %c7_229 = arith.constant 7 : index
    %c0_230 = arith.constant 0 : index
    %210 = vector.load %arg50[%c7_229, %c0_230] : memref<24x128xf32, #tpu.memory_space<vmem>>, vector<8x128xf32>
    %c0_231 = arith.constant 0 : index
    %c256_232 = arith.constant 256 : index
    %211 = vector.load %arg54[%c0_231, %c256_232] : memref<16x1792xf32, #tpu.memory_space<vmem>>, vector<8x128xf32>
    tpu.vector_store %arg54[%c0_231, %c256_232], %210 {strides = array<i32>} : memref<16x1792xf32, #tpu.memory_space<vmem>>, vector<8x128xf32>,
    %c8_233 = arith.constant 8 : index
    %c0_234 = arith.constant 0 : index
    %212 = vector.load %arg50[%c8_233, %c0_234] : memref<24x128xf32, #tpu.memory_space<vmem>>, vector<8x128xf32>
    %c0_235 = arith.constant 0 : index
    %c384_236 = arith.constant 384 : index
    %213 = vector.load %arg54[%c0_235, %c384_236] : memref<16x1792xf32, #tpu.memory_space<vmem>>, vector<8x128xf32>
    tpu.vector_store %arg54[%c0_235, %c384_236], %212 {strides = array<i32>} : memref<16x1792xf32, #tpu.memory_space<vmem>>, vector<8x128xf32>,
    %c9_237 = arith.constant 9 : index
    %c0_238 = arith.constant 0 : index
    %214 = vector.load %arg50[%c9_237, %c0_238] : memref<24x128xf32, #tpu.memory_space<vmem>>, vector<8x128xf32>
    %c0_239 = arith.constant 0 : index
    %c512 = arith.constant 512 : index
    %215 = vector.load %arg54[%c0_239, %c512] : memref<16x1792xf32, #tpu.memory_space<vmem>>, vector<8x128xf32>
    tpu.vector_store %arg54[%c0_239, %c512], %214 {strides = array<i32>} : memref<16x1792xf32, #tpu.memory_space<vmem>>, vector<8x128xf32>,
    %c10_240 = arith.constant 10 : index
    %c0_241 = arith.constant 0 : index
    %216 = vector.load %arg50[%c10_240, %c0_241] : memref<24x128xf32, #tpu.memory_space<vmem>>, vector<8x128xf32>
    %c0_242 = arith.constant 0 : index
    %c640 = arith.constant 640 : index
    %217 = vector.load %arg54[%c0_242, %c640] : memref<16x1792xf32, #tpu.memory_space<vmem>>, vector<8x128xf32>
    tpu.vector_store %arg54[%c0_242, %c640], %216 {strides = array<i32>} : memref<16x1792xf32, #tpu.memory_space<vmem>>, vector<8x128xf32>,
    %c11_243 = arith.constant 11 : index
    %c0_244 = arith.constant 0 : index
    %218 = vector.load %arg50[%c11_243, %c0_244] : memref<24x128xf32, #tpu.memory_space<vmem>>, vector<8x128xf32>
    %c0_245 = arith.constant 0 : index
    %c768 = arith.constant 768 : index
    %219 = vector.load %arg54[%c0_245, %c768] : memref<16x1792xf32, #tpu.memory_space<vmem>>, vector<8x128xf32>
    tpu.vector_store %arg54[%c0_245, %c768], %218 {strides = array<i32>} : memref<16x1792xf32, #tpu.memory_space<vmem>>, vector<8x128xf32>,
    %c0_246 = arith.constant 0 : index
    %c0_247 = arith.constant 0 : index
    %220 = vector.load %arg54[%c0_246, %c0_247] : memref<16x1792xf32, #tpu.memory_space<vmem>>, vector<8x896xf32>
    %221 = arith.truncf %220 : vector<8x896xf32> to vector<8x896xbf16>
    %c0_248 = arith.constant 0 : index
    %c0_249 = arith.constant 0 : index
    %222 = vector.load %arg21[%c0_248, %c0_249] : memref<896x128xbf16, #tpu.memory_space<vmem>>, vector<896x128xbf16>
    %cst_250 = arith.constant dense<0.000000e+00> : vector<8x128xf32>
    %223 = tpu.matmul %221, %222, %cst_250 {dimension_numbers = #tpu.dot_dimension_numbers<[1], [0], [0], [1], [0, 0, 1, 1], [], []>} : vector<8x896xbf16>, vector<896x128xbf16>, vector<8x128xf32> -> vector<8x128xf32>
    %c0_251 = arith.constant 0 : index
    %c0_252 = arith.constant 0 : index
    %224 = vector.load %arg22[%c0_251, %c0_252] : memref<1x128xf32, #tpu.memory_space<vmem>>, vector<1x128xf32>
    %225 = vector.broadcast %224 : vector<1x128xf32> to vector<8x128xf32>
    %226 = arith.mulf %223, %225 : vector<8x128xf32>
    %c0_253 = arith.constant 0 : index
    %c0_254 = arith.constant 0 : index
    %227 = vector.load %arg23[%c0_253, %c0_254] : memref<1x128xf32, #tpu.memory_space<vmem>>, vector<1x128xf32>
    %228 = vector.broadcast %227 : vector<1x128xf32> to vector<8x128xf32>
    %229 = arith.addf %226, %228 : vector<8x128xf32>
    %cst_255 = arith.constant dense<0.000000e+00> : vector<128xf32>
    %230 = vector.multi_reduction <add>, %229, %cst_255 [0] : vector<8x128xf32> to vector<128xf32>
    %231 = vector.shape_cast %230 : vector<128xf32> to vector<1x128xf32>
    %cst_256 = arith.constant 8.000000e+00 : f32
    %232 = vector.broadcast %cst_256 : f32 to vector<1x128xf32>
    %233 = arith.divf %231, %232 : vector<1x128xf32>
    %cst_257 = arith.constant dense<0xFF800000> : vector<128xf32>
    %234 = vector.multi_reduction <maximumf>, %229, %cst_257 [0] : vector<8x128xf32> to vector<128xf32>
    %235 = vector.shape_cast %234 : vector<128xf32> to vector<1x128xf32>
    %236 = tpu.iota {dimensions = array<i32: 0>} : vector<2x128xi32>
    %c0_i32_258 = arith.constant 0 : i32
    %237 = vector.broadcast %c0_i32_258 : i32 to vector<2x128xi32>
    %238 = arith.cmpi eq, %236, %237 : vector<2x128xi32>
    %239 = vector.shape_cast %233 : vector<1x128xf32> to vector<1x128xf32>
    %240 = vector.broadcast %239 : vector<1x128xf32> to vector<2x128xf32>
    %241 = vector.shape_cast %235 : vector<1x128xf32> to vector<1x128xf32>
    %242 = vector.broadcast %241 : vector<1x128xf32> to vector<2x128xf32>
    %243 = arith.select %238, %240, %242 : vector<2x128xi1>, vector<2x128xf32>
    %244 = arith.truncf %243 : vector<2x128xf32> to vector<2x128xbf16>
    %c0_259 = arith.constant 0 : index
    %c0_260 = arith.constant 0 : index
    %245 = vector.load %arg27[%c0_259, %c0_260] : memref<128x16xbf16, #tpu.memory_space<vmem>>, vector<128x16xbf16>
    %cst_261 = arith.constant dense<0.000000e+00> : vector<2x16xf32>
    %246 = tpu.matmul %244, %245, %cst_261 {dimension_numbers = #tpu.dot_dimension_numbers<[1], [0], [0], [1], [0, 0, 1, 1], [], []>} : vector<2x128xbf16>, vector<128x16xbf16>, vector<2x16xf32> -> vector<2x16xf32>
    %c0_262 = arith.constant 0 : index
    %c0_263 = arith.constant 0 : index
    %247 = vector.load %arg28[%c0_262, %c0_263] : memref<1x16xf32, #tpu.memory_space<vmem>>, vector<1x16xf32>
    %248 = vector.broadcast %247 : vector<1x16xf32> to vector<2x16xf32>
    %249 = arith.addf %246, %248 : vector<2x16xf32>
    %cst_264 = arith.constant 0.000000e+00 : f32
    %250 = vector.broadcast %cst_264 : f32 to vector<2x16xf32>
    %251 = arith.maximumf %249, %250 : vector<2x16xf32>
    %252 = arith.truncf %251 : vector<2x16xf32> to vector<2x16xbf16>
    %c0_265 = arith.constant 0 : index
    %c0_266 = arith.constant 0 : index
    %253 = vector.load %arg29[%c0_265, %c0_266] : memref<16x128xbf16, #tpu.memory_space<vmem>>, vector<16x128xbf16>
    %cst_267 = arith.constant dense<0.000000e+00> : vector<2x128xf32>
    %254 = tpu.matmul %252, %253, %cst_267 {dimension_numbers = #tpu.dot_dimension_numbers<[1], [0], [0], [1], [0, 0, 1, 1], [], []>} : vector<2x16xbf16>, vector<16x128xbf16>, vector<2x128xf32> -> vector<2x128xf32>
    %c0_268 = arith.constant 0 : index
    %c0_269 = arith.constant 0 : index
    %255 = vector.load %arg30[%c0_268, %c0_269] : memref<1x128xf32, #tpu.memory_space<vmem>>, vector<1x128xf32>
    %256 = vector.broadcast %255 : vector<1x128xf32> to vector<2x128xf32>
    %257 = arith.addf %254, %256 : vector<2x128xf32>
    %cst_270 = arith.constant dense<0.000000e+00> : vector<128xf32>
    %258 = vector.multi_reduction <add>, %257, %cst_270 [0] : vector<2x128xf32> to vector<128xf32>
    %259 = vector.shape_cast %258 : vector<128xf32> to vector<1x128xf32>
    %260 = arith.negf %259 : vector<1x128xf32>
    %261 = math.exp %260 : vector<1x128xf32>
    %cst_271 = arith.constant 1.000000e+00 : f32
    %262 = vector.broadcast %cst_271 : f32 to vector<1x128xf32>
    %263 = arith.addf %262, %261 : vector<1x128xf32>
    %264 = arith.divf %262, %263 : vector<1x128xf32>
    %265 = vector.broadcast %264 : vector<1x128xf32> to vector<8x128xf32>
    %266 = arith.mulf %229, %265 : vector<8x128xf32>
    %cst_272 = arith.constant dense<0xFF800000> : vector<8xf32>
    %267 = vector.multi_reduction <maximumf>, %266, %cst_272 [1] : vector<8x128xf32> to vector<8xf32>
    %268 = vector.shape_cast %267 : vector<8xf32> to vector<8x1xf32>
    %269 = arith.negf %268 : vector<8x1xf32>
    %270 = math.exp %269 : vector<8x1xf32>
    %cst_273 = arith.constant 1.000000e+00 : f32
    %271 = vector.broadcast %cst_273 : f32 to vector<8x1xf32>
    %272 = arith.addf %271, %270 : vector<8x1xf32>
    %273 = arith.divf %271, %272 : vector<8x1xf32>
    %274 = vector.broadcast %273 : vector<8x1xf32> to vector<8x128xf32>
    %275 = arith.mulf %266, %274 : vector<8x128xf32>
    %276 = arith.addf %275, %178 : vector<8x128xf32>
    %c8_274 = arith.constant 8 : index
    %c0_275 = arith.constant 0 : index
    %277 = vector.load %arg51[%c8_274, %c0_275] : memref<24x128xf32, #tpu.memory_space<vmem>>, vector<8x128xf32>
    tpu.vector_store %arg51[%c8_274, %c0_275], %276 {strides = array<i32>} : memref<24x128xf32, #tpu.memory_space<vmem>>, vector<8x128xf32>,
    %c8_276 = arith.constant 8 : index
    %c0_277 = arith.constant 0 : index
    %278 = tpu.strided_load %arg51[%c8_276, %c0_277] {strides = array<i32: 2, 1>} : memref<24x128xf32, #tpu.memory_space<vmem>>, vector<4x128xf32>
    %279 = arith.truncf %278 : vector<4x128xf32> to vector<4x128xbf16>
    %c0_278 = arith.constant 0 : index
    %c0_279 = arith.constant 0 : index
    %280 = vector.load %arg37[%c0_278, %c0_279] : memref<128x256xbf16, #tpu.memory_space<vmem>>, vector<128x256xbf16>
    %cst_280 = arith.constant dense<0.000000e+00> : vector<4x256xf32>
    %281 = tpu.matmul %279, %280, %cst_280 {dimension_numbers = #tpu.dot_dimension_numbers<[1], [0], [0], [1], [0, 0, 1, 1], [], []>} : vector<4x128xbf16>, vector<128x256xbf16>, vector<4x256xf32> -> vector<4x256xf32>
    %c0_281 = arith.constant 0 : index
    %c0_282 = arith.constant 0 : index
    %282 = vector.load %arg38[%c0_281, %c0_282] : memref<1x256xf32, #tpu.memory_space<vmem>>, vector<1x256xf32>
    %283 = vector.broadcast %282 : vector<1x256xf32> to vector<4x256xf32>
    %284 = arith.mulf %281, %283 : vector<4x256xf32>
    %c0_283 = arith.constant 0 : index
    %c0_284 = arith.constant 0 : index
    %285 = vector.load %arg39[%c0_283, %c0_284] : memref<1x256xf32, #tpu.memory_space<vmem>>, vector<1x256xf32>
    %286 = vector.broadcast %285 : vector<1x256xf32> to vector<4x256xf32>
    %287 = arith.addf %284, %286 : vector<4x256xf32>
    %c5_285 = arith.constant 5 : index
    %c0_286 = arith.constant 0 : index
    %288 = tpu.strided_load %arg51[%c5_285, %c0_286] {strides = array<i32: 2, 1>} : memref<24x128xf32, #tpu.memory_space<vmem>>, vector<4x128xf32>
    %c0_287 = arith.constant 0 : index
    %c0_288 = arith.constant 0 : index
    %289 = vector.load %arg54[%c0_287, %c0_288] : memref<16x1792xf32, #tpu.memory_space<vmem>>, vector<4x128xf32>
    tpu.vector_store %arg54[%c0_287, %c0_288], %288 {strides = array<i32>} : memref<16x1792xf32, #tpu.memory_space<vmem>>, vector<4x128xf32>,
    %c6_289 = arith.constant 6 : index
    %c0_290 = arith.constant 0 : index
    %290 = tpu.strided_load %arg51[%c6_289, %c0_290] {strides = array<i32: 2, 1>} : memref<24x128xf32, #tpu.memory_space<vmem>>, vector<4x128xf32>
    %c0_291 = arith.constant 0 : index
    %c128_292 = arith.constant 128 : index
    %291 = vector.load %arg54[%c0_291, %c128_292] : memref<16x1792xf32, #tpu.memory_space<vmem>>, vector<4x128xf32>
    tpu.vector_store %arg54[%c0_291, %c128_292], %290 {strides = array<i32>} : memref<16x1792xf32, #tpu.memory_space<vmem>>, vector<4x128xf32>,
    %c7_293 = arith.constant 7 : index
    %c0_294 = arith.constant 0 : index
    %292 = tpu.strided_load %arg51[%c7_293, %c0_294] {strides = array<i32: 2, 1>} : memref<24x128xf32, #tpu.memory_space<vmem>>, vector<4x128xf32>
    %c0_295 = arith.constant 0 : index
    %c256_296 = arith.constant 256 : index
    %293 = vector.load %arg54[%c0_295, %c256_296] : memref<16x1792xf32, #tpu.memory_space<vmem>>, vector<4x128xf32>
    tpu.vector_store %arg54[%c0_295, %c256_296], %292 {strides = array<i32>} : memref<16x1792xf32, #tpu.memory_space<vmem>>, vector<4x128xf32>,
    %c8_297 = arith.constant 8 : index
    %c0_298 = arith.constant 0 : index
    %294 = tpu.strided_load %arg51[%c8_297, %c0_298] {strides = array<i32: 2, 1>} : memref<24x128xf32, #tpu.memory_space<vmem>>, vector<4x128xf32>
    %c0_299 = arith.constant 0 : index
    %c384_300 = arith.constant 384 : index
    %295 = vector.load %arg54[%c0_299, %c384_300] : memref<16x1792xf32, #tpu.memory_space<vmem>>, vector<4x128xf32>
    tpu.vector_store %arg54[%c0_299, %c384_300], %294 {strides = array<i32>} : memref<16x1792xf32, #tpu.memory_space<vmem>>, vector<4x128xf32>,
    %c9_301 = arith.constant 9 : index
    %c0_302 = arith.constant 0 : index
    %296 = tpu.strided_load %arg51[%c9_301, %c0_302] {strides = array<i32: 2, 1>} : memref<24x128xf32, #tpu.memory_space<vmem>>, vector<4x128xf32>
    %c0_303 = arith.constant 0 : index
    %c512_304 = arith.constant 512 : index
    %297 = vector.load %arg54[%c0_303, %c512_304] : memref<16x1792xf32, #tpu.memory_space<vmem>>, vector<4x128xf32>
    tpu.vector_store %arg54[%c0_303, %c512_304], %296 {strides = array<i32>} : memref<16x1792xf32, #tpu.memory_space<vmem>>, vector<4x128xf32>,
    %c10_305 = arith.constant 10 : index
    %c0_306 = arith.constant 0 : index
    %298 = tpu.strided_load %arg51[%c10_305, %c0_306] {strides = array<i32: 2, 1>} : memref<24x128xf32, #tpu.memory_space<vmem>>, vector<4x128xf32>
    %c0_307 = arith.constant 0 : index
    %c640_308 = arith.constant 640 : index
    %299 = vector.load %arg54[%c0_307, %c640_308] : memref<16x1792xf32, #tpu.memory_space<vmem>>, vector<4x128xf32>
    tpu.vector_store %arg54[%c0_307, %c640_308], %298 {strides = array<i32>} : memref<16x1792xf32, #tpu.memory_space<vmem>>, vector<4x128xf32>,
    %c11_309 = arith.constant 11 : index
    %c0_310 = arith.constant 0 : index
    %300 = tpu.strided_load %arg51[%c11_309, %c0_310] {strides = array<i32: 2, 1>} : memref<24x128xf32, #tpu.memory_space<vmem>>, vector<4x128xf32>
    %c0_311 = arith.constant 0 : index
    %c768_312 = arith.constant 768 : index
    %301 = vector.load %arg54[%c0_311, %c768_312] : memref<16x1792xf32, #tpu.memory_space<vmem>>, vector<4x128xf32>
    tpu.vector_store %arg54[%c0_311, %c768_312], %300 {strides = array<i32>} : memref<16x1792xf32, #tpu.memory_space<vmem>>, vector<4x128xf32>,
    %c0_313 = arith.constant 0 : index
    %c0_314 = arith.constant 0 : index
    %302 = vector.load %arg54[%c0_313, %c0_314] : memref<16x1792xf32, #tpu.memory_space<vmem>>, vector<4x896xf32>
    %303 = arith.truncf %302 : vector<4x896xf32> to vector<4x896xbf16>
    %c0_315 = arith.constant 0 : index
    %c0_316 = arith.constant 0 : index
    %304 = vector.load %arg31[%c0_315, %c0_316] : memref<896x256xbf16, #tpu.memory_space<vmem>>, vector<896x256xbf16>
    %cst_317 = arith.constant dense<0.000000e+00> : vector<4x256xf32>
    %305 = tpu.matmul %303, %304, %cst_317 {dimension_numbers = #tpu.dot_dimension_numbers<[1], [0], [0], [1], [0, 0, 1, 1], [], []>} : vector<4x896xbf16>, vector<896x256xbf16>, vector<4x256xf32> -> vector<4x256xf32>
    %c0_318 = arith.constant 0 : index
    %c0_319 = arith.constant 0 : index
    %306 = vector.load %arg32[%c0_318, %c0_319] : memref<1x256xf32, #tpu.memory_space<vmem>>, vector<1x256xf32>
    %307 = vector.broadcast %306 : vector<1x256xf32> to vector<4x256xf32>
    %308 = arith.mulf %305, %307 : vector<4x256xf32>
    %c0_320 = arith.constant 0 : index
    %c0_321 = arith.constant 0 : index
    %309 = vector.load %arg33[%c0_320, %c0_321] : memref<1x256xf32, #tpu.memory_space<vmem>>, vector<1x256xf32>
    %310 = vector.broadcast %309 : vector<1x256xf32> to vector<4x256xf32>
    %311 = arith.addf %308, %310 : vector<4x256xf32>
    %cst_322 = arith.constant 0.000000e+00 : f32
    %312 = vector.broadcast %cst_322 : f32 to vector<4x256xf32>
    %313 = arith.maximumf %311, %312 : vector<4x256xf32>
    %c8_323 = arith.constant 8 : index
    %c0_324 = arith.constant 0 : index
    %314 = vector.load %arg52[%c8_323, %c0_324] : memref<20x256xf32, #tpu.memory_space<vmem>>, vector<4x256xf32>
    tpu.vector_store %arg52[%c8_323, %c0_324], %313 {strides = array<i32>} : memref<20x256xf32, #tpu.memory_space<vmem>>, vector<4x256xf32>,
    %c5_325 = arith.constant 5 : index
    %c0_326 = arith.constant 0 : index
    %315 = vector.load %arg52[%c5_325, %c0_326] : memref<20x256xf32, #tpu.memory_space<vmem>>, vector<4x256xf32>
    %c0_327 = arith.constant 0 : index
    %c0_328 = arith.constant 0 : index
    %316 = vector.load %arg54[%c0_327, %c0_328] : memref<16x1792xf32, #tpu.memory_space<vmem>>, vector<4x256xf32>
    tpu.vector_store %arg54[%c0_327, %c0_328], %315 {strides = array<i32>} : memref<16x1792xf32, #tpu.memory_space<vmem>>, vector<4x256xf32>,
    %c6_329 = arith.constant 6 : index
    %c0_330 = arith.constant 0 : index
    %317 = vector.load %arg52[%c6_329, %c0_330] : memref<20x256xf32, #tpu.memory_space<vmem>>, vector<4x256xf32>
    %c0_331 = arith.constant 0 : index
    %c256_332 = arith.constant 256 : index
    %318 = vector.load %arg54[%c0_331, %c256_332] : memref<16x1792xf32, #tpu.memory_space<vmem>>, vector<4x256xf32>
    tpu.vector_store %arg54[%c0_331, %c256_332], %317 {strides = array<i32>} : memref<16x1792xf32, #tpu.memory_space<vmem>>, vector<4x256xf32>,
    %c7_333 = arith.constant 7 : index
    %c0_334 = arith.constant 0 : index
    %319 = vector.load %arg52[%c7_333, %c0_334] : memref<20x256xf32, #tpu.memory_space<vmem>>, vector<4x256xf32>
    %c0_335 = arith.constant 0 : index
    %c512_336 = arith.constant 512 : index
    %320 = vector.load %arg54[%c0_335, %c512_336] : memref<16x1792xf32, #tpu.memory_space<vmem>>, vector<4x256xf32>
    tpu.vector_store %arg54[%c0_335, %c512_336], %319 {strides = array<i32>} : memref<16x1792xf32, #tpu.memory_space<vmem>>, vector<4x256xf32>,
    %c8_337 = arith.constant 8 : index
    %c0_338 = arith.constant 0 : index
    %321 = vector.load %arg52[%c8_337, %c0_338] : memref<20x256xf32, #tpu.memory_space<vmem>>, vector<4x256xf32>
    %c0_339 = arith.constant 0 : index
    %c768_340 = arith.constant 768 : index
    %322 = vector.load %arg54[%c0_339, %c768_340] : memref<16x1792xf32, #tpu.memory_space<vmem>>, vector<4x256xf32>
    tpu.vector_store %arg54[%c0_339, %c768_340], %321 {strides = array<i32>} : memref<16x1792xf32, #tpu.memory_space<vmem>>, vector<4x256xf32>,
    %c9_341 = arith.constant 9 : index
    %c0_342 = arith.constant 0 : index
    %323 = vector.load %arg52[%c9_341, %c0_342] : memref<20x256xf32, #tpu.memory_space<vmem>>, vector<4x256xf32>
    %c0_343 = arith.constant 0 : index
    %c1024 = arith.constant 1024 : index
    %324 = vector.load %arg54[%c0_343, %c1024] : memref<16x1792xf32, #tpu.memory_space<vmem>>, vector<4x256xf32>
    tpu.vector_store %arg54[%c0_343, %c1024], %323 {strides = array<i32>} : memref<16x1792xf32, #tpu.memory_space<vmem>>, vector<4x256xf32>,
    %c10_344 = arith.constant 10 : index
    %c0_345 = arith.constant 0 : index
    %325 = vector.load %arg52[%c10_344, %c0_345] : memref<20x256xf32, #tpu.memory_space<vmem>>, vector<4x256xf32>
    %c0_346 = arith.constant 0 : index
    %c1280 = arith.constant 1280 : index
    %326 = vector.load %arg54[%c0_346, %c1280] : memref<16x1792xf32, #tpu.memory_space<vmem>>, vector<4x256xf32>
    tpu.vector_store %arg54[%c0_346, %c1280], %325 {strides = array<i32>} : memref<16x1792xf32, #tpu.memory_space<vmem>>, vector<4x256xf32>,
    %c11_347 = arith.constant 11 : index
    %c0_348 = arith.constant 0 : index
    %327 = vector.load %arg52[%c11_347, %c0_348] : memref<20x256xf32, #tpu.memory_space<vmem>>, vector<4x256xf32>
    %c0_349 = arith.constant 0 : index
    %c1536 = arith.constant 1536 : index
    %328 = vector.load %arg54[%c0_349, %c1536] : memref<16x1792xf32, #tpu.memory_space<vmem>>, vector<4x256xf32>
    tpu.vector_store %arg54[%c0_349, %c1536], %327 {strides = array<i32>} : memref<16x1792xf32, #tpu.memory_space<vmem>>, vector<4x256xf32>,
    %c0_350 = arith.constant 0 : index
    %c0_351 = arith.constant 0 : index
    %329 = vector.load %arg54[%c0_350, %c0_351] : memref<16x1792xf32, #tpu.memory_space<vmem>>, vector<4x1792xf32>
    %330 = arith.truncf %329 : vector<4x1792xf32> to vector<4x1792xbf16>
    %c0_352 = arith.constant 0 : index
    %c0_353 = arith.constant 0 : index
    %331 = vector.load %arg34[%c0_352, %c0_353] : memref<1792x256xbf16, #tpu.memory_space<vmem>>, vector<1792x256xbf16>
    %cst_354 = arith.constant dense<0.000000e+00> : vector<4x256xf32>
    %332 = tpu.matmul %330, %331, %cst_354 {dimension_numbers = #tpu.dot_dimension_numbers<[1], [0], [0], [1], [0, 0, 1, 1], [], []>} : vector<4x1792xbf16>, vector<1792x256xbf16>, vector<4x256xf32> -> vector<4x256xf32>
    %c0_355 = arith.constant 0 : index
    %c0_356 = arith.constant 0 : index
    %333 = vector.load %arg35[%c0_355, %c0_356] : memref<1x256xf32, #tpu.memory_space<vmem>>, vector<1x256xf32>
    %334 = vector.broadcast %333 : vector<1x256xf32> to vector<4x256xf32>
    %335 = arith.mulf %332, %334 : vector<4x256xf32>
    %c0_357 = arith.constant 0 : index
    %c0_358 = arith.constant 0 : index
    %336 = vector.load %arg36[%c0_357, %c0_358] : memref<1x256xf32, #tpu.memory_space<vmem>>, vector<1x256xf32>
    %337 = vector.broadcast %336 : vector<1x256xf32> to vector<4x256xf32>
    %338 = arith.addf %335, %337 : vector<4x256xf32>
    %cst_359 = arith.constant dense<0.000000e+00> : vector<256xf32>
    %339 = vector.multi_reduction <add>, %338, %cst_359 [0] : vector<4x256xf32> to vector<256xf32>
    %340 = vector.shape_cast %339 : vector<256xf32> to vector<1x256xf32>
    %cst_360 = arith.constant 4.000000e+00 : f32
    %341 = vector.broadcast %cst_360 : f32 to vector<1x256xf32>
    %342 = arith.divf %340, %341 : vector<1x256xf32>
    %cst_361 = arith.constant dense<0xFF800000> : vector<256xf32>
    %343 = vector.multi_reduction <maximumf>, %338, %cst_361 [0] : vector<4x256xf32> to vector<256xf32>
    %344 = vector.shape_cast %343 : vector<256xf32> to vector<1x256xf32>
    %345 = tpu.iota {dimensions = array<i32: 0>} : vector<2x256xi32>
    %c0_i32_362 = arith.constant 0 : i32
    %346 = vector.broadcast %c0_i32_362 : i32 to vector<2x256xi32>
    %347 = arith.cmpi eq, %345, %346 : vector<2x256xi32>
    %348 = vector.shape_cast %342 : vector<1x256xf32> to vector<1x256xf32>
    %349 = vector.broadcast %348 : vector<1x256xf32> to vector<2x256xf32>
    %350 = vector.shape_cast %344 : vector<1x256xf32> to vector<1x256xf32>
    %351 = vector.broadcast %350 : vector<1x256xf32> to vector<2x256xf32>
    %352 = arith.select %347, %349, %351 : vector<2x256xi1>, vector<2x256xf32>
    %353 = arith.truncf %352 : vector<2x256xf32> to vector<2x256xbf16>
    %c0_363 = arith.constant 0 : index
    %c0_364 = arith.constant 0 : index
    %354 = vector.load %arg40[%c0_363, %c0_364] : memref<256x32xbf16, #tpu.memory_space<vmem>>, vector<256x32xbf16>
    %cst_365 = arith.constant dense<0.000000e+00> : vector<2x32xf32>
    %355 = tpu.matmul %353, %354, %cst_365 {dimension_numbers = #tpu.dot_dimension_numbers<[1], [0], [0], [1], [0, 0, 1, 1], [], []>} : vector<2x256xbf16>, vector<256x32xbf16>, vector<2x32xf32> -> vector<2x32xf32>
    %c0_366 = arith.constant 0 : index
    %c0_367 = arith.constant 0 : index
    %356 = vector.load %arg41[%c0_366, %c0_367] : memref<1x32xf32, #tpu.memory_space<vmem>>, vector<1x32xf32>
    %357 = vector.broadcast %356 : vector<1x32xf32> to vector<2x32xf32>
    %358 = arith.addf %355, %357 : vector<2x32xf32>
    %cst_368 = arith.constant 0.000000e+00 : f32
    %359 = vector.broadcast %cst_368 : f32 to vector<2x32xf32>
    %360 = arith.maximumf %358, %359 : vector<2x32xf32>
    %361 = arith.truncf %360 : vector<2x32xf32> to vector<2x32xbf16>
    %c0_369 = arith.constant 0 : index
    %c0_370 = arith.constant 0 : index
    %362 = vector.load %arg42[%c0_369, %c0_370] : memref<32x256xbf16, #tpu.memory_space<vmem>>, vector<32x256xbf16>
    %cst_371 = arith.constant dense<0.000000e+00> : vector<2x256xf32>
    %363 = tpu.matmul %361, %362, %cst_371 {dimension_numbers = #tpu.dot_dimension_numbers<[1], [0], [0], [1], [0, 0, 1, 1], [], []>} : vector<2x32xbf16>, vector<32x256xbf16>, vector<2x256xf32> -> vector<2x256xf32>
    %c0_372 = arith.constant 0 : index
    %c0_373 = arith.constant 0 : index
    %364 = vector.load %arg43[%c0_372, %c0_373] : memref<1x256xf32, #tpu.memory_space<vmem>>, vector<1x256xf32>
    %365 = vector.broadcast %364 : vector<1x256xf32> to vector<2x256xf32>
    %366 = arith.addf %363, %365 : vector<2x256xf32>
    %cst_374 = arith.constant dense<0.000000e+00> : vector<256xf32>
    %367 = vector.multi_reduction <add>, %366, %cst_374 [0] : vector<2x256xf32> to vector<256xf32>
    %368 = vector.shape_cast %367 : vector<256xf32> to vector<1x256xf32>
    %369 = arith.negf %368 : vector<1x256xf32>
    %370 = math.exp %369 : vector<1x256xf32>
    %cst_375 = arith.constant 1.000000e+00 : f32
    %371 = vector.broadcast %cst_375 : f32 to vector<1x256xf32>
    %372 = arith.addf %371, %370 : vector<1x256xf32>
    %373 = arith.divf %371, %372 : vector<1x256xf32>
    %374 = vector.broadcast %373 : vector<1x256xf32> to vector<4x256xf32>
    %375 = arith.mulf %338, %374 : vector<4x256xf32>
    %cst_376 = arith.constant dense<0xFF800000> : vector<4xf32>
    %376 = vector.multi_reduction <maximumf>, %375, %cst_376 [1] : vector<4x256xf32> to vector<4xf32>
    %377 = vector.shape_cast %376 : vector<4xf32> to vector<4x1xf32>
    %378 = arith.negf %377 : vector<4x1xf32>
    %379 = math.exp %378 : vector<4x1xf32>
    %cst_377 = arith.constant 1.000000e+00 : f32
    %380 = vector.broadcast %cst_377 : f32 to vector<4x1xf32>
    %381 = arith.addf %380, %379 : vector<4x1xf32>
    %382 = arith.divf %380, %381 : vector<4x1xf32>
    %383 = vector.broadcast %382 : vector<4x1xf32> to vector<4x256xf32>
    %384 = arith.mulf %375, %383 : vector<4x256xf32>
    %385 = arith.addf %384, %287 : vector<4x256xf32>
    %c0_378 = arith.constant 0 : index
    %c0_379 = arith.constant 0 : index
    %c0_380 = arith.constant 0 : index
    %386 = vector.load %arg44[%c0_378, %c0_379, %c0_380] : memref<1x4x256xf32, #tpu.memory_space<vmem>>, vector<1x4x256xf32>
    %387 = vector.shape_cast %386 : vector<1x4x256xf32> to vector<4x256xf32>
    %388 = vector.shape_cast %385 : vector<4x256xf32> to vector<1x4x256xf32>
    tpu.vector_store %arg44[%c0_378, %c0_379, %c0_380], %388 {strides = array<i32>} : memref<1x4x256xf32, #tpu.memory_space<vmem>>, vector<1x4x256xf32>,
    return
  }
  func.func @transform_0(%arg0: i32) -> (i32, i32, i32) {
    %c0_i32 = arith.constant 0 : i32
    %c0_i32_0 = arith.constant 0 : i32
    %c0_i32_1 = arith.constant 0 : i32
    return %arg0, %c0_i32, %c0_i32_0 : i32, i32, i32
  }
  func.func @transform_1(%arg0: i32) -> (i32, i32) {
    %c0_i32 = arith.constant 0 : i32
    %c0_i32_0 = arith.constant 0 : i32
    %c0_i32_1 = arith.constant 0 : i32
    return %c0_i32, %c0_i32_0 : i32, i32
  }
  func.func @transform_2(%arg0: i32) -> (i32, i32) {
    %c0_i32 = arith.constant 0 : i32
    %c0_i32_0 = arith.constant 0 : i32
    %c0_i32_1 = arith.constant 0 : i32
    return %c0_i32, %c0_i32_0 : i32, i32
  }
  func.func @transform_3(%arg0: i32) -> (i32, i32) {
    %c0_i32 = arith.constant 0 : i32
    %c0_i32_0 = arith.constant 0 : i32
    %c0_i32_1 = arith.constant 0 : i32
    return %c0_i32, %c0_i32_0 : i32, i32
  }
  func.func @transform_4(%arg0: i32) -> (i32, i32) {
    %c0_i32 = arith.constant 0 : i32
    %c0_i32_0 = arith.constant 0 : i32
    %c0_i32_1 = arith.constant 0 : i32
    return %c0_i32, %c0_i32_0 : i32, i32
  }
  func.func @transform_5(%arg0: i32) -> (i32, i32) {
    %c0_i32 = arith.constant 0 : i32
    %c0_i32_0 = arith.constant 0 : i32
    %c0_i32_1 = arith.constant 0 : i32
    return %c0_i32, %c0_i32_0 : i32, i32
  }
  func.func @transform_6(%arg0: i32) -> (i32, i32) {
    %c0_i32 = arith.constant 0 : i32
    %c0_i32_0 = arith.constant 0 : i32
    %c0_i32_1 = arith.constant 0 : i32
    return %c0_i32, %c0_i32_0 : i32, i32
  }
  func.func @transform_7(%arg0: i32) -> (i32, i32) {
    %c0_i32 = arith.constant 0 : i32
    %c0_i32_0 = arith.constant 0 : i32
    %c0_i32_1 = arith.constant 0 : i32
    return %c0_i32, %c0_i32_0 : i32, i32
  }
  func.func @transform_8(%arg0: i32) -> (i32, i32) {
    %c0_i32 = arith.constant 0 : i32
    %c0_i32_0 = arith.constant 0 : i32
    %c0_i32_1 = arith.constant 0 : i32
    return %c0_i32, %c0_i32_0 : i32, i32
  }
  func.func @transform_9(%arg0: i32) -> (i32, i32) {
    %c0_i32 = arith.constant 0 : i32
    %c0_i32_0 = arith.constant 0 : i32
    %c0_i32_1 = arith.constant 0 : i32
    return %c0_i32, %c0_i32_0 : i32, i32
  }
  func.func @transform_10(%arg0: i32) -> (i32, i32) {
    %c0_i32 = arith.constant 0 : i32
    %c0_i32_0 = arith.constant 0 : i32
    %c0_i32_1 = arith.constant 0 : i32
    return %c0_i32, %c0_i32_0 : i32, i32
  }
  func.func @transform_11(%arg0: i32) -> (i32, i32) {
    %c0_i32 = arith.constant 0 : i32
    %c0_i32_0 = arith.constant 0 : i32
    %c0_i32_1 = arith.constant 0 : i32
    return %c0_i32, %c0_i32_0 : i32, i32
  }
  func.func @transform_12(%arg0: i32) -> (i32, i32) {
    %c0_i32 = arith.constant 0 : i32
    %c0_i32_0 = arith.constant 0 : i32
    %c0_i32_1 = arith.constant 0 : i32
    return %c0_i32, %c0_i32_0 : i32, i32
  }
  func.func @transform_13(%arg0: i32) -> (i32, i32) {
    %c0_i32 = arith.constant 0 : i32
    %c0_i32_0 = arith.constant 0 : i32
    %c0_i32_1 = arith.constant 0 : i32
    return %c0_i32, %c0_i32_0 : i32, i32
  }
  func.func @transform_14(%arg0: i32) -> (i32, i32) {
    %c0_i32 = arith.constant 0 : i32
    %c0_i32_0 = arith.constant 0 : i32
    %c0_i32_1 = arith.constant 0 : i32
    return %c0_i32, %c0_i32_0 : i32, i32
  }
  func.func @transform_15(%arg0: i32) -> (i32, i32) {
    %c0_i32 = arith.constant 0 : i32
    %c0_i32_0 = arith.constant 0 : i32
    %c0_i32_1 = arith.constant 0 : i32
    return %c0_i32, %c0_i32_0 : i32, i32
  }
  func.func @transform_16(%arg0: i32) -> (i32, i32) {
    %c0_i32 = arith.constant 0 : i32
    %c0_i32_0 = arith.constant 0 : i32
    %c0_i32_1 = arith.constant 0 : i32
    return %c0_i32, %c0_i32_0 : i32, i32
  }
  func.func @transform_17(%arg0: i32) -> (i32, i32) {
    %c0_i32 = arith.constant 0 : i32
    %c0_i32_0 = arith.constant 0 : i32
    %c0_i32_1 = arith.constant 0 : i32
    return %c0_i32, %c0_i32_0 : i32, i32
  }
  func.func @transform_18(%arg0: i32) -> (i32, i32) {
    %c0_i32 = arith.constant 0 : i32
    %c0_i32_0 = arith.constant 0 : i32
    %c0_i32_1 = arith.constant 0 : i32
    return %c0_i32, %c0_i32_0 : i32, i32
  }
  func.func @transform_19(%arg0: i32) -> (i32, i32) {
    %c0_i32 = arith.constant 0 : i32
    %c0_i32_0 = arith.constant 0 : i32
    %c0_i32_1 = arith.constant 0 : i32
    return %c0_i32, %c0_i32_0 : i32, i32
  }
  func.func @transform_20(%arg0: i32) -> (i32, i32) {
    %c0_i32 = arith.constant 0 : i32
    %c0_i32_0 = arith.constant 0 : i32
    %c0_i32_1 = arith.constant 0 : i32
    return %c0_i32, %c0_i32_0 : i32, i32
  }
  func.func @transform_21(%arg0: i32) -> (i32, i32) {
    %c0_i32 = arith.constant 0 : i32
    %c0_i32_0 = arith.constant 0 : i32
    %c0_i32_1 = arith.constant 0 : i32
    return %c0_i32, %c0_i32_0 : i32, i32
  }
  func.func @transform_22(%arg0: i32) -> (i32, i32) {
    %c0_i32 = arith.constant 0 : i32
    %c0_i32_0 = arith.constant 0 : i32
    %c0_i32_1 = arith.constant 0 : i32
    return %c0_i32, %c0_i32_0 : i32, i32
  }
  func.func @transform_23(%arg0: i32) -> (i32, i32) {
    %c0_i32 = arith.constant 0 : i32
    %c0_i32_0 = arith.constant 0 : i32
    %c0_i32_1 = arith.constant 0 : i32
    return %c0_i32, %c0_i32_0 : i32, i32
  }
  func.func @transform_24(%arg0: i32) -> (i32, i32) {
    %c0_i32 = arith.constant 0 : i32
    %c0_i32_0 = arith.constant 0 : i32
    %c0_i32_1 = arith.constant 0 : i32
    return %c0_i32, %c0_i32_0 : i32, i32
  }
  func.func @transform_25(%arg0: i32) -> (i32, i32) {
    %c0_i32 = arith.constant 0 : i32
    %c0_i32_0 = arith.constant 0 : i32
    %c0_i32_1 = arith.constant 0 : i32
    return %c0_i32, %c0_i32_0 : i32, i32
  }
  func.func @transform_26(%arg0: i32) -> (i32, i32) {
    %c0_i32 = arith.constant 0 : i32
    %c0_i32_0 = arith.constant 0 : i32
    %c0_i32_1 = arith.constant 0 : i32
    return %c0_i32, %c0_i32_0 : i32, i32
  }
  func.func @transform_27(%arg0: i32) -> (i32, i32) {
    %c0_i32 = arith.constant 0 : i32
    %c0_i32_0 = arith.constant 0 : i32
    %c0_i32_1 = arith.constant 0 : i32
    return %c0_i32, %c0_i32_0 : i32, i32
  }
  func.func @transform_28(%arg0: i32) -> (i32, i32) {
    %c0_i32 = arith.constant 0 : i32
    %c0_i32_0 = arith.constant 0 : i32
    %c0_i32_1 = arith.constant 0 : i32
    return %c0_i32, %c0_i32_0 : i32, i32
  }
  func.func @transform_29(%arg0: i32) -> (i32, i32) {
    %c0_i32 = arith.constant 0 : i32
    %c0_i32_0 = arith.constant 0 : i32
    %c0_i32_1 = arith.constant 0 : i32
    return %c0_i32, %c0_i32_0 : i32, i32
  }
  func.func @transform_30(%arg0: i32) -> (i32, i32) {
    %c0_i32 = arith.constant 0 : i32
    %c0_i32_0 = arith.constant 0 : i32
    %c0_i32_1 = arith.constant 0 : i32
    return %c0_i32, %c0_i32_0 : i32, i32
  }
  func.func @transform_31(%arg0: i32) -> (i32, i32) {
    %c0_i32 = arith.constant 0 : i32
    %c0_i32_0 = arith.constant 0 : i32
    %c0_i32_1 = arith.constant 0 : i32
    return %c0_i32, %c0_i32_0 : i32, i32
  }
  func.func @transform_32(%arg0: i32) -> (i32, i32) {
    %c0_i32 = arith.constant 0 : i32
    %c0_i32_0 = arith.constant 0 : i32
    %c0_i32_1 = arith.constant 0 : i32
    return %c0_i32, %c0_i32_0 : i32, i32
  }
  func.func @transform_33(%arg0: i32) -> (i32, i32) {
    %c0_i32 = arith.constant 0 : i32
    %c0_i32_0 = arith.constant 0 : i32
    %c0_i32_1 = arith.constant 0 : i32
    return %c0_i32, %c0_i32_0 : i32, i32
  }
  func.func @transform_34(%arg0: i32) -> (i32, i32) {
    %c0_i32 = arith.constant 0 : i32
    %c0_i32_0 = arith.constant 0 : i32
    %c0_i32_1 = arith.constant 0 : i32
    return %c0_i32, %c0_i32_0 : i32, i32
  }
  func.func @transform_35(%arg0: i32) -> (i32, i32) {
    %c0_i32 = arith.constant 0 : i32
    %c0_i32_0 = arith.constant 0 : i32
    %c0_i32_1 = arith.constant 0 : i32
    return %c0_i32, %c0_i32_0 : i32, i32
  }
  func.func @transform_36(%arg0: i32) -> (i32, i32) {
    %c0_i32 = arith.constant 0 : i32
    %c0_i32_0 = arith.constant 0 : i32
    %c0_i32_1 = arith.constant 0 : i32
    return %c0_i32, %c0_i32_0 : i32, i32
  }
  func.func @transform_37(%arg0: i32) -> (i32, i32) {
    %c0_i32 = arith.constant 0 : i32
    %c0_i32_0 = arith.constant 0 : i32
    %c0_i32_1 = arith.constant 0 : i32
    return %c0_i32, %c0_i32_0 : i32, i32
  }
  func.func @transform_38(%arg0: i32) -> (i32, i32) {
    %c0_i32 = arith.constant 0 : i32
    %c0_i32_0 = arith.constant 0 : i32
    %c0_i32_1 = arith.constant 0 : i32
    return %c0_i32, %c0_i32_0 : i32, i32
  }
  func.func @transform_39(%arg0: i32) -> (i32, i32) {
    %c0_i32 = arith.constant 0 : i32
    %c0_i32_0 = arith.constant 0 : i32
    %c0_i32_1 = arith.constant 0 : i32
    return %c0_i32, %c0_i32_0 : i32, i32
  }
  func.func @transform_40(%arg0: i32) -> (i32, i32) {
    %c0_i32 = arith.constant 0 : i32
    %c0_i32_0 = arith.constant 0 : i32
    %c0_i32_1 = arith.constant 0 : i32
    return %c0_i32, %c0_i32_0 : i32, i32
  }
  func.func @transform_41(%arg0: i32) -> (i32, i32) {
    %c0_i32 = arith.constant 0 : i32
    %c0_i32_0 = arith.constant 0 : i32
    %c0_i32_1 = arith.constant 0 : i32
    return %c0_i32, %c0_i32_0 : i32, i32
  }
  func.func @transform_42(%arg0: i32) -> (i32, i32) {
    %c0_i32 = arith.constant 0 : i32
    %c0_i32_0 = arith.constant 0 : i32
    %c0_i32_1 = arith.constant 0 : i32
    return %c0_i32, %c0_i32_0 : i32, i32
  }
  func.func @transform_43(%arg0: i32) -> (i32, i32, i32) {
    %c0_i32 = arith.constant 0 : i32
    %c0_i32_0 = arith.constant 0 : i32
    %c0_i32_1 = arith.constant 0 : i32
    return %arg0, %c0_i32, %c0_i32_0 : i32, i32, i32
  }
}

</mosaic_0001>

<llo_original>
// kernel: backbone_forward.1
$region0: #{backbone_forward.1}
  #allocation0 [shape = 'u32[]', space=smem, size = 0x4, offset = 0x4, fixed_abs, tag = 'smem constant byte address 0x4 - core index']
  #allocation1 [shape = 'u32[144,128]{1,0:T(1,128)}', space=vmem, size = 0x12000, scoped, tag = 'internal scratch']
  #allocation2 [shape = 'f32[80,8]{1,0:T(8,128)}', space=vmem, size = 0xa000, scoped, tag = 'scratch operand']
  #allocation3 [shape = 'f32[72,64]{1,0:T(8,128)}', space=vmem, size = 0x9000, scoped, tag = 'scratch operand']
  #allocation4 [shape = 'f32[48,64]{1,0:T(8,128)}', space=vmem, size = 0x6000, scoped, tag = 'scratch operand']
  #allocation5 [shape = 'f32[32,64]{1,0:T(8,128)}', space=vmem, size = 0x4000, scoped, tag = 'scratch operand']
  #allocation6 [shape = 'f32[32,64]{1,0:T(8,128)}', space=vmem, size = 0x4000, scoped, tag = 'scratch operand']
  #allocation7 [shape = 'f32[24,128]{1,0:T(8,128)}', space=vmem, size = 0x3000, scoped, tag = 'scratch operand']
  #allocation8 [shape = 'f32[24,128]{1,0:T(8,128)}', space=vmem, size = 0x3000, scoped, tag = 'scratch operand']
  #allocation9 [shape = 'f32[20,256]{1,0:T(8,128)}', space=vmem, size = 0x6000, scoped, tag = 'scratch operand']
  #allocation10 [shape = 'f32[64,32]{1,0:T(8,128)}', space=vmem, size = 0x8000, scoped, tag = 'scratch operand']
  #allocation11 [shape = 'f32[16,1792]{1,0:T(8,128)}', space=vmem, size = 0x1c000, scoped, tag = 'scratch operand']
  %s0 = inlined_call_operand.smem [shape: u32[44], index: -1, kind: input, shape index: {}]
  %s1 = sld [smem:[%s0]]
  %s2 = scalar_lea.smem %s0, 1
  %s3 = sld [smem:[%s2]]
  %s4 = scalar_lea.smem %s0, 2
  %s5 = sld [smem:[%s4]]
  %s6 = scalar_lea.smem %s0, 3
  %s7 = sld [smem:[%s6]]
  %s8 = scalar_lea.smem %s0, 4
  %s9 = sld [smem:[%s8]]
  %s10 = scalar_lea.smem %s0, 5
  %s11 = sld [smem:[%s10]]
  %s12 = scalar_lea.smem %s0, 6
  %s13 = sld [smem:[%s12]]
  %s14 = scalar_lea.smem %s0, 7
  %s15 = sld [smem:[%s14]]
  %s16 = scalar_lea.smem %s0, 8
  %s17 = sld [smem:[%s16]]
  %s18 = scalar_lea.smem %s0, 9
  %s19 = sld [smem:[%s18]]
  %s20 = scalar_lea.smem %s0, 10
  %s21 = sld [smem:[%s20]]
  %s22 = scalar_lea.smem %s0, 11
  %s23 = sld [smem:[%s22]]
  %s24 = scalar_lea.smem %s0, 12
  %s25 = sld [smem:[%s24]]
  %s26 = scalar_lea.smem %s0, 13
  %s27 = sld [smem:[%s26]]
  %s28 = scalar_lea.smem %s0, 14
  %s29 = sld [smem:[%s28]]
  %s30 = scalar_lea.smem %s0, 15
  %s31 = sld [smem:[%s30]]
  %s32 = scalar_lea.smem %s0, 16
  %s33 = sld [smem:[%s32]]
  %s34 = scalar_lea.smem %s0, 17
  %s35 = sld [smem:[%s34]]
  %s36 = scalar_lea.smem %s0, 18
  %s37 = sld [smem:[%s36]]
  %s38 = scalar_lea.smem %s0, 19
  %s39 = sld [smem:[%s38]]
  %s40 = scalar_lea.smem %s0, 20
  %s41 = sld [smem:[%s40]]
  %s42 = scalar_lea.smem %s0, 21
  %s43 = sld [smem:[%s42]]
  %s44 = scalar_lea.smem %s0, 22
  %s45 = sld [smem:[%s44]]
  %s46 = scalar_lea.smem %s0, 23
  %s47 = sld [smem:[%s46]]
  %s48 = scalar_lea.smem %s0, 24
  %s49 = sld [smem:[%s48]]
  %s50 = scalar_lea.smem %s0, 25
  %s51 = sld [smem:[%s50]]
  %s52 = scalar_lea.smem %s0, 26
  %s53 = sld [smem:[%s52]]
  %s54 = scalar_lea.smem %s0, 27
  %s55 = sld [smem:[%s54]]
  %s56 = scalar_lea.smem %s0, 28
  %s57 = sld [smem:[%s56]]
  %s58 = scalar_lea.smem %s0, 29
  %s59 = sld [smem:[%s58]]
  %s60 = scalar_lea.smem %s0, 30
  %s61 = sld [smem:[%s60]]
  %s62 = scalar_lea.smem %s0, 31
  %s63 = sld [smem:[%s62]]
  %s64 = scalar_lea.smem %s0, 32
  %s65 = sld [smem:[%s64]]
  %s66 = scalar_lea.smem %s0, 33
  %s67 = sld [smem:[%s66]]
  %s68 = scalar_lea.smem %s0, 34
  %s69 = sld [smem:[%s68]]
  %s70 = scalar_lea.smem %s0, 35
  %s71 = sld [smem:[%s70]]
  %s72 = scalar_lea.smem %s0, 36
  %s73 = sld [smem:[%s72]]
  %s74 = scalar_lea.smem %s0, 37
  %s75 = sld [smem:[%s74]]
  %s76 = scalar_lea.smem %s0, 38
  %s77 = sld [smem:[%s76]]
  %s78 = scalar_lea.smem %s0, 39
  %s79 = sld [smem:[%s78]]
  %s80 = scalar_lea.smem %s0, 40
  %s81 = sld [smem:[%s80]]
  %s82 = scalar_lea.smem %s0, 41
  %s83 = sld [smem:[%s82]]
  %s84 = scalar_lea.smem %s0, 42
  %s85 = sld [smem:[%s84]]
  %s86 = scalar_lea.smem %s0, 43
  %s87 = sld [smem:[%s86]]
  %s88 = sld [smem:[#allocation0]]
  $region337: #{backbone_forward.1} parent=0
    _
  %s90 = ssub.s32 1, %s88
  %s91 = scalar_select 0, %s90, %s88
  $region1: #{backbone_forward.1} parent=0
    #allocation12 [shape = 'u8[512]{0}', space=vmem, size = 0x400, scoped, tag = 'input window, operand 2, single buffered']
    #allocation13 [shape = 's32[2]{0}', space=sflag, size = 0x8, scoped, tag = 'scoped memory for backbone_forward.1']
    #allocation14 [shape = 's32[2]{0}', space=sflag, size = 0x8, scoped, tag = 'scoped memory for backbone_forward.1']
    #allocation15 [shape = 'u8[512]{0}', space=vmem, size = 0x400, scoped, tag = 'input window, operand 3, single buffered']
    #allocation16 [shape = 's32[1]{0}', space=sflag, size = 0x4, scoped, tag = 'scoped memory for backbone_forward.1']
    #allocation17 [shape = 'u8[512]{0}', space=vmem, size = 0x400, scoped, tag = 'input window, operand 5, single buffered']
    #allocation18 [shape = 'u8[512]{0}', space=vmem, size = 0x400, scoped, tag = 'input window, operand 6, single buffered']
    #allocation19 [shape = 's32[1]{0}', space=sflag, size = 0x4, scoped, tag = 'scoped memory for backbone_forward.1']
    #allocation20 [shape = 'u8[512]{0}', space=vmem, size = 0x400, scoped, tag = 'input window, operand 8, single buffered']
    #allocation21 [shape = 'u8[512]{0}', space=vmem, size = 0x400, scoped, tag = 'input window, operand 9, single buffered']
    #allocation22 [shape = 's32[1]{0}', space=sflag, size = 0x4, scoped, tag = 'scoped memory for backbone_forward.1']
    #allocation23 [shape = 'u8[16384]{0}', space=vmem, size = 0x4000, scoped, tag = 'input window, operand 10, single buffered']
    #allocation24 [shape = 'u8[512]{0}', space=vmem, size = 0x400, scoped, tag = 'input window, operand 11, single buffered']
    #allocation25 [shape = 's32[1]{0}', space=sflag, size = 0x4, scoped, tag = 'scoped memory for backbone_forward.1']
    #allocation26 [shape = 'u8[512]{0}', space=vmem, size = 0x400, scoped, tag = 'input window, operand 12, single buffered']
    #allocation27 [shape = 'u8[512]{0}', space=vmem, size = 0x400, scoped, tag = 'input window, operand 14, single buffered']
    #allocation28 [shape = 's32[1]{0}', space=sflag, size = 0x4, scoped, tag = 'scoped memory for backbone_forward.1']
    #allocation29 [shape = 'u8[2048]{0}', space=vmem, size = 0x800, scoped, tag = 'input window, operand 15, single buffered']
    #allocation30 [shape = 'u8[512]{0}', space=vmem, size = 0x400, scoped, tag = 'input window, operand 16, single buffered']
    #allocation31 [shape = 's32[1]{0}', space=sflag, size = 0x4, scoped, tag = 'scoped memory for backbone_forward.1']
    #allocation32 [shape = 'u8[512]{0}', space=vmem, size = 0x400, scoped, tag = 'input window, operand 18, single buffered']
    #allocation33 [shape = 'u8[512]{0}', space=vmem, size = 0x400, scoped, tag = 'input window, operand 19, single buffered']
    #allocation34 [shape = 's32[1]{0}', space=sflag, size = 0x4, scoped, tag = 'scoped memory for backbone_forward.1']
    #allocation35 [shape = 'u8[512]{0}', space=vmem, size = 0x400, scoped, tag = 'input window, operand 21, single buffered']
    #allocation36 [shape = 'u8[512]{0}', space=vmem, size = 0x400, scoped, tag = 'input window, operand 22, single buffered']
    #allocation37 [shape = 's32[1]{0}', space=sflag, size = 0x4, scoped, tag = 'scoped memory for backbone_forward.1']
    #allocation38 [shape = 'u8[16384]{0}', space=vmem, size = 0x4000, scoped, tag = 'input window, operand 23, single buffered']
    #allocation39 [shape = 'u8[512]{0}', space=vmem, size = 0x400, scoped, tag = 'input window, operand 24, single buffered']
    #allocation40 [shape = 's32[1]{0}', space=sflag, size = 0x4, scoped, tag = 'scoped memory for backbone_forward.1']
    #allocation41 [shape = 'u8[512]{0}', space=vmem, size = 0x400, scoped, tag = 'input window, operand 25, single buffered']
    #allocation42 [shape = 'u8[512]{0}', space=vmem, size = 0x400, scoped, tag = 'input window, operand 27, single buffered']
    #allocation43 [shape = 's32[1]{0}', space=sflag, size = 0x4, scoped, tag = 'scoped memory for backbone_forward.1']
    #allocation44 [shape = 'u8[4096]{0}', space=vmem, size = 0x1000, scoped, tag = 'input window, operand 28, single buffered']
    #allocation45 [shape = 'u8[512]{0}', space=vmem, size = 0x400, scoped, tag = 'input window, operand 29, single buffered']
    #allocation46 [shape = 's32[1]{0}', space=sflag, size = 0x4, scoped, tag = 'scoped memory for backbone_forward.1']
    #allocation47 [shape = 'u8[1024]{0}', space=vmem, size = 0x400, scoped, tag = 'input window, operand 31, single buffered']
    #allocation48 [shape = 'u8[1024]{0}', space=vmem, size = 0x400, scoped, tag = 'input window, operand 32, single buffered']
    #allocation49 [shape = 's32[1]{0}', space=sflag, size = 0x4, scoped, tag = 'scoped memory for backbone_forward.1']
    #allocation50 [shape = 'u8[917504]{0}', space=vmem, size = 0xe0000, scoped, tag = 'input window, operand 33, single buffered']
    #allocation51 [shape = 'u8[1024]{0}', space=vmem, size = 0x400, scoped, tag = 'input window, operand 34, single buffered']
    #allocation52 [shape = 's32[1]{0}', space=sflag, size = 0x4, scoped, tag = 'scoped memory for backbone_forward.1']
    #allocation53 [shape = 'u8[1024]{0}', space=vmem, size = 0x400, scoped, tag = 'input window, operand 35, single buffered']
    #allocation54 [shape = 'u8[65536]{0}', space=vmem, size = 0x10000, scoped, tag = 'input window, operand 36, single buffered']
    #allocation55 [shape = 's32[1]{0}', space=sflag, size = 0x4, scoped, tag = 'scoped memory for backbone_forward.1']
    #allocation56 [shape = 'u8[1024]{0}', space=vmem, size = 0x400, scoped, tag = 'input window, operand 37, single buffered']
    #allocation57 [shape = 'u8[1024]{0}', space=vmem, size = 0x400, scoped, tag = 'input window, operand 38, single buffered']
    #allocation58 [shape = 's32[1]{0}', space=sflag, size = 0x4, scoped, tag = 'scoped memory for backbone_forward.1']
    #allocation59 [shape = 'u8[512]{0}', space=vmem, size = 0x400, scoped, tag = 'input window, operand 40, single buffered']
    #allocation60 [shape = 'u8[16384]{0}', space=vmem, size = 0x4000, scoped, tag = 'input window, operand 41, single buffered']
    #allocation61 [shape = 's32[1]{0}', space=sflag, size = 0x4, scoped, tag = 'scoped memory for backbone_forward.1']
    #allocation62 [shape = 'u8[1024]{0}', space=vmem, size = 0x400, scoped, tag = 'input window, operand 42, single buffered']
    #allocation63 [shape = 'u8[8192]{0}', space=vmem, size = 0x2000, scoped, tag = 'output window, operand 0']
    %92 = vsyncpa [#allocation13], 0
    %93 = vsyncpa [#allocation16], 0
    %94 = vsyncpa [#allocation19], 0
    %95 = vsyncpa [#allocation22], 0
    %96 = vsyncpa [#allocation25], 0
    %97 = vsyncpa [#allocation28], 0
    %98 = vsyncpa [#allocation31], 0
    %99 = vsyncpa [#allocation34], 0
    %100 = vsyncpa [#allocation37], 0
    %101 = vsyncpa [#allocation40], 0
    %102 = vsyncpa [#allocation43], 0
    %103 = vsyncpa [#allocation46], 0
    %104 = vsyncpa [#allocation49], 0
    %105 = vsyncpa [#allocation52], 0
    %106 = vsyncpa [#allocation55], 0
    %107 = vsyncpa [#allocation58], 0
    %108 = vsyncpa [#allocation61], 0
    %109 = vsyncpa [#allocation14], 0
    %s110 = scalar_lea.sflag [#allocation14], 1
    %111 = vsyncpa %s110, 0
    loop: start=0, step=1, limit=4
    $region2: #{backbone_forward.1} parent=1 // loop_pre_header
      _
    $region3: #{backbone_forward.1} parent=1 // loop_header
      %s113 = sphi 0, %s117
      %p114 = scmp.ge.s32.totalorder %s113, 4
      %s123 = sphi 0, %s125
      %s126 = sphi 0, %s123
      %s127 = sphi 0, %s126
      %s143 = sphi 0, %s127
      %s147 = sphi 0, %s147
      %s149 = sphi 0, %s147
      %s150 = sphi 0, %s149
      %s164 = sphi 0, %s150
      %s168 = sphi 0, %s168
      %s170 = sphi 0, %s168
      %s171 = sphi 0, %s170
      %s185 = sphi 0, %s171
      %s189 = sphi 0, %s189
      %s191 = sphi 0, %s189
      %s192 = sphi 0, %s191
      %s206 = sphi 0, %s192
      %s210 = sphi 0, %s210
      %s212 = sphi 0, %s210
      %s213 = sphi 0, %s212
      %s227 = sphi 0, %s213
      %s231 = sphi 0, %s231
      %s233 = sphi 0, %s231
      %s234 = sphi 0, %s233
      %s248 = sphi 0, %s234
      %s252 = sphi 0, %s252
      %s254 = sphi 0, %s252
      %s255 = sphi 0, %s254
      %s269 = sphi 0, %s255
      %s273 = sphi 0, %s273
      %s275 = sphi 0, %s273
      %s276 = sphi 0, %s275
      %s290 = sphi 0, %s276
      %s294 = sphi 0, %s294
      %s296 = sphi 0, %s294
      %s297 = sphi 0, %s296
      %s311 = sphi 0, %s297
      %s315 = sphi 0, %s315
      %s317 = sphi 0, %s315
      %s318 = sphi 0, %s317
      %s332 = sphi 0, %s318
      %s336 = sphi 0, %s336
      %s338 = sphi 0, %s336
      %s339 = sphi 0, %s338
      %s353 = sphi 0, %s339
      %s357 = sphi 0, %s357
      %s359 = sphi 0, %s357
      %s360 = sphi 0, %s359
      %s374 = sphi 0, %s360
      %s378 = sphi 0, %s378
      %s380 = sphi 0, %s378
      %s381 = sphi 0, %s380
      %s395 = sphi 0, %s381
      %s399 = sphi 0, %s399
      %s401 = sphi 0, %s399
      %s402 = sphi 0, %s401
      %s416 = sphi 0, %s402
      %s420 = sphi 0, %s420
      %s422 = sphi 0, %s420
      %s423 = sphi 0, %s422
      %s437 = sphi 0, %s423
      %s441 = sphi 0, %s441
      %s443 = sphi 0, %s441
      %s444 = sphi 0, %s443
      %s458 = sphi 0, %s444
      %s462 = sphi 0, %s462
      %s464 = sphi 0, %s462
      %s465 = sphi 0, %s464
      %s479 = sphi 0, %s465
      %s483 = sphi 0, %s483
      %s485 = sphi 0, %s483
      %s486 = sphi 0, %s485
      %s500 = sphi 0, %s486
      %s504 = sphi 0, %s504
      %s506 = sphi 0, %s504
      %s507 = sphi 0, %s506
      %s521 = sphi 0, %s507
      %s525 = sphi 0, %s525
      %s527 = sphi 0, %s525
      %s528 = sphi 0, %s527
      %s542 = sphi 0, %s528
      %s546 = sphi 0, %s546
      %s548 = sphi 0, %s546
      %s549 = sphi 0, %s548
      %s563 = sphi 0, %s549
      %s567 = sphi 0, %s567
      %s569 = sphi 0, %s567
      %s570 = sphi 0, %s569
      %s584 = sphi 0, %s570
      %s588 = sphi 0, %s588
      %s590 = sphi 0, %s588
      %s591 = sphi 0, %s590
      %s605 = sphi 0, %s591
      %s609 = sphi 0, %s609
      %s611 = sphi 0, %s609
      %s612 = sphi 0, %s611
      %s626 = sphi 0, %s612
      %s630 = sphi 0, %s630
      %s632 = sphi 0, %s630
      %s633 = sphi 0, %s632
      %s647 = sphi 0, %s633
      %s651 = sphi 0, %s651
      %s653 = sphi 0, %s651
      %s654 = sphi 0, %s653
      %s668 = sphi 0, %s654
      %s672 = sphi 0, %s672
      %s674 = sphi 0, %s672
      %s675 = sphi 0, %s674
      %s689 = sphi 0, %s675
      %s693 = sphi 0, %s693
      %s695 = sphi 0, %s693
      %s696 = sphi 0, %s695
      %s710 = sphi 0, %s696
      %s714 = sphi 0, %s714
      %s716 = sphi 0, %s714
      %s717 = sphi 0, %s716
      %s731 = sphi 0, %s717
      %s735 = sphi 0, %s735
      %s737 = sphi 0, %s735
      %s738 = sphi 0, %s737
      %s752 = sphi 0, %s738
      %s756 = sphi 0, %s756
      %s758 = sphi 0, %s756
      %s759 = sphi 0, %s758
      %s773 = sphi 0, %s759
      %s777 = sphi 0, %s777
      %s779 = sphi 0, %s777
      %s780 = sphi 0, %s779
      %s794 = sphi 0, %s780
      %s798 = sphi 0, %s798
      %s800 = sphi 0, %s798
      %s801 = sphi 0, %s800
      %s815 = sphi 0, %s801
      %s819 = sphi 0, %s819
      %s821 = sphi 0, %s819
      %s822 = sphi 0, %s821
      %s836 = sphi 0, %s822
      %s840 = sphi 0, %s840
      %s842 = sphi 0, %s840
      %s843 = sphi 0, %s842
      %s857 = sphi 0, %s843
      %s861 = sphi 0, %s861
      %s863 = sphi 0, %s861
      %s864 = sphi 0, %s863
      %s878 = sphi 0, %s864
      %s882 = sphi 0, %s882
      %s884 = sphi 0, %s882
      %s885 = sphi 0, %s884
      %s899 = sphi 0, %s885
      %s903 = sphi 0, %s903
      %s905 = sphi 0, %s903
      %s906 = sphi 0, %s905
      %s920 = sphi 0, %s906
      %s924 = sphi 0, %s924
      %s926 = sphi 0, %s924
      %s927 = sphi 0, %s926
      %s941 = sphi 0, %s927
      %s945 = sphi 0, %s945
      %s947 = sphi 0, %s945
      %s948 = sphi 0, %s947
      %s962 = sphi 0, %s948
      %s966 = sphi 0, %s966
      %s968 = sphi 0, %s966
      %s969 = sphi 0, %s968
      %s983 = sphi 0, %s969
      %s987 = sphi 0, %s987
      %s989 = sphi 0, %s987
      %s990 = sphi 0, %s989
      %s1004 = sphi 0, %s990
      %s1008 = sphi 0, %s1008
      %s1010 = sphi 0, %s1008
      %s1011 = sphi 0, %s1010
      %s1025 = sphi 0, %s1011
      %s1031 = sphi 0, %s1033
      %s1034 = sphi 0, %s1031
      %s1035 = sphi 0, %s1034
      %s1051 = sphi 0, %s1035
    $region4: #{backbone_forward.1} parent=1 // loop_header_branch
      %116 = sbr.rel (%p114) target = $region8
    $region5: #{backbone_forward.1} parent=1 // loop_body
      %s118 = ssub.s32 %s113, 1
      %s119 = ssub.s32 %s113, 2
      %s120 = sadd.s32 %s113, 1
      %s121 = ssub.s32 %s113, %s120
      %p122 = scmp.eq.s32.totalorder %s121, 0
      %s124 = sadd.s32 %s123, 1
      %s125 = scalar_select %p122, %s123, %s124
      %p128 = pneg %p122
      %p129 = scmp.eq.s32.totalorder %s113, 1
      %p130 = por %p128, %p129
      %p131 = scmp.ne.s32.totalorder %s123, %s126
      %p132 = scmp.eq.s32.totalorder %s113, 0
      %p133 = por %p131, %p132
      %p134 = scmp.ne.s32.totalorder %s123, %s126
      %p135 = scmp.eq.s32.totalorder %s118, 1
      %p136 = por %p134, %p135
      %p137 = scmp.ne.s32.totalorder %s126, %s127
      %p138 = scmp.eq.s32.totalorder %s118, 0
      %p139 = por %p137, %p138
      %p140 = scmp.ne.s32.totalorder %s126, %s127
      %p141 = scmp.eq.s32.totalorder %s119, 1
      %p142 = por %p140, %p141
      %p144 = scmp.ne.s32.totalorder %s127, %s143
      %p145 = scmp.eq.s32.totalorder %s119, 0
      %p146 = por %p144, %p145
      %s148 = sadd.s32 %s147, 1
      %p151 = scmp.eq.s32.totalorder %s113, 1
      %p152 = scmp.ne.s32.totalorder %s147, %s149
      %p153 = scmp.eq.s32.totalorder %s113, 0
      %p154 = por %p152, %p153
      %p155 = scmp.ne.s32.totalorder %s147, %s149
      %p156 = scmp.eq.s32.totalorder %s118, 1
      %p157 = por %p155, %p156
      %p158 = scmp.ne.s32.totalorder %s149, %s150
      %p159 = scmp.eq.s32.totalorder %s118, 0
      %p160 = por %p158, %p159
      %p161 = scmp.ne.s32.totalorder %s149, %s150
      %p162 = scmp.eq.s32.totalorder %s119, 1
      %p163 = por %p161, %p162
      %p165 = scmp.ne.s32.totalorder %s150, %s164
      %p166 = scmp.eq.s32.totalorder %s119, 0
      %p167 = por %p165, %p166
      %s169 = sadd.s32 %s168, 1
      %p172 = scmp.eq.s32.totalorder %s113, 1
      %p173 = scmp.ne.s32.totalorder %s168, %s170
      %p174 = scmp.eq.s32.totalorder %s113, 0
      %p175 = por %p173, %p174
      %p176 = scmp.ne.s32.totalorder %s168, %s170
      %p177 = scmp.eq.s32.totalorder %s118, 1
      %p178 = por %p176, %p177
      %p179 = scmp.ne.s32.totalorder %s170, %s171
      %p180 = scmp.eq.s32.totalorder %s118, 0
      %p181 = por %p179, %p180
      %p182 = scmp.ne.s32.totalorder %s170, %s171
      %p183 = scmp.eq.s32.totalorder %s119, 1
      %p184 = por %p182, %p183
      %p186 = scmp.ne.s32.totalorder %s171, %s185
      %p187 = scmp.eq.s32.totalorder %s119, 0
      %p188 = por %p186, %p187
      %s190 = sadd.s32 %s189, 1
      %p193 = scmp.eq.s32.totalorder %s113, 1
      %p194 = scmp.ne.s32.totalorder %s189, %s191
      %p195 = scmp.eq.s32.totalorder %s113, 0
      %p196 = por %p194, %p195
      %p197 = scmp.ne.s32.totalorder %s189, %s191
      %p198 = scmp.eq.s32.totalorder %s118, 1
      %p199 = por %p197, %p198
      %p200 = scmp.ne.s32.totalorder %s191, %s192
      %p201 = scmp.eq.s32.totalorder %s118, 0
      %p202 = por %p200, %p201
      %p203 = scmp.ne.s32.totalorder %s191, %s192
      %p204 = scmp.eq.s32.totalorder %s119, 1
      %p205 = por %p203, %p204
      %p207 = scmp.ne.s32.totalorder %s192, %s206
      %p208 = scmp.eq.s32.totalorder %s119, 0
      %p209 = por %p207, %p208
      %s211 = sadd.s32 %s210, 1
      %p214 = scmp.eq.s32.totalorder %s113, 1
      %p215 = scmp.ne.s32.totalorder %s210, %s212
      %p216 = scmp.eq.s32.totalorder %s113, 0
      %p217 = por %p215, %p216
      %p218 = scmp.ne.s32.totalorder %s210, %s212
      %p219 = scmp.eq.s32.totalorder %s118, 1
      %p220 = por %p218, %p219
      %p221 = scmp.ne.s32.totalorder %s212, %s213
      %p222 = scmp.eq.s32.totalorder %s118, 0
      %p223 = por %p221, %p222
      %p224 = scmp.ne.s32.totalorder %s212, %s213
      %p225 = scmp.eq.s32.totalorder %s119, 1
      %p226 = por %p224, %p225
      %p228 = scmp.ne.s32.totalorder %s213, %s227
      %p229 = scmp.eq.s32.totalorder %s119, 0
      %p230 = por %p228, %p229
      %s232 = sadd.s32 %s231, 1
      %p235 = scmp.eq.s32.totalorder %s113, 1
      %p236 = scmp.ne.s32.totalorder %s231, %s233
      %p237 = scmp.eq.s32.totalorder %s113, 0
      %p238 = por %p236, %p237
      %p239 = scmp.ne.s32.totalorder %s231, %s233
      %p240 = scmp.eq.s32.totalorder %s118, 1
      %p241 = por %p239, %p240
      %p242 = scmp.ne.s32.totalorder %s233, %s234
      %p243 = scmp.eq.s32.totalorder %s118, 0
      %p244 = por %p242, %p243
      %p245 = scmp.ne.s32.totalorder %s233, %s234
      %p246 = scmp.eq.s32.totalorder %s119, 1
      %p247 = por %p245, %p246
      %p249 = scmp.ne.s32.totalorder %s234, %s248
      %p250 = scmp.eq.s32.totalorder %s119, 0
      %p251 = por %p249, %p250
      %s253 = sadd.s32 %s252, 1
      %p256 = scmp.eq.s32.totalorder %s113, 1
      %p257 = scmp.ne.s32.totalorder %s252, %s254
      %p258 = scmp.eq.s32.totalorder %s113, 0
      %p259 = por %p257, %p258
      %p260 = scmp.ne.s32.totalorder %s252, %s254
      %p261 = scmp.eq.s32.totalorder %s118, 1
      %p262 = por %p260, %p261
      %p263 = scmp.ne.s32.totalorder %s254, %s255
      %p264 = scmp.eq.s32.totalorder %s118, 0
      %p265 = por %p263, %p264
      %p266 = scmp.ne.s32.totalorder %s254, %s255
      %p267 = scmp.eq.s32.totalorder %s119, 1
      %p268 = por %p266, %p267
      %p270 = scmp.ne.s32.totalorder %s255, %s269
      %p271 = scmp.eq.s32.totalorder %s119, 0
      %p272 = por %p270, %p271
      %s274 = sadd.s32 %s273, 1
      %p277 = scmp.eq.s32.totalorder %s113, 1
      %p278 = scmp.ne.s32.totalorder %s273, %s275
      %p279 = scmp.eq.s32.totalorder %s113, 0
      %p280 = por %p278, %p279
      %p281 = scmp.ne.s32.totalorder %s273, %s275
      %p282 = scmp.eq.s32.totalorder %s118, 1
      %p283 = por %p281, %p282
      %p284 = scmp.ne.s32.totalorder %s275, %s276
      %p285 = scmp.eq.s32.totalorder %s118, 0
      %p286 = por %p284, %p285
      %p287 = scmp.ne.s32.totalorder %s275, %s276
      %p288 = scmp.eq.s32.totalorder %s119, 1
      %p289 = por %p287, %p288
      %p291 = scmp.ne.s32.totalorder %s276, %s290
      %p292 = scmp.eq.s32.totalorder %s119, 0
      %p293 = por %p291, %p292
      %s295 = sadd.s32 %s294, 1
      %p298 = scmp.eq.s32.totalorder %s113, 1
      %p299 = scmp.ne.s32.totalorder %s294, %s296
      %p300 = scmp.eq.s32.totalorder %s113, 0
      %p301 = por %p299, %p300
      %p302 = scmp.ne.s32.totalorder %s294, %s296
      %p303 = scmp.eq.s32.totalorder %s118, 1
      %p304 = por %p302, %p303
      %p305 = scmp.ne.s32.totalorder %s296, %s297
      %p306 = scmp.eq.s32.totalorder %s118, 0
      %p307 = por %p305, %p306
      %p308 = scmp.ne.s32.totalorder %s296, %s297
      %p309 = scmp.eq.s32.totalorder %s119, 1
      %p310 = por %p308, %p309
      %p312 = scmp.ne.s32.totalorder %s297, %s311
      %p313 = scmp.eq.s32.totalorder %s119, 0
      %p314 = por %p312, %p313
      %s316 = sadd.s32 %s315, 1
      %p319 = scmp.eq.s32.totalorder %s113, 1
      %p320 = scmp.ne.s32.totalorder %s315, %s317
      %p321 = scmp.eq.s32.totalorder %s113, 0
      %p322 = por %p320, %p321
      %p323 = scmp.ne.s32.totalorder %s315, %s317
      %p324 = scmp.eq.s32.totalorder %s118, 1
      %p325 = por %p323, %p324
      %p326 = scmp.ne.s32.totalorder %s317, %s318
      %p327 = scmp.eq.s32.totalorder %s118, 0
      %p328 = por %p326, %p327
      %p329 = scmp.ne.s32.totalorder %s317, %s318
      %p330 = scmp.eq.s32.totalorder %s119, 1
      %p331 = por %p329, %p330
      %p333 = scmp.ne.s32.totalorder %s318, %s332
      %p334 = scmp.eq.s32.totalorder %s119, 0
      %p335 = por %p333, %p334
      %s337 = sadd.s32 %s336, 1
      %p340 = scmp.eq.s32.totalorder %s113, 1
      %p341 = scmp.ne.s32.totalorder %s336, %s338
      %p342 = scmp.eq.s32.totalorder %s113, 0
      %p343 = por %p341, %p342
      %p344 = scmp.ne.s32.totalorder %s336, %s338
      %p345 = scmp.eq.s32.totalorder %s118, 1
      %p346 = por %p344, %p345
      %p347 = scmp.ne.s32.totalorder %s338, %s339
      %p348 = scmp.eq.s32.totalorder %s118, 0
      %p349 = por %p347, %p348
      %p350 = scmp.ne.s32.totalorder %s338, %s339
      %p351 = scmp.eq.s32.totalorder %s119, 1
      %p352 = por %p350, %p351
      %p354 = scmp.ne.s32.totalorder %s339, %s353
      %p355 = scmp.eq.s32.totalorder %s119, 0
      %p356 = por %p354, %p355
      %s358 = sadd.s32 %s357, 1
      %p361 = scmp.eq.s32.totalorder %s113, 1
      %p362 = scmp.ne.s32.totalorder %s357, %s359
      %p363 = scmp.eq.s32.totalorder %s113, 0
      %p364 = por %p362, %p363
      %p365 = scmp.ne.s32.totalorder %s357, %s359
      %p366 = scmp.eq.s32.totalorder %s118, 1
      %p367 = por %p365, %p366
      %p368 = scmp.ne.s32.totalorder %s359, %s360
      %p369 = scmp.eq.s32.totalorder %s118, 0
      %p370 = por %p368, %p369
      %p371 = scmp.ne.s32.totalorder %s359, %s360
      %p372 = scmp.eq.s32.totalorder %s119, 1
      %p373 = por %p371, %p372
      %p375 = scmp.ne.s32.totalorder %s360, %s374
      %p376 = scmp.eq.s32.totalorder %s119, 0
      %p377 = por %p375, %p376
      %s379 = sadd.s32 %s378, 1
      %p382 = scmp.eq.s32.totalorder %s113, 1
      %p383 = scmp.ne.s32.totalorder %s378, %s380
      %p384 = scmp.eq.s32.totalorder %s113, 0
      %p385 = por %p383, %p384
      %p386 = scmp.ne.s32.totalorder %s378, %s380
      %p387 = scmp.eq.s32.totalorder %s118, 1
      %p388 = por %p386, %p387
      %p389 = scmp.ne.s32.totalorder %s380, %s381
      %p390 = scmp.eq.s32.totalorder %s118, 0
      %p391 = por %p389, %p390
      %p392 = scmp.ne.s32.totalorder %s380, %s381
      %p393 = scmp.eq.s32.totalorder %s119, 1
      %p394 = por %p392, %p393
      %p396 = scmp.ne.s32.totalorder %s381, %s395
      %p397 = scmp.eq.s32.totalorder %s119, 0
      %p398 = por %p396, %p397
      %s400 = sadd.s32 %s399, 1
      %p403 = scmp.eq.s32.totalorder %s113, 1
      %p404 = scmp.ne.s32.totalorder %s399, %s401
      %p405 = scmp.eq.s32.totalorder %s113, 0
      %p406 = por %p404, %p405
      %p407 = scmp.ne.s32.totalorder %s399, %s401
      %p408 = scmp.eq.s32.totalorder %s118, 1
      %p409 = por %p407, %p408
      %p410 = scmp.ne.s32.totalorder %s401, %s402
      %p411 = scmp.eq.s32.totalorder %s118, 0
      %p412 = por %p410, %p411
      %p413 = scmp.ne.s32.totalorder %s401, %s402
      %p414 = scmp.eq.s32.totalorder %s119, 1
      %p415 = por %p413, %p414
      %p417 = scmp.ne.s32.totalorder %s402, %s416
      %p418 = scmp.eq.s32.totalorder %s119, 0
      %p419 = por %p417, %p418
      %s421 = sadd.s32 %s420, 1
      %p424 = scmp.eq.s32.totalorder %s113, 1
      %p425 = scmp.ne.s32.totalorder %s420, %s422
      %p426 = scmp.eq.s32.totalorder %s113, 0
      %p427 = por %p425, %p426
      %p428 = scmp.ne.s32.totalorder %s420, %s422
      %p429 = scmp.eq.s32.totalorder %s118, 1
      %p430 = por %p428, %p429
      %p431 = scmp.ne.s32.totalorder %s422, %s423
      %p432 = scmp.eq.s32.totalorder %s118, 0
      %p433 = por %p431, %p432
      %p434 = scmp.ne.s32.totalorder %s422, %s423
      %p435 = scmp.eq.s32.totalorder %s119, 1
      %p436 = por %p434, %p435
      %p438 = scmp.ne.s32.totalorder %s423, %s437
      %p439 = scmp.eq.s32.totalorder %s119, 0
      %p440 = por %p438, %p439
      %s442 = sadd.s32 %s441, 1
      %p445 = scmp.eq.s32.totalorder %s113, 1
      %p446 = scmp.ne.s32.totalorder %s441, %s443
      %p447 = scmp.eq.s32.totalorder %s113, 0
      %p448 = por %p446, %p447
      %p449 = scmp.ne.s32.totalorder %s441, %s443
      %p450 = scmp.eq.s32.totalorder %s118, 1
      %p451 = por %p449, %p450
      %p452 = scmp.ne.s32.totalorder %s443, %s444
      %p453 = scmp.eq.s32.totalorder %s118, 0
      %p454 = por %p452, %p453
      %p455 = scmp.ne.s32.totalorder %s443, %s444
      %p456 = scmp.eq.s32.totalorder %s119, 1
      %p457 = por %p455, %p456
      %p459 = scmp.ne.s32.totalorder %s444, %s458
      %p460 = scmp.eq.s32.totalorder %s119, 0
      %p461 = por %p459, %p460
      %s463 = sadd.s32 %s462, 1
      %p466 = scmp.eq.s32.totalorder %s113, 1
      %p467 = scmp.ne.s32.totalorder %s462, %s464
      %p468 = scmp.eq.s32.totalorder %s113, 0
      %p469 = por %p467, %p468
      %p470 = scmp.ne.s32.totalorder %s462, %s464
      %p471 = scmp.eq.s32.totalorder %s118, 1
      %p472 = por %p470, %p471
      %p473 = scmp.ne.s32.totalorder %s464, %s465
      %p474 = scmp.eq.s32.totalorder %s118, 0
      %p475 = por %p473, %p474
      %p476 = scmp.ne.s32.totalorder %s464, %s465
      %p477 = scmp.eq.s32.totalorder %s119, 1
      %p478 = por %p476, %p477
      %p480 = scmp.ne.s32.totalorder %s465, %s479
      %p481 = scmp.eq.s32.totalorder %s119, 0
      %p482 = por %p480, %p481
      %s484 = sadd.s32 %s483, 1
      %p487 = scmp.eq.s32.totalorder %s113, 1
      %p488 = scmp.ne.s32.totalorder %s483, %s485
      %p489 = scmp.eq.s32.totalorder %s113, 0
      %p490 = por %p488, %p489
      %p491 = scmp.ne.s32.totalorder %s483, %s485
      %p492 = scmp.eq.s32.totalorder %s118, 1
      %p493 = por %p491, %p492
      %p494 = scmp.ne.s32.totalorder %s485, %s486
      %p495 = scmp.eq.s32.totalorder %s118, 0
      %p496 = por %p494, %p495
      %p497 = scmp.ne.s32.totalorder %s485, %s486
      %p498 = scmp.eq.s32.totalorder %s119, 1
      %p499 = por %p497, %p498
      %p501 = scmp.ne.s32.totalorder %s486, %s500
      %p502 = scmp.eq.s32.totalorder %s119, 0
      %p503 = por %p501, %p502
      %s505 = sadd.s32 %s504, 1
      %p508 = scmp.eq.s32.totalorder %s113, 1
      %p509 = scmp.ne.s32.totalorder %s504, %s506
      %p510 = scmp.eq.s32.totalorder %s113, 0
      %p511 = por %p509, %p510
      %p512 = scmp.ne.s32.totalorder %s504, %s506
      %p513 = scmp.eq.s32.totalorder %s118, 1
      %p514 = por %p512, %p513
      %p515 = scmp.ne.s32.totalorder %s506, %s507
      %p516 = scmp.eq.s32.totalorder %s118, 0
      %p517 = por %p515, %p516
      %p518 = scmp.ne.s32.totalorder %s506, %s507
      %p519 = scmp.eq.s32.totalorder %s119, 1
      %p520 = por %p518, %p519
      %p522 = scmp.ne.s32.totalorder %s507, %s521
      %p523 = scmp.eq.s32.totalorder %s119, 0
      %p524 = por %p522, %p523
      %s526 = sadd.s32 %s525, 1
      %p529 = scmp.eq.s32.totalorder %s113, 1
      %p530 = scmp.ne.s32.totalorder %s525, %s527
      %p531 = scmp.eq.s32.totalorder %s113, 0
      %p532 = por %p530, %p531
      %p533 = scmp.ne.s32.totalorder %s525, %s527
      %p534 = scmp.eq.s32.totalorder %s118, 1
      %p535 = por %p533, %p534
      %p536 = scmp.ne.s32.totalorder %s527, %s528
      %p537 = scmp.eq.s32.totalorder %s118, 0
      %p538 = por %p536, %p537
      %p539 = scmp.ne.s32.totalorder %s527, %s528
      %p540 = scmp.eq.s32.totalorder %s119, 1
      %p541 = por %p539, %p540
      %p543 = scmp.ne.s32.totalorder %s528, %s542
      %p544 = scmp.eq.s32.totalorder %s119, 0
      %p545 = por %p543, %p544
      %s547 = sadd.s32 %s546, 1
      %p550 = scmp.eq.s32.totalorder %s113, 1
      %p551 = scmp.ne.s32.totalorder %s546, %s548
      %p552 = scmp.eq.s32.totalorder %s113, 0
      %p553 = por %p551, %p552
      %p554 = scmp.ne.s32.totalorder %s546, %s548
      %p555 = scmp.eq.s32.totalorder %s118, 1
      %p556 = por %p554, %p555
      %p557 = scmp.ne.s32.totalorder %s548, %s549
      %p558 = scmp.eq.s32.totalorder %s118, 0
      %p559 = por %p557, %p558
      %p560 = scmp.ne.s32.totalorder %s548, %s549
      %p561 = scmp.eq.s32.totalorder %s119, 1
      %p562 = por %p560, %p561
      %p564 = scmp.ne.s32.totalorder %s549, %s563
      %p565 = scmp.eq.s32.totalorder %s119, 0
      %p566 = por %p564, %p565
      %s568 = sadd.s32 %s567, 1
      %p571 = scmp.eq.s32.totalorder %s113, 1
      %p572 = scmp.ne.s32.totalorder %s567, %s569
      %p573 = scmp.eq.s32.totalorder %s113, 0
      %p574 = por %p572, %p573
      %p575 = scmp.ne.s32.totalorder %s567, %s569
      %p576 = scmp.eq.s32.totalorder %s118, 1
      %p577 = por %p575, %p576
      %p578 = scmp.ne.s32.totalorder %s569, %s570
      %p579 = scmp.eq.s32.totalorder %s118, 0
      %p580 = por %p578, %p579
      %p581 = scmp.ne.s32.totalorder %s569, %s570
      %p582 = scmp.eq.s32.totalorder %s119, 1
      %p583 = por %p581, %p582
      %p585 = scmp.ne.s32.totalorder %s570, %s584
      %p586 = scmp.eq.s32.totalorder %s119, 0
      %p587 = por %p585, %p586
      %s589 = sadd.s32 %s588, 1
      %p592 = scmp.eq.s32.totalorder %s113, 1
      %p593 = scmp.ne.s32.totalorder %s588, %s590
      %p594 = scmp.eq.s32.totalorder %s113, 0
      %p595 = por %p593, %p594
      %p596 = scmp.ne.s32.totalorder %s588, %s590
      %p597 = scmp.eq.s32.totalorder %s118, 1
      %p598 = por %p596, %p597
      %p599 = scmp.ne.s32.totalorder %s590, %s591
      %p600 = scmp.eq.s32.totalorder %s118, 0
      %p601 = por %p599, %p600
      %p602 = scmp.ne.s32.totalorder %s590, %s591
      %p603 = scmp.eq.s32.totalorder %s119, 1
      %p604 = por %p602, %p603
      %p606 = scmp.ne.s32.totalorder %s591, %s605
      %p607 = scmp.eq.s32.totalorder %s119, 0
      %p608 = por %p606, %p607
      %s610 = sadd.s32 %s609, 1
      %p613 = scmp.eq.s32.totalorder %s113, 1
      %p614 = scmp.ne.s32.totalorder %s609, %s611
      %p615 = scmp.eq.s32.totalorder %s113, 0
      %p616 = por %p614, %p615
      %p617 = scmp.ne.s32.totalorder %s609, %s611
      %p618 = scmp.eq.s32.totalorder %s118, 1
      %p619 = por %p617, %p618
      %p620 = scmp.ne.s32.totalorder %s611, %s612
      %p621 = scmp.eq.s32.totalorder %s118, 0
      %p622 = por %p620, %p621
      %p623 = scmp.ne.s32.totalorder %s611, %s612
      %p624 = scmp.eq.s32.totalorder %s119, 1
      %p625 = por %p623, %p624
      %p627 = scmp.ne.s32.totalorder %s612, %s626
      %p628 = scmp.eq.s32.totalorder %s119, 0
      %p629 = por %p627, %p628
      %s631 = sadd.s32 %s630, 1
      %p634 = scmp.eq.s32.totalorder %s113, 1
      %p635 = scmp.ne.s32.totalorder %s630, %s632
      %p636 = scmp.eq.s32.totalorder %s113, 0
      %p637 = por %p635, %p636
      %p638 = scmp.ne.s32.totalorder %s630, %s632
      %p639 = scmp.eq.s32.totalorder %s118, 1
      %p640 = por %p638, %p639
      %p641 = scmp.ne.s32.totalorder %s632, %s633
      %p642 = scmp.eq.s32.totalorder %s118, 0
      %p643 = por %p641, %p642
      %p644 = scmp.ne.s32.totalorder %s632, %s633
      %p645 = scmp.eq.s32.totalorder %s119, 1
      %p646 = por %p644, %p645
      %p648 = scmp.ne.s32.totalorder %s633, %s647
      %p649 = scmp.eq.s32.totalorder %s119, 0
      %p650 = por %p648, %p649
      %s652 = sadd.s32 %s651, 1
      %p655 = scmp.eq.s32.totalorder %s113, 1
      %p656 = scmp.ne.s32.totalorder %s651, %s653
      %p657 = scmp.eq.s32.totalorder %s113, 0
      %p658 = por %p656, %p657
      %p659 = scmp.ne.s32.totalorder %s651, %s653
      %p660 = scmp.eq.s32.totalorder %s118, 1
      %p661 = por %p659, %p660
      %p662 = scmp.ne.s32.totalorder %s653, %s654
      %p663 = scmp.eq.s32.totalorder %s118, 0
      %p664 = por %p662, %p663
      %p665 = scmp.ne.s32.totalorder %s653, %s654
      %p666 = scmp.eq.s32.totalorder %s119, 1
      %p667 = por %p665, %p666
      %p669 = scmp.ne.s32.totalorder %s654, %s668
      %p670 = scmp.eq.s32.totalorder %s119, 0
      %p671 = por %p669, %p670
      %s673 = sadd.s32 %s672, 1
      %p676 = scmp.eq.s32.totalorder %s113, 1
      %p677 = scmp.ne.s32.totalorder %s672, %s674
      %p678 = scmp.eq.s32.totalorder %s113, 0
      %p679 = por %p677, %p678
      %p680 = scmp.ne.s32.totalorder %s672, %s674
      %p681 = scmp.eq.s32.totalorder %s118, 1
      %p682 = por %p680, %p681
      %p683 = scmp.ne.s32.totalorder %s674, %s675
      %p684 = scmp.eq.s32.totalorder %s118, 0
      %p685 = por %p683, %p684
      %p686 = scmp.ne.s32.totalorder %s674, %s675
      %p687 = scmp.eq.s32.totalorder %s119, 1
      %p688 = por %p686, %p687
      %p690 = scmp.ne.s32.totalorder %s675, %s689
      %p691 = scmp.eq.s32.totalorder %s119, 0
      %p692 = por %p690, %p691
      %s694 = sadd.s32 %s693, 1
      %p697 = scmp.eq.s32.totalorder %s113, 1
      %p698 = scmp.ne.s32.totalorder %s693, %s695
      %p699 = scmp.eq.s32.totalorder %s113, 0
      %p700 = por %p698, %p699
      %p701 = scmp.ne.s32.totalorder %s693, %s695
      %p702 = scmp.eq.s32.totalorder %s118, 1
      %p703 = por %p701, %p702
      %p704 = scmp.ne.s32.totalorder %s695, %s696
      %p705 = scmp.eq.s32.totalorder %s118, 0
      %p706 = por %p704, %p705
      %p707 = scmp.ne.s32.totalorder %s695, %s696
      %p708 = scmp.eq.s32.totalorder %s119, 1
      %p709 = por %p707, %p708
      %p711 = scmp.ne.s32.totalorder %s696, %s710
      %p712 = scmp.eq.s32.totalorder %s119, 0
      %p713 = por %p711, %p712
      %s715 = sadd.s32 %s714, 1
      %p718 = scmp.eq.s32.totalorder %s113, 1
      %p719 = scmp.ne.s32.totalorder %s714, %s716
      %p720 = scmp.eq.s32.totalorder %s113, 0
      %p721 = por %p719, %p720
      %p722 = scmp.ne.s32.totalorder %s714, %s716
      %p723 = scmp.eq.s32.totalorder %s118, 1
      %p724 = por %p722, %p723
      %p725 = scmp.ne.s32.totalorder %s716, %s717
      %p726 = scmp.eq.s32.totalorder %s118, 0
      %p727 = por %p725, %p726
      %p728 = scmp.ne.s32.totalorder %s716, %s717
      %p729 = scmp.eq.s32.totalorder %s119, 1
      %p730 = por %p728, %p729
      %p732 = scmp.ne.s32.totalorder %s717, %s731
      %p733 = scmp.eq.s32.totalorder %s119, 0
      %p734 = por %p732, %p733
      %s736 = sadd.s32 %s735, 1
      %p739 = scmp.eq.s32.totalorder %s113, 1
      %p740 = scmp.ne.s32.totalorder %s735, %s737
      %p741 = scmp.eq.s32.totalorder %s113, 0
      %p742 = por %p740, %p741
      %p743 = scmp.ne.s32.totalorder %s735, %s737
      %p744 = scmp.eq.s32.totalorder %s118, 1
      %p745 = por %p743, %p744
      %p746 = scmp.ne.s32.totalorder %s737, %s738
      %p747 = scmp.eq.s32.totalorder %s118, 0
      %p748 = por %p746, %p747
      %p749 = scmp.ne.s32.totalorder %s737, %s738
      %p750 = scmp.eq.s32.totalorder %s119, 1
      %p751 = por %p749, %p750
      %p753 = scmp.ne.s32.totalorder %s738, %s752
      %p754 = scmp.eq.s32.totalorder %s119, 0
      %p755 = por %p753, %p754
      %s757 = sadd.s32 %s756, 1
      %p760 = scmp.eq.s32.totalorder %s113, 1
      %p761 = scmp.ne.s32.totalorder %s756, %s758
      %p762 = scmp.eq.s32.totalorder %s113, 0
      %p763 = por %p761, %p762
      %p764 = scmp.ne.s32.totalorder %s756, %s758
      %p765 = scmp.eq.s32.totalorder %s118, 1
      %p766 = por %p764, %p765
      %p767 = scmp.ne.s32.totalorder %s758, %s759
      %p768 = scmp.eq.s32.totalorder %s118, 0
      %p769 = por %p767, %p768
      %p770 = scmp.ne.s32.totalorder %s758, %s759
      %p771 = scmp.eq.s32.totalorder %s119, 1
      %p772 = por %p770, %p771
      %p774 = scmp.ne.s32.totalorder %s759, %s773
      %p775 = scmp.eq.s32.totalorder %s119, 0
      %p776 = por %p774, %p775
      %s778 = sadd.s32 %s777, 1
      %p781 = scmp.eq.s32.totalorder %s113, 1
      %p782 = scmp.ne.s32.totalorder %s777, %s779
      %p783 = scmp.eq.s32.totalorder %s113, 0
      %p784 = por %p782, %p783
      %p785 = scmp.ne.s32.totalorder %s777, %s779
      %p786 = scmp.eq.s32.totalorder %s118, 1
      %p787 = por %p785, %p786
      %p788 = scmp.ne.s32.totalorder %s779, %s780
      %p789 = scmp.eq.s32.totalorder %s118, 0
      %p790 = por %p788, %p789
      %p791 = scmp.ne.s32.totalorder %s779, %s780
      %p792 = scmp.eq.s32.totalorder %s119, 1
      %p793 = por %p791, %p792
      %p795 = scmp.ne.s32.totalorder %s780, %s794
      %p796 = scmp.eq.s32.totalorder %s119, 0
      %p797 = por %p795, %p796
      %s799 = sadd.s32 %s798, 1
      %p802 = scmp.eq.s32.totalorder %s113, 1
      %p803 = scmp.ne.s32.totalorder %s798, %s800
      %p804 = scmp.eq.s32.totalorder %s113, 0
      %p805 = por %p803, %p804
      %p806 = scmp.ne.s32.totalorder %s798, %s800
      %p807 = scmp.eq.s32.totalorder %s118, 1
      %p808 = por %p806, %p807
      %p809 = scmp.ne.s32.totalorder %s800, %s801
      %p810 = scmp.eq.s32.totalorder %s118, 0
      %p811 = por %p809, %p810
      %p812 = scmp.ne.s32.totalorder %s800, %s801
      %p813 = scmp.eq.s32.totalorder %s119, 1
      %p814 = por %p812, %p813
      %p816 = scmp.ne.s32.totalorder %s801, %s815
      %p817 = scmp.eq.s32.totalorder %s119, 0
      %p818 = por %p816, %p817
      %s820 = sadd.s32 %s819, 1
      %p823 = scmp.eq.s32.totalorder %s113, 1
      %p824 = scmp.ne.s32.totalorder %s819, %s821
      %p825 = scmp.eq.s32.totalorder %s113, 0
      %p826 = por %p824, %p825
      %p827 = scmp.ne.s32.totalorder %s819, %s821
      %p828 = scmp.eq.s32.totalorder %s118, 1
      %p829 = por %p827, %p828
      %p830 = scmp.ne.s32.totalorder %s821, %s822
      %p831 = scmp.eq.s32.totalorder %s118, 0
      %p832 = por %p830, %p831
      %p833 = scmp.ne.s32.totalorder %s821, %s822
      %p834 = scmp.eq.s32.totalorder %s119, 1
      %p835 = por %p833, %p834
      %p837 = scmp.ne.s32.totalorder %s822, %s836
      %p838 = scmp.eq.s32.totalorder %s119, 0
      %p839 = por %p837, %p838
      %s841 = sadd.s32 %s840, 1
      %p844 = scmp.eq.s32.totalorder %s113, 1
      %p845 = scmp.ne.s32.totalorder %s840, %s842
      %p846 = scmp.eq.s32.totalorder %s113, 0
      %p847 = por %p845, %p846
      %p848 = scmp.ne.s32.totalorder %s840, %s842
      %p849 = scmp.eq.s32.totalorder %s118, 1
      %p850 = por %p848, %p849
      %p851 = scmp.ne.s32.totalorder %s842, %s843
      %p852 = scmp.eq.s32.totalorder %s118, 0
      %p853 = por %p851, %p852
      %p854 = scmp.ne.s32.totalorder %s842, %s843
      %p855 = scmp.eq.s32.totalorder %s119, 1
      %p856 = por %p854, %p855
      %p858 = scmp.ne.s32.totalorder %s843, %s857
      %p859 = scmp.eq.s32.totalorder %s119, 0
      %p860 = por %p858, %p859
      %s862 = sadd.s32 %s861, 1
      %p865 = scmp.eq.s32.totalorder %s113, 1
      %p866 = scmp.ne.s32.totalorder %s861, %s863
      %p867 = scmp.eq.s32.totalorder %s113, 0
      %p868 = por %p866, %p867
      %p869 = scmp.ne.s32.totalorder %s861, %s863
      %p870 = scmp.eq.s32.totalorder %s118, 1
      %p871 = por %p869, %p870
      %p872 = scmp.ne.s32.totalorder %s863, %s864
      %p873 = scmp.eq.s32.totalorder %s118, 0
      %p874 = por %p872, %p873
      %p875 = scmp.ne.s32.totalorder %s863, %s864
      %p876 = scmp.eq.s32.totalorder %s119, 1
      %p877 = por %p875, %p876
      %p879 = scmp.ne.s32.totalorder %s864, %s878
      %p880 = scmp.eq.s32.totalorder %s119, 0
      %p881 = por %p879, %p880
      %s883 = sadd.s32 %s882, 1
      %p886 = scmp.eq.s32.totalorder %s113, 1
      %p887 = scmp.ne.s32.totalorder %s882, %s884
      %p888 = scmp.eq.s32.totalorder %s113, 0
      %p889 = por %p887, %p888
      %p890 = scmp.ne.s32.totalorder %s882, %s884
      %p891 = scmp.eq.s32.totalorder %s118, 1
      %p892 = por %p890, %p891
      %p893 = scmp.ne.s32.totalorder %s884, %s885
      %p894 = scmp.eq.s32.totalorder %s118, 0
      %p895 = por %p893, %p894
      %p896 = scmp.ne.s32.totalorder %s884, %s885
      %p897 = scmp.eq.s32.totalorder %s119, 1
      %p898 = por %p896, %p897
      %p900 = scmp.ne.s32.totalorder %s885, %s899
      %p901 = scmp.eq.s32.totalorder %s119, 0
      %p902 = por %p900, %p901
      %s904 = sadd.s32 %s903, 1
      %p907 = scmp.eq.s32.totalorder %s113, 1
      %p908 = scmp.ne.s32.totalorder %s903, %s905
      %p909 = scmp.eq.s32.totalorder %s113, 0
      %p910 = por %p908, %p909
      %p911 = scmp.ne.s32.totalorder %s903, %s905
      %p912 = scmp.eq.s32.totalorder %s118, 1
      %p913 = por %p911, %p912
      %p914 = scmp.ne.s32.totalorder %s905, %s906
      %p915 = scmp.eq.s32.totalorder %s118, 0
      %p916 = por %p914, %p915
      %p917 = scmp.ne.s32.totalorder %s905, %s906
      %p918 = scmp.eq.s32.totalorder %s119, 1
      %p919 = por %p917, %p918
      %p921 = scmp.ne.s32.totalorder %s906, %s920
      %p922 = scmp.eq.s32.totalorder %s119, 0
      %p923 = por %p921, %p922
      %s925 = sadd.s32 %s924, 1
      %p928 = scmp.eq.s32.totalorder %s113, 1
      %p929 = scmp.ne.s32.totalorder %s924, %s926
      %p930 = scmp.eq.s32.totalorder %s113, 0
      %p931 = por %p929, %p930
      %p932 = scmp.ne.s32.totalorder %s924, %s926
      %p933 = scmp.eq.s32.totalorder %s118, 1
      %p934 = por %p932, %p933
      %p935 = scmp.ne.s32.totalorder %s926, %s927
      %p936 = scmp.eq.s32.totalorder %s118, 0
      %p937 = por %p935, %p936
      %p938 = scmp.ne.s32.totalorder %s926, %s927
      %p939 = scmp.eq.s32.totalorder %s119, 1
      %p940 = por %p938, %p939
      %p942 = scmp.ne.s32.totalorder %s927, %s941
      %p943 = scmp.eq.s32.totalorder %s119, 0
      %p944 = por %p942, %p943
      %s946 = sadd.s32 %s945, 1
      %p949 = scmp.eq.s32.totalorder %s113, 1
      %p950 = scmp.ne.s32.totalorder %s945, %s947
      %p951 = scmp.eq.s32.totalorder %s113, 0
      %p952 = por %p950, %p951
      %p953 = scmp.ne.s32.totalorder %s945, %s947
      %p954 = scmp.eq.s32.totalorder %s118, 1
      %p955 = por %p953, %p954
      %p956 = scmp.ne.s32.totalorder %s947, %s948
      %p957 = scmp.eq.s32.totalorder %s118, 0
      %p958 = por %p956, %p957
      %p959 = scmp.ne.s32.totalorder %s947, %s948
      %p960 = scmp.eq.s32.totalorder %s119, 1
      %p961 = por %p959, %p960
      %p963 = scmp.ne.s32.totalorder %s948, %s962
      %p964 = scmp.eq.s32.totalorder %s119, 0
      %p965 = por %p963, %p964
      %s967 = sadd.s32 %s966, 1
      %p970 = scmp.eq.s32.totalorder %s113, 1
      %p971 = scmp.ne.s32.totalorder %s966, %s968
      %p972 = scmp.eq.s32.totalorder %s113, 0
      %p973 = por %p971, %p972
      %p974 = scmp.ne.s32.totalorder %s966, %s968
      %p975 = scmp.eq.s32.totalorder %s118, 1
      %p976 = por %p974, %p975
      %p977 = scmp.ne.s32.totalorder %s968, %s969
      %p978 = scmp.eq.s32.totalorder %s118, 0
      %p979 = por %p977, %p978
      %p980 = scmp.ne.s32.totalorder %s968, %s969
      %p981 = scmp.eq.s32.totalorder %s119, 1
      %p982 = por %p980, %p981
      %p984 = scmp.ne.s32.totalorder %s969, %s983
      %p985 = scmp.eq.s32.totalorder %s119, 0
      %p986 = por %p984, %p985
      %s988 = sadd.s32 %s987, 1
      %p991 = scmp.eq.s32.totalorder %s113, 1
      %p992 = scmp.ne.s32.totalorder %s987, %s989
      %p993 = scmp.eq.s32.totalorder %s113, 0
      %p994 = por %p992, %p993
      %p995 = scmp.ne.s32.totalorder %s987, %s989
      %p996 = scmp.eq.s32.totalorder %s118, 1
      %p997 = por %p995, %p996
      %p998 = scmp.ne.s32.totalorder %s989, %s990
      %p999 = scmp.eq.s32.totalorder %s118, 0
      %p1000 = por %p998, %p999
      %p1001 = scmp.ne.s32.totalorder %s989, %s990
      %p1002 = scmp.eq.s32.totalorder %s119, 1
      %p1003 = por %p1001, %p1002
      %p1005 = scmp.ne.s32.totalorder %s990, %s1004
      %p1006 = scmp.eq.s32.totalorder %s119, 0
      %p1007 = por %p1005, %p1006
      %s1009 = sadd.s32 %s1008, 1
      %p1012 = scmp.eq.s32.totalorder %s113, 1
      %p1013 = scmp.ne.s32.totalorder %s1008, %s1010
      %p1014 = scmp.eq.s32.totalorder %s113, 0
      %p1015 = por %p1013, %p1014
      %p1016 = scmp.ne.s32.totalorder %s1008, %s1010
      %p1017 = scmp.eq.s32.totalorder %s118, 1
      %p1018 = por %p1016, %p1017
      %p1019 = scmp.ne.s32.totalorder %s1010, %s1011
      %p1020 = scmp.eq.s32.totalorder %s118, 0
      %p1021 = por %p1019, %p1020
      %p1022 = scmp.ne.s32.totalorder %s1010, %s1011
      %p1023 = scmp.eq.s32.totalorder %s119, 1
      %p1024 = por %p1022, %p1023
      %p1026 = scmp.ne.s32.totalorder %s1011, %s1025
      %p1027 = scmp.eq.s32.totalorder %s119, 0
      %p1028 = por %p1026, %p1027
      %s1029 = ssub.s32 %s113, %s120
      %p1030 = scmp.eq.s32.totalorder %s1029, 0
      %s1032 = sadd.s32 %s1031, 1
      %s1033 = scalar_select %p1030, %s1031, %s1032
      %p1036 = pneg %p1030
      %p1037 = scmp.eq.s32.totalorder %s113, 1
      %p1038 = por %p1036, %p1037
      %p1039 = scmp.ne.s32.totalorder %s1031, %s1034
      %p1040 = scmp.eq.s32.totalorder %s113, 0
      %p1041 = por %p1039, %p1040
      %p1042 = scmp.ne.s32.totalorder %s1031, %s1034
      %p1043 = scmp.eq.s32.totalorder %s118, 1
      %p1044 = por %p1042, %p1043
      %p1045 = scmp.ne.s32.totalorder %s1034, %s1035
      %p1046 = scmp.eq.s32.totalorder %s118, 0
      %p1047 = por %p1045, %p1046
      %p1048 = scmp.ne.s32.totalorder %s1034, %s1035
      %p1049 = scmp.eq.s32.totalorder %s119, 1
      %p1050 = por %p1048, %p1049
      %p1052 = scmp.ne.s32.totalorder %s1035, %s1051
      %p1053 = scmp.eq.s32.totalorder %s119, 0
      %p1054 = por %p1052, %p1053
      %p1055 = scmp.le.s32.totalorder 1, %s113
      %p1056 = scmp.lt.s32.totalorder %s113, 3
      %p1057 = pnand %p1055, %p1056
      %p1058 = pneg %p1057
      // Predicated region
      $region9: #{backbone_forward.1} parent=5 // pred_check
        _
      $region10: #{backbone_forward.1} parent=5 // pred_check_branch
        %1060 = sbr.rel (%p1057) target = $region12
      $region11: #{backbone_forward.1} parent=5 // pred_region
        %s1061 = ssub.s32 %s113, 1
        // Predicated region
        $region13: #{backbone_forward.1} parent=11 // pred_check
          %p1062 = pneg %p160
        $region14: #{backbone_forward.1} parent=11 // pred_check_branch
          %1064 = sbr.rel (%p1062) target = $region16
        $region15: #{backbone_forward.1} parent=11 // pred_region
          _
        $region16: #{backbone_forward.1} parent=11 // pred_fallthru
          _
        // Predicated region
        $region17: #{backbone_forward.1} parent=11 // pred_check
          %p1065 = pneg %p181
        $region18: #{backbone_forward.1} parent=11 // pred_check_branch
          %1067 = sbr.rel (%p1065) target = $region20
        $region19: #{backbone_forward.1} parent=11 // pred_region
          %s1069 = ssub.s32 16, 16
          %1070 = vsyncadd [#allocation13], %s1069
          %s1072 = sshll.u32 [#allocation12], 4
          %s1073 = int_to_ptr.vmem [resolvable:$true] %s1072
          %1075 = dma.hbm_to_vmem [thread:$0]  %s5, 16, %s1073, [#allocation13]
        $region20: #{backbone_forward.1} parent=11 // pred_fallthru
          _
        // Predicated region
        $region21: #{backbone_forward.1} parent=11 // pred_check
          %p1076 = pneg %p202
        $region22: #{backbone_forward.1} parent=11 // pred_check_branch
          %1078 = sbr.rel (%p1076) target = $region24
        $region23: #{backbone_forward.1} parent=11 // pred_region
          %s1080 = ssub.s32 16, 16
          %1081 = vsyncadd [#allocation16], %s1080
          %s1083 = sshll.u32 [#allocation15], 4
          %s1084 = int_to_ptr.vmem [resolvable:$true] %s1083
          %1086 = dma.hbm_to_vmem [thread:$0]  %s7, 16, %s1084, [#allocation16]
        $region24: #{backbone_forward.1} parent=11 // pred_fallthru
          _
        // Predicated region
        $region25: #{backbone_forward.1} parent=11 // pred_check
          %p1087 = pneg %p223
        $region26: #{backbone_forward.1} parent=11 // pred_check_branch
          %1089 = sbr.rel (%p1087) target = $region28
        $region27: #{backbone_forward.1} parent=11 // pred_region
          _
        $region28: #{backbone_forward.1} parent=11 // pred_fallthru
          _
        // Predicated region
        $region29: #{backbone_forward.1} parent=11 // pred_check
          %p1090 = pneg %p244
        $region30: #{backbone_forward.1} parent=11 // pred_check_branch
          %1092 = sbr.rel (%p1090) target = $region32
        $region31: #{backbone_forward.1} parent=11 // pred_region
          %s1094 = ssub.s32 16, 16
          %1095 = vsyncadd [#allocation16], %s1094
          %s1097 = sshll.u32 [#allocation17], 4
          %s1098 = int_to_ptr.vmem [resolvable:$true] %s1097
          %1100 = dma.hbm_to_vmem [thread:$0]  %s11, 16, %s1098, [#allocation16]
        $region32: #{backbone_forward.1} parent=11 // pred_fallthru
          _
        // Predicated region
        $region33: #{backbone_forward.1} parent=11 // pred_check
          %p1101 = pneg %p265
        $region34: #{backbone_forward.1} parent=11 // pred_check_branch
          %1103 = sbr.rel (%p1101) target = $region36
        $region35: #{backbone_forward.1} parent=11 // pred_region
          %s1105 = ssub.s32 16, 16
          %1106 = vsyncadd [#allocation19], %s1105
          %s1108 = sshll.u32 [#allocation18], 4
          %s1109 = int_to_ptr.vmem [resolvable:$true] %s1108
          %1111 = dma.hbm_to_vmem [thread:$0]  %s13, 16, %s1109, [#allocation19]
        $region36: #{backbone_forward.1} parent=11 // pred_fallthru
          _
        // Predicated region
        $region37: #{backbone_forward.1} parent=11 // pred_check
          %p1112 = pneg %p286
        $region38: #{backbone_forward.1} parent=11 // pred_check_branch
          %1114 = sbr.rel (%p1112) target = $region40
        $region39: #{backbone_forward.1} parent=11 // pred_region
          _
        $region40: #{backbone_forward.1} parent=11 // pred_fallthru
          _
        // Predicated region
        $region41: #{backbone_forward.1} parent=11 // pred_check
          %p1115 = pneg %p307
        $region42: #{backbone_forward.1} parent=11 // pred_check_branch
          %1117 = sbr.rel (%p1115) target = $region44
        $region43: #{backbone_forward.1} parent=11 // pred_region
          %s1119 = ssub.s32 16, 16
          %1120 = vsyncadd [#allocation19], %s1119
          %s1122 = sshll.u32 [#allocation20], 4
          %s1123 = int_to_ptr.vmem [resolvable:$true] %s1122
          %1125 = dma.hbm_to_vmem [thread:$0]  %s17, 16, %s1123, [#allocation19]
        $region44: #{backbone_forward.1} parent=11 // pred_fallthru
          _
        // Predicated region
        $region45: #{backbone_forward.1} parent=11 // pred_check
          %p1126 = pneg %p328
        $region46: #{backbone_forward.1} parent=11 // pred_check_branch
          %1128 = sbr.rel (%p1126) target = $region48
        $region47: #{backbone_forward.1} parent=11 // pred_region
          %s1130 = ssub.s32 16, 16
          %1131 = vsyncadd [#allocation22], %s1130
          %s1133 = sshll.u32 [#allocation21], 4
          %s1134 = int_to_ptr.vmem [resolvable:$true] %s1133
          %1136 = dma.hbm_to_vmem [thread:$0]  %s19, 16, %s1134, [#allocation22]
        $region48: #{backbone_forward.1} parent=11 // pred_fallthru
          _
        // Predicated region
        $region49: #{backbone_forward.1} parent=11 // pred_check
          %p1137 = pneg %p349
        $region50: #{backbone_forward.1} parent=11 // pred_check_branch
          %1139 = sbr.rel (%p1137) target = $region52
        $region51: #{backbone_forward.1} parent=11 // pred_region
          %s1141 = ssub.s32 512, 512
          %1142 = vsyncadd [#allocation22], %s1141
          %s1143 = sshll.u32 [#allocation23], 4
          %s1144 = int_to_ptr.vmem [resolvable:$true] %s1143
          %1149 = dma.hbm_to_vmem [thread:$0]  %s21, 512, %s1144, [#allocation22], 64, 64, 4
        $region52: #{backbone_forward.1} parent=11 // pred_fallthru
          _
        // Predicated region
        $region53: #{backbone_forward.1} parent=11 // pred_check
          %p1150 = pneg %p370
        $region54: #{backbone_forward.1} parent=11 // pred_check_branch
          %1152 = sbr.rel (%p1150) target = $region56
        $region55: #{backbone_forward.1} parent=11 // pred_region
          %s1154 = ssub.s32 16, 16
          %1155 = vsyncadd [#allocation25], %s1154
          %s1157 = sshll.u32 [#allocation24], 4
          %s1158 = int_to_ptr.vmem [resolvable:$true] %s1157
          %1160 = dma.hbm_to_vmem [thread:$0]  %s23, 16, %s1158, [#allocation25]
        $region56: #{backbone_forward.1} parent=11 // pred_fallthru
          _
        // Predicated region
        $region57: #{backbone_forward.1} parent=11 // pred_check
          %p1161 = pneg %p391
        $region58: #{backbone_forward.1} parent=11 // pred_check_branch
          %1163 = sbr.rel (%p1161) target = $region60
        $region59: #{backbone_forward.1} parent=11 // pred_region
          %s1165 = ssub.s32 16, 16
          %1166 = vsyncadd [#allocation25], %s1165
          %s1168 = sshll.u32 [#allocation26], 4
          %s1169 = int_to_ptr.vmem [resolvable:$true] %s1168
          %1171 = dma.hbm_to_vmem [thread:$0]  %s25, 16, %s1169, [#allocation25]
        $region60: #{backbone_forward.1} parent=11 // pred_fallthru
          _
        // Predicated region
        $region61: #{backbone_forward.1} parent=11 // pred_check
          %p1172 = pneg %p412
        $region62: #{backbone_forward.1} parent=11 // pred_check_branch
          %1174 = sbr.rel (%p1172) target = $region64
        $region63: #{backbone_forward.1} parent=11 // pred_region
          _
        $region64: #{backbone_forward.1} parent=11 // pred_fallthru
          _
        // Predicated region
        $region65: #{backbone_forward.1} parent=11 // pred_check
          %p1175 = pneg %p433
        $region66: #{backbone_forward.1} parent=11 // pred_check_branch
          %1177 = sbr.rel (%p1175) target = $region68
        $region67: #{backbone_forward.1} parent=11 // pred_region
          %s1179 = ssub.s32 16, 16
          %1180 = vsyncadd [#allocation28], %s1179
          %s1182 = sshll.u32 [#allocation27], 4
          %s1183 = int_to_ptr.vmem [resolvable:$true] %s1182
          %1185 = dma.hbm_to_vmem [thread:$0]  %s29, 16, %s1183, [#allocation28]
        $region68: #{backbone_forward.1} parent=11 // pred_fallthru
          _
        // Predicated region
        $region69: #{backbone_forward.1} parent=11 // pred_check
          %p1186 = pneg %p454
        $region70: #{backbone_forward.1} parent=11 // pred_check_branch
          %1188 = sbr.rel (%p1186) target = $region72
        $region71: #{backbone_forward.1} parent=11 // pred_region
          %s1190 = ssub.s32 64, 64
          %1191 = vsyncadd [#allocation28], %s1190
          %s1193 = sshll.u32 [#allocation29], 4
          %s1194 = int_to_ptr.vmem [resolvable:$true] %s1193
          %1196 = dma.hbm_to_vmem [thread:$0]  %s31, 64, %s1194, [#allocation28]
        $region72: #{backbone_forward.1} parent=11 // pred_fallthru
          _
        // Predicated region
        $region73: #{backbone_forward.1} parent=11 // pred_check
          %p1197 = pneg %p475
        $region74: #{backbone_forward.1} parent=11 // pred_check_branch
          %1199 = sbr.rel (%p1197) target = $region76
        $region75: #{backbone_forward.1} parent=11 // pred_region
          %s1201 = ssub.s32 16, 16
          %1202 = vsyncadd [#allocation31], %s1201
          %s1204 = sshll.u32 [#allocation30], 4
          %s1205 = int_to_ptr.vmem [resolvable:$true] %s1204
          %1207 = dma.hbm_to_vmem [thread:$0]  %s33, 16, %s1205, [#allocation31]
        $region76: #{backbone_forward.1} parent=11 // pred_fallthru
          _
        // Predicated region
        $region77: #{backbone_forward.1} parent=11 // pred_check
          %p1208 = pneg %p496
        $region78: #{backbone_forward.1} parent=11 // pred_check_branch
          %1210 = sbr.rel (%p1208) target = $region80
        $region79: #{backbone_forward.1} parent=11 // pred_region
          _
        $region80: #{backbone_forward.1} parent=11 // pred_fallthru
          _
        // Predicated region
        $region81: #{backbone_forward.1} parent=11 // pred_check
          %p1211 = pneg %p517
        $region82: #{backbone_forward.1} parent=11 // pred_check_branch
          %1213 = sbr.rel (%p1211) target = $region84
        $region83: #{backbone_forward.1} parent=11 // pred_region
          %s1215 = ssub.s32 16, 16
          %1216 = vsyncadd [#allocation31], %s1215
          %s1218 = sshll.u32 [#allocation32], 4
          %s1219 = int_to_ptr.vmem [resolvable:$true] %s1218
          %1221 = dma.hbm_to_vmem [thread:$0]  %s37, 16, %s1219, [#allocation31]
        $region84: #{backbone_forward.1} parent=11 // pred_fallthru
          _
        // Predicated region
        $region85: #{backbone_forward.1} parent=11 // pred_check
          %p1222 = pneg %p538
        $region86: #{backbone_forward.1} parent=11 // pred_check_branch
          %1224 = sbr.rel (%p1222) target = $region88
        $region87: #{backbone_forward.1} parent=11 // pred_region
          %s1226 = ssub.s32 16, 16
          %1227 = vsyncadd [#allocation34], %s1226
          %s1229 = sshll.u32 [#allocation33], 4
          %s1230 = int_to_ptr.vmem [resolvable:$true] %s1229
          %1232 = dma.hbm_to_vmem [thread:$0]  %s39, 16, %s1230, [#allocation34]
        $region88: #{backbone_forward.1} parent=11 // pred_fallthru
          _
        // Predicated region
        $region89: #{backbone_forward.1} parent=11 // pred_check
          %p1233 = pneg %p559
        $region90: #{backbone_forward.1} parent=11 // pred_check_branch
          %1235 = sbr.rel (%p1233) target = $region92
        $region91: #{backbone_forward.1} parent=11 // pred_region
          _
        $region92: #{backbone_forward.1} parent=11 // pred_fallthru
          _
        // Predicated region
        $region93: #{backbone_forward.1} parent=11 // pred_check
          %p1236 = pneg %p580
        $region94: #{backbone_forward.1} parent=11 // pred_check_branch
          %1238 = sbr.rel (%p1236) target = $region96
        $region95: #{backbone_forward.1} parent=11 // pred_region
          %s1240 = ssub.s32 16, 16
          %1241 = vsyncadd [#allocation34], %s1240
          %s1243 = sshll.u32 [#allocation35], 4
          %s1244 = int_to_ptr.vmem [resolvable:$true] %s1243
          %1246 = dma.hbm_to_vmem [thread:$0]  %s43, 16, %s1244, [#allocation34]
        $region96: #{backbone_forward.1} parent=11 // pred_fallthru
          _
        // Predicated region
        $region97: #{backbone_forward.1} parent=11 // pred_check
          %p1247 = pneg %p601
        $region98: #{backbone_forward.1} parent=11 // pred_check_branch
          %1249 = sbr.rel (%p1247) target = $region100
        $region99: #{backbone_forward.1} parent=11 // pred_region
          %s1251 = ssub.s32 16, 16
          %1252 = vsyncadd [#allocation37], %s1251
          %s1254 = sshll.u32 [#allocation36], 4
          %s1255 = int_to_ptr.vmem [resolvable:$true] %s1254
          %1257 = dma.hbm_to_vmem [thread:$0]  %s45, 16, %s1255, [#allocation37]
        $region100: #{backbone_forward.1} parent=11 // pred_fallthru
          _
        // Predicated region
        $region101: #{backbone_forward.1} parent=11 // pred_check
          %p1258 = pneg %p622
        $region102: #{backbone_forward.1} parent=11 // pred_check_branch
          %1260 = sbr.rel (%p1258) target = $region104
        $region103: #{backbone_forward.1} parent=11 // pred_region
          %s1262 = ssub.s32 512, 512
          %1263 = vsyncadd [#allocation37], %s1262
          %s1264 = sshll.u32 [#allocation38], 4
          %s1265 = int_to_ptr.vmem [resolvable:$true] %s1264
          %1270 = dma.hbm_to_vmem [thread:$0]  %s47, 512, %s1265, [#allocation37], 64, 64, 4
        $region104: #{backbone_forward.1} parent=11 // pred_fallthru
          _
        // Predicated region
        $region105: #{backbone_forward.1} parent=11 // pred_check
          %p1271 = pneg %p643
        $region106: #{backbone_forward.1} parent=11 // pred_check_branch
          %1273 = sbr.rel (%p1271) target = $region108
        $region107: #{backbone_forward.1} parent=11 // pred_region
          %s1275 = ssub.s32 16, 16
          %1276 = vsyncadd [#allocation40], %s1275
          %s1278 = sshll.u32 [#allocation39], 4
          %s1279 = int_to_ptr.vmem [resolvable:$true] %s1278
          %1281 = dma.hbm_to_vmem [thread:$0]  %s49, 16, %s1279, [#allocation40]
        $region108: #{backbone_forward.1} parent=11 // pred_fallthru
          _
        // Predicated region
        $region109: #{backbone_forward.1} parent=11 // pred_check
          %p1282 = pneg %p664
        $region110: #{backbone_forward.1} parent=11 // pred_check_branch
          %1284 = sbr.rel (%p1282) target = $region112
        $region111: #{backbone_forward.1} parent=11 // pred_region
          %s1286 = ssub.s32 16, 16
          %1287 = vsyncadd [#allocation40], %s1286
          %s1289 = sshll.u32 [#allocation41], 4
          %s1290 = int_to_ptr.vmem [resolvable:$true] %s1289
          %1292 = dma.hbm_to_vmem [thread:$0]  %s51, 16, %s1290, [#allocation40]
        $region112: #{backbone_forward.1} parent=11 // pred_fallthru
          _
        // Predicated region
        $region113: #{backbone_forward.1} parent=11 // pred_check
          %p1293 = pneg %p685
        $region114: #{backbone_forward.1} parent=11 // pred_check_branch
          %1295 = sbr.rel (%p1293) target = $region116
        $region115: #{backbone_forward.1} parent=11 // pred_region
          _
        $region116: #{backbone_forward.1} parent=11 // pred_fallthru
          _
        // Predicated region
        $region117: #{backbone_forward.1} parent=11 // pred_check
          %p1296 = pneg %p706
        $region118: #{backbone_forward.1} parent=11 // pred_check_branch
          %1298 = sbr.rel (%p1296) target = $region120
        $region119: #{backbone_forward.1} parent=11 // pred_region
          %s1300 = ssub.s32 16, 16
          %1301 = vsyncadd [#allocation43], %s1300
          %s1303 = sshll.u32 [#allocation42], 4
          %s1304 = int_to_ptr.vmem [resolvable:$true] %s1303
          %1306 = dma.hbm_to_vmem [thread:$0]  %s55, 16, %s1304, [#allocation43]
        $region120: #{backbone_forward.1} parent=11 // pred_fallthru
          _
        // Predicated region
        $region121: #{backbone_forward.1} parent=11 // pred_check
          %p1307 = pneg %p727
        $region122: #{backbone_forward.1} parent=11 // pred_check_branch
          %1309 = sbr.rel (%p1307) target = $region124
        $region123: #{backbone_forward.1} parent=11 // pred_region
          %s1311 = ssub.s32 128, 128
          %1312 = vsyncadd [#allocation43], %s1311
          %s1313 = sshll.u32 [#allocation44], 4
          %s1314 = int_to_ptr.vmem [resolvable:$true] %s1313
          %1319 = dma.hbm_to_vmem [thread:$0]  %s57, 128, %s1314, [#allocation43], 64, 64, 4
        $region124: #{backbone_forward.1} parent=11 // pred_fallthru
          _
        // Predicated region
        $region125: #{backbone_forward.1} parent=11 // pred_check
          %p1320 = pneg %p748
        $region126: #{backbone_forward.1} parent=11 // pred_check_branch
          %1322 = sbr.rel (%p1320) target = $region128
        $region127: #{backbone_forward.1} parent=11 // pred_region
          %s1324 = ssub.s32 16, 16
          %1325 = vsyncadd [#allocation46], %s1324
          %s1327 = sshll.u32 [#allocation45], 4
          %s1328 = int_to_ptr.vmem [resolvable:$true] %s1327
          %1330 = dma.hbm_to_vmem [thread:$0]  %s59, 16, %s1328, [#allocation46]
        $region128: #{backbone_forward.1} parent=11 // pred_fallthru
          _
        // Predicated region
        $region129: #{backbone_forward.1} parent=11 // pred_check
          %p1331 = pneg %p769
        $region130: #{backbone_forward.1} parent=11 // pred_check_branch
          %1333 = sbr.rel (%p1331) target = $region132
        $region131: #{backbone_forward.1} parent=11 // pred_region
          _
        $region132: #{backbone_forward.1} parent=11 // pred_fallthru
          _
        // Predicated region
        $region133: #{backbone_forward.1} parent=11 // pred_check
          %p1334 = pneg %p790
        $region134: #{backbone_forward.1} parent=11 // pred_check_branch
          %1336 = sbr.rel (%p1334) target = $region136
        $region135: #{backbone_forward.1} parent=11 // pred_region
          %s1338 = ssub.s32 32, 32
          %1339 = vsyncadd [#allocation46], %s1338
          %s1341 = sshll.u32 [#allocation47], 4
          %s1342 = int_to_ptr.vmem [resolvable:$true] %s1341
          %1344 = dma.hbm_to_vmem [thread:$0]  %s63, 32, %s1342, [#allocation46]
        $region136: #{backbone_forward.1} parent=11 // pred_fallthru
          _
        // Predicated region
        $region137: #{backbone_forward.1} parent=11 // pred_check
          %p1345 = pneg %p811
        $region138: #{backbone_forward.1} parent=11 // pred_check_branch
          %1347 = sbr.rel (%p1345) target = $region140
        $region139: #{backbone_forward.1} parent=11 // pred_region
          %s1349 = ssub.s32 32, 32
          %1350 = vsyncadd [#allocation49], %s1349
          %s1352 = sshll.u32 [#allocation48], 4
          %s1353 = int_to_ptr.vmem [resolvable:$true] %s1352
          %1355 = dma.hbm_to_vmem [thread:$0]  %s65, 32, %s1353, [#allocation49]
        $region140: #{backbone_forward.1} parent=11 // pred_fallthru
          _
        // Predicated region
        $region141: #{backbone_forward.1} parent=11 // pred_check
          %p1356 = pneg %p832
        $region142: #{backbone_forward.1} parent=11 // pred_check_branch
          %1358 = sbr.rel (%p1356) target = $region144
        $region143: #{backbone_forward.1} parent=11 // pred_region
          %s1360 = ssub.s32 28672, 28672
          %1361 = vsyncadd [#allocation49], %s1360
          %s1362 = sshll.u32 [#allocation50], 4
          %s1363 = int_to_ptr.vmem [resolvable:$true] %s1362
          %1368 = dma.hbm_to_vmem [thread:$0]  %s67, 28672, %s1363, [#allocation49], 128, 128, 8
        $region144: #{backbone_forward.1} parent=11 // pred_fallthru
          _
        // Predicated region
        $region145: #{backbone_forward.1} parent=11 // pred_check
          %p1369 = pneg %p853
        $region146: #{backbone_forward.1} parent=11 // pred_check_branch
          %1371 = sbr.rel (%p1369) target = $region148
        $region147: #{backbone_forward.1} parent=11 // pred_region
          %s1373 = ssub.s32 32, 32
          %1374 = vsyncadd [#allocation52], %s1373
          %s1376 = sshll.u32 [#allocation51], 4
          %s1377 = int_to_ptr.vmem [resolvable:$true] %s1376
          %1379 = dma.hbm_to_vmem [thread:$0]  %s69, 32, %s1377, [#allocation52]
        $region148: #{backbone_forward.1} parent=11 // pred_fallthru
          _
        // Predicated region
        $region149: #{backbone_forward.1} parent=11 // pred_check
          %p1380 = pneg %p874
        $region150: #{backbone_forward.1} parent=11 // pred_check_branch
          %1382 = sbr.rel (%p1380) target = $region152
        $region151: #{backbone_forward.1} parent=11 // pred_region
          %s1384 = ssub.s32 32, 32
          %1385 = vsyncadd [#allocation52], %s1384
          %s1387 = sshll.u32 [#allocation53], 4
          %s1388 = int_to_ptr.vmem [resolvable:$true] %s1387
          %1390 = dma.hbm_to_vmem [thread:$0]  %s71, 32, %s1388, [#allocation52]
        $region152: #{backbone_forward.1} parent=11 // pred_fallthru
          _
        // Predicated region
        $region153: #{backbone_forward.1} parent=11 // pred_check
          %p1391 = pneg %p895
        $region154: #{backbone_forward.1} parent=11 // pred_check_branch
          %1393 = sbr.rel (%p1391) target = $region156
        $region155: #{backbone_forward.1} parent=11 // pred_region
          %s1395 = ssub.s32 2048, 2048
          %1396 = vsyncadd [#allocation55], %s1395
          %s1397 = sshll.u32 [#allocation54], 4
          %s1398 = int_to_ptr.vmem [resolvable:$true] %s1397
          %1403 = dma.hbm_to_vmem [thread:$0]  %s73, 2048, %s1398, [#allocation55], 128, 128, 8
        $region156: #{backbone_forward.1} parent=11 // pred_fallthru
          _
        // Predicated region
        $region157: #{backbone_forward.1} parent=11 // pred_check
          %p1404 = pneg %p916
        $region158: #{backbone_forward.1} parent=11 // pred_check_branch
          %1406 = sbr.rel (%p1404) target = $region160
        $region159: #{backbone_forward.1} parent=11 // pred_region
          %s1408 = ssub.s32 32, 32
          %1409 = vsyncadd [#allocation55], %s1408
          %s1411 = sshll.u32 [#allocation56], 4
          %s1412 = int_to_ptr.vmem [resolvable:$true] %s1411
          %1414 = dma.hbm_to_vmem [thread:$0]  %s75, 32, %s1412, [#allocation55]
        $region160: #{backbone_forward.1} parent=11 // pred_fallthru
          _
        // Predicated region
        $region161: #{backbone_forward.1} parent=11 // pred_check
          %p1415 = pneg %p937
        $region162: #{backbone_forward.1} parent=11 // pred_check_branch
          %1417 = sbr.rel (%p1415) target = $region164
        $region163: #{backbone_forward.1} parent=11 // pred_region
          %s1419 = ssub.s32 32, 32
          %1420 = vsyncadd [#allocation58], %s1419
          %s1422 = sshll.u32 [#allocation57], 4
          %s1423 = int_to_ptr.vmem [resolvable:$true] %s1422
          %1425 = dma.hbm_to_vmem [thread:$0]  %s77, 32, %s1423, [#allocation58]
        $region164: #{backbone_forward.1} parent=11 // pred_fallthru
          _
        // Predicated region
        $region165: #{backbone_forward.1} parent=11 // pred_check
          %p1426 = pneg %p958
        $region166: #{backbone_forward.1} parent=11 // pred_check_branch
          %1428 = sbr.rel (%p1426) target = $region168
        $region167: #{backbone_forward.1} parent=11 // pred_region
          _
        $region168: #{backbone_forward.1} parent=11 // pred_fallthru
          _
        // Predicated region
        $region169: #{backbone_forward.1} parent=11 // pred_check
          %p1429 = pneg %p979
        $region170: #{backbone_forward.1} parent=11 // pred_check_branch
          %1431 = sbr.rel (%p1429) target = $region172
        $region171: #{backbone_forward.1} parent=11 // pred_region
          %s1433 = ssub.s32 16, 16
          %1434 = vsyncadd [#allocation58], %s1433
          %s1436 = sshll.u32 [#allocation59], 4
          %s1437 = int_to_ptr.vmem [resolvable:$true] %s1436
          %1439 = dma.hbm_to_vmem [thread:$0]  %s81, 16, %s1437, [#allocation58]
        $region172: #{backbone_forward.1} parent=11 // pred_fallthru
          _
        // Predicated region
        $region173: #{backbone_forward.1} parent=11 // pred_check
          %p1440 = pneg %p1000
        $region174: #{backbone_forward.1} parent=11 // pred_check_branch
          %1442 = sbr.rel (%p1440) target = $region176
        $region175: #{backbone_forward.1} parent=11 // pred_region
          %s1444 = ssub.s32 512, 512
          %1445 = vsyncadd [#allocation61], %s1444
          %s1446 = sshll.u32 [#allocation60], 4
          %s1447 = int_to_ptr.vmem [resolvable:$true] %s1446
          %1452 = dma.hbm_to_vmem [thread:$0]  %s83, 512, %s1447, [#allocation61], 128, 128, 8
        $region176: #{backbone_forward.1} parent=11 // pred_fallthru
          _
        // Predicated region
        $region177: #{backbone_forward.1} parent=11 // pred_check
          %p1453 = pneg %p1021
        $region178: #{backbone_forward.1} parent=11 // pred_check_branch
          %1455 = sbr.rel (%p1453) target = $region180
        $region179: #{backbone_forward.1} parent=11 // pred_region
          %s1457 = ssub.s32 32, 32
          %1458 = vsyncadd [#allocation61], %s1457
          %s1460 = sshll.u32 [#allocation62], 4
          %s1461 = int_to_ptr.vmem [resolvable:$true] %s1460
          %1463 = dma.hbm_to_vmem [thread:$0]  %s85, 32, %s1461, [#allocation61]
        $region180: #{backbone_forward.1} parent=11 // pred_fallthru
          _
      $region12: #{backbone_forward.1} parent=5 // pred_fallthru
        _
      %p1464 = scmp.lt.s32.totalorder %s113, 2
      // Predicated region
      $region181: #{backbone_forward.1} parent=5 // pred_check
        %p1465 = pneg %p1464
      $region182: #{backbone_forward.1} parent=5 // pred_check_branch
        %1467 = sbr.rel (%p1465) target = $region184
      $region183: #{backbone_forward.1} parent=5 // pred_region
        // Predicated region
        $region185: #{backbone_forward.1} parent=183 // pred_check
          %p1468 = pneg %p133
        $region186: #{backbone_forward.1} parent=183 // pred_check_branch
          %1470 = sbr.rel (%p1468) target = $region188
        $region187: #{backbone_forward.1} parent=183 // pred_region
          %p1471 = scmp.lt.s32.totalorder %s113, 1
          %s1472 = scalar_select %p1471, %s113, 1
          %s1473 = smul.addr %s1472, 8
          %s1474 = smul.addr %s1473, 8
          %s1475 = scalar_lea.vmem %s1, %s1474
        $region188: #{backbone_forward.1} parent=183 // pred_fallthru
          _
      $region184: #{backbone_forward.1} parent=5 // pred_fallthru
        _
      %p1476 = scmp.le.s32.totalorder 1, %s113
      %p1477 = scmp.lt.s32.totalorder %s113, 3
      %p1478 = pnand %p1476, %p1477
      %p1479 = pneg %p1478
      // Predicated region
      $region189: #{backbone_forward.1} parent=5 // pred_check
        _
      $region190: #{backbone_forward.1} parent=5 // pred_check_branch
        %1481 = sbr.rel (%p1478) target = $region192
      $region191: #{backbone_forward.1} parent=5 // pred_region
        %s1482 = ssub.s32 %s113, 1
        // Predicated region
        $region193: #{backbone_forward.1} parent=191 // pred_check
          %p1483 = pneg %p181
        $region194: #{backbone_forward.1} parent=191 // pred_check_branch
          %1485 = sbr.rel (%p1483) target = $region196
        $region195: #{backbone_forward.1} parent=191 // pred_region
          %1486 = dma.done [#allocation13], 16
        $region196: #{backbone_forward.1} parent=191 // pred_fallthru
          _
        // Predicated region
        $region197: #{backbone_forward.1} parent=191 // pred_check
          %p1487 = pneg %p202
        $region198: #{backbone_forward.1} parent=191 // pred_check_branch
          %1489 = sbr.rel (%p1487) target = $region200
        $region199: #{backbone_forward.1} parent=191 // pred_region
          %1490 = dma.done [#allocation16], 16
        $region200: #{backbone_forward.1} parent=191 // pred_fallthru
          _
        // Predicated region
        $region201: #{backbone_forward.1} parent=191 // pred_check
          %p1491 = pneg %p244
        $region202: #{backbone_forward.1} parent=191 // pred_check_branch
          %1493 = sbr.rel (%p1491) target = $region204
        $region203: #{backbone_forward.1} parent=191 // pred_region
          %1494 = dma.done [#allocation16], 16
        $region204: #{backbone_forward.1} parent=191 // pred_fallthru
          _
        // Predicated region
        $region205: #{backbone_forward.1} parent=191 // pred_check
          %p1495 = pneg %p265
        $region206: #{backbone_forward.1} parent=191 // pred_check_branch
          %1497 = sbr.rel (%p1495) target = $region208
        $region207: #{backbone_forward.1} parent=191 // pred_region
          %1498 = dma.done [#allocation19], 16
        $region208: #{backbone_forward.1} parent=191 // pred_fallthru
          _
        // Predicated region
        $region209: #{backbone_forward.1} parent=191 // pred_check
          %p1499 = pneg %p307
        $region210: #{backbone_forward.1} parent=191 // pred_check_branch
          %1501 = sbr.rel (%p1499) target = $region212
        $region211: #{backbone_forward.1} parent=191 // pred_region
          %1502 = dma.done [#allocation19], 16
        $region212: #{backbone_forward.1} parent=191 // pred_fallthru
          _
        // Predicated region
        $region213: #{backbone_forward.1} parent=191 // pred_check
          %p1503 = pneg %p328
        $region214: #{backbone_forward.1} parent=191 // pred_check_branch
          %1505 = sbr.rel (%p1503) target = $region216
        $region215: #{backbone_forward.1} parent=191 // pred_region
          %1506 = dma.done [#allocation22], 16
        $region216: #{backbone_forward.1} parent=191 // pred_fallthru
          _
        // Predicated region
        $region217: #{backbone_forward.1} parent=191 // pred_check
          %p1507 = pneg %p349
        $region218: #{backbone_forward.1} parent=191 // pred_check_branch
          %1509 = sbr.rel (%p1507) target = $region220
        $region219: #{backbone_forward.1} parent=191 // pred_region
          %1510 = dma.done [#allocation22], 512
        $region220: #{backbone_forward.1} parent=191 // pred_fallthru
          _
        // Predicated region
        $region221: #{backbone_forward.1} parent=191 // pred_check
          %p1511 = pneg %p370
        $region222: #{backbone_forward.1} parent=191 // pred_check_branch
          %1513 = sbr.rel (%p1511) target = $region224
        $region223: #{backbone_forward.1} parent=191 // pred_region
          %1514 = dma.done [#allocation25], 16
        $region224: #{backbone_forward.1} parent=191 // pred_fallthru
          _
        // Predicated region
        $region225: #{backbone_forward.1} parent=191 // pred_check
          %p1515 = pneg %p391
        $region226: #{backbone_forward.1} parent=191 // pred_check_branch
          %1517 = sbr.rel (%p1515) target = $region228
        $region227: #{backbone_forward.1} parent=191 // pred_region
          %1518 = dma.done [#allocation25], 16
        $region228: #{backbone_forward.1} parent=191 // pred_fallthru
          _
        // Predicated region
        $region229: #{backbone_forward.1} parent=191 // pred_check
          %p1519 = pneg %p433
        $region230: #{backbone_forward.1} parent=191 // pred_check_branch
          %1521 = sbr.rel (%p1519) target = $region232
        $region231: #{backbone_forward.1} parent=191 // pred_region
          %1522 = dma.done [#allocation28], 16
        $region232: #{backbone_forward.1} parent=191 // pred_fallthru
          _
        // Predicated region
        $region233: #{backbone_forward.1} parent=191 // pred_check
          %p1523 = pneg %p454
        $region234: #{backbone_forward.1} parent=191 // pred_check_branch
          %1525 = sbr.rel (%p1523) target = $region236
        $region235: #{backbone_forward.1} parent=191 // pred_region
          %1526 = dma.done [#allocation28], 64
        $region236: #{backbone_forward.1} parent=191 // pred_fallthru
          _
        // Predicated region
        $region237: #{backbone_forward.1} parent=191 // pred_check
          %p1527 = pneg %p475
        $region238: #{backbone_forward.1} parent=191 // pred_check_branch
          %1529 = sbr.rel (%p1527) target = $region240
        $region239: #{backbone_forward.1} parent=191 // pred_region
          %1530 = dma.done [#allocation31], 16
        $region240: #{backbone_forward.1} parent=191 // pred_fallthru
          _
        // Predicated region
        $region241: #{backbone_forward.1} parent=191 // pred_check
          %p1531 = pneg %p517
        $region242: #{backbone_forward.1} parent=191 // pred_check_branch
          %1533 = sbr.rel (%p1531) target = $region244
        $region243: #{backbone_forward.1} parent=191 // pred_region
          %1534 = dma.done [#allocation31], 16
        $region244: #{backbone_forward.1} parent=191 // pred_fallthru
          _
        // Predicated region
        $region245: #{backbone_forward.1} parent=191 // pred_check
          %p1535 = pneg %p538
        $region246: #{backbone_forward.1} parent=191 // pred_check_branch
          %1537 = sbr.rel (%p1535) target = $region248
        $region247: #{backbone_forward.1} parent=191 // pred_region
          %1538 = dma.done [#allocation34], 16
        $region248: #{backbone_forward.1} parent=191 // pred_fallthru
          _
        // Predicated region
        $region249: #{backbone_forward.1} parent=191 // pred_check
          %p1539 = pneg %p580
        $region250: #{backbone_forward.1} parent=191 // pred_check_branch
          %1541 = sbr.rel (%p1539) target = $region252
        $region251: #{backbone_forward.1} parent=191 // pred_region
          %1542 = dma.done [#allocation34], 16
        $region252: #{backbone_forward.1} parent=191 // pred_fallthru
          _
        // Predicated region
        $region253: #{backbone_forward.1} parent=191 // pred_check
          %p1543 = pneg %p601
        $region254: #{backbone_forward.1} parent=191 // pred_check_branch
          %1545 = sbr.rel (%p1543) target = $region256
        $region255: #{backbone_forward.1} parent=191 // pred_region
          %1546 = dma.done [#allocation37], 16
        $region256: #{backbone_forward.1} parent=191 // pred_fallthru
          _
        // Predicated region
        $region257: #{backbone_forward.1} parent=191 // pred_check
          %p1547 = pneg %p622
        $region258: #{backbone_forward.1} parent=191 // pred_check_branch
          %1549 = sbr.rel (%p1547) target = $region260
        $region259: #{backbone_forward.1} parent=191 // pred_region
          %1550 = dma.done [#allocation37], 512
        $region260: #{backbone_forward.1} parent=191 // pred_fallthru
          _
        // Predicated region
        $region261: #{backbone_forward.1} parent=191 // pred_check
          %p1551 = pneg %p643
        $region262: #{backbone_forward.1} parent=191 // pred_check_branch
          %1553 = sbr.rel (%p1551) target = $region264
        $region263: #{backbone_forward.1} parent=191 // pred_region
          %1554 = dma.done [#allocation40], 16
        $region264: #{backbone_forward.1} parent=191 // pred_fallthru
          _
        // Predicated region
        $region265: #{backbone_forward.1} parent=191 // pred_check
          %p1555 = pneg %p664
        $region266: #{backbone_forward.1} parent=191 // pred_check_branch
          %1557 = sbr.rel (%p1555) target = $region268
        $region267: #{backbone_forward.1} parent=191 // pred_region
          %1558 = dma.done [#allocation40], 16
        $region268: #{backbone_forward.1} parent=191 // pred_fallthru
          _
        // Predicated region
        $region269: #{backbone_forward.1} parent=191 // pred_check
          %p1559 = pneg %p706
        $region270: #{backbone_forward.1} parent=191 // pred_check_branch
          %1561 = sbr.rel (%p1559) target = $region272
        $region271: #{backbone_forward.1} parent=191 // pred_region
          %1562 = dma.done [#allocation43], 16
        $region272: #{backbone_forward.1} parent=191 // pred_fallthru
          _
        // Predicated region
        $region273: #{backbone_forward.1} parent=191 // pred_check
          %p1563 = pneg %p727
        $region274: #{backbone_forward.1} parent=191 // pred_check_branch
          %1565 = sbr.rel (%p1563) target = $region276
        $region275: #{backbone_forward.1} parent=191 // pred_region
          %1566 = dma.done [#allocation43], 128
        $region276: #{backbone_forward.1} parent=191 // pred_fallthru
          _
        // Predicated region
        $region277: #{backbone_forward.1} parent=191 // pred_check
          %p1567 = pneg %p748
        $region278: #{backbone_forward.1} parent=191 // pred_check_branch
          %1569 = sbr.rel (%p1567) target = $region280
        $region279: #{backbone_forward.1} parent=191 // pred_region
          %1570 = dma.done [#allocation46], 16
        $region280: #{backbone_forward.1} parent=191 // pred_fallthru
          _
        // Predicated region
        $region281: #{backbone_forward.1} parent=191 // pred_check
          %p1571 = pneg %p790
        $region282: #{backbone_forward.1} parent=191 // pred_check_branch
          %1573 = sbr.rel (%p1571) target = $region284
        $region283: #{backbone_forward.1} parent=191 // pred_region
          %1574 = dma.done [#allocation46], 32
        $region284: #{backbone_forward.1} parent=191 // pred_fallthru
          _
        // Predicated region
        $region285: #{backbone_forward.1} parent=191 // pred_check
          %p1575 = pneg %p811
        $region286: #{backbone_forward.1} parent=191 // pred_check_branch
          %1577 = sbr.rel (%p1575) target = $region288
        $region287: #{backbone_forward.1} parent=191 // pred_region
          %1578 = dma.done [#allocation49], 32
        $region288: #{backbone_forward.1} parent=191 // pred_fallthru
          _
        // Predicated region
        $region289: #{backbone_forward.1} parent=191 // pred_check
          %p1579 = pneg %p832
        $region290: #{backbone_forward.1} parent=191 // pred_check_branch
          %1581 = sbr.rel (%p1579) target = $region292
        $region291: #{backbone_forward.1} parent=191 // pred_region
          %1582 = dma.done [#allocation49], 28672
        $region292: #{backbone_forward.1} parent=191 // pred_fallthru
          _
        // Predicated region
        $region293: #{backbone_forward.1} parent=191 // pred_check
          %p1583 = pneg %p853
        $region294: #{backbone_forward.1} parent=191 // pred_check_branch
          %1585 = sbr.rel (%p1583) target = $region296
        $region295: #{backbone_forward.1} parent=191 // pred_region
          %1586 = dma.done [#allocation52], 32
        $region296: #{backbone_forward.1} parent=191 // pred_fallthru
          _
        // Predicated region
        $region297: #{backbone_forward.1} parent=191 // pred_check
          %p1587 = pneg %p874
        $region298: #{backbone_forward.1} parent=191 // pred_check_branch
          %1589 = sbr.rel (%p1587) target = $region300
        $region299: #{backbone_forward.1} parent=191 // pred_region
          %1590 = dma.done [#allocation52], 32
        $region300: #{backbone_forward.1} parent=191 // pred_fallthru
          _
        // Predicated region
        $region301: #{backbone_forward.1} parent=191 // pred_check
          %p1591 = pneg %p895
        $region302: #{backbone_forward.1} parent=191 // pred_check_branch
          %1593 = sbr.rel (%p1591) target = $region304
        $region303: #{backbone_forward.1} parent=191 // pred_region
          %1594 = dma.done [#allocation55], 2048
        $region304: #{backbone_forward.1} parent=191 // pred_fallthru
          _
        // Predicated region
        $region305: #{backbone_forward.1} parent=191 // pred_check
          %p1595 = pneg %p916
        $region306: #{backbone_forward.1} parent=191 // pred_check_branch
          %1597 = sbr.rel (%p1595) target = $region308
        $region307: #{backbone_forward.1} parent=191 // pred_region
          %1598 = dma.done [#allocation55], 32
        $region308: #{backbone_forward.1} parent=191 // pred_fallthru
          _
        // Predicated region
        $region309: #{backbone_forward.1} parent=191 // pred_check
          %p1599 = pneg %p937
        $region310: #{backbone_forward.1} parent=191 // pred_check_branch
          %1601 = sbr.rel (%p1599) target = $region312
        $region311: #{backbone_forward.1} parent=191 // pred_region
          %1602 = dma.done [#allocation58], 32
        $region312: #{backbone_forward.1} parent=191 // pred_fallthru
          _
        // Predicated region
        $region313: #{backbone_forward.1} parent=191 // pred_check
          %p1603 = pneg %p979
        $region314: #{backbone_forward.1} parent=191 // pred_check_branch
          %1605 = sbr.rel (%p1603) target = $region316
        $region315: #{backbone_forward.1} parent=191 // pred_region
          %1606 = dma.done [#allocation58], 16
        $region316: #{backbone_forward.1} parent=191 // pred_fallthru
          _
        // Predicated region
        $region317: #{backbone_forward.1} parent=191 // pred_check
          %p1607 = pneg %p1000
        $region318: #{backbone_forward.1} parent=191 // pred_check_branch
          %1609 = sbr.rel (%p1607) target = $region320
        $region319: #{backbone_forward.1} parent=191 // pred_region
          %1610 = dma.done [#allocation61], 512
        $region320: #{backbone_forward.1} parent=191 // pred_fallthru
          _
        // Predicated region
        $region321: #{backbone_forward.1} parent=191 // pred_check
          %p1611 = pneg %p1021
        $region322: #{backbone_forward.1} parent=191 // pred_check_branch
          %1613 = sbr.rel (%p1611) target = $region324
        $region323: #{backbone_forward.1} parent=191 // pred_region
          %1614 = dma.done [#allocation61], 32
        $region324: #{backbone_forward.1} parent=191 // pred_fallthru
          _
        %p1615 = scmp.lt.s32.totalorder %s118, 1
        %s1616 = scalar_select %p1615, %s118, 1
        %s1617 = smul.addr %s1616, 8
        %s1618 = smul.addr %s1617, 8
        %s1619 = scalar_lea.vmem %s1, %s1618
        %p1620 = pneg %p139
        %p1621 = pneg %p136
        %p1622 = pneg %p160
        %p1623 = pneg %p157
        %p1624 = pneg %p181
        %p1625 = pneg %p178
        %p1626 = pneg %p202
        %p1627 = pneg %p199
        %p1628 = pneg %p223
        %p1629 = pneg %p220
        %p1630 = pneg %p244
        %p1631 = pneg %p241
        %p1632 = pneg %p265
        %p1633 = pneg %p262
        %p1634 = pneg %p286
        %p1635 = pneg %p283
        %p1636 = pneg %p307
        %p1637 = pneg %p304
        %p1638 = pneg %p328
        %p1639 = pneg %p325
        %p1640 = pneg %p349
        %p1641 = pneg %p346
        %p1642 = pneg %p370
        %p1643 = pneg %p367
        %p1644 = pneg %p391
        %p1645 = pneg %p388
        %p1646 = pneg %p412
        %p1647 = pneg %p409
        %p1648 = pneg %p433
        %p1649 = pneg %p430
        %p1650 = pneg %p454
        %p1651 = pneg %p451
        %p1652 = pneg %p475
        %p1653 = pneg %p472
        %p1654 = pneg %p496
        %p1655 = pneg %p493
        %p1656 = pneg %p517
        %p1657 = pneg %p514
        %p1658 = pneg %p538
        %p1659 = pneg %p535
        %p1660 = pneg %p559
        %p1661 = pneg %p556
        %p1662 = pneg %p580
        %p1663 = pneg %p577
        %p1664 = pneg %p601
        %p1665 = pneg %p598
        %p1666 = pneg %p622
        %p1667 = pneg %p619
        %p1668 = pneg %p643
        %p1669 = pneg %p640
        %p1670 = pneg %p664
        %p1671 = pneg %p661
        %p1672 = pneg %p685
        %p1673 = pneg %p682
        %p1674 = pneg %p706
        %p1675 = pneg %p703
        %p1676 = pneg %p727
        %p1677 = pneg %p724
        %p1678 = pneg %p748
        %p1679 = pneg %p745
        %p1680 = pneg %p769
        %p1681 = pneg %p766
        %p1682 = pneg %p790
        %p1683 = pneg %p787
        %p1684 = pneg %p811
        %p1685 = pneg %p808
        %p1686 = pneg %p832
        %p1687 = pneg %p829
        %p1688 = pneg %p853
        %p1689 = pneg %p850
        %p1690 = pneg %p874
        %p1691 = pneg %p871
        %p1692 = pneg %p895
        %p1693 = pneg %p892
        %p1694 = pneg %p916
        %p1695 = pneg %p913
        %p1696 = pneg %p937
        %p1697 = pneg %p934
        %p1698 = pneg %p958
        %p1699 = pneg %p955
        %p1700 = pneg %p979
        %p1701 = pneg %p976
        %p1702 = pneg %p1000
        %p1703 = pneg %p997
        %p1704 = pneg %p1021
        %p1705 = pneg %p1018
        %p1706 = pneg %p1047
        %p1707 = pneg %p1044
        %s1708 = sand.u32 %s1034, 1
        %s1709 = scalar_lea.sflag [#allocation14], %s1708
        %s1710 = sand.u32 %s1034, 1
        %s1711 = smul.addr %s1710, 8
        %s1712 = scalar_lea.vmem [#allocation63], %s1711
        %p1713 = scmp.lt.s32.totalorder %s118, 1
        %s1714 = scalar_select %p1713, %s118, 1
        %s1715 = smul.addr %s1714, 8
        %s1716 = smul.addr %s1715, 8
        %s1717 = scalar_lea.vmem %s1, %s1716
        %vm1719 = vcmask 64512
        %1720 = vst.msk [vmem:[#allocation2] sm:$0xff] %vm1719, 0.0
        %1721 = vst.msk [vmem:[#allocation2 + $0x48] sm:$0xff] %vm1719, 0.0
        %vm1722 = vcmask 523264
        %1723 = vst.msk [vmem:[#allocation3] sm:$0xff] %vm1722, 0.0
        %1724 = vst.msk [vmem:[#allocation4] sm:$0xff] %vm1722, 0.0
        %1725 = vst.msk [vmem:[#allocation4 + $0x28] sm:$0xff] %vm1722, 0.0
        %1726 = vst.msk [vmem:[#allocation5] sm:$0xff] %vm1722, 0.0
        %1727 = vst.msk [vmem:[#allocation5 + $0x18] sm:$0xff] %vm1722, 0.0
        %1728 = vst.msk [vmem:[#allocation6] sm:$0xff] %vm1722, 0.0
        %1729 = vst.msk [vmem:[#allocation6 + $0x18] sm:$0xff] %vm1722, 0.0
        %1730 = vst [vmem:[#allocation7] sm:$0xff] 0.0
        %1731 = vst [vmem:[#allocation7 + $0x10] sm:$0xff] 0.0
        %1732 = vst [vmem:[#allocation8] sm:$0xff] 0.0
        %1733 = vst [vmem:[#allocation8 + $0x10] sm:$0xff] 0.0
        %1734 = vst [vmem:[#allocation9] sm:$0xff] 0.0
        %1735 = vst [vmem:[#allocation9 + $0x8] sm:$0xff] 0.0
        %1736 = vst [vmem:[#allocation9 + $0x10] sm:$0xf0] 0.0
        %1737 = vst [vmem:[#allocation9 + $0x18] sm:$0xf0] 0.0
        %1738 = vst [vmem:[#allocation9 + $0x20] sm:$0xf] 0.0
        %1739 = vst [vmem:[#allocation9 + $0x28] sm:$0xf] 0.0
        %v1740 = vld [vmem:[%s1717] sm:$0xff]
        %v1741 = vld [vmem:[%s1717 + $0x8] sm:$0xff]
        %v1742 = vld [vmem:[%s1717 + $0x10] sm:$0xff]
        %v1743 = vld [vmem:[%s1717 + $0x18] sm:$0xff]
        %v1744 = vld [vmem:[%s1717 + $0x20] sm:$0xff]
        %v1745 = vld [vmem:[%s1717 + $0x28] sm:$0xff]
        %v1746 = vld [vmem:[%s1717 + $0x30] sm:$0xff]
        %v1747 = vld [vmem:[%s1717 + $0x38] sm:$0xff]
        %1748 = vst.msk [vmem:[#allocation2 + $0x8] sm:$0xff] %vm1719, %v1740
        %1749 = vst.msk [vmem:[#allocation2 + $0x10] sm:$0xff] %vm1719, %v1741
        %1750 = vst.msk [vmem:[#allocation2 + $0x18] sm:$0xff] %vm1719, %v1742
        %1751 = vst.msk [vmem:[#allocation2 + $0x20] sm:$0xff] %vm1719, %v1743
        %1752 = vst.msk [vmem:[#allocation2 + $0x28] sm:$0xff] %vm1719, %v1744
        %1753 = vst.msk [vmem:[#allocation2 + $0x30] sm:$0xff] %vm1719, %v1745
        %1754 = vst.msk [vmem:[#allocation2 + $0x38] sm:$0xff] %vm1719, %v1746
        %1755 = vst.msk [vmem:[#allocation2 + $0x40] sm:$0xff] %vm1719, %v1747
        %v1756 = vld [vmem:[#allocation2 + $0x6] sm:$0xff]
        %v1757 = vld [vmem:[#allocation2 + $0xe] sm:$0xff]
        %v1758 = vld [vmem:[#allocation2 + $0x16] sm:$0xff]
        %v1759 = vld [vmem:[#allocation2 + $0x1e] sm:$0xff]
        %v1760 = vld [vmem:[#allocation2 + $0x26] sm:$0xff]
        %v1761 = vld [vmem:[#allocation2 + $0x2e] sm:$0xff]
        %v1762 = vld [vmem:[#allocation2 + $0x36] sm:$0xff]
        %v1763 = vld [vmem:[#allocation2 + $0x3e] sm:$0xff]
        %1764 = vst.msk [vmem:[#allocation10] sm:$0xff] %vm1719, %v1756
        %1765 = vst.msk [vmem:[#allocation10 + $0x8] sm:$0xff] %vm1719, %v1757
        %1766 = vst.msk [vmem:[#allocation10 + $0x10] sm:$0xff] %vm1719, %v1758
        %1767 = vst.msk [vmem:[#allocation10 + $0x18] sm:$0xff] %vm1719, %v1759
        %1768 = vst.msk [vmem:[#allocation10 + $0x20] sm:$0xff] %vm1719, %v1760
        %1769 = vst.msk [vmem:[#allocation10 + $0x28] sm:$0xff] %vm1719, %v1761
        %1770 = vst.msk [vmem:[#allocation10 + $0x30] sm:$0xff] %vm1719, %v1762
        %1771 = vst.msk [vmem:[#allocation10 + $0x38] sm:$0xff] %vm1719, %v1763
        %v1772 = vld [vmem:[#allocation2 + $0x7] sm:$0xff]
        %v1773 = vld [vmem:[#allocation2 + $0xf] sm:$0xff]
        %v1774 = vld [vmem:[#allocation2 + $0x17] sm:$0xff]
        %v1775 = vld [vmem:[#allocation2 + $0x1f] sm:$0xff]
        %v1776 = vld [vmem:[#allocation2 + $0x27] sm:$0xff]
        %v1777 = vld [vmem:[#allocation2 + $0x2f] sm:$0xff]
        %v1778 = vld [vmem:[#allocation2 + $0x37] sm:$0xff]
        %v1779 = vld [vmem:[#allocation2 + $0x3f] sm:$0xff]
        %1788 = vrot.lane.b32.xlu0 %v1772, 8
        %v1789 = vpop.permute.xlu0 %1788
        %1790 = vrot.lane.b32.xlu0 %v1773, 8
        %v1791 = vpop.permute.xlu0 %1790
        %1792 = vrot.lane.b32.xlu0 %v1774, 8
        %v1793 = vpop.permute.xlu0 %1792
        %1794 = vrot.lane.b32.xlu0 %v1775, 8
        %v1795 = vpop.permute.xlu0 %1794
        %1796 = vrot.lane.b32.xlu0 %v1776, 8
        %v1797 = vpop.permute.xlu0 %1796
        %1798 = vrot.lane.b32.xlu0 %v1777, 8
        %v1799 = vpop.permute.xlu0 %1798
        %1800 = vrot.lane.b32.xlu0 %v1778, 8
        %v1801 = vpop.permute.xlu0 %1800
        %1802 = vrot.lane.b32.xlu0 %v1779, 8
        %v1803 = vpop.permute.xlu0 %1802
        %vm1812 = vcmask 130112
        %1813 = vst.msk [vmem:[#allocation10] sm:$0xff] %vm1812, %v1789
        %1814 = vst.msk [vmem:[#allocation10 + $0x8] sm:$0xff] %vm1812, %v1791
        %1815 = vst.msk [vmem:[#allocation10 + $0x10] sm:$0xff] %vm1812, %v1793
        %1816 = vst.msk [vmem:[#allocation10 + $0x18] sm:$0xff] %vm1812, %v1795
        %1817 = vst.msk [vmem:[#allocation10 + $0x20] sm:$0xff] %vm1812, %v1797
        %1818 = vst.msk [vmem:[#allocation10 + $0x28] sm:$0xff] %vm1812, %v1799
        %1819 = vst.msk [vmem:[#allocation10 + $0x30] sm:$0xff] %vm1812, %v1801
        %1820 = vst.msk [vmem:[#allocation10 + $0x38] sm:$0xff] %vm1812, %v1803
        %v1821 = vld [vmem:[#allocation2 + $0x8] sm:$0xff]
        %v1822 = vld [vmem:[#allocation2 + $0x10] sm:$0xff]
        %v1823 = vld [vmem:[#allocation2 + $0x18] sm:$0xff]
        %v1824 = vld [vmem:[#allocation2 + $0x20] sm:$0xff]
        %v1825 = vld [vmem:[#allocation2 + $0x28] sm:$0xff]
        %v1826 = vld [vmem:[#allocation2 + $0x30] sm:$0xff]
        %v1827 = vld [vmem:[#allocation2 + $0x38] sm:$0xff]
        %v1828 = vld [vmem:[#allocation2 + $0x40] sm:$0xff]
        %1837 = vrot.lane.b32.xlu0 %v1821, 16
        %v1838 = vpop.permute.xlu0 %1837
        %1839 = vrot.lane.b32.xlu0 %v1822, 16
        %v1840 = vpop.permute.xlu0 %1839
        %1841 = vrot.lane.b32.xlu0 %v1823, 16
        %v1842 = vpop.permute.xlu0 %1841
        %1843 = vrot.lane.b32.xlu0 %v1824, 16
        %v1844 = vpop.permute.xlu0 %1843
        %1845 = vrot.lane.b32.xlu0 %v1825, 16
        %v1846 = vpop.permute.xlu0 %1845
        %1847 = vrot.lane.b32.xlu0 %v1826, 16
        %v1848 = vpop.permute.xlu0 %1847
        %1849 = vrot.lane.b32.xlu0 %v1827, 16
        %v1850 = vpop.permute.xlu0 %1849
        %1851 = vrot.lane.b32.xlu0 %v1828, 16
        %v1852 = vpop.permute.xlu0 %1851
        %vm1861 = vcmask 195712
        %1862 = vst.msk [vmem:[#allocation10] sm:$0xff] %vm1861, %v1838
        %1863 = vst.msk [vmem:[#allocation10 + $0x8] sm:$0xff] %vm1861, %v1840
        %1864 = vst.msk [vmem:[#allocation10 + $0x10] sm:$0xff] %vm1861, %v1842
        %1865 = vst.msk [vmem:[#allocation10 + $0x18] sm:$0xff] %vm1861, %v1844
        %1866 = vst.msk [vmem:[#allocation10 + $0x20] sm:$0xff] %vm1861, %v1846
        %1867 = vst.msk [vmem:[#allocation10 + $0x28] sm:$0xff] %vm1861, %v1848
        %1868 = vst.msk [vmem:[#allocation10 + $0x30] sm:$0xff] %vm1861, %v1850
        %1869 = vst.msk [vmem:[#allocation10 + $0x38] sm:$0xff] %vm1861, %v1852
        %v1870 = vld [vmem:[#allocation2 + $0x9] sm:$0xff]
        %v1871 = vld [vmem:[#allocation2 + $0x11] sm:$0xff]
        %v1872 = vld [vmem:[#allocation2 + $0x19] sm:$0xff]
        %v1873 = vld [vmem:[#allocation2 + $0x21] sm:$0xff]
        %v1874 = vld [vmem:[#allocation2 + $0x29] sm:$0xff]
        %v1875 = vld [vmem:[#allocation2 + $0x31] sm:$0xff]
        %v1876 = vld [vmem:[#allocation2 + $0x39] sm:$0xff]
        %v1877 = vld [vmem:[#allocation2 + $0x41] sm:$0xff]
        %1886 = vrot.lane.b32.xlu0 %v1870, 24
        %v1887 = vpop.permute.xlu0 %1886
        %1888 = vrot.lane.b32.xlu0 %v1871, 24
        %v1889 = vpop.permute.xlu0 %1888
        %1890 = vrot.lane.b32.xlu0 %v1872, 24
        %v1891 = vpop.permute.xlu0 %1890
        %1892 = vrot.lane.b32.xlu0 %v1873, 24
        %v1893 = vpop.permute.xlu0 %1892
        %1894 = vrot.lane.b32.xlu0 %v1874, 24
        %v1895 = vpop.permute.xlu0 %1894
        %1896 = vrot.lane.b32.xlu0 %v1875, 24
        %v1897 = vpop.permute.xlu0 %1896
        %1898 = vrot.lane.b32.xlu0 %v1876, 24
        %v1899 = vpop.permute.xlu0 %1898
        %1900 = vrot.lane.b32.xlu0 %v1877, 24
        %v1901 = vpop.permute.xlu0 %1900
        %vm1910 = vcmask 261312
        %1911 = vst.msk [vmem:[#allocation10] sm:$0xff] %vm1910, %v1887
        %1912 = vst.msk [vmem:[#allocation10 + $0x8] sm:$0xff] %vm1910, %v1889
        %1913 = vst.msk [vmem:[#allocation10 + $0x10] sm:$0xff] %vm1910, %v1891
        %1914 = vst.msk [vmem:[#allocation10 + $0x18] sm:$0xff] %vm1910, %v1893
        %1915 = vst.msk [vmem:[#allocation10 + $0x20] sm:$0xff] %vm1910, %v1895
        %1916 = vst.msk [vmem:[#allocation10 + $0x28] sm:$0xff] %vm1910, %v1897
        %1917 = vst.msk [vmem:[#allocation10 + $0x30] sm:$0xff] %vm1910, %v1899
        %1918 = vst.msk [vmem:[#allocation10 + $0x38] sm:$0xff] %vm1910, %v1901
        %v1919 = vld [vmem:[#allocation10] sm:$0xff]
        %v1920 = vld [vmem:[#allocation10 + $0x8] sm:$0xff]
        %v1921 = vld [vmem:[#allocation10 + $0x10] sm:$0xff]
        %v1922 = vld [vmem:[#allocation10 + $0x18] sm:$0xff]
        %v1923 = vld [vmem:[#allocation10 + $0x20] sm:$0xff]
        %v1924 = vld [vmem:[#allocation10 + $0x28] sm:$0xff]
        %v1925 = vld [vmem:[#allocation10 + $0x30] sm:$0xff]
        %v1926 = vld [vmem:[#allocation10 + $0x38] sm:$0xff]
        %v1927 = vpack.c.bf16 %v1920, %v1919
        %v1928 = vpack.c.bf16 %v1922, %v1921
        %v1929 = vpack.c.bf16 %v1924, %v1923
        %v1930 = vpack.c.bf16 %v1926, %v1925
        %v1931 = vld [vmem:[%s3] sm:$0xf]
        %v1932 = vld [vmem:[%s3 + $0x4] sm:$0xf]
        %v1933 = vld [vmem:[%s3 + $0x8] sm:$0xf]
        %v1934 = vld [vmem:[%s3 + $0xc] sm:$0xf]
        %v1939 = vunpack.c.l.b16 %v1931
        %v1940 = vunpack.c.l.b16 %v1932
        %v1941 = vunpack.c.l.b16 %v1933
        %v1942 = vunpack.c.l.b16 %v1934
        %v1943 = vpack.c.b16 %v1940, %v1939
        %v1944 = vpack.c.b16 %v1942, %v1941
        %vm1947 = vcmask 261120
        %v1949 = vsel %vm1947, %v1927, 0
        %v1952 = vsel %vm1947, %v1928, 0
        %v1955 = vsel %vm1947, %v1929, 0
        %v1958 = vsel %vm1947, %v1930, 0
        %1960 = vmatprep.subr.bf16.mxu0 0
        %1961 = vmatpush1.bf16.msra.mxu0 %v1943
        %1962 = vmatprep.subr.bf16.mxu0 0
        %1963 = vmatpush1.bf16.msra.mxu0 %v1944
        %1964 = vmatprep.subr.bf16.mxu0 0
        %1965 = vmatpush1.bf16.msra.mxu0 0
        %1966 = vmatprep.subr.bf16.mxu0 0
        %1967 = vmatpush1.bf16.msra.mxu0 0
        %1968 = vmatprep.subr.bf16.mxu0 0
        %1969 = vmatpush1.bf16.msra.mxu0 0
        %1970 = vmatprep.subr.bf16.mxu0 0
        %1971 = vmatpush1.bf16.msra.mxu0 0
        %1972 = vmatprep.subr.bf16.mxu0 0
        %1973 = vmatpush1.bf16.msra.mxu0 0
        %1974 = vmatprep.subr.bf16.mxu0 0
        %1975 = vmatpush1.bf16.msra.mxu0 0
        %1976 = vmatprep.subr.bf16.mxu0 0
        %1977 = vmatpush1.bf16.msra.mxu0 0
        %1978 = vmatprep.subr.bf16.mxu0 0
        %1979 = vmatpush1.bf16.msra.mxu0 0
        %1980 = vmatprep.subr.bf16.mxu0 0
        %1981 = vmatpush1.bf16.msra.mxu0 0
        %1982 = vmatprep.subr.bf16.mxu0 0
        %1983 = vmatpush1.bf16.msra.mxu0 0
        %1984 = vmatprep.subr.bf16.mxu0 0
        %1985 = vmatpush1.bf16.msra.mxu0 0
        %1986 = vmatprep.subr.bf16.mxu0 0
        %1987 = vmatpush1.bf16.msra.mxu0 0
        %1988 = vmatprep.subr.bf16.mxu0 0
        %1989 = vmatpush1.bf16.msra.mxu0 0
        %1990 = vmatprep.subr.bf16.mxu0 0
        %1991 = vmatpush1.bf16.msra.mxu0 0
        %1992 = vmatprep.mubr.bf16.mxu0 0
        %1993 = vmatmul.mubr.bf16.gmra.mrb[0].mxu0 %v1949
        %v1994 = vpop.f32.mrb[0].mxu0
        %v1995 = vadd.f32 0.0, %v1994
        %v1996 = vpop.f32.mrb[0].mxu0
        %v1997 = vpop.f32.mrb[0].mxu0
        %v1998 = vadd.f32 0.0, %v1997
        %v1999 = vpop.f32.mrb[0].mxu0
        %2000 = vmatprep.mubr.bf16.mxu0 0
        %2001 = vmatmul.mubr.bf16.gmra.mrb[0].mxu0 %v1952
        %v2002 = vpop.f32.mrb[0].mxu0
        %v2003 = vadd.f32 0.0, %v2002
        %v2004 = vpop.f32.mrb[0].mxu0
        %v2005 = vpop.f32.mrb[0].mxu0
        %v2006 = vadd.f32 0.0, %v2005
        %v2007 = vpop.f32.mrb[0].mxu0
        %2008 = vmatprep.mubr.bf16.mxu0 0
        %2009 = vmatmul.mubr.bf16.gmra.mrb[0].mxu0 %v1955
        %v2010 = vpop.f32.mrb[0].mxu0
        %v2011 = vadd.f32 0.0, %v2010
        %v2012 = vpop.f32.mrb[0].mxu0
        %v2013 = vpop.f32.mrb[0].mxu0
        %v2014 = vadd.f32 0.0, %v2013
        %v2015 = vpop.f32.mrb[0].mxu0
        %2016 = vmatprep.mubr.bf16.mxu0 0
        %2017 = vmatmul.mubr.bf16.gmra.mrb[0].mxu0 %v1958
        %v2018 = vpop.f32.mrb[0].mxu0
        %v2019 = vadd.f32 0.0, %v2018
        %v2020 = vpop.f32.mrb[0].mxu0
        %v2021 = vpop.f32.mrb[0].mxu0
        %v2022 = vadd.f32 0.0, %v2021
        %v2023 = vpop.f32.mrb[0].mxu0
        %2024 = vdwg.mxu0
        %v2025 = vld [vmem:[#allocation12] sm:$0x1]
        %v2027 = vlaneseq
        %v2028 = vshrl.u32 %v2027, 7
        %v2029 = vsub.s32 0, %v2028
        %v2030 = vrot.slane %v2025, %v2029
        %v2032 = vmul.f32 %v1995, %v2030
        %v2033 = vmul.f32 %v1998, %v2030
        %v2034 = vmul.f32 %v2003, %v2030
        %v2035 = vmul.f32 %v2006, %v2030
        %v2036 = vmul.f32 %v2011, %v2030
        %v2037 = vmul.f32 %v2014, %v2030
        %v2038 = vmul.f32 %v2019, %v2030
        %v2039 = vmul.f32 %v2022, %v2030
        %v2040 = vld [vmem:[#allocation15] sm:$0x1]
        %v2042 = vlaneseq
        %v2043 = vshrl.u32 %v2042, 7
        %v2044 = vsub.s32 0, %v2043
        %v2045 = vrot.slane %v2040, %v2044
        %v2047 = vadd.f32 %v2032, %v2045
        %v2048 = vadd.f32 %v2033, %v2045
        %v2049 = vadd.f32 %v2034, %v2045
        %v2050 = vadd.f32 %v2035, %v2045
        %v2051 = vadd.f32 %v2036, %v2045
        %v2052 = vadd.f32 %v2037, %v2045
        %v2053 = vadd.f32 %v2038, %v2045
        %v2054 = vadd.f32 %v2039, %v2045
        %v2055 = vmax.f32 %v2047, 0.0
        %v2056 = vmax.f32 %v2048, 0.0
        %v2057 = vmax.f32 %v2049, 0.0
        %v2058 = vmax.f32 %v2050, 0.0
        %v2059 = vmax.f32 %v2051, 0.0
        %v2060 = vmax.f32 %v2052, 0.0
        %v2061 = vmax.f32 %v2053, 0.0
        %v2062 = vmax.f32 %v2054, 0.0
        %2063 = vst.msk [vmem:[#allocation3 + $0x8] sm:$0xff] %vm1722, %v2055
        %2064 = vst.msk [vmem:[#allocation3 + $0x10] sm:$0xff] %vm1722, %v2056
        %2065 = vst.msk [vmem:[#allocation3 + $0x18] sm:$0xff] %vm1722, %v2057
        %2066 = vst.msk [vmem:[#allocation3 + $0x20] sm:$0xff] %vm1722, %v2058
        %2067 = vst.msk [vmem:[#allocation3 + $0x28] sm:$0xff] %vm1722, %v2059
        %2068 = vst.msk [vmem:[#allocation3 + $0x30] sm:$0xff] %vm1722, %v2060
        %2069 = vst.msk [vmem:[#allocation3 + $0x38] sm:$0xff] %vm1722, %v2061
        %2070 = vst.msk [vmem:[#allocation3 + $0x40] sm:$0xff] %vm1722, %v2062
        %s2071 = scalar_lea.vmem [#allocation3], 7
        %v2072 = vld [vmem:[%s2071] ss:$2 sm:$0xff]
        %s2073 = scalar_lea.vmem [#allocation3], 23
        %v2074 = vld [vmem:[%s2073] ss:$2 sm:$0xff]
        %s2075 = scalar_lea.vmem [#allocation3], 39
        %v2076 = vld [vmem:[%s2075] ss:$2 sm:$0xff]
        %s2077 = scalar_lea.vmem [#allocation3], 55
        %v2078 = vld [vmem:[%s2077] ss:$2 sm:$0xff]
        %s2079 = scalar_lea.vmem [#allocation3], 8
        %v2080 = vld [vmem:[%s2079] ss:$2 sm:$0xff]
        %s2081 = scalar_lea.vmem [#allocation3], 24
        %v2082 = vld [vmem:[%s2081] ss:$2 sm:$0xff]
        %s2083 = scalar_lea.vmem [#allocation3], 40
        %v2084 = vld [vmem:[%s2083] ss:$2 sm:$0xff]
        %s2085 = scalar_lea.vmem [#allocation3], 56
        %v2086 = vld [vmem:[%s2085] ss:$2 sm:$0xff]
        %v2087 = vmax.f32 %v2072, %v2080
        %v2088 = vmax.f32 %v2074, %v2082
        %v2089 = vmax.f32 %v2076, %v2084
        %v2090 = vmax.f32 %v2078, %v2086
        %s2091 = scalar_lea.vmem [#allocation3], 9
        %v2092 = vld [vmem:[%s2091] ss:$2 sm:$0xff]
        %s2093 = scalar_lea.vmem [#allocation3], 25
        %v2094 = vld [vmem:[%s2093] ss:$2 sm:$0xff]
        %s2095 = scalar_lea.vmem [#allocation3], 41
        %v2096 = vld [vmem:[%s2095] ss:$2 sm:$0xff]
        %s2097 = scalar_lea.vmem [#allocation3], 57
        %v2098 = vld [vmem:[%s2097] ss:$2 sm:$0xff]
        %v2099 = vmax.f32 %v2087, %v2092
        %v2100 = vmax.f32 %v2088, %v2094
        %v2101 = vmax.f32 %v2089, %v2096
        %v2102 = vmax.f32 %v2090, %v2098
        %2103 = vst.msk [vmem:[#allocation4 + $0x8] sm:$0xff] %vm1722, %v2099
        %2104 = vst.msk [vmem:[#allocation4 + $0x10] sm:$0xff] %vm1722, %v2100
        %2105 = vst.msk [vmem:[#allocation4 + $0x18] sm:$0xff] %vm1722, %v2101
        %2106 = vst.msk [vmem:[#allocation4 + $0x20] sm:$0xff] %vm1722, %v2102
        %s2107 = scalar_lea.vmem [#allocation4], 8
        %v2108 = vld [vmem:[%s2107] ss:$2 sm:$0xff]
        %s2109 = scalar_lea.vmem [#allocation4], 24
        %v2110 = vld [vmem:[%s2109] ss:$2 sm:$0xff]
        %v2111 = vpack.c.bf16 %v2110, %v2108
        %v2112 = vld [vmem:[#allocation23] sm:$0xf]
        %v2113 = vld [vmem:[#allocation23 + $0x4] sm:$0xf]
        %v2114 = vld [vmem:[#allocation23 + $0x8] sm:$0xf]
        %v2115 = vld [vmem:[#allocation23 + $0xc] sm:$0xf]
        %v2116 = vld [vmem:[#allocation23 + $0x10] sm:$0xf]
        %v2117 = vld [vmem:[#allocation23 + $0x14] sm:$0xf]
        %v2118 = vld [vmem:[#allocation23 + $0x18] sm:$0xf]
        %v2119 = vld [vmem:[#allocation23 + $0x1c] sm:$0xf]
        %v2128 = vunpack.c.l.b16 %v2112
        %v2129 = vunpack.c.l.b16 %v2113
        %v2130 = vunpack.c.l.b16 %v2114
        %v2131 = vunpack.c.l.b16 %v2115
        %v2132 = vunpack.c.l.b16 %v2116
        %v2133 = vunpack.c.l.b16 %v2117
        %v2134 = vunpack.c.l.b16 %v2118
        %v2135 = vunpack.c.l.b16 %v2119
        %v2136 = vpack.c.b16 %v2129, %v2128
        %v2137 = vpack.c.b16 %v2131, %v2130
        %v2138 = vpack.c.b16 %v2133, %v2132
        %v2139 = vpack.c.b16 %v2135, %v2134
        %v2145 = vsel %vm1722, %v2111, 0
        %2147 = vmatprep.subr.bf16.mxu0 0
        %2148 = vmatpush1.bf16.msra.mxu0 %v2136
        %2149 = vmatprep.subr.bf16.mxu0 0
        %2150 = vmatpush1.bf16.msra.mxu0 %v2137
        %2151 = vmatprep.subr.bf16.mxu0 0
        %2152 = vmatpush1.bf16.msra.mxu0 %v2138
        %2153 = vmatprep.subr.bf16.mxu0 0
        %2154 = vmatpush1.bf16.msra.mxu0 %v2139
        %2155 = vmatprep.subr.bf16.mxu0 0
        %2156 = vmatpush1.bf16.msra.mxu0 0
        %2157 = vmatprep.subr.bf16.mxu0 0
        %2158 = vmatpush1.bf16.msra.mxu0 0
        %2159 = vmatprep.subr.bf16.mxu0 0
        %2160 = vmatpush1.bf16.msra.mxu0 0
        %2161 = vmatprep.subr.bf16.mxu0 0
        %2162 = vmatpush1.bf16.msra.mxu0 0
        %2163 = vmatprep.subr.bf16.mxu0 0
        %2164 = vmatpush1.bf16.msra.mxu0 0
        %2165 = vmatprep.subr.bf16.mxu0 0
        %2166 = vmatpush1.bf16.msra.mxu0 0
        %2167 = vmatprep.subr.bf16.mxu0 0
        %2168 = vmatpush1.bf16.msra.mxu0 0
        %2169 = vmatprep.subr.bf16.mxu0 0
        %2170 = vmatpush1.bf16.msra.mxu0 0
        %2171 = vmatprep.subr.bf16.mxu0 0
        %2172 = vmatpush1.bf16.msra.mxu0 0
        %2173 = vmatprep.subr.bf16.mxu0 0
        %2174 = vmatpush1.bf16.msra.mxu0 0
        %2175 = vmatprep.subr.bf16.mxu0 0
        %2176 = vmatpush1.bf16.msra.mxu0 0
        %2177 = vmatprep.subr.bf16.mxu0 0
        %2178 = vmatpush1.bf16.msra.mxu0 0
        %2179 = vmatprep.mubr.bf16.mxu0 0
        %2180 = vmatmul.mubr.bf16.gmra.mrb[0].mxu0 %v2145
        %v2181 = vpop.f32.mrb[0].mxu0
        %v2182 = vadd.f32 0.0, %v2181
        %v2183 = vpop.f32.mrb[0].mxu0
        %v2184 = vpop.f32.mrb[0].mxu0
        %v2185 = vadd.f32 0.0, %v2184
        %v2186 = vpop.f32.mrb[0].mxu0
        %2187 = vdwg.mxu0
        %v2188 = vld [vmem:[#allocation24] sm:$0x1]
        %v2190 = vlaneseq
        %v2191 = vshrl.u32 %v2190, 7
        %v2192 = vsub.s32 0, %v2191
        %v2193 = vrot.slane %v2188, %v2192
        %v2195 = vmul.f32 %v2182, %v2193
        %v2196 = vmul.f32 %v2185, %v2193
        %v2197 = vld [vmem:[#allocation26] sm:$0x1]
        %v2199 = vlaneseq
        %v2200 = vshrl.u32 %v2199, 7
        %v2201 = vsub.s32 0, %v2200
        %v2202 = vrot.slane %v2197, %v2201
        %v2204 = vadd.f32 %v2195, %v2202
        %v2205 = vadd.f32 %v2196, %v2202
        %s2206 = scalar_lea.vmem [#allocation4], 5
        %v2207 = vld [vmem:[%s2206] ss:$2 sm:$0xff]
        %s2208 = scalar_lea.vmem [#allocation4], 21
        %v2209 = vld [vmem:[%s2208] ss:$2 sm:$0xff]
        %2210 = vst.msk [vmem:[#allocation11] sm:$0xff] %vm1722, %v2207
        %2211 = vst.msk [vmem:[#allocation11 + $0x70] sm:$0xff] %vm1722, %v2209
        %s2212 = scalar_lea.vmem [#allocation4], 6
        %v2213 = vld [vmem:[%s2212] ss:$2 sm:$0xff]
        %s2214 = scalar_lea.vmem [#allocation4], 22
        %v2215 = vld [vmem:[%s2214] ss:$2 sm:$0xff]
        %2218 = vrot.lane.b32.xlu0 %v2213, 64
        %v2219 = vpop.permute.xlu0 %2218
        %2220 = vrot.lane.b32.xlu0 %v2215, 64
        %v2221 = vpop.permute.xlu0 %2220
        %vm2224 = vcmask 1048064
        %2225 = vst.msk [vmem:[#allocation11] sm:$0xff] %vm2224, %v2219
        %2226 = vst.msk [vmem:[#allocation11 + $0x70] sm:$0xff] %vm2224, %v2221
        %s2227 = scalar_lea.vmem [#allocation4], 7
        %v2228 = vld [vmem:[%s2227] ss:$2 sm:$0xff]
        %s2229 = scalar_lea.vmem [#allocation4], 23
        %v2230 = vld [vmem:[%s2229] ss:$2 sm:$0xff]
        %2231 = vst.msk [vmem:[#allocation11 + $0x8] sm:$0xff] %vm1722, %v2228
        %2232 = vst.msk [vmem:[#allocation11 + $0x78] sm:$0xff] %vm1722, %v2230
        %v2233 = vld [vmem:[%s2107] ss:$2 sm:$0xff]
        %v2234 = vld [vmem:[%s2109] ss:$2 sm:$0xff]
        %2237 = vrot.lane.b32.xlu0 %v2233, 64
        %v2238 = vpop.permute.xlu0 %2237
        %2239 = vrot.lane.b32.xlu0 %v2234, 64
        %v2240 = vpop.permute.xlu0 %2239
        %2243 = vst.msk [vmem:[#allocation11 + $0x8] sm:$0xff] %vm2224, %v2238
        %2244 = vst.msk [vmem:[#allocation11 + $0x78] sm:$0xff] %vm2224, %v2240
        %s2245 = scalar_lea.vmem [#allocation4], 9
        %v2246 = vld [vmem:[%s2245] ss:$2 sm:$0xff]
        %s2247 = scalar_lea.vmem [#allocation4], 25
        %v2248 = vld [vmem:[%s2247] ss:$2 sm:$0xff]
        %2249 = vst.msk [vmem:[#allocation11 + $0x10] sm:$0xff] %vm1722, %v2246
        %2250 = vst.msk [vmem:[#allocation11 + $0x80] sm:$0xff] %vm1722, %v2248
        %s2251 = scalar_lea.vmem [#allocation4], 10
        %v2252 = vld [vmem:[%s2251] ss:$2 sm:$0xff]
        %s2253 = scalar_lea.vmem [#allocation4], 26
        %v2254 = vld [vmem:[%s2253] ss:$2 sm:$0xff]
        %2257 = vrot.lane.b32.xlu0 %v2252, 64
        %v2258 = vpop.permute.xlu0 %2257
        %2259 = vrot.lane.b32.xlu0 %v2254, 64
        %v2260 = vpop.permute.xlu0 %2259
        %2263 = vst.msk [vmem:[#allocation11 + $0x10] sm:$0xff] %vm2224, %v2258
        %2264 = vst.msk [vmem:[#allocation11 + $0x80] sm:$0xff] %vm2224, %v2260
        %s2265 = scalar_lea.vmem [#allocation4], 11
        %v2266 = vld [vmem:[%s2265] ss:$2 sm:$0xff]
        %s2267 = scalar_lea.vmem [#allocation4], 27
        %v2268 = vld [vmem:[%s2267] ss:$2 sm:$0xff]
        %2269 = vst.msk [vmem:[#allocation11 + $0x18] sm:$0xff] %vm1722, %v2266
        %2270 = vst.msk [vmem:[#allocation11 + $0x88] sm:$0xff] %vm1722, %v2268
        %v2271 = vld [vmem:[#allocation11] sm:$0xff]
        %v2272 = vld [vmem:[#allocation11 + $0x8] sm:$0xff]
        %v2273 = vld [vmem:[#allocation11 + $0x10] sm:$0xff]
        %v2274 = vld [vmem:[#allocation11 + $0x18] sm:$0xff]
        %v2275 = vld [vmem:[#allocation11 + $0x70] sm:$0xff]
        %v2276 = vld [vmem:[#allocation11 + $0x78] sm:$0xff]
        %v2277 = vld [vmem:[#allocation11 + $0x80] sm:$0xff]
        %v2278 = vld [vmem:[#allocation11 + $0x88] sm:$0xff]
        %v2279 = vpack.c.bf16 %v2275, %v2271
        %v2280 = vpack.c.bf16 %v2276, %v2272
        %v2281 = vpack.c.bf16 %v2277, %v2273
        %v2282 = vpack.c.bf16 %v2278, %v2274
        %v2283 = vld [vmem:[%s9] sm:$0xf]
        %v2284 = vld [vmem:[%s9 + $0x4] sm:$0xf]
        %v2285 = vld [vmem:[%s9 + $0x8] sm:$0xf]
        %v2286 = vld [vmem:[%s9 + $0xc] sm:$0xf]
        %v2287 = vld [vmem:[%s9 + $0x10] sm:$0xf]
        %v2288 = vld [vmem:[%s9 + $0x14] sm:$0xf]
        %v2289 = vld [vmem:[%s9 + $0x18] sm:$0xf]
        %v2290 = vld [vmem:[%s9 + $0x1c] sm:$0xf]
        %v2291 = vld [vmem:[%s9 + $0x20] sm:$0xf]
        %v2292 = vld [vmem:[%s9 + $0x24] sm:$0xf]
        %v2293 = vld [vmem:[%s9 + $0x28] sm:$0xf]
        %v2294 = vld [vmem:[%s9 + $0x2c] sm:$0xf]
        %v2295 = vld [vmem:[%s9 + $0x30] sm:$0xf]
        %v2296 = vld [vmem:[%s9 + $0x34] sm:$0xf]
        %v2297 = vld [vmem:[%s9 + $0x38] sm:$0xf]
        %v2298 = vld [vmem:[%s9 + $0x3c] sm:$0xf]
        %v2299 = vld [vmem:[%s9 + $0x40] sm:$0xf]
        %v2300 = vld [vmem:[%s9 + $0x44] sm:$0xf]
        %v2301 = vld [vmem:[%s9 + $0x48] sm:$0xf]
        %v2302 = vld [vmem:[%s9 + $0x4c] sm:$0xf]
        %v2303 = vld [vmem:[%s9 + $0x50] sm:$0xf]
        %v2304 = vld [vmem:[%s9 + $0x54] sm:$0xf]
        %v2305 = vld [vmem:[%s9 + $0x58] sm:$0xf]
        %v2306 = vld [vmem:[%s9 + $0x5c] sm:$0xf]
        %v2307 = vld [vmem:[%s9 + $0x60] sm:$0xf]
        %v2308 = vld [vmem:[%s9 + $0x64] sm:$0xf]
        %v2309 = vld [vmem:[%s9 + $0x68] sm:$0xf]
        %v2310 = vld [vmem:[%s9 + $0x6c] sm:$0xf]
        %v2311 = vld [vmem:[%s9 + $0x70] sm:$0xf]
        %v2312 = vld [vmem:[%s9 + $0x74] sm:$0xf]
        %v2313 = vld [vmem:[%s9 + $0x78] sm:$0xf]
        %v2314 = vld [vmem:[%s9 + $0x7c] sm:$0xf]
        %v2315 = vld [vmem:[%s9 + $0x80] sm:$0xf]
        %v2316 = vld [vmem:[%s9 + $0x84] sm:$0xf]
        %v2317 = vld [vmem:[%s9 + $0x88] sm:$0xf]
        %v2318 = vld [vmem:[%s9 + $0x8c] sm:$0xf]
        %v2319 = vld [vmem:[%s9 + $0x90] sm:$0xf]
        %v2320 = vld [vmem:[%s9 + $0x94] sm:$0xf]
        %v2321 = vld [vmem:[%s9 + $0x98] sm:$0xf]
        %v2322 = vld [vmem:[%s9 + $0x9c] sm:$0xf]
        %v2323 = vld [vmem:[%s9 + $0xa0] sm:$0xf]
        %v2324 = vld [vmem:[%s9 + $0xa4] sm:$0xf]
        %v2325 = vld [vmem:[%s9 + $0xa8] sm:$0xf]
        %v2326 = vld [vmem:[%s9 + $0xac] sm:$0xf]
        %v2327 = vld [vmem:[%s9 + $0xb0] sm:$0xf]
        %v2328 = vld [vmem:[%s9 + $0xb4] sm:$0xf]
        %v2329 = vld [vmem:[%s9 + $0xb8] sm:$0xf]
        %v2330 = vld [vmem:[%s9 + $0xbc] sm:$0xf]
        %v2331 = vld [vmem:[%s9 + $0xc0] sm:$0xf]
        %v2332 = vld [vmem:[%s9 + $0xc4] sm:$0xf]
        %v2333 = vld [vmem:[%s9 + $0xc8] sm:$0xf]
        %v2334 = vld [vmem:[%s9 + $0xcc] sm:$0xf]
        %v2335 = vld [vmem:[%s9 + $0xd0] sm:$0xf]
        %v2336 = vld [vmem:[%s9 + $0xd4] sm:$0xf]
        %v2337 = vld [vmem:[%s9 + $0xd8] sm:$0xf]
        %v2338 = vld [vmem:[%s9 + $0xdc] sm:$0xf]
        %v2395 = vunpack.c.l.b16 %v2283
        %v2396 = vunpack.c.l.b16 %v2284
        %v2397 = vunpack.c.l.b16 %v2285
        %v2398 = vunpack.c.l.b16 %v2286
        %v2399 = vunpack.c.l.b16 %v2287
        %v2400 = vunpack.c.l.b16 %v2288
        %v2401 = vunpack.c.l.b16 %v2289
        %v2402 = vunpack.c.l.b16 %v2290
        %v2403 = vunpack.c.l.b16 %v2291
        %v2404 = vunpack.c.l.b16 %v2292
        %v2405 = vunpack.c.l.b16 %v2293
        %v2406 = vunpack.c.l.b16 %v2294
        %v2407 = vunpack.c.l.b16 %v2295
        %v2408 = vunpack.c.l.b16 %v2296
        %v2409 = vunpack.c.l.b16 %v2297
        %v2410 = vunpack.c.l.b16 %v2298
        %v2411 = vunpack.c.l.b16 %v2299
        %v2412 = vunpack.c.l.b16 %v2300
        %v2413 = vunpack.c.l.b16 %v2301
        %v2414 = vunpack.c.l.b16 %v2302
        %v2415 = vunpack.c.l.b16 %v2303
        %v2416 = vunpack.c.l.b16 %v2304
        %v2417 = vunpack.c.l.b16 %v2305
        %v2418 = vunpack.c.l.b16 %v2306
        %v2419 = vunpack.c.l.b16 %v2307
        %v2420 = vunpack.c.l.b16 %v2308
        %v2421 = vunpack.c.l.b16 %v2309
        %v2422 = vunpack.c.l.b16 %v2310
        %v2423 = vunpack.c.l.b16 %v2311
        %v2424 = vunpack.c.l.b16 %v2312
        %v2425 = vunpack.c.l.b16 %v2313
        %v2426 = vunpack.c.l.b16 %v2314
        %v2427 = vunpack.c.l.b16 %v2315
        %v2428 = vunpack.c.l.b16 %v2316
        %v2429 = vunpack.c.l.b16 %v2317
        %v2430 = vunpack.c.l.b16 %v2318
        %v2431 = vunpack.c.l.b16 %v2319
        %v2432 = vunpack.c.l.b16 %v2320
        %v2433 = vunpack.c.l.b16 %v2321
        %v2434 = vunpack.c.l.b16 %v2322
        %v2435 = vunpack.c.l.b16 %v2323
        %v2436 = vunpack.c.l.b16 %v2324
        %v2437 = vunpack.c.l.b16 %v2325
        %v2438 = vunpack.c.l.b16 %v2326
        %v2439 = vunpack.c.l.b16 %v2327
        %v2440 = vunpack.c.l.b16 %v2328
        %v2441 = vunpack.c.l.b16 %v2329
        %v2442 = vunpack.c.l.b16 %v2330
        %v2443 = vunpack.c.l.b16 %v2331
        %v2444 = vunpack.c.l.b16 %v2332
        %v2445 = vunpack.c.l.b16 %v2333
        %v2446 = vunpack.c.l.b16 %v2334
        %v2447 = vunpack.c.l.b16 %v2335
        %v2448 = vunpack.c.l.b16 %v2336
        %v2449 = vunpack.c.l.b16 %v2337
        %v2450 = vunpack.c.l.b16 %v2338
        %v2451 = vpack.c.b16 %v2396, %v2395
        %v2452 = vpack.c.b16 %v2398, %v2397
        %v2453 = vpack.c.b16 %v2400, %v2399
        %v2454 = vpack.c.b16 %v2402, %v2401
        %v2455 = vpack.c.b16 %v2404, %v2403
        %v2456 = vpack.c.b16 %v2406, %v2405
        %v2457 = vpack.c.b16 %v2408, %v2407
        %v2458 = vpack.c.b16 %v2410, %v2409
        %v2459 = vpack.c.b16 %v2412, %v2411
        %v2460 = vpack.c.b16 %v2414, %v2413
        %v2461 = vpack.c.b16 %v2416, %v2415
        %v2462 = vpack.c.b16 %v2418, %v2417
        %v2463 = vpack.c.b16 %v2420, %v2419
        %v2464 = vpack.c.b16 %v2422, %v2421
        %v2465 = vpack.c.b16 %v2424, %v2423
        %v2466 = vpack.c.b16 %v2426, %v2425
        %v2467 = vpack.c.b16 %v2428, %v2427
        %v2468 = vpack.c.b16 %v2430, %v2429
        %v2469 = vpack.c.b16 %v2432, %v2431
        %v2470 = vpack.c.b16 %v2434, %v2433
        %v2471 = vpack.c.b16 %v2436, %v2435
        %v2472 = vpack.c.b16 %v2438, %v2437
        %v2473 = vpack.c.b16 %v2440, %v2439
        %v2474 = vpack.c.b16 %v2442, %v2441
        %v2475 = vpack.c.b16 %v2444, %v2443
        %v2476 = vpack.c.b16 %v2446, %v2445
        %v2477 = vpack.c.b16 %v2448, %v2447
        %v2478 = vpack.c.b16 %v2450, %v2449
        %v2508 = vsel %vm1722, %v2282, 0
        %2510 = vmatprep.subr.bf16.mxu0 0
        %2511 = vmatpush1.bf16.msra.mxu0 %v2451
        %2512 = vmatprep.subr.bf16.mxu0 0
        %2513 = vmatpush1.bf16.msra.mxu0 %v2452
        %2514 = vmatprep.subr.bf16.mxu0 0
        %2515 = vmatpush1.bf16.msra.mxu0 %v2453
        %2516 = vmatprep.subr.bf16.mxu0 0
        %2517 = vmatpush1.bf16.msra.mxu0 %v2454
        %2518 = vmatprep.subr.bf16.mxu0 0
        %2519 = vmatpush1.bf16.msra.mxu0 %v2455
        %2520 = vmatprep.subr.bf16.mxu0 0
        %2521 = vmatpush1.bf16.msra.mxu0 %v2456
        %2522 = vmatprep.subr.bf16.mxu0 0
        %2523 = vmatpush1.bf16.msra.mxu0 %v2457
        %2524 = vmatprep.subr.bf16.mxu0 0
        %2525 = vmatpush1.bf16.msra.mxu0 %v2458
        %2526 = vmatprep.subr.bf16.mxu0 0
        %2527 = vmatpush1.bf16.msra.mxu0 %v2459
        %2528 = vmatprep.subr.bf16.mxu0 0
        %2529 = vmatpush1.bf16.msra.mxu0 %v2460
        %2530 = vmatprep.subr.bf16.mxu0 0
        %2531 = vmatpush1.bf16.msra.mxu0 %v2461
        %2532 = vmatprep.subr.bf16.mxu0 0
        %2533 = vmatpush1.bf16.msra.mxu0 %v2462
        %2534 = vmatprep.subr.bf16.mxu0 0
        %2535 = vmatpush1.bf16.msra.mxu0 %v2463
        %2536 = vmatprep.subr.bf16.mxu0 0
        %2537 = vmatpush1.bf16.msra.mxu0 %v2464
        %2538 = vmatprep.subr.bf16.mxu0 0
        %2539 = vmatpush1.bf16.msra.mxu0 %v2465
        %2540 = vmatprep.subr.bf16.mxu0 0
        %2541 = vmatpush1.bf16.msra.mxu0 %v2466
        %2542 = vmatprep.mubr.bf16.mxu0 %v2280
        %2543 = vmatmul.mubr.bf16.gmra.mrb[0].mxu0 %v2279
        %v2544 = vpop.f32.mrb[0].mxu0
        %v2545 = vadd.f32 0.0, %v2544
        %v2546 = vpop.f32.mrb[0].mxu0
        %v2547 = vpop.f32.mrb[0].mxu0
        %v2548 = vadd.f32 0.0, %v2547
        %v2549 = vpop.f32.mrb[0].mxu0
        %2550 = vdwg.mxu0
        %2551 = vmatprep.subr.bf16.mxu0 0
        %2552 = vmatpush1.bf16.msra.mxu0 %v2467
        %2553 = vmatprep.subr.bf16.mxu0 0
        %2554 = vmatpush1.bf16.msra.mxu0 %v2468
        %2555 = vmatprep.subr.bf16.mxu0 0
        %2556 = vmatpush1.bf16.msra.mxu0 %v2469
        %2557 = vmatprep.subr.bf16.mxu0 0
        %2558 = vmatpush1.bf16.msra.mxu0 %v2470
        %2559 = vmatprep.subr.bf16.mxu0 0
        %2560 = vmatpush1.bf16.msra.mxu0 %v2471
        %2561 = vmatprep.subr.bf16.mxu0 0
        %2562 = vmatpush1.bf16.msra.mxu0 %v2472
        %2563 = vmatprep.subr.bf16.mxu0 0
        %2564 = vmatpush1.bf16.msra.mxu0 %v2473
        %2565 = vmatprep.subr.bf16.mxu0 0
        %2566 = vmatpush1.bf16.msra.mxu0 %v2474
        %2567 = vmatprep.subr.bf16.mxu0 0
        %2568 = vmatpush1.bf16.msra.mxu0 %v2475
        %2569 = vmatprep.subr.bf16.mxu0 0
        %2570 = vmatpush1.bf16.msra.mxu0 %v2476
        %2571 = vmatprep.subr.bf16.mxu0 0
        %2572 = vmatpush1.bf16.msra.mxu0 %v2477
        %2573 = vmatprep.subr.bf16.mxu0 0
        %2574 = vmatpush1.bf16.msra.mxu0 %v2478
        %2575 = vmatprep.subr.bf16.mxu0 0
        %2576 = vmatpush1.bf16.msra.mxu0 0
        %2577 = vmatprep.subr.bf16.mxu0 0
        %2578 = vmatpush1.bf16.msra.mxu0 0
        %2579 = vmatprep.subr.bf16.mxu0 0
        %2580 = vmatpush1.bf16.msra.mxu0 0
        %2581 = vmatprep.subr.bf16.mxu0 0
        %2582 = vmatpush1.bf16.msra.mxu0 0
        %2583 = vmatprep.mubr.bf16.mxu0 %v2508
        %2584 = vmatmul.mubr.bf16.gmra.mrb[0].mxu0 %v2281
        %v2585 = vpop.f32.mrb[0].mxu0
        %v2586 = vadd.f32 %v2545, %v2585
        %v2587 = vpop.f32.mrb[0].mxu0
        %v2588 = vpop.f32.mrb[0].mxu0
        %v2589 = vadd.f32 %v2548, %v2588
        %v2590 = vpop.f32.mrb[0].mxu0
        %2591 = vdwg.mxu0
        %v2592 = vld [vmem:[#allocation17] sm:$0x1]
        %v2594 = vlaneseq
        %v2595 = vshrl.u32 %v2594, 7
        %v2596 = vsub.s32 0, %v2595
        %v2597 = vrot.slane %v2592, %v2596
        %v2599 = vmul.f32 %v2586, %v2597
        %v2600 = vmul.f32 %v2589, %v2597
        %v2601 = vld [vmem:[#allocation18] sm:$0x1]
        %v2603 = vlaneseq
        %v2604 = vshrl.u32 %v2603, 7
        %v2605 = vsub.s32 0, %v2604
        %v2606 = vrot.slane %v2601, %v2605
        %v2608 = vadd.f32 %v2599, %v2606
        %v2609 = vadd.f32 %v2600, %v2606
        %v2610 = vmax.f32 %v2608, 0.0
        %v2611 = vmax.f32 %v2609, 0.0
        %2612 = vst.msk [vmem:[#allocation5 + $0x8] sm:$0xff] %vm1722, %v2610
        %2613 = vst.msk [vmem:[#allocation5 + $0x10] sm:$0xff] %vm1722, %v2611
        %v2614 = vld [vmem:[#allocation5 + $0x5] sm:$0xff]
        %v2615 = vld [vmem:[#allocation5 + $0xd] sm:$0xff]
        %2616 = vst.msk [vmem:[#allocation11] sm:$0xff] %vm1722, %v2614
        %2617 = vst.msk [vmem:[#allocation11 + $0x70] sm:$0xff] %vm1722, %v2615
        %v2618 = vld [vmem:[#allocation5 + $0x6] sm:$0xff]
        %v2619 = vld [vmem:[#allocation5 + $0xe] sm:$0xff]
        %2622 = vrot.lane.b32.xlu0 %v2618, 64
        %v2623 = vpop.permute.xlu0 %2622
        %2624 = vrot.lane.b32.xlu0 %v2619, 64
        %v2625 = vpop.permute.xlu0 %2624
        %2628 = vst.msk [vmem:[#allocation11] sm:$0xff] %vm2224, %v2623
        %2629 = vst.msk [vmem:[#allocation11 + $0x70] sm:$0xff] %vm2224, %v2625
        %v2630 = vld [vmem:[#allocation5 + $0x7] sm:$0xff]
        %v2631 = vld [vmem:[#allocation5 + $0xf] sm:$0xff]
        %2632 = vst.msk [vmem:[#allocation11 + $0x8] sm:$0xff] %vm1722, %v2630
        %2633 = vst.msk [vmem:[#allocation11 + $0x78] sm:$0xff] %vm1722, %v2631
        %v2634 = vld [vmem:[#allocation5 + $0x8] sm:$0xff]
        %v2635 = vld [vmem:[#allocation5 + $0x10] sm:$0xff]
        %2638 = vrot.lane.b32.xlu0 %v2634, 64
        %v2639 = vpop.permute.xlu0 %2638
        %2640 = vrot.lane.b32.xlu0 %v2635, 64
        %v2641 = vpop.permute.xlu0 %2640
        %2644 = vst.msk [vmem:[#allocation11 + $0x8] sm:$0xff] %vm2224, %v2639
        %2645 = vst.msk [vmem:[#allocation11 + $0x78] sm:$0xff] %vm2224, %v2641
        %v2646 = vld [vmem:[#allocation5 + $0x9] sm:$0xff]
        %v2647 = vld [vmem:[#allocation5 + $0x11] sm:$0xff]
        %2648 = vst.msk [vmem:[#allocation11 + $0x10] sm:$0xff] %vm1722, %v2646
        %2649 = vst.msk [vmem:[#allocation11 + $0x80] sm:$0xff] %vm1722, %v2647
        %v2650 = vld [vmem:[#allocation5 + $0xa] sm:$0xff]
        %v2651 = vld [vmem:[#allocation5 + $0x12] sm:$0xff]
        %2654 = vrot.lane.b32.xlu0 %v2650, 64
        %v2655 = vpop.permute.xlu0 %2654
        %2656 = vrot.lane.b32.xlu0 %v2651, 64
        %v2657 = vpop.permute.xlu0 %2656
        %2660 = vst.msk [vmem:[#allocation11 + $0x10] sm:$0xff] %vm2224, %v2655
        %2661 = vst.msk [vmem:[#allocation11 + $0x80] sm:$0xff] %vm2224, %v2657
        %v2662 = vld [vmem:[#allocation5 + $0xb] sm:$0xff]
        %v2663 = vld [vmem:[#allocation5 + $0x13] sm:$0xff]
        %2664 = vst.msk [vmem:[#allocation11 + $0x18] sm:$0xff] %vm1722, %v2662
        %2665 = vst.msk [vmem:[#allocation11 + $0x88] sm:$0xff] %vm1722, %v2663
        %v2666 = vld [vmem:[#allocation11] sm:$0xff]
        %v2667 = vld [vmem:[#allocation11 + $0x8] sm:$0xff]
        %v2668 = vld [vmem:[#allocation11 + $0x10] sm:$0xff]
        %v2669 = vld [vmem:[#allocation11 + $0x18] sm:$0xff]
        %v2670 = vld [vmem:[#allocation11 + $0x70] sm:$0xff]
        %v2671 = vld [vmem:[#allocation11 + $0x78] sm:$0xff]
        %v2672 = vld [vmem:[#allocation11 + $0x80] sm:$0xff]
        %v2673 = vld [vmem:[#allocation11 + $0x88] sm:$0xff]
        %v2674 = vpack.c.bf16 %v2670, %v2666
        %v2675 = vpack.c.bf16 %v2671, %v2667
        %v2676 = vpack.c.bf16 %v2672, %v2668
        %v2677 = vpack.c.bf16 %v2673, %v2669
        %v2678 = vld [vmem:[%s15] sm:$0xf]
        %v2679 = vld [vmem:[%s15 + $0x4] sm:$0xf]
        %v2680 = vld [vmem:[%s15 + $0x8] sm:$0xf]
        %v2681 = vld [vmem:[%s15 + $0xc] sm:$0xf]
        %v2682 = vld [vmem:[%s15 + $0x10] sm:$0xf]
        %v2683 = vld [vmem:[%s15 + $0x14] sm:$0xf]
        %v2684 = vld [vmem:[%s15 + $0x18] sm:$0xf]
        %v2685 = vld [vmem:[%s15 + $0x1c] sm:$0xf]
        %v2686 = vld [vmem:[%s15 + $0x20] sm:$0xf]
        %v2687 = vld [vmem:[%s15 + $0x24] sm:$0xf]
        %v2688 = vld [vmem:[%s15 + $0x28] sm:$0xf]
        %v2689 = vld [vmem:[%s15 + $0x2c] sm:$0xf]
        %v2690 = vld [vmem:[%s15 + $0x30] sm:$0xf]
        %v2691 = vld [vmem:[%s15 + $0x34] sm:$0xf]
        %v2692 = vld [vmem:[%s15 + $0x38] sm:$0xf]
        %v2693 = vld [vmem:[%s15 + $0x3c] sm:$0xf]
        %v2694 = vld [vmem:[%s15 + $0x40] sm:$0xf]
        %v2695 = vld [vmem:[%s15 + $0x44] sm:$0xf]
        %v2696 = vld [vmem:[%s15 + $0x48] sm:$0xf]
        %v2697 = vld [vmem:[%s15 + $0x4c] sm:$0xf]
        %v2698 = vld [vmem:[%s15 + $0x50] sm:$0xf]
        %v2699 = vld [vmem:[%s15 + $0x54] sm:$0xf]
        %v2700 = vld [vmem:[%s15 + $0x58] sm:$0xf]
        %v2701 = vld [vmem:[%s15 + $0x5c] sm:$0xf]
        %v2702 = vld [vmem:[%s15 + $0x60] sm:$0xf]
        %v2703 = vld [vmem:[%s15 + $0x64] sm:$0xf]
        %v2704 = vld [vmem:[%s15 + $0x68] sm:$0xf]
        %v2705 = vld [vmem:[%s15 + $0x6c] sm:$0xf]
        %v2706 = vld [vmem:[%s15 + $0x70] sm:$0xf]
        %v2707 = vld [vmem:[%s15 + $0x74] sm:$0xf]
        %v2708 = vld [vmem:[%s15 + $0x78] sm:$0xf]
        %v2709 = vld [vmem:[%s15 + $0x7c] sm:$0xf]
        %v2710 = vld [vmem:[%s15 + $0x80] sm:$0xf]
        %v2711 = vld [vmem:[%s15 + $0x84] sm:$0xf]
        %v2712 = vld [vmem:[%s15 + $0x88] sm:$0xf]
        %v2713 = vld [vmem:[%s15 + $0x8c] sm:$0xf]
        %v2714 = vld [vmem:[%s15 + $0x90] sm:$0xf]
        %v2715 = vld [vmem:[%s15 + $0x94] sm:$0xf]
        %v2716 = vld [vmem:[%s15 + $0x98] sm:$0xf]
        %v2717 = vld [vmem:[%s15 + $0x9c] sm:$0xf]
        %v2718 = vld [vmem:[%s15 + $0xa0] sm:$0xf]
        %v2719 = vld [vmem:[%s15 + $0xa4] sm:$0xf]
        %v2720 = vld [vmem:[%s15 + $0xa8] sm:$0xf]
        %v2721 = vld [vmem:[%s15 + $0xac] sm:$0xf]
        %v2722 = vld [vmem:[%s15 + $0xb0] sm:$0xf]
        %v2723 = vld [vmem:[%s15 + $0xb4] sm:$0xf]
        %v2724 = vld [vmem:[%s15 + $0xb8] sm:$0xf]
        %v2725 = vld [vmem:[%s15 + $0xbc] sm:$0xf]
        %v2726 = vld [vmem:[%s15 + $0xc0] sm:$0xf]
        %v2727 = vld [vmem:[%s15 + $0xc4] sm:$0xf]
        %v2728 = vld [vmem:[%s15 + $0xc8] sm:$0xf]
        %v2729 = vld [vmem:[%s15 + $0xcc] sm:$0xf]
        %v2730 = vld [vmem:[%s15 + $0xd0] sm:$0xf]
        %v2731 = vld [vmem:[%s15 + $0xd4] sm:$0xf]
        %v2732 = vld [vmem:[%s15 + $0xd8] sm:$0xf]
        %v2733 = vld [vmem:[%s15 + $0xdc] sm:$0xf]
        %v2790 = vunpack.c.l.b16 %v2678
        %v2791 = vunpack.c.l.b16 %v2679
        %v2792 = vunpack.c.l.b16 %v2680
        %v2793 = vunpack.c.l.b16 %v2681
        %v2794 = vunpack.c.l.b16 %v2682
        %v2795 = vunpack.c.l.b16 %v2683
        %v2796 = vunpack.c.l.b16 %v2684
        %v2797 = vunpack.c.l.b16 %v2685
        %v2798 = vunpack.c.l.b16 %v2686
        %v2799 = vunpack.c.l.b16 %v2687
        %v2800 = vunpack.c.l.b16 %v2688
        %v2801 = vunpack.c.l.b16 %v2689
        %v2802 = vunpack.c.l.b16 %v2690
        %v2803 = vunpack.c.l.b16 %v2691
        %v2804 = vunpack.c.l.b16 %v2692
        %v2805 = vunpack.c.l.b16 %v2693
        %v2806 = vunpack.c.l.b16 %v2694
        %v2807 = vunpack.c.l.b16 %v2695
        %v2808 = vunpack.c.l.b16 %v2696
        %v2809 = vunpack.c.l.b16 %v2697
        %v2810 = vunpack.c.l.b16 %v2698
        %v2811 = vunpack.c.l.b16 %v2699
        %v2812 = vunpack.c.l.b16 %v2700
        %v2813 = vunpack.c.l.b16 %v2701
        %v2814 = vunpack.c.l.b16 %v2702
        %v2815 = vunpack.c.l.b16 %v2703
        %v2816 = vunpack.c.l.b16 %v2704
        %v2817 = vunpack.c.l.b16 %v2705
        %v2818 = vunpack.c.l.b16 %v2706
        %v2819 = vunpack.c.l.b16 %v2707
        %v2820 = vunpack.c.l.b16 %v2708
        %v2821 = vunpack.c.l.b16 %v2709
        %v2822 = vunpack.c.l.b16 %v2710
        %v2823 = vunpack.c.l.b16 %v2711
        %v2824 = vunpack.c.l.b16 %v2712
        %v2825 = vunpack.c.l.b16 %v2713
        %v2826 = vunpack.c.l.b16 %v2714
        %v2827 = vunpack.c.l.b16 %v2715
        %v2828 = vunpack.c.l.b16 %v2716
        %v2829 = vunpack.c.l.b16 %v2717
        %v2830 = vunpack.c.l.b16 %v2718
        %v2831 = vunpack.c.l.b16 %v2719
        %v2832 = vunpack.c.l.b16 %v2720
        %v2833 = vunpack.c.l.b16 %v2721
        %v2834 = vunpack.c.l.b16 %v2722
        %v2835 = vunpack.c.l.b16 %v2723
        %v2836 = vunpack.c.l.b16 %v2724
        %v2837 = vunpack.c.l.b16 %v2725
        %v2838 = vunpack.c.l.b16 %v2726
        %v2839 = vunpack.c.l.b16 %v2727
        %v2840 = vunpack.c.l.b16 %v2728
        %v2841 = vunpack.c.l.b16 %v2729
        %v2842 = vunpack.c.l.b16 %v2730
        %v2843 = vunpack.c.l.b16 %v2731
        %v2844 = vunpack.c.l.b16 %v2732
        %v2845 = vunpack.c.l.b16 %v2733
        %v2846 = vpack.c.b16 %v2791, %v2790
        %v2847 = vpack.c.b16 %v2793, %v2792
        %v2848 = vpack.c.b16 %v2795, %v2794
        %v2849 = vpack.c.b16 %v2797, %v2796
        %v2850 = vpack.c.b16 %v2799, %v2798
        %v2851 = vpack.c.b16 %v2801, %v2800
        %v2852 = vpack.c.b16 %v2803, %v2802
        %v2853 = vpack.c.b16 %v2805, %v2804
        %v2854 = vpack.c.b16 %v2807, %v2806
        %v2855 = vpack.c.b16 %v2809, %v2808
        %v2856 = vpack.c.b16 %v2811, %v2810
        %v2857 = vpack.c.b16 %v2813, %v2812
        %v2858 = vpack.c.b16 %v2815, %v2814
        %v2859 = vpack.c.b16 %v2817, %v2816
        %v2860 = vpack.c.b16 %v2819, %v2818
        %v2861 = vpack.c.b16 %v2821, %v2820
        %v2862 = vpack.c.b16 %v2823, %v2822
        %v2863 = vpack.c.b16 %v2825, %v2824
        %v2864 = vpack.c.b16 %v2827, %v2826
        %v2865 = vpack.c.b16 %v2829, %v2828
        %v2866 = vpack.c.b16 %v2831, %v2830
        %v2867 = vpack.c.b16 %v2833, %v2832
        %v2868 = vpack.c.b16 %v2835, %v2834
        %v2869 = vpack.c.b16 %v2837, %v2836
        %v2870 = vpack.c.b16 %v2839, %v2838
        %v2871 = vpack.c.b16 %v2841, %v2840
        %v2872 = vpack.c.b16 %v2843, %v2842
        %v2873 = vpack.c.b16 %v2845, %v2844
        %v2903 = vsel %vm1722, %v2677, 0
        %2905 = vmatprep.subr.bf16.mxu0 0
        %2906 = vmatpush1.bf16.msra.mxu0 %v2846
        %2907 = vmatprep.subr.bf16.mxu0 0
        %2908 = vmatpush1.bf16.msra.mxu0 %v2847
        %2909 = vmatprep.subr.bf16.mxu0 0
        %2910 = vmatpush1.bf16.msra.mxu0 %v2848
        %2911 = vmatprep.subr.bf16.mxu0 0
        %2912 = vmatpush1.bf16.msra.mxu0 %v2849
        %2913 = vmatprep.subr.bf16.mxu0 0
        %2914 = vmatpush1.bf16.msra.mxu0 %v2850
        %2915 = vmatprep.subr.bf16.mxu0 0
        %2916 = vmatpush1.bf16.msra.mxu0 %v2851
        %2917 = vmatprep.subr.bf16.mxu0 0
        %2918 = vmatpush1.bf16.msra.mxu0 %v2852
        %2919 = vmatprep.subr.bf16.mxu0 0
        %2920 = vmatpush1.bf16.msra.mxu0 %v2853
        %2921 = vmatprep.subr.bf16.mxu0 0
        %2922 = vmatpush1.bf16.msra.mxu0 %v2854
        %2923 = vmatprep.subr.bf16.mxu0 0
        %2924 = vmatpush1.bf16.msra.mxu0 %v2855
        %2925 = vmatprep.subr.bf16.mxu0 0
        %2926 = vmatpush1.bf16.msra.mxu0 %v2856
        %2927 = vmatprep.subr.bf16.mxu0 0
        %2928 = vmatpush1.bf16.msra.mxu0 %v2857
        %2929 = vmatprep.subr.bf16.mxu0 0
        %2930 = vmatpush1.bf16.msra.mxu0 %v2858
        %2931 = vmatprep.subr.bf16.mxu0 0
        %2932 = vmatpush1.bf16.msra.mxu0 %v2859
        %2933 = vmatprep.subr.bf16.mxu0 0
        %2934 = vmatpush1.bf16.msra.mxu0 %v2860
        %2935 = vmatprep.subr.bf16.mxu0 0
        %2936 = vmatpush1.bf16.msra.mxu0 %v2861
        %2937 = vmatprep.mubr.bf16.mxu0 %v2675
        %2938 = vmatmul.mubr.bf16.gmra.mrb[0].mxu0 %v2674
        %v2939 = vpop.f32.mrb[0].mxu0
        %v2940 = vadd.f32 0.0, %v2939
        %v2941 = vpop.f32.mrb[0].mxu0
        %v2942 = vpop.f32.mrb[0].mxu0
        %v2943 = vadd.f32 0.0, %v2942
        %v2944 = vpop.f32.mrb[0].mxu0
        %2945 = vdwg.mxu0
        %2946 = vmatprep.subr.bf16.mxu0 0
        %2947 = vmatpush1.bf16.msra.mxu0 %v2862
        %2948 = vmatprep.subr.bf16.mxu0 0
        %2949 = vmatpush1.bf16.msra.mxu0 %v2863
        %2950 = vmatprep.subr.bf16.mxu0 0
        %2951 = vmatpush1.bf16.msra.mxu0 %v2864
        %2952 = vmatprep.subr.bf16.mxu0 0
        %2953 = vmatpush1.bf16.msra.mxu0 %v2865
        %2954 = vmatprep.subr.bf16.mxu0 0
        %2955 = vmatpush1.bf16.msra.mxu0 %v2866
        %2956 = vmatprep.subr.bf16.mxu0 0
        %2957 = vmatpush1.bf16.msra.mxu0 %v2867
        %2958 = vmatprep.subr.bf16.mxu0 0
        %2959 = vmatpush1.bf16.msra.mxu0 %v2868
        %2960 = vmatprep.subr.bf16.mxu0 0
        %2961 = vmatpush1.bf16.msra.mxu0 %v2869
        %2962 = vmatprep.subr.bf16.mxu0 0
        %2963 = vmatpush1.bf16.msra.mxu0 %v2870
        %2964 = vmatprep.subr.bf16.mxu0 0
        %2965 = vmatpush1.bf16.msra.mxu0 %v2871
        %2966 = vmatprep.subr.bf16.mxu0 0
        %2967 = vmatpush1.bf16.msra.mxu0 %v2872
        %2968 = vmatprep.subr.bf16.mxu0 0
        %2969 = vmatpush1.bf16.msra.mxu0 %v2873
        %2970 = vmatprep.subr.bf16.mxu0 0
        %2971 = vmatpush1.bf16.msra.mxu0 0
        %2972 = vmatprep.subr.bf16.mxu0 0
        %2973 = vmatpush1.bf16.msra.mxu0 0
        %2974 = vmatprep.subr.bf16.mxu0 0
        %2975 = vmatpush1.bf16.msra.mxu0 0
        %2976 = vmatprep.subr.bf16.mxu0 0
        %2977 = vmatpush1.bf16.msra.mxu0 0
        %2978 = vmatprep.mubr.bf16.mxu0 %v2903
        %2979 = vmatmul.mubr.bf16.gmra.mrb[0].mxu0 %v2676
        %v2980 = vpop.f32.mrb[0].mxu0
        %v2981 = vadd.f32 %v2940, %v2980
        %v2982 = vpop.f32.mrb[0].mxu0
        %v2983 = vpop.f32.mrb[0].mxu0
        %v2984 = vadd.f32 %v2943, %v2983
        %v2985 = vpop.f32.mrb[0].mxu0
        %2986 = vdwg.mxu0
        %v2987 = vld [vmem:[#allocation20] sm:$0x1]
        %v2989 = vlaneseq
        %v2990 = vshrl.u32 %v2989, 7
        %v2991 = vsub.s32 0, %v2990
        %v2992 = vrot.slane %v2987, %v2991
        %v2994 = vmul.f32 %v2981, %v2992
        %v2995 = vmul.f32 %v2984, %v2992
        %v2996 = vld [vmem:[#allocation21] sm:$0x1]
        %v2998 = vlaneseq
        %v2999 = vshrl.u32 %v2998, 7
        %v3000 = vsub.s32 0, %v2999
        %v3001 = vrot.slane %v2996, %v3000
        %v3003 = vadd.f32 %v2994, %v3001
        %v3004 = vadd.f32 %v2995, %v3001
        %v3005 = vsel %vm1722, %v3003, 0.0
        %v3006 = vsel %vm1722, %v3004, 0.0
        %v3007 = vadd.f32 %v3005, %v3006
        %v3008 = vrot.slane %v3007, 4
        %v3009 = vadd.f32 %v3007, %v3008
        %v3010 = vrot.slane %v3009, 2
        %v3011 = vadd.f32 %v3009, %v3010
        %v3012 = vrot.slane %v3011, 1
        %v3013 = vadd.f32 %v3011, %v3012
        %v3014 = vrcp.pop 16.0
        %v3015 = vmul.f32 %v3013, %v3014
        %v3016 = vsel %vm1722, %v3003, -inf
        %v3017 = vsel %vm1722, %v3004, -inf
        %v3018 = vmax.f32 %v3016, %v3017
        %v3019 = vrot.slane %v3018, 4
        %v3020 = vmax.f32 %v3018, %v3019
        %v3021 = vrot.slane %v3020, 2
        %v3022 = vmax.f32 %v3020, %v3021
        %v3023 = vrot.slane %v3022, 1
        %v3024 = vmax.f32 %v3022, %v3023
        %v3025 = vlaneseq
        %v3026 = vshrl.u32 %v3025, 7
        %vm3027 = vcmp.eq.s32.totalorder %v3026, 0
        %v3028 = vsel %vm3027, %v3015, %v3024
        %v3029 = vpack.c.bf16 %v3028, %v3028
        %v3030 = vld [vmem:[%s27] sm:$0xf]
        %v3031 = vld [vmem:[%s27 + $0x4] sm:$0xf]
        %v3032 = vld [vmem:[%s27 + $0x8] sm:$0xf]
        %v3033 = vld [vmem:[%s27 + $0xc] sm:$0xf]
        %v3034 = vld [vmem:[%s27 + $0x10] sm:$0xf]
        %v3035 = vld [vmem:[%s27 + $0x14] sm:$0xf]
        %v3036 = vld [vmem:[%s27 + $0x18] sm:$0xf]
        %v3037 = vld [vmem:[%s27 + $0x1c] sm:$0xf]
        %v3038 = vld [vmem:[#allocation27] sm:$0x1]
        %v3040 = vlaneseq
        %v3041 = vshrl.u32 %v3040, 7
        %v3042 = vsub.s32 0, %v3041
        %v3043 = vrot.slane %v3038, %v3042
        %v3053 = vunpack.c.l.b16 %v3030
        %v3054 = vunpack.c.l.b16 %v3031
        %v3055 = vunpack.c.l.b16 %v3032
        %v3056 = vunpack.c.l.b16 %v3033
        %v3057 = vunpack.c.l.b16 %v3034
        %v3058 = vunpack.c.l.b16 %v3035
        %v3059 = vunpack.c.l.b16 %v3036
        %v3060 = vunpack.c.l.b16 %v3037
        %v3061 = vpack.c.b16 %v3054, %v3053
        %v3062 = vpack.c.b16 %v3056, %v3055
        %v3063 = vpack.c.b16 %v3058, %v3057
        %v3064 = vpack.c.b16 %v3060, %v3059
        %v3070 = vsel %vm1722, %v3029, 0
        %3072 = vmatprep.subr.bf16.mxu0 0
        %3073 = vmatpush1.bf16.msra.mxu0 %v3061
        %3074 = vmatprep.subr.bf16.mxu0 0
        %3075 = vmatpush1.bf16.msra.mxu0 %v3062
        %3076 = vmatprep.subr.bf16.mxu0 0
        %3077 = vmatpush1.bf16.msra.mxu0 %v3063
        %3078 = vmatprep.subr.bf16.mxu0 0
        %3079 = vmatpush1.bf16.msra.mxu0 %v3064
        %3080 = vmatprep.subr.bf16.mxu0 0
        %3081 = vmatpush1.bf16.msra.mxu0 0
        %3082 = vmatprep.subr.bf16.mxu0 0
        %3083 = vmatpush1.bf16.msra.mxu0 0
        %3084 = vmatprep.subr.bf16.mxu0 0
        %3085 = vmatpush1.bf16.msra.mxu0 0
        %3086 = vmatprep.subr.bf16.mxu0 0
        %3087 = vmatpush1.bf16.msra.mxu0 0
        %3088 = vmatprep.subr.bf16.mxu0 0
        %3089 = vmatpush1.bf16.msra.mxu0 0
        %3090 = vmatprep.subr.bf16.mxu0 0
        %3091 = vmatpush1.bf16.msra.mxu0 0
        %3092 = vmatprep.subr.bf16.mxu0 0
        %3093 = vmatpush1.bf16.msra.mxu0 0
        %3094 = vmatprep.subr.bf16.mxu0 0
        %3095 = vmatpush1.bf16.msra.mxu0 0
        %3096 = vmatprep.subr.bf16.mxu0 0
        %3097 = vmatpush1.bf16.msra.mxu0 0
        %3098 = vmatprep.subr.bf16.mxu0 0
        %3099 = vmatpush1.bf16.msra.mxu0 0
        %3100 = vmatprep.subr.bf16.mxu0 0
        %3101 = vmatpush1.bf16.msra.mxu0 0
        %3102 = vmatprep.subr.bf16.mxu0 0
        %3103 = vmatpush1.bf16.msra.mxu0 0
        %3104 = vmatprep.mubr.bf16.mxu0 0
        %3105 = vmatmul.mubr.bf16.gmra.mrb[0].mxu0 %v3070
        %v3106 = vpop.f32.mrb[0].mxu0
        %v3107 = vadd.f32 %v3043, %v3106
        %v3108 = vpop.f32.mrb[0].mxu0
        %v3109 = vpop.f32.mrb[0].mxu0
        %v3110 = vpop.f32.mrb[0].mxu0
        %3111 = vdwg.mxu0
        %v3112 = vmax.f32 %v3107, 0.0
        %v3113 = vpack.c.bf16 %v3112, %v3112
        %v3114 = vld [vmem:[#allocation29] sm:$0xf]
        %v3115 = vld [vmem:[#allocation30] sm:$0x1]
        %v3117 = vlaneseq
        %v3118 = vshrl.u32 %v3117, 7
        %v3119 = vsub.s32 0, %v3118
        %v3120 = vrot.slane %v3115, %v3119
        %v3123 = vsel %vm1719, %v3113, 0
        %vm3125 = vcmask 1043456
        %v3127 = vsel %vm3125, %v3114, 0
        %3129 = vmatprep.subr.bf16.mxu0 0
        %3130 = vmatpush1.bf16.msra.mxu0 %v3127
        %3131 = vmatprep.subr.bf16.mxu0 0
        %3132 = vmatpush1.bf16.msra.mxu0 0
        %3133 = vmatprep.subr.bf16.mxu0 0
        %3134 = vmatpush1.bf16.msra.mxu0 0
        %3135 = vmatprep.subr.bf16.mxu0 0
        %3136 = vmatpush1.bf16.msra.mxu0 0
        %3137 = vmatprep.subr.bf16.mxu0 0
        %3138 = vmatpush1.bf16.msra.mxu0 0
        %3139 = vmatprep.subr.bf16.mxu0 0
        %3140 = vmatpush1.bf16.msra.mxu0 0
        %3141 = vmatprep.subr.bf16.mxu0 0
        %3142 = vmatpush1.bf16.msra.mxu0 0
        %3143 = vmatprep.subr.bf16.mxu0 0
        %3144 = vmatpush1.bf16.msra.mxu0 0
        %3145 = vmatprep.subr.bf16.mxu0 0
        %3146 = vmatpush1.bf16.msra.mxu0 0
        %3147 = vmatprep.subr.bf16.mxu0 0
        %3148 = vmatpush1.bf16.msra.mxu0 0
        %3149 = vmatprep.subr.bf16.mxu0 0
        %3150 = vmatpush1.bf16.msra.mxu0 0
        %3151 = vmatprep.subr.bf16.mxu0 0
        %3152 = vmatpush1.bf16.msra.mxu0 0
        %3153 = vmatprep.subr.bf16.mxu0 0
        %3154 = vmatpush1.bf16.msra.mxu0 0
        %3155 = vmatprep.subr.bf16.mxu0 0
        %3156 = vmatpush1.bf16.msra.mxu0 0
        %3157 = vmatprep.subr.bf16.mxu0 0
        %3158 = vmatpush1.bf16.msra.mxu0 0
        %3159 = vmatprep.subr.bf16.mxu0 0
        %3160 = vmatpush1.bf16.msra.mxu0 0
        %3161 = vmatprep.mubr.bf16.mxu0 0
        %3162 = vmatmul.mubr.bf16.gmra.mrb[0].mxu0 %v3123
        %v3163 = vpop.f32.mrb[0].mxu0
        %v3164 = vadd.f32 %v3120, %v3163
        %v3165 = vpop.f32.mrb[0].mxu0
        %v3166 = vpop.f32.mrb[0].mxu0
        %v3167 = vpop.f32.mrb[0].mxu0
        %3168 = vdwg.mxu0
        %vm3169 = vcmask 517120
        %v3170 = vsel %vm3169, %v3164, 0.0
        %v3171 = vrot.slane %v3170, 4
        %v3172 = vadd.f32 %v3170, %v3171
        %v3173 = vrot.slane %v3172, 2
        %v3174 = vadd.f32 %v3172, %v3173
        %v3175 = vrot.slane %v3174, 1
        %v3176 = vadd.f32 %v3174, %v3175
        %v3177 = vxor.u32 %v3176, 2147483648
        %v3178 = vmul.f32 %v3177, 1.442695
        %v3179 = vpow.pop %v3178
        %v3180 = vadd.f32 %v3179, 1.0
        %v3181 = vrcp.pop %v3180
        %v3182 = vmul.f32 1.0, %v3181
        %v3183 = vmul.f32 %v3003, %v3182
        %v3184 = vmul.f32 %v3004, %v3182
        %v3185 = vsel %vm1722, %v3183, -inf
        %3186 = vmax.xlane.f32.xlu0 %v3185
        %v3187 = vpop.xlane.xlu0 %3186
        %v3188 = vsel %vm1722, %v3184, -inf
        %3189 = vmax.xlane.f32.xlu0 %v3188
        %v3190 = vpop.xlane.xlu0 %3189
        %v3191 = vxor.u32 %v3187, 2147483648
        %v3192 = vxor.u32 %v3190, 2147483648
        %v3193 = vmul.f32 %v3191, 1.442695
        %v3194 = vpow.pop %v3193
        %v3195 = vmul.f32 %v3192, 1.442695
        %v3196 = vpow.pop %v3195
        %v3197 = vadd.f32 %v3194, 1.0
        %v3198 = vadd.f32 %v3196, 1.0
        %v3199 = vrcp.pop %v3197
        %v3200 = vmul.f32 1.0, %v3199
        %v3201 = vrcp.pop %v3198
        %v3202 = vmul.f32 1.0, %v3201
        %v3203 = vmul.f32 %v3183, %v3200
        %v3204 = vmul.f32 %v3184, %v3202
        %v3205 = vadd.f32 %v3203, %v2204
        %v3206 = vadd.f32 %v3204, %v2205
        %3207 = vst.msk [vmem:[#allocation6 + $0x8] sm:$0xff] %vm1722, %v3205
        %3208 = vst.msk [vmem:[#allocation6 + $0x10] sm:$0xff] %vm1722, %v3206
        %s3209 = scalar_lea.vmem [#allocation6], 8
        %v3210 = vld [vmem:[%s3209] ss:$2 sm:$0xff]
        %v3211 = vpack.c.bf16 %v3210, %v3210
        %v3212 = vld [vmem:[#allocation38] sm:$0xf]
        %v3213 = vld [vmem:[#allocation38 + $0x4] sm:$0xf]
        %v3214 = vld [vmem:[#allocation38 + $0x8] sm:$0xf]
        %v3215 = vld [vmem:[#allocation38 + $0xc] sm:$0xf]
        %v3216 = vld [vmem:[#allocation38 + $0x10] sm:$0xf]
        %v3217 = vld [vmem:[#allocation38 + $0x14] sm:$0xf]
        %v3218 = vld [vmem:[#allocation38 + $0x18] sm:$0xf]
        %v3219 = vld [vmem:[#allocation38 + $0x1c] sm:$0xf]
        %v3228 = vunpack.c.l.b16 %v3212
        %v3229 = vunpack.c.l.b16 %v3213
        %v3230 = vunpack.c.l.b16 %v3214
        %v3231 = vunpack.c.l.b16 %v3215
        %v3232 = vunpack.c.l.b16 %v3216
        %v3233 = vunpack.c.l.b16 %v3217
        %v3234 = vunpack.c.l.b16 %v3218
        %v3235 = vunpack.c.l.b16 %v3219
        %v3236 = vpack.c.b16 %v3229, %v3228
        %v3237 = vpack.c.b16 %v3231, %v3230
        %v3238 = vpack.c.b16 %v3233, %v3232
        %v3239 = vpack.c.b16 %v3235, %v3234
        %v3245 = vsel %vm1722, %v3211, 0
        %3247 = vmatprep.subr.bf16.mxu0 0
        %3248 = vmatpush1.bf16.msra.mxu0 %v3236
        %3249 = vmatprep.subr.bf16.mxu0 0
        %3250 = vmatpush1.bf16.msra.mxu0 %v3237
        %3251 = vmatprep.subr.bf16.mxu0 0
        %3252 = vmatpush1.bf16.msra.mxu0 %v3238
        %3253 = vmatprep.subr.bf16.mxu0 0
        %3254 = vmatpush1.bf16.msra.mxu0 %v3239
        %3255 = vmatprep.subr.bf16.mxu0 0
        %3256 = vmatpush1.bf16.msra.mxu0 0
        %3257 = vmatprep.subr.bf16.mxu0 0
        %3258 = vmatpush1.bf16.msra.mxu0 0
        %3259 = vmatprep.subr.bf16.mxu0 0
        %3260 = vmatpush1.bf16.msra.mxu0 0
        %3261 = vmatprep.subr.bf16.mxu0 0
        %3262 = vmatpush1.bf16.msra.mxu0 0
        %3263 = vmatprep.subr.bf16.mxu0 0
        %3264 = vmatpush1.bf16.msra.mxu0 0
        %3265 = vmatprep.subr.bf16.mxu0 0
        %3266 = vmatpush1.bf16.msra.mxu0 0
        %3267 = vmatprep.subr.bf16.mxu0 0
        %3268 = vmatpush1.bf16.msra.mxu0 0
        %3269 = vmatprep.subr.bf16.mxu0 0
        %3270 = vmatpush1.bf16.msra.mxu0 0
        %3271 = vmatprep.subr.bf16.mxu0 0
        %3272 = vmatpush1.bf16.msra.mxu0 0
        %3273 = vmatprep.subr.bf16.mxu0 0
        %3274 = vmatpush1.bf16.msra.mxu0 0
        %3275 = vmatprep.subr.bf16.mxu0 0
        %3276 = vmatpush1.bf16.msra.mxu0 0
        %3277 = vmatprep.subr.bf16.mxu0 0
        %3278 = vmatpush1.bf16.msra.mxu0 0
        %3279 = vmatprep.mubr.bf16.mxu0 0
        %3280 = vmatmul.mubr.bf16.gmra.mrb[0].mxu0 %v3245
        %v3281 = vpop.f32.mrb[0].mxu0
        %v3282 = vadd.f32 0.0, %v3281
        %v3283 = vpop.f32.mrb[0].mxu0
        %v3284 = vpop.f32.mrb[0].mxu0
        %v3285 = vpop.f32.mrb[0].mxu0
        %3286 = vdwg.mxu0
        %v3287 = vld [vmem:[#allocation39] sm:$0x1]
        %v3289 = vlaneseq
        %v3290 = vshrl.u32 %v3289, 7
        %v3291 = vsub.s32 0, %v3290
        %v3292 = vrot.slane %v3287, %v3291
        %v3294 = vmul.f32 %v3282, %v3292
        %v3295 = vld [vmem:[#allocation41] sm:$0x1]
        %v3297 = vlaneseq
        %v3298 = vshrl.u32 %v3297, 7
        %v3299 = vsub.s32 0, %v3298
        %v3300 = vrot.slane %v3295, %v3299
        %v3302 = vadd.f32 %v3294, %v3300
        %s3303 = scalar_lea.vmem [#allocation6], 5
        %v3304 = vld [vmem:[%s3303] ss:$2 sm:$0xff]
        %3305 = vst.msk [vmem:[#allocation11] sm:$0xff] %vm1722, %v3304
        %s3306 = scalar_lea.vmem [#allocation6], 6
        %v3307 = vld [vmem:[%s3306] ss:$2 sm:$0xff]
        %3309 = vrot.lane.b32.xlu0 %v3307, 64
        %v3310 = vpop.permute.xlu0 %3309
        %3312 = vst.msk [vmem:[#allocation11] sm:$0xff] %vm2224, %v3310
        %s3313 = scalar_lea.vmem [#allocation6], 7
        %v3314 = vld [vmem:[%s3313] ss:$2 sm:$0xff]
        %3315 = vst.msk [vmem:[#allocation11 + $0x8] sm:$0xff] %vm1722, %v3314
        %v3316 = vld [vmem:[%s3209] ss:$2 sm:$0xff]
        %3318 = vrot.lane.b32.xlu0 %v3316, 64
        %v3319 = vpop.permute.xlu0 %3318
        %3321 = vst.msk [vmem:[#allocation11 + $0x8] sm:$0xff] %vm2224, %v3319
        %s3322 = scalar_lea.vmem [#allocation6], 9
        %v3323 = vld [vmem:[%s3322] ss:$2 sm:$0xff]
        %3324 = vst.msk [vmem:[#allocation11 + $0x10] sm:$0xff] %vm1722, %v3323
        %s3325 = scalar_lea.vmem [#allocation6], 10
        %v3326 = vld [vmem:[%s3325] ss:$2 sm:$0xff]
        %3328 = vrot.lane.b32.xlu0 %v3326, 64
        %v3329 = vpop.permute.xlu0 %3328
        %3331 = vst.msk [vmem:[#allocation11 + $0x10] sm:$0xff] %vm2224, %v3329
        %s3332 = scalar_lea.vmem [#allocation6], 11
        %v3333 = vld [vmem:[%s3332] ss:$2 sm:$0xff]
        %3334 = vst.msk [vmem:[#allocation11 + $0x18] sm:$0xff] %vm1722, %v3333
        %v3335 = vld [vmem:[#allocation11] sm:$0xff]
        %v3336 = vld [vmem:[#allocation11 + $0x8] sm:$0xff]
        %v3337 = vld [vmem:[#allocation11 + $0x10] sm:$0xff]
        %v3338 = vld [vmem:[#allocation11 + $0x18] sm:$0xff]
        %v3339 = vpack.c.bf16 %v3335, %v3335
        %v3340 = vpack.c.bf16 %v3336, %v3336
        %v3341 = vpack.c.bf16 %v3337, %v3337
        %v3342 = vpack.c.bf16 %v3338, %v3338
        %v3343 = vld [vmem:[%s35] sm:$0xf]
        %v3344 = vld [vmem:[%s35 + $0x4] sm:$0xf]
        %v3345 = vld [vmem:[%s35 + $0x8] sm:$0xf]
        %v3346 = vld [vmem:[%s35 + $0xc] sm:$0xf]
        %v3347 = vld [vmem:[%s35 + $0x10] sm:$0xf]
        %v3348 = vld [vmem:[%s35 + $0x14] sm:$0xf]
        %v3349 = vld [vmem:[%s35 + $0x18] sm:$0xf]
        %v3350 = vld [vmem:[%s35 + $0x1c] sm:$0xf]
        %v3351 = vld [vmem:[%s35 + $0x20] sm:$0xf]
        %v3352 = vld [vmem:[%s35 + $0x24] sm:$0xf]
        %v3353 = vld [vmem:[%s35 + $0x28] sm:$0xf]
        %v3354 = vld [vmem:[%s35 + $0x2c] sm:$0xf]
        %v3355 = vld [vmem:[%s35 + $0x30] sm:$0xf]
        %v3356 = vld [vmem:[%s35 + $0x34] sm:$0xf]
        %v3357 = vld [vmem:[%s35 + $0x38] sm:$0xf]
        %v3358 = vld [vmem:[%s35 + $0x3c] sm:$0xf]
        %v3359 = vld [vmem:[%s35 + $0x40] sm:$0xf]
        %v3360 = vld [vmem:[%s35 + $0x44] sm:$0xf]
        %v3361 = vld [vmem:[%s35 + $0x48] sm:$0xf]
        %v3362 = vld [vmem:[%s35 + $0x4c] sm:$0xf]
        %v3363 = vld [vmem:[%s35 + $0x50] sm:$0xf]
        %v3364 = vld [vmem:[%s35 + $0x54] sm:$0xf]
        %v3365 = vld [vmem:[%s35 + $0x58] sm:$0xf]
        %v3366 = vld [vmem:[%s35 + $0x5c] sm:$0xf]
        %v3367 = vld [vmem:[%s35 + $0x60] sm:$0xf]
        %v3368 = vld [vmem:[%s35 + $0x64] sm:$0xf]
        %v3369 = vld [vmem:[%s35 + $0x68] sm:$0xf]
        %v3370 = vld [vmem:[%s35 + $0x6c] sm:$0xf]
        %v3371 = vld [vmem:[%s35 + $0x70] sm:$0xf]
        %v3372 = vld [vmem:[%s35 + $0x74] sm:$0xf]
        %v3373 = vld [vmem:[%s35 + $0x78] sm:$0xf]
        %v3374 = vld [vmem:[%s35 + $0x7c] sm:$0xf]
        %v3375 = vld [vmem:[%s35 + $0x80] sm:$0xf]
        %v3376 = vld [vmem:[%s35 + $0x84] sm:$0xf]
        %v3377 = vld [vmem:[%s35 + $0x88] sm:$0xf]
        %v3378 = vld [vmem:[%s35 + $0x8c] sm:$0xf]
        %v3379 = vld [vmem:[%s35 + $0x90] sm:$0xf]
        %v3380 = vld [vmem:[%s35 + $0x94] sm:$0xf]
        %v3381 = vld [vmem:[%s35 + $0x98] sm:$0xf]
        %v3382 = vld [vmem:[%s35 + $0x9c] sm:$0xf]
        %v3383 = vld [vmem:[%s35 + $0xa0] sm:$0xf]
        %v3384 = vld [vmem:[%s35 + $0xa4] sm:$0xf]
        %v3385 = vld [vmem:[%s35 + $0xa8] sm:$0xf]
        %v3386 = vld [vmem:[%s35 + $0xac] sm:$0xf]
        %v3387 = vld [vmem:[%s35 + $0xb0] sm:$0xf]
        %v3388 = vld [vmem:[%s35 + $0xb4] sm:$0xf]
        %v3389 = vld [vmem:[%s35 + $0xb8] sm:$0xf]
        %v3390 = vld [vmem:[%s35 + $0xbc] sm:$0xf]
        %v3391 = vld [vmem:[%s35 + $0xc0] sm:$0xf]
        %v3392 = vld [vmem:[%s35 + $0xc4] sm:$0xf]
        %v3393 = vld [vmem:[%s35 + $0xc8] sm:$0xf]
        %v3394 = vld [vmem:[%s35 + $0xcc] sm:$0xf]
        %v3395 = vld [vmem:[%s35 + $0xd0] sm:$0xf]
        %v3396 = vld [vmem:[%s35 + $0xd4] sm:$0xf]
        %v3397 = vld [vmem:[%s35 + $0xd8] sm:$0xf]
        %v3398 = vld [vmem:[%s35 + $0xdc] sm:$0xf]
        %v3455 = vunpack.c.l.b16 %v3343
        %v3456 = vunpack.c.l.b16 %v3344
        %v3457 = vunpack.c.l.b16 %v3345
        %v3458 = vunpack.c.l.b16 %v3346
        %v3459 = vunpack.c.l.b16 %v3347
        %v3460 = vunpack.c.l.b16 %v3348
        %v3461 = vunpack.c.l.b16 %v3349
        %v3462 = vunpack.c.l.b16 %v3350
        %v3463 = vunpack.c.l.b16 %v3351
        %v3464 = vunpack.c.l.b16 %v3352
        %v3465 = vunpack.c.l.b16 %v3353
        %v3466 = vunpack.c.l.b16 %v3354
        %v3467 = vunpack.c.l.b16 %v3355
        %v3468 = vunpack.c.l.b16 %v3356
        %v3469 = vunpack.c.l.b16 %v3357
        %v3470 = vunpack.c.l.b16 %v3358
        %v3471 = vunpack.c.l.b16 %v3359
        %v3472 = vunpack.c.l.b16 %v3360
        %v3473 = vunpack.c.l.b16 %v3361
        %v3474 = vunpack.c.l.b16 %v3362
        %v3475 = vunpack.c.l.b16 %v3363
        %v3476 = vunpack.c.l.b16 %v3364
        %v3477 = vunpack.c.l.b16 %v3365
        %v3478 = vunpack.c.l.b16 %v3366
        %v3479 = vunpack.c.l.b16 %v3367
        %v3480 = vunpack.c.l.b16 %v3368
        %v3481 = vunpack.c.l.b16 %v3369
        %v3482 = vunpack.c.l.b16 %v3370
        %v3483 = vunpack.c.l.b16 %v3371
        %v3484 = vunpack.c.l.b16 %v3372
        %v3485 = vunpack.c.l.b16 %v3373
        %v3486 = vunpack.c.l.b16 %v3374
        %v3487 = vunpack.c.l.b16 %v3375
        %v3488 = vunpack.c.l.b16 %v3376
        %v3489 = vunpack.c.l.b16 %v3377
        %v3490 = vunpack.c.l.b16 %v3378
        %v3491 = vunpack.c.l.b16 %v3379
        %v3492 = vunpack.c.l.b16 %v3380
        %v3493 = vunpack.c.l.b16 %v3381
        %v3494 = vunpack.c.l.b16 %v3382
        %v3495 = vunpack.c.l.b16 %v3383
        %v3496 = vunpack.c.l.b16 %v3384
        %v3497 = vunpack.c.l.b16 %v3385
        %v3498 = vunpack.c.l.b16 %v3386
        %v3499 = vunpack.c.l.b16 %v3387
        %v3500 = vunpack.c.l.b16 %v3388
        %v3501 = vunpack.c.l.b16 %v3389
        %v3502 = vunpack.c.l.b16 %v3390
        %v3503 = vunpack.c.l.b16 %v3391
        %v3504 = vunpack.c.l.b16 %v3392
        %v3505 = vunpack.c.l.b16 %v3393
        %v3506 = vunpack.c.l.b16 %v3394
        %v3507 = vunpack.c.l.b16 %v3395
        %v3508 = vunpack.c.l.b16 %v3396
        %v3509 = vunpack.c.l.b16 %v3397
        %v3510 = vunpack.c.l.b16 %v3398
        %v3511 = vpack.c.b16 %v3456, %v3455
        %v3512 = vpack.c.b16 %v3458, %v3457
        %v3513 = vpack.c.b16 %v3460, %v3459
        %v3514 = vpack.c.b16 %v3462, %v3461
        %v3515 = vpack.c.b16 %v3464, %v3463
        %v3516 = vpack.c.b16 %v3466, %v3465
        %v3517 = vpack.c.b16 %v3468, %v3467
        %v3518 = vpack.c.b16 %v3470, %v3469
        %v3519 = vpack.c.b16 %v3472, %v3471
        %v3520 = vpack.c.b16 %v3474, %v3473
        %v3521 = vpack.c.b16 %v3476, %v3475
        %v3522 = vpack.c.b16 %v3478, %v3477
        %v3523 = vpack.c.b16 %v3480, %v3479
        %v3524 = vpack.c.b16 %v3482, %v3481
        %v3525 = vpack.c.b16 %v3484, %v3483
        %v3526 = vpack.c.b16 %v3486, %v3485
        %v3527 = vpack.c.b16 %v3488, %v3487
        %v3528 = vpack.c.b16 %v3490, %v3489
        %v3529 = vpack.c.b16 %v3492, %v3491
        %v3530 = vpack.c.b16 %v3494, %v3493
        %v3531 = vpack.c.b16 %v3496, %v3495
        %v3532 = vpack.c.b16 %v3498, %v3497
        %v3533 = vpack.c.b16 %v3500, %v3499
        %v3534 = vpack.c.b16 %v3502, %v3501
        %v3535 = vpack.c.b16 %v3504, %v3503
        %v3536 = vpack.c.b16 %v3506, %v3505
        %v3537 = vpack.c.b16 %v3508, %v3507
        %v3538 = vpack.c.b16 %v3510, %v3509
        %v3568 = vsel %vm1722, %v3342, 0
        %3570 = vmatprep.subr.bf16.mxu0 0
        %3571 = vmatpush1.bf16.msra.mxu0 %v3511
        %3572 = vmatprep.subr.bf16.mxu0 0
        %3573 = vmatpush1.bf16.msra.mxu0 %v3512
        %3574 = vmatprep.subr.bf16.mxu0 0
        %3575 = vmatpush1.bf16.msra.mxu0 %v3513
        %3576 = vmatprep.subr.bf16.mxu0 0
        %3577 = vmatpush1.bf16.msra.mxu0 %v3514
        %3578 = vmatprep.subr.bf16.mxu0 0
        %3579 = vmatpush1.bf16.msra.mxu0 %v3515
        %3580 = vmatprep.subr.bf16.mxu0 0
        %3581 = vmatpush1.bf16.msra.mxu0 %v3516
        %3582 = vmatprep.subr.bf16.mxu0 0
        %3583 = vmatpush1.bf16.msra.mxu0 %v3517
        %3584 = vmatprep.subr.bf16.mxu0 0
        %3585 = vmatpush1.bf16.msra.mxu0 %v3518
        %3586 = vmatprep.subr.bf16.mxu0 0
        %3587 = vmatpush1.bf16.msra.mxu0 %v3519
        %3588 = vmatprep.subr.bf16.mxu0 0
        %3589 = vmatpush1.bf16.msra.mxu0 %v3520
        %3590 = vmatprep.subr.bf16.mxu0 0
        %3591 = vmatpush1.bf16.msra.mxu0 %v3521
        %3592 = vmatprep.subr.bf16.mxu0 0
        %3593 = vmatpush1.bf16.msra.mxu0 %v3522
        %3594 = vmatprep.subr.bf16.mxu0 0
        %3595 = vmatpush1.bf16.msra.mxu0 %v3523
        %3596 = vmatprep.subr.bf16.mxu0 0
        %3597 = vmatpush1.bf16.msra.mxu0 %v3524
        %3598 = vmatprep.subr.bf16.mxu0 0
        %3599 = vmatpush1.bf16.msra.mxu0 %v3525
        %3600 = vmatprep.subr.bf16.mxu0 0
        %3601 = vmatpush1.bf16.msra.mxu0 %v3526
        %3602 = vmatprep.mubr.bf16.mxu0 %v3340
        %3603 = vmatmul.mubr.bf16.gmra.mrb[0].mxu0 %v3339
        %v3604 = vpop.f32.mrb[0].mxu0
        %v3605 = vadd.f32 0.0, %v3604
        %v3606 = vpop.f32.mrb[0].mxu0
        %v3607 = vpop.f32.mrb[0].mxu0
        %v3608 = vpop.f32.mrb[0].mxu0
        %3609 = vdwg.mxu0
        %3610 = vmatprep.subr.bf16.mxu0 0
        %3611 = vmatpush1.bf16.msra.mxu0 %v3527
        %3612 = vmatprep.subr.bf16.mxu0 0
        %3613 = vmatpush1.bf16.msra.mxu0 %v3528
        %3614 = vmatprep.subr.bf16.mxu0 0
        %3615 = vmatpush1.bf16.msra.mxu0 %v3529
        %3616 = vmatprep.subr.bf16.mxu0 0
        %3617 = vmatpush1.bf16.msra.mxu0 %v3530
        %3618 = vmatprep.subr.bf16.mxu0 0
        %3619 = vmatpush1.bf16.msra.mxu0 %v3531
        %3620 = vmatprep.subr.bf16.mxu0 0
        %3621 = vmatpush1.bf16.msra.mxu0 %v3532
        %3622 = vmatprep.subr.bf16.mxu0 0
        %3623 = vmatpush1.bf16.msra.mxu0 %v3533
        %3624 = vmatprep.subr.bf16.mxu0 0
        %3625 = vmatpush1.bf16.msra.mxu0 %v3534
        %3626 = vmatprep.subr.bf16.mxu0 0
        %3627 = vmatpush1.bf16.msra.mxu0 %v3535
        %3628 = vmatprep.subr.bf16.mxu0 0
        %3629 = vmatpush1.bf16.msra.mxu0 %v3536
        %3630 = vmatprep.subr.bf16.mxu0 0
        %3631 = vmatpush1.bf16.msra.mxu0 %v3537
        %3632 = vmatprep.subr.bf16.mxu0 0
        %3633 = vmatpush1.bf16.msra.mxu0 %v3538
        %3634 = vmatprep.subr.bf16.mxu0 0
        %3635 = vmatpush1.bf16.msra.mxu0 0
        %3636 = vmatprep.subr.bf16.mxu0 0
        %3637 = vmatpush1.bf16.msra.mxu0 0
        %3638 = vmatprep.subr.bf16.mxu0 0
        %3639 = vmatpush1.bf16.msra.mxu0 0
        %3640 = vmatprep.subr.bf16.mxu0 0
        %3641 = vmatpush1.bf16.msra.mxu0 0
        %3642 = vmatprep.mubr.bf16.mxu0 %v3568
        %3643 = vmatmul.mubr.bf16.gmra.mrb[0].mxu0 %v3341
        %v3644 = vpop.f32.mrb[0].mxu0
        %v3645 = vadd.f32 %v3605, %v3644
        %v3646 = vpop.f32.mrb[0].mxu0
        %v3647 = vpop.f32.mrb[0].mxu0
        %v3648 = vpop.f32.mrb[0].mxu0
        %3649 = vdwg.mxu0
        %v3650 = vld [vmem:[#allocation32] sm:$0x1]
        %v3652 = vlaneseq
        %v3653 = vshrl.u32 %v3652, 7
        %v3654 = vsub.s32 0, %v3653
        %v3655 = vrot.slane %v3650, %v3654
        %v3657 = vmul.f32 %v3645, %v3655
        %v3658 = vld [vmem:[#allocation33] sm:$0x1]
        %v3660 = vlaneseq
        %v3661 = vshrl.u32 %v3660, 7
        %v3662 = vsub.s32 0, %v3661
        %v3663 = vrot.slane %v3658, %v3662
        %v3665 = vadd.f32 %v3657, %v3663
        %v3666 = vmax.f32 %v3665, 0.0
        %3667 = vst [vmem:[#allocation7 + $0x8] sm:$0xff] %v3666
        %v3668 = vld [vmem:[#allocation7 + $0x5] sm:$0xff]
        %3669 = vst [vmem:[#allocation11] sm:$0xff] %v3668
        %v3670 = vld [vmem:[#allocation7 + $0x6] sm:$0xff]
        %3671 = vst [vmem:[#allocation11 + $0x8] sm:$0xff] %v3670
        %v3672 = vld [vmem:[#allocation7 + $0x7] sm:$0xff]
        %3673 = vst [vmem:[#allocation11 + $0x10] sm:$0xff] %v3672
        %v3674 = vld [vmem:[#allocation7 + $0x8] sm:$0xff]
        %3675 = vst [vmem:[#allocation11 + $0x18] sm:$0xff] %v3674
        %v3676 = vld [vmem:[#allocation7 + $0x9] sm:$0xff]
        %3677 = vst [vmem:[#allocation11 + $0x20] sm:$0xff] %v3676
        %v3678 = vld [vmem:[#allocation7 + $0xa] sm:$0xff]
        %3679 = vst [vmem:[#allocation11 + $0x28] sm:$0xff] %v3678
        %v3680 = vld [vmem:[#allocation7 + $0xb] sm:$0xff]
        %3681 = vst [vmem:[#allocation11 + $0x30] sm:$0xff] %v3680
        %v3682 = vld [vmem:[#allocation11] sm:$0xff]
        %v3683 = vld [vmem:[#allocation11 + $0x8] sm:$0xff]
        %v3684 = vld [vmem:[#allocation11 + $0x10] sm:$0xff]
        %v3685 = vld [vmem:[#allocation11 + $0x18] sm:$0xff]
        %v3686 = vld [vmem:[#allocation11 + $0x20] sm:$0xff]
        %v3687 = vld [vmem:[#allocation11 + $0x28] sm:$0xff]
        %v3688 = vld [vmem:[#allocation11 + $0x30] sm:$0xff]
        %v3689 = vpack.c.bf16 %v3682, %v3682
        %v3690 = vpack.c.bf16 %v3683, %v3683
        %v3691 = vpack.c.bf16 %v3684, %v3684
        %v3692 = vpack.c.bf16 %v3685, %v3685
        %v3693 = vpack.c.bf16 %v3686, %v3686
        %v3694 = vpack.c.bf16 %v3687, %v3687
        %v3695 = vpack.c.bf16 %v3688, %v3688
        %v3696 = vld [vmem:[%s41] sm:$0xf]
        %v3697 = vld [vmem:[%s41 + $0x4] sm:$0xf]
        %v3698 = vld [vmem:[%s41 + $0x8] sm:$0xf]
        %v3699 = vld [vmem:[%s41 + $0xc] sm:$0xf]
        %v3700 = vld [vmem:[%s41 + $0x10] sm:$0xf]
        %v3701 = vld [vmem:[%s41 + $0x14] sm:$0xf]
        %v3702 = vld [vmem:[%s41 + $0x18] sm:$0xf]
        %v3703 = vld [vmem:[%s41 + $0x1c] sm:$0xf]
        %v3704 = vld [vmem:[%s41 + $0x20] sm:$0xf]
        %v3705 = vld [vmem:[%s41 + $0x24] sm:$0xf]
        %v3706 = vld [vmem:[%s41 + $0x28] sm:$0xf]
        %v3707 = vld [vmem:[%s41 + $0x2c] sm:$0xf]
        %v3708 = vld [vmem:[%s41 + $0x30] sm:$0xf]
        %v3709 = vld [vmem:[%s41 + $0x34] sm:$0xf]
        %v3710 = vld [vmem:[%s41 + $0x38] sm:$0xf]
        %v3711 = vld [vmem:[%s41 + $0x3c] sm:$0xf]
        %v3712 = vld [vmem:[%s41 + $0x40] sm:$0xf]
        %v3713 = vld [vmem:[%s41 + $0x44] sm:$0xf]
        %v3714 = vld [vmem:[%s41 + $0x48] sm:$0xf]
        %v3715 = vld [vmem:[%s41 + $0x4c] sm:$0xf]
        %v3716 = vld [vmem:[%s41 + $0x50] sm:$0xf]
        %v3717 = vld [vmem:[%s41 + $0x54] sm:$0xf]
        %v3718 = vld [vmem:[%s41 + $0x58] sm:$0xf]
        %v3719 = vld [vmem:[%s41 + $0x5c] sm:$0xf]
        %v3720 = vld [vmem:[%s41 + $0x60] sm:$0xf]
        %v3721 = vld [vmem:[%s41 + $0x64] sm:$0xf]
        %v3722 = vld [vmem:[%s41 + $0x68] sm:$0xf]
        %v3723 = vld [vmem:[%s41 + $0x6c] sm:$0xf]
        %v3724 = vld [vmem:[%s41 + $0x70] sm:$0xf]
        %v3725 = vld [vmem:[%s41 + $0x74] sm:$0xf]
        %v3726 = vld [vmem:[%s41 + $0x78] sm:$0xf]
        %v3727 = vld [vmem:[%s41 + $0x7c] sm:$0xf]
        %v3728 = vld [vmem:[%s41 + $0x80] sm:$0xf]
        %v3729 = vld [vmem:[%s41 + $0x84] sm:$0xf]
        %v3730 = vld [vmem:[%s41 + $0x88] sm:$0xf]
        %v3731 = vld [vmem:[%s41 + $0x8c] sm:$0xf]
        %v3732 = vld [vmem:[%s41 + $0x90] sm:$0xf]
        %v3733 = vld [vmem:[%s41 + $0x94] sm:$0xf]
        %v3734 = vld [vmem:[%s41 + $0x98] sm:$0xf]
        %v3735 = vld [vmem:[%s41 + $0x9c] sm:$0xf]
        %v3736 = vld [vmem:[%s41 + $0xa0] sm:$0xf]
        %v3737 = vld [vmem:[%s41 + $0xa4] sm:$0xf]
        %v3738 = vld [vmem:[%s41 + $0xa8] sm:$0xf]
        %v3739 = vld [vmem:[%s41 + $0xac] sm:$0xf]
        %v3740 = vld [vmem:[%s41 + $0xb0] sm:$0xf]
        %v3741 = vld [vmem:[%s41 + $0xb4] sm:$0xf]
        %v3742 = vld [vmem:[%s41 + $0xb8] sm:$0xf]
        %v3743 = vld [vmem:[%s41 + $0xbc] sm:$0xf]
        %v3744 = vld [vmem:[%s41 + $0xc0] sm:$0xf]
        %v3745 = vld [vmem:[%s41 + $0xc4] sm:$0xf]
        %v3746 = vld [vmem:[%s41 + $0xc8] sm:$0xf]
        %v3747 = vld [vmem:[%s41 + $0xcc] sm:$0xf]
        %v3748 = vld [vmem:[%s41 + $0xd0] sm:$0xf]
        %v3749 = vld [vmem:[%s41 + $0xd4] sm:$0xf]
        %v3750 = vld [vmem:[%s41 + $0xd8] sm:$0xf]
        %v3751 = vld [vmem:[%s41 + $0xdc] sm:$0xf]
        %v3752 = vld [vmem:[%s41 + $0xe0] sm:$0xf]
        %v3753 = vld [vmem:[%s41 + $0xe4] sm:$0xf]
        %v3754 = vld [vmem:[%s41 + $0xe8] sm:$0xf]
        %v3755 = vld [vmem:[%s41 + $0xec] sm:$0xf]
        %v3756 = vld [vmem:[%s41 + $0xf0] sm:$0xf]
        %v3757 = vld [vmem:[%s41 + $0xf4] sm:$0xf]
        %v3758 = vld [vmem:[%s41 + $0xf8] sm:$0xf]
        %v3759 = vld [vmem:[%s41 + $0xfc] sm:$0xf]
        %v3760 = vld [vmem:[%s41 + $0x100] sm:$0xf]
        %v3761 = vld [vmem:[%s41 + $0x104] sm:$0xf]
        %v3762 = vld [vmem:[%s41 + $0x108] sm:$0xf]
        %v3763 = vld [vmem:[%s41 + $0x10c] sm:$0xf]
        %v3764 = vld [vmem:[%s41 + $0x110] sm:$0xf]
        %v3765 = vld [vmem:[%s41 + $0x114] sm:$0xf]
        %v3766 = vld [vmem:[%s41 + $0x118] sm:$0xf]
        %v3767 = vld [vmem:[%s41 + $0x11c] sm:$0xf]
        %v3768 = vld [vmem:[%s41 + $0x120] sm:$0xf]
        %v3769 = vld [vmem:[%s41 + $0x124] sm:$0xf]
        %v3770 = vld [vmem:[%s41 + $0x128] sm:$0xf]
        %v3771 = vld [vmem:[%s41 + $0x12c] sm:$0xf]
        %v3772 = vld [vmem:[%s41 + $0x130] sm:$0xf]
        %v3773 = vld [vmem:[%s41 + $0x134] sm:$0xf]
        %v3774 = vld [vmem:[%s41 + $0x138] sm:$0xf]
        %v3775 = vld [vmem:[%s41 + $0x13c] sm:$0xf]
        %v3776 = vld [vmem:[%s41 + $0x140] sm:$0xf]
        %v3777 = vld [vmem:[%s41 + $0x144] sm:$0xf]
        %v3778 = vld [vmem:[%s41 + $0x148] sm:$0xf]
        %v3779 = vld [vmem:[%s41 + $0x14c] sm:$0xf]
        %v3780 = vld [vmem:[%s41 + $0x150] sm:$0xf]
        %v3781 = vld [vmem:[%s41 + $0x154] sm:$0xf]
        %v3782 = vld [vmem:[%s41 + $0x158] sm:$0xf]
        %v3783 = vld [vmem:[%s41 + $0x15c] sm:$0xf]
        %v3784 = vld [vmem:[%s41 + $0x160] sm:$0xf]
        %v3785 = vld [vmem:[%s41 + $0x164] sm:$0xf]
        %v3786 = vld [vmem:[%s41 + $0x168] sm:$0xf]
        %v3787 = vld [vmem:[%s41 + $0x16c] sm:$0xf]
        %v3788 = vld [vmem:[%s41 + $0x170] sm:$0xf]
        %v3789 = vld [vmem:[%s41 + $0x174] sm:$0xf]
        %v3790 = vld [vmem:[%s41 + $0x178] sm:$0xf]
        %v3791 = vld [vmem:[%s41 + $0x17c] sm:$0xf]
        %v3792 = vld [vmem:[%s41 + $0x180] sm:$0xf]
        %v3793 = vld [vmem:[%s41 + $0x184] sm:$0xf]
        %v3794 = vld [vmem:[%s41 + $0x188] sm:$0xf]
        %v3795 = vld [vmem:[%s41 + $0x18c] sm:$0xf]
        %v3796 = vld [vmem:[%s41 + $0x190] sm:$0xf]
        %v3797 = vld [vmem:[%s41 + $0x194] sm:$0xf]
        %v3798 = vld [vmem:[%s41 + $0x198] sm:$0xf]
        %v3799 = vld [vmem:[%s41 + $0x19c] sm:$0xf]
        %v3800 = vld [vmem:[%s41 + $0x1a0] sm:$0xf]
        %v3801 = vld [vmem:[%s41 + $0x1a4] sm:$0xf]
        %v3802 = vld [vmem:[%s41 + $0x1a8] sm:$0xf]
        %v3803 = vld [vmem:[%s41 + $0x1ac] sm:$0xf]
        %v3804 = vld [vmem:[%s41 + $0x1b0] sm:$0xf]
        %v3805 = vld [vmem:[%s41 + $0x1b4] sm:$0xf]
        %v3806 = vld [vmem:[%s41 + $0x1b8] sm:$0xf]
        %v3807 = vld [vmem:[%s41 + $0x1bc] sm:$0xf]
        %v3920 = vunpack.c.l.b16 %v3696
        %v3921 = vunpack.c.l.b16 %v3697
        %v3922 = vunpack.c.l.b16 %v3698
        %v3923 = vunpack.c.l.b16 %v3699
        %v3924 = vunpack.c.l.b16 %v3700
        %v3925 = vunpack.c.l.b16 %v3701
        %v3926 = vunpack.c.l.b16 %v3702
        %v3927 = vunpack.c.l.b16 %v3703
        %v3928 = vunpack.c.l.b16 %v3704
        %v3929 = vunpack.c.l.b16 %v3705
        %v3930 = vunpack.c.l.b16 %v3706
        %v3931 = vunpack.c.l.b16 %v3707
        %v3932 = vunpack.c.l.b16 %v3708
        %v3933 = vunpack.c.l.b16 %v3709
        %v3934 = vunpack.c.l.b16 %v3710
        %v3935 = vunpack.c.l.b16 %v3711
        %v3936 = vunpack.c.l.b16 %v3712
        %v3937 = vunpack.c.l.b16 %v3713
        %v3938 = vunpack.c.l.b16 %v3714
        %v3939 = vunpack.c.l.b16 %v3715
        %v3940 = vunpack.c.l.b16 %v3716
        %v3941 = vunpack.c.l.b16 %v3717
        %v3942 = vunpack.c.l.b16 %v3718
        %v3943 = vunpack.c.l.b16 %v3719
        %v3944 = vunpack.c.l.b16 %v3720
        %v3945 = vunpack.c.l.b16 %v3721
        %v3946 = vunpack.c.l.b16 %v3722
        %v3947 = vunpack.c.l.b16 %v3723
        %v3948 = vunpack.c.l.b16 %v3724
        %v3949 = vunpack.c.l.b16 %v3725
        %v3950 = vunpack.c.l.b16 %v3726
        %v3951 = vunpack.c.l.b16 %v3727
        %v3952 = vunpack.c.l.b16 %v3728
        %v3953 = vunpack.c.l.b16 %v3729
        %v3954 = vunpack.c.l.b16 %v3730
        %v3955 = vunpack.c.l.b16 %v3731
        %v3956 = vunpack.c.l.b16 %v3732
        %v3957 = vunpack.c.l.b16 %v3733
        %v3958 = vunpack.c.l.b16 %v3734
        %v3959 = vunpack.c.l.b16 %v3735
        %v3960 = vunpack.c.l.b16 %v3736
        %v3961 = vunpack.c.l.b16 %v3737
        %v3962 = vunpack.c.l.b16 %v3738
        %v3963 = vunpack.c.l.b16 %v3739
        %v3964 = vunpack.c.l.b16 %v3740
        %v3965 = vunpack.c.l.b16 %v3741
        %v3966 = vunpack.c.l.b16 %v3742
        %v3967 = vunpack.c.l.b16 %v3743
        %v3968 = vunpack.c.l.b16 %v3744
        %v3969 = vunpack.c.l.b16 %v3745
        %v3970 = vunpack.c.l.b16 %v3746
        %v3971 = vunpack.c.l.b16 %v3747
        %v3972 = vunpack.c.l.b16 %v3748
        %v3973 = vunpack.c.l.b16 %v3749
        %v3974 = vunpack.c.l.b16 %v3750
        %v3975 = vunpack.c.l.b16 %v3751
        %v3976 = vunpack.c.l.b16 %v3752
        %v3977 = vunpack.c.l.b16 %v3753
        %v3978 = vunpack.c.l.b16 %v3754
        %v3979 = vunpack.c.l.b16 %v3755
        %v3980 = vunpack.c.l.b16 %v3756
        %v3981 = vunpack.c.l.b16 %v3757
        %v3982 = vunpack.c.l.b16 %v3758
        %v3983 = vunpack.c.l.b16 %v3759
        %v3984 = vunpack.c.l.b16 %v3760
        %v3985 = vunpack.c.l.b16 %v3761
        %v3986 = vunpack.c.l.b16 %v3762
        %v3987 = vunpack.c.l.b16 %v3763
        %v3988 = vunpack.c.l.b16 %v3764
        %v3989 = vunpack.c.l.b16 %v3765
        %v3990 = vunpack.c.l.b16 %v3766
        %v3991 = vunpack.c.l.b16 %v3767
        %v3992 = vunpack.c.l.b16 %v3768
        %v3993 = vunpack.c.l.b16 %v3769
        %v3994 = vunpack.c.l.b16 %v3770
        %v3995 = vunpack.c.l.b16 %v3771
        %v3996 = vunpack.c.l.b16 %v3772
        %v3997 = vunpack.c.l.b16 %v3773
        %v3998 = vunpack.c.l.b16 %v3774
        %v3999 = vunpack.c.l.b16 %v3775
        %v4000 = vunpack.c.l.b16 %v3776
        %v4001 = vunpack.c.l.b16 %v3777
        %v4002 = vunpack.c.l.b16 %v3778
        %v4003 = vunpack.c.l.b16 %v3779
        %v4004 = vunpack.c.l.b16 %v3780
        %v4005 = vunpack.c.l.b16 %v3781
        %v4006 = vunpack.c.l.b16 %v3782
        %v4007 = vunpack.c.l.b16 %v3783
        %v4008 = vunpack.c.l.b16 %v3784
        %v4009 = vunpack.c.l.b16 %v3785
        %v4010 = vunpack.c.l.b16 %v3786
        %v4011 = vunpack.c.l.b16 %v3787
        %v4012 = vunpack.c.l.b16 %v3788
        %v4013 = vunpack.c.l.b16 %v3789
        %v4014 = vunpack.c.l.b16 %v3790
        %v4015 = vunpack.c.l.b16 %v3791
        %v4016 = vunpack.c.l.b16 %v3792
        %v4017 = vunpack.c.l.b16 %v3793
        %v4018 = vunpack.c.l.b16 %v3794
        %v4019 = vunpack.c.l.b16 %v3795
        %v4020 = vunpack.c.l.b16 %v3796
        %v4021 = vunpack.c.l.b16 %v3797
        %v4022 = vunpack.c.l.b16 %v3798
        %v4023 = vunpack.c.l.b16 %v3799
        %v4024 = vunpack.c.l.b16 %v3800
        %v4025 = vunpack.c.l.b16 %v3801
        %v4026 = vunpack.c.l.b16 %v3802
        %v4027 = vunpack.c.l.b16 %v3803
        %v4028 = vunpack.c.l.b16 %v3804
        %v4029 = vunpack.c.l.b16 %v3805
        %v4030 = vunpack.c.l.b16 %v3806
        %v4031 = vunpack.c.l.b16 %v3807
        %v4032 = vpack.c.b16 %v3921, %v3920
        %v4033 = vpack.c.b16 %v3923, %v3922
        %v4034 = vpack.c.b16 %v3925, %v3924
        %v4035 = vpack.c.b16 %v3927, %v3926
        %v4036 = vpack.c.b16 %v3929, %v3928
        %v4037 = vpack.c.b16 %v3931, %v3930
        %v4038 = vpack.c.b16 %v3933, %v3932
        %v4039 = vpack.c.b16 %v3935, %v3934
        %v4040 = vpack.c.b16 %v3937, %v3936
        %v4041 = vpack.c.b16 %v3939, %v3938
        %v4042 = vpack.c.b16 %v3941, %v3940
        %v4043 = vpack.c.b16 %v3943, %v3942
        %v4044 = vpack.c.b16 %v3945, %v3944
        %v4045 = vpack.c.b16 %v3947, %v3946
        %v4046 = vpack.c.b16 %v3949, %v3948
        %v4047 = vpack.c.b16 %v3951, %v3950
        %v4048 = vpack.c.b16 %v3953, %v3952
        %v4049 = vpack.c.b16 %v3955, %v3954
        %v4050 = vpack.c.b16 %v3957, %v3956
        %v4051 = vpack.c.b16 %v3959, %v3958
        %v4052 = vpack.c.b16 %v3961, %v3960
        %v4053 = vpack.c.b16 %v3963, %v3962
        %v4054 = vpack.c.b16 %v3965, %v3964
        %v4055 = vpack.c.b16 %v3967, %v3966
        %v4056 = vpack.c.b16 %v3969, %v3968
        %v4057 = vpack.c.b16 %v3971, %v3970
        %v4058 = vpack.c.b16 %v3973, %v3972
        %v4059 = vpack.c.b16 %v3975, %v3974
        %v4060 = vpack.c.b16 %v3977, %v3976
        %v4061 = vpack.c.b16 %v3979, %v3978
        %v4062 = vpack.c.b16 %v3981, %v3980
        %v4063 = vpack.c.b16 %v3983, %v3982
        %v4064 = vpack.c.b16 %v3985, %v3984
        %v4065 = vpack.c.b16 %v3987, %v3986
        %v4066 = vpack.c.b16 %v3989, %v3988
        %v4067 = vpack.c.b16 %v3991, %v3990
        %v4068 = vpack.c.b16 %v3993, %v3992
        %v4069 = vpack.c.b16 %v3995, %v3994
        %v4070 = vpack.c.b16 %v3997, %v3996
        %v4071 = vpack.c.b16 %v3999, %v3998
        %v4072 = vpack.c.b16 %v4001, %v4000
        %v4073 = vpack.c.b16 %v4003, %v4002
        %v4074 = vpack.c.b16 %v4005, %v4004
        %v4075 = vpack.c.b16 %v4007, %v4006
        %v4076 = vpack.c.b16 %v4009, %v4008
        %v4077 = vpack.c.b16 %v4011, %v4010
        %v4078 = vpack.c.b16 %v4013, %v4012
        %v4079 = vpack.c.b16 %v4015, %v4014
        %v4080 = vpack.c.b16 %v4017, %v4016
        %v4081 = vpack.c.b16 %v4019, %v4018
        %v4082 = vpack.c.b16 %v4021, %v4020
        %v4083 = vpack.c.b16 %v4023, %v4022
        %v4084 = vpack.c.b16 %v4025, %v4024
        %v4085 = vpack.c.b16 %v4027, %v4026
        %v4086 = vpack.c.b16 %v4029, %v4028
        %v4087 = vpack.c.b16 %v4031, %v4030
        %4144 = vmatprep.subr.bf16.mxu0 0
        %4145 = vmatpush1.bf16.msra.mxu0 %v4032
        %4146 = vmatprep.subr.bf16.mxu0 0
        %4147 = vmatpush1.bf16.msra.mxu0 %v4033
        %4148 = vmatprep.subr.bf16.mxu0 0
        %4149 = vmatpush1.bf16.msra.mxu0 %v4034
        %4150 = vmatprep.subr.bf16.mxu0 0
        %4151 = vmatpush1.bf16.msra.mxu0 %v4035
        %4152 = vmatprep.subr.bf16.mxu0 0
        %4153 = vmatpush1.bf16.msra.mxu0 %v4036
        %4154 = vmatprep.subr.bf16.mxu0 0
        %4155 = vmatpush1.bf16.msra.mxu0 %v4037
        %4156 = vmatprep.subr.bf16.mxu0 0
        %4157 = vmatpush1.bf16.msra.mxu0 %v4038
        %4158 = vmatprep.subr.bf16.mxu0 0
        %4159 = vmatpush1.bf16.msra.mxu0 %v4039
        %4160 = vmatprep.subr.bf16.mxu0 0
        %4161 = vmatpush1.bf16.msra.mxu0 %v4040
        %4162 = vmatprep.subr.bf16.mxu0 0
        %4163 = vmatpush1.bf16.msra.mxu0 %v4041
        %4164 = vmatprep.subr.bf16.mxu0 0
        %4165 = vmatpush1.bf16.msra.mxu0 %v4042
        %4166 = vmatprep.subr.bf16.mxu0 0
        %4167 = vmatpush1.bf16.msra.mxu0 %v4043
        %4168 = vmatprep.subr.bf16.mxu0 0
        %4169 = vmatpush1.bf16.msra.mxu0 %v4044
        %4170 = vmatprep.subr.bf16.mxu0 0
        %4171 = vmatpush1.bf16.msra.mxu0 %v4045
        %4172 = vmatprep.subr.bf16.mxu0 0
        %4173 = vmatpush1.bf16.msra.mxu0 %v4046
        %4174 = vmatprep.subr.bf16.mxu0 0
        %4175 = vmatpush1.bf16.msra.mxu0 %v4047
        %4176 = vmatprep.mubr.bf16.mxu0 %v3690
        %4177 = vmatmul.mubr.bf16.gmra.mrb[0].mxu0 %v3689
        %v4178 = vpop.f32.mrb[0].mxu0
        %v4179 = vadd.f32 0.0, %v4178
        %v4180 = vpop.f32.mrb[0].mxu0
        %v4181 = vpop.f32.mrb[0].mxu0
        %v4182 = vpop.f32.mrb[0].mxu0
        %4183 = vdwg.mxu0
        %4184 = vmatprep.subr.bf16.mxu0 0
        %4185 = vmatpush1.bf16.msra.mxu0 %v4048
        %4186 = vmatprep.subr.bf16.mxu0 0
        %4187 = vmatpush1.bf16.msra.mxu0 %v4049
        %4188 = vmatprep.subr.bf16.mxu0 0
        %4189 = vmatpush1.bf16.msra.mxu0 %v4050
        %4190 = vmatprep.subr.bf16.mxu0 0
        %4191 = vmatpush1.bf16.msra.mxu0 %v4051
        %4192 = vmatprep.subr.bf16.mxu0 0
        %4193 = vmatpush1.bf16.msra.mxu0 %v4052
        %4194 = vmatprep.subr.bf16.mxu0 0
        %4195 = vmatpush1.bf16.msra.mxu0 %v4053
        %4196 = vmatprep.subr.bf16.mxu0 0
        %4197 = vmatpush1.bf16.msra.mxu0 %v4054
        %4198 = vmatprep.subr.bf16.mxu0 0
        %4199 = vmatpush1.bf16.msra.mxu0 %v4055
        %4200 = vmatprep.subr.bf16.mxu0 0
        %4201 = vmatpush1.bf16.msra.mxu0 %v4056
        %4202 = vmatprep.subr.bf16.mxu0 0
        %4203 = vmatpush1.bf16.msra.mxu0 %v4057
        %4204 = vmatprep.subr.bf16.mxu0 0
        %4205 = vmatpush1.bf16.msra.mxu0 %v4058
        %4206 = vmatprep.subr.bf16.mxu0 0
        %4207 = vmatpush1.bf16.msra.mxu0 %v4059
        %4208 = vmatprep.subr.bf16.mxu0 0
        %4209 = vmatpush1.bf16.msra.mxu0 %v4060
        %4210 = vmatprep.subr.bf16.mxu0 0
        %4211 = vmatpush1.bf16.msra.mxu0 %v4061
        %4212 = vmatprep.subr.bf16.mxu0 0
        %4213 = vmatpush1.bf16.msra.mxu0 %v4062
        %4214 = vmatprep.subr.bf16.mxu0 0
        %4215 = vmatpush1.bf16.msra.mxu0 %v4063
        %4216 = vmatprep.mubr.bf16.mxu0 %v3692
        %4217 = vmatmul.mubr.bf16.gmra.mrb[0].mxu0 %v3691
        %v4218 = vpop.f32.mrb[0].mxu0
        %v4219 = vadd.f32 %v4179, %v4218
        %v4220 = vpop.f32.mrb[0].mxu0
        %v4221 = vpop.f32.mrb[0].mxu0
        %v4222 = vpop.f32.mrb[0].mxu0
        %4223 = vdwg.mxu0
        %4224 = vmatprep.subr.bf16.mxu0 0
        %4225 = vmatpush1.bf16.msra.mxu0 %v4064
        %4226 = vmatprep.subr.bf16.mxu0 0
        %4227 = vmatpush1.bf16.msra.mxu0 %v4065
        %4228 = vmatprep.subr.bf16.mxu0 0
        %4229 = vmatpush1.bf16.msra.mxu0 %v4066
        %4230 = vmatprep.subr.bf16.mxu0 0
        %4231 = vmatpush1.bf16.msra.mxu0 %v4067
        %4232 = vmatprep.subr.bf16.mxu0 0
        %4233 = vmatpush1.bf16.msra.mxu0 %v4068
        %4234 = vmatprep.subr.bf16.mxu0 0
        %4235 = vmatpush1.bf16.msra.mxu0 %v4069
        %4236 = vmatprep.subr.bf16.mxu0 0
        %4237 = vmatpush1.bf16.msra.mxu0 %v4070
        %4238 = vmatprep.subr.bf16.mxu0 0
        %4239 = vmatpush1.bf16.msra.mxu0 %v4071
        %4240 = vmatprep.subr.bf16.mxu0 0
        %4241 = vmatpush1.bf16.msra.mxu0 %v4072
        %4242 = vmatprep.subr.bf16.mxu0 0
        %4243 = vmatpush1.bf16.msra.mxu0 %v4073
        %4244 = vmatprep.subr.bf16.mxu0 0
        %4245 = vmatpush1.bf16.msra.mxu0 %v4074
        %4246 = vmatprep.subr.bf16.mxu0 0
        %4247 = vmatpush1.bf16.msra.mxu0 %v4075
        %4248 = vmatprep.subr.bf16.mxu0 0
        %4249 = vmatpush1.bf16.msra.mxu0 %v4076
        %4250 = vmatprep.subr.bf16.mxu0 0
        %4251 = vmatpush1.bf16.msra.mxu0 %v4077
        %4252 = vmatprep.subr.bf16.mxu0 0
        %4253 = vmatpush1.bf16.msra.mxu0 %v4078
        %4254 = vmatprep.subr.bf16.mxu0 0
        %4255 = vmatpush1.bf16.msra.mxu0 %v4079
        %4256 = vmatprep.mubr.bf16.mxu0 %v3694
        %4257 = vmatmul.mubr.bf16.gmra.mrb[0].mxu0 %v3693
        %v4258 = vpop.f32.mrb[0].mxu0
        %v4259 = vadd.f32 %v4219, %v4258
        %v4260 = vpop.f32.mrb[0].mxu0
        %v4261 = vpop.f32.mrb[0].mxu0
        %v4262 = vpop.f32.mrb[0].mxu0
        %4263 = vdwg.mxu0
        %4264 = vmatprep.subr.bf16.mxu0 0
        %4265 = vmatpush1.bf16.msra.mxu0 %v4080
        %4266 = vmatprep.subr.bf16.mxu0 0
        %4267 = vmatpush1.bf16.msra.mxu0 %v4081
        %4268 = vmatprep.subr.bf16.mxu0 0
        %4269 = vmatpush1.bf16.msra.mxu0 %v4082
        %4270 = vmatprep.subr.bf16.mxu0 0
        %4271 = vmatpush1.bf16.msra.mxu0 %v4083
        %4272 = vmatprep.subr.bf16.mxu0 0
        %4273 = vmatpush1.bf16.msra.mxu0 %v4084
        %4274 = vmatprep.subr.bf16.mxu0 0
        %4275 = vmatpush1.bf16.msra.mxu0 %v4085
        %4276 = vmatprep.subr.bf16.mxu0 0
        %4277 = vmatpush1.bf16.msra.mxu0 %v4086
        %4278 = vmatprep.subr.bf16.mxu0 0
        %4279 = vmatpush1.bf16.msra.mxu0 %v4087
        %4280 = vmatprep.subr.bf16.mxu0 0
        %4281 = vmatpush1.bf16.msra.mxu0 0
        %4282 = vmatprep.subr.bf16.mxu0 0
        %4283 = vmatpush1.bf16.msra.mxu0 0
        %4284 = vmatprep.subr.bf16.mxu0 0
        %4285 = vmatpush1.bf16.msra.mxu0 0
        %4286 = vmatprep.subr.bf16.mxu0 0
        %4287 = vmatpush1.bf16.msra.mxu0 0
        %4288 = vmatprep.subr.bf16.mxu0 0
        %4289 = vmatpush1.bf16.msra.mxu0 0
        %4290 = vmatprep.subr.bf16.mxu0 0
        %4291 = vmatpush1.bf16.msra.mxu0 0
        %4292 = vmatprep.subr.bf16.mxu0 0
        %4293 = vmatpush1.bf16.msra.mxu0 0
        %4294 = vmatprep.subr.bf16.mxu0 0
        %4295 = vmatpush1.bf16.msra.mxu0 0
        %4296 = vmatprep.mubr.bf16.mxu0 0
        %4297 = vmatmul.mubr.bf16.gmra.mrb[0].mxu0 %v3695
        %v4298 = vpop.f32.mrb[0].mxu0
        %v4299 = vadd.f32 %v4259, %v4298
        %v4300 = vpop.f32.mrb[0].mxu0
        %v4301 = vpop.f32.mrb[0].mxu0
        %v4302 = vpop.f32.mrb[0].mxu0
        %4303 = vdwg.mxu0
        %v4304 = vld [vmem:[#allocation35] sm:$0x1]
        %v4306 = vlaneseq
        %v4307 = vshrl.u32 %v4306, 7
        %v4308 = vsub.s32 0, %v4307
        %v4309 = vrot.slane %v4304, %v4308
        %v4311 = vmul.f32 %v4299, %v4309
        %v4312 = vld [vmem:[#allocation36] sm:$0x1]
        %v4314 = vlaneseq
        %v4315 = vshrl.u32 %v4314, 7
        %v4316 = vsub.s32 0, %v4315
        %v4317 = vrot.slane %v4312, %v4316
        %v4319 = vadd.f32 %v4311, %v4317
        %v4320 = vrot.slane %v4319, 4
        %v4321 = vadd.f32 %v4319, %v4320
        %v4322 = vrot.slane %v4321, 2
        %v4323 = vadd.f32 %v4321, %v4322
        %v4324 = vrot.slane %v4323, 1
        %v4325 = vadd.f32 %v4323, %v4324
        %v4326 = vrcp.pop 8.0
        %v4327 = vmul.f32 %v4325, %v4326
        %v4328 = vrot.slane %v4319, 4
        %v4329 = vmax.f32 %v4319, %v4328
        %v4330 = vrot.slane %v4329, 2
        %v4331 = vmax.f32 %v4329, %v4330
        %v4332 = vrot.slane %v4331, 1
        %v4333 = vmax.f32 %v4331, %v4332
        %v4334 = vsel %vm3027, %v4327, %v4333
        %v4335 = vpack.c.bf16 %v4334, %v4334
        %v4336 = vld [vmem:[%s53] sm:$0xf]
        %v4337 = vld [vmem:[%s53 + $0x4] sm:$0xf]
        %v4338 = vld [vmem:[%s53 + $0x8] sm:$0xf]
        %v4339 = vld [vmem:[%s53 + $0xc] sm:$0xf]
        %v4340 = vld [vmem:[%s53 + $0x10] sm:$0xf]
        %v4341 = vld [vmem:[%s53 + $0x14] sm:$0xf]
        %v4342 = vld [vmem:[%s53 + $0x18] sm:$0xf]
        %v4343 = vld [vmem:[%s53 + $0x1c] sm:$0xf]
        %v4344 = vld [vmem:[%s53 + $0x20] sm:$0xf]
        %v4345 = vld [vmem:[%s53 + $0x24] sm:$0xf]
        %v4346 = vld [vmem:[%s53 + $0x28] sm:$0xf]
        %v4347 = vld [vmem:[%s53 + $0x2c] sm:$0xf]
        %v4348 = vld [vmem:[%s53 + $0x30] sm:$0xf]
        %v4349 = vld [vmem:[%s53 + $0x34] sm:$0xf]
        %v4350 = vld [vmem:[%s53 + $0x38] sm:$0xf]
        %v4351 = vld [vmem:[%s53 + $0x3c] sm:$0xf]
        %v4352 = vld [vmem:[#allocation42] sm:$0x1]
        %v4354 = vlaneseq
        %v4355 = vshrl.u32 %v4354, 7
        %v4356 = vsub.s32 0, %v4355
        %v4357 = vrot.slane %v4352, %v4356
        %v4375 = vunpack.c.l.b16 %v4336
        %v4376 = vunpack.c.l.b16 %v4337
        %v4377 = vunpack.c.l.b16 %v4338
        %v4378 = vunpack.c.l.b16 %v4339
        %v4379 = vunpack.c.l.b16 %v4340
        %v4380 = vunpack.c.l.b16 %v4341
        %v4381 = vunpack.c.l.b16 %v4342
        %v4382 = vunpack.c.l.b16 %v4343
        %v4383 = vunpack.c.l.b16 %v4344
        %v4384 = vunpack.c.l.b16 %v4345
        %v4385 = vunpack.c.l.b16 %v4346
        %v4386 = vunpack.c.l.b16 %v4347
        %v4387 = vunpack.c.l.b16 %v4348
        %v4388 = vunpack.c.l.b16 %v4349
        %v4389 = vunpack.c.l.b16 %v4350
        %v4390 = vunpack.c.l.b16 %v4351
        %v4391 = vpack.c.b16 %v4376, %v4375
        %v4392 = vpack.c.b16 %v4378, %v4377
        %v4393 = vpack.c.b16 %v4380, %v4379
        %v4394 = vpack.c.b16 %v4382, %v4381
        %v4395 = vpack.c.b16 %v4384, %v4383
        %v4396 = vpack.c.b16 %v4386, %v4385
        %v4397 = vpack.c.b16 %v4388, %v4387
        %v4398 = vpack.c.b16 %v4390, %v4389
        %4407 = vmatprep.subr.bf16.mxu0 0
        %4408 = vmatpush1.bf16.msra.mxu0 %v4391
        %4409 = vmatprep.subr.bf16.mxu0 0
        %4410 = vmatpush1.bf16.msra.mxu0 %v4392
        %4411 = vmatprep.subr.bf16.mxu0 0
        %4412 = vmatpush1.bf16.msra.mxu0 %v4393
        %4413 = vmatprep.subr.bf16.mxu0 0
        %4414 = vmatpush1.bf16.msra.mxu0 %v4394
        %4415 = vmatprep.subr.bf16.mxu0 0
        %4416 = vmatpush1.bf16.msra.mxu0 %v4395
        %4417 = vmatprep.subr.bf16.mxu0 0
        %4418 = vmatpush1.bf16.msra.mxu0 %v4396
        %4419 = vmatprep.subr.bf16.mxu0 0
        %4420 = vmatpush1.bf16.msra.mxu0 %v4397
        %4421 = vmatprep.subr.bf16.mxu0 0
        %4422 = vmatpush1.bf16.msra.mxu0 %v4398
        %4423 = vmatprep.subr.bf16.mxu0 0
        %4424 = vmatpush1.bf16.msra.mxu0 0
        %4425 = vmatprep.subr.bf16.mxu0 0
        %4426 = vmatpush1.bf16.msra.mxu0 0
        %4427 = vmatprep.subr.bf16.mxu0 0
        %4428 = vmatpush1.bf16.msra.mxu0 0
        %4429 = vmatprep.subr.bf16.mxu0 0
        %4430 = vmatpush1.bf16.msra.mxu0 0
        %4431 = vmatprep.subr.bf16.mxu0 0
        %4432 = vmatpush1.bf16.msra.mxu0 0
        %4433 = vmatprep.subr.bf16.mxu0 0
        %4434 = vmatpush1.bf16.msra.mxu0 0
        %4435 = vmatprep.subr.bf16.mxu0 0
        %4436 = vmatpush1.bf16.msra.mxu0 0
        %4437 = vmatprep.subr.bf16.mxu0 0
        %4438 = vmatpush1.bf16.msra.mxu0 0
        %4439 = vmatprep.mubr.bf16.mxu0 0
        %4440 = vmatmul.mubr.bf16.gmra.mrb[0].mxu0 %v4335
        %v4441 = vpop.f32.mrb[0].mxu0
        %v4442 = vadd.f32 %v4357, %v4441
        %v4443 = vpop.f32.mrb[0].mxu0
        %v4444 = vpop.f32.mrb[0].mxu0
        %v4445 = vpop.f32.mrb[0].mxu0
        %4446 = vdwg.mxu0
        %v4447 = vmax.f32 %v4442, 0.0
        %v4448 = vpack.c.bf16 %v4447, %v4447
        %v4449 = vld [vmem:[#allocation44] sm:$0xf]
        %v4450 = vld [vmem:[#allocation44 + $0x4] sm:$0xf]
        %v4451 = vld [vmem:[#allocation45] sm:$0x1]
        %v4453 = vlaneseq
        %v4454 = vshrl.u32 %v4453, 7
        %v4455 = vsub.s32 0, %v4454
        %v4456 = vrot.slane %v4451, %v4455
        %v4460 = vunpack.c.l.b16 %v4449
        %v4461 = vunpack.c.l.b16 %v4450
        %v4462 = vpack.c.b16 %v4461, %v4460
        %vm4464 = vcmask 130048
        %v4466 = vsel %vm4464, %v4448, 0
        %4468 = vmatprep.subr.bf16.mxu0 0
        %4469 = vmatpush1.bf16.msra.mxu0 %v4462
        %4470 = vmatprep.subr.bf16.mxu0 0
        %4471 = vmatpush1.bf16.msra.mxu0 0
        %4472 = vmatprep.subr.bf16.mxu0 0
        %4473 = vmatpush1.bf16.msra.mxu0 0
        %4474 = vmatprep.subr.bf16.mxu0 0
        %4475 = vmatpush1.bf16.msra.mxu0 0
        %4476 = vmatprep.subr.bf16.mxu0 0
        %4477 = vmatpush1.bf16.msra.mxu0 0
        %4478 = vmatprep.subr.bf16.mxu0 0
        %4479 = vmatpush1.bf16.msra.mxu0 0
        %4480 = vmatprep.subr.bf16.mxu0 0
        %4481 = vmatpush1.bf16.msra.mxu0 0
        %4482 = vmatprep.subr.bf16.mxu0 0
        %4483 = vmatpush1.bf16.msra.mxu0 0
        %4484 = vmatprep.subr.bf16.mxu0 0
        %4485 = vmatpush1.bf16.msra.mxu0 0
        %4486 = vmatprep.subr.bf16.mxu0 0
        %4487 = vmatpush1.bf16.msra.mxu0 0
        %4488 = vmatprep.subr.bf16.mxu0 0
        %4489 = vmatpush1.bf16.msra.mxu0 0
        %4490 = vmatprep.subr.bf16.mxu0 0
        %4491 = vmatpush1.bf16.msra.mxu0 0
        %4492 = vmatprep.subr.bf16.mxu0 0
        %4493 = vmatpush1.bf16.msra.mxu0 0
        %4494 = vmatprep.subr.bf16.mxu0 0
        %4495 = vmatpush1.bf16.msra.mxu0 0
        %4496 = vmatprep.subr.bf16.mxu0 0
        %4497 = vmatpush1.bf16.msra.mxu0 0
        %4498 = vmatprep.subr.bf16.mxu0 0
        %4499 = vmatpush1.bf16.msra.mxu0 0
        %4500 = vmatprep.mubr.bf16.mxu0 0
        %4501 = vmatmul.mubr.bf16.gmra.mrb[0].mxu0 %v4466
        %v4502 = vpop.f32.mrb[0].mxu0
        %v4503 = vadd.f32 %v4456, %v4502
        %v4504 = vpop.f32.mrb[0].mxu0
        %v4505 = vpop.f32.mrb[0].mxu0
        %v4506 = vpop.f32.mrb[0].mxu0
        %4507 = vdwg.mxu0
        %vm4508 = vcmask 1041408
        %v4509 = vsel %vm4508, %v4503, 0.0
        %v4510 = vrot.slane %v4509, 4
        %v4511 = vadd.f32 %v4509, %v4510
        %v4512 = vrot.slane %v4511, 2
        %v4513 = vadd.f32 %v4511, %v4512
        %v4514 = vrot.slane %v4513, 1
        %v4515 = vadd.f32 %v4513, %v4514
        %v4516 = vxor.u32 %v4515, 2147483648
        %v4517 = vmul.f32 %v4516, 1.442695
        %v4518 = vpow.pop %v4517
        %v4519 = vadd.f32 %v4518, 1.0
        %v4520 = vrcp.pop %v4519
        %v4521 = vmul.f32 1.0, %v4520
        %v4522 = vmul.f32 %v4319, %v4521
        %4523 = vmax.xlane.f32.xlu0 %v4522
        %v4524 = vpop.xlane.xlu0 %4523
        %v4525 = vxor.u32 %v4524, 2147483648
        %v4526 = vmul.f32 %v4525, 1.442695
        %v4527 = vpow.pop %v4526
        %v4528 = vadd.f32 %v4527, 1.0
        %v4529 = vrcp.pop %v4528
        %v4530 = vmul.f32 1.0, %v4529
        %v4531 = vmul.f32 %v4522, %v4530
        %v4532 = vadd.f32 %v4531, %v3302
        %4533 = vst [vmem:[#allocation8 + $0x8] sm:$0xff] %v4532
        %s4534 = scalar_lea.vmem [#allocation8], 8
        %v4535 = vld [vmem:[%s4534] ss:$2 sm:$0xf]
        %v4536 = vpack.c.bf16 %v4535, %v4535
        %v4537 = vld [vmem:[#allocation54] sm:$0xff]
        %v4538 = vld [vmem:[#allocation54 + $0x8] sm:$0xff]
        %v4539 = vld [vmem:[#allocation54 + $0x10] sm:$0xff]
        %v4540 = vld [vmem:[#allocation54 + $0x18] sm:$0xff]
        %v4541 = vld [vmem:[#allocation54 + $0x20] sm:$0xff]
        %v4542 = vld [vmem:[#allocation54 + $0x28] sm:$0xff]
        %v4543 = vld [vmem:[#allocation54 + $0x30] sm:$0xff]
        %v4544 = vld [vmem:[#allocation54 + $0x38] sm:$0xff]
        %v4545 = vld [vmem:[#allocation54 + $0x40] sm:$0xff]
        %v4546 = vld [vmem:[#allocation54 + $0x48] sm:$0xff]
        %v4547 = vld [vmem:[#allocation54 + $0x50] sm:$0xff]
        %v4548 = vld [vmem:[#allocation54 + $0x58] sm:$0xff]
        %v4549 = vld [vmem:[#allocation54 + $0x60] sm:$0xff]
        %v4550 = vld [vmem:[#allocation54 + $0x68] sm:$0xff]
        %v4551 = vld [vmem:[#allocation54 + $0x70] sm:$0xff]
        %v4552 = vld [vmem:[#allocation54 + $0x78] sm:$0xff]
        %v4569 = vunpack.c.l.b16 %v4537
        %v4570 = vunpack.c.h.b16 %v4537
        %v4571 = vunpack.c.l.b16 %v4538
        %v4572 = vunpack.c.h.b16 %v4538
        %v4573 = vunpack.c.l.b16 %v4539
        %v4574 = vunpack.c.h.b16 %v4539
        %v4575 = vunpack.c.l.b16 %v4540
        %v4576 = vunpack.c.h.b16 %v4540
        %v4577 = vunpack.c.l.b16 %v4541
        %v4578 = vunpack.c.h.b16 %v4541
        %v4579 = vunpack.c.l.b16 %v4542
        %v4580 = vunpack.c.h.b16 %v4542
        %v4581 = vunpack.c.l.b16 %v4543
        %v4582 = vunpack.c.h.b16 %v4543
        %v4583 = vunpack.c.l.b16 %v4544
        %v4584 = vunpack.c.h.b16 %v4544
        %v4585 = vunpack.c.l.b16 %v4545
        %v4586 = vunpack.c.h.b16 %v4545
        %v4587 = vunpack.c.l.b16 %v4546
        %v4588 = vunpack.c.h.b16 %v4546
        %v4589 = vunpack.c.l.b16 %v4547
        %v4590 = vunpack.c.h.b16 %v4547
        %v4591 = vunpack.c.l.b16 %v4548
        %v4592 = vunpack.c.h.b16 %v4548
        %v4593 = vunpack.c.l.b16 %v4549
        %v4594 = vunpack.c.h.b16 %v4549
        %v4595 = vunpack.c.l.b16 %v4550
        %v4596 = vunpack.c.h.b16 %v4550
        %v4597 = vunpack.c.l.b16 %v4551
        %v4598 = vunpack.c.h.b16 %v4551
        %v4599 = vunpack.c.l.b16 %v4552
        %v4600 = vunpack.c.h.b16 %v4552
        %v4601 = vpack.c.b16 %v4571, %v4569
        %v4602 = vpack.c.b16 %v4572, %v4570
        %v4603 = vpack.c.b16 %v4575, %v4573
        %v4604 = vpack.c.b16 %v4576, %v4574
        %v4605 = vpack.c.b16 %v4579, %v4577
        %v4606 = vpack.c.b16 %v4580, %v4578
        %v4607 = vpack.c.b16 %v4583, %v4581
        %v4608 = vpack.c.b16 %v4584, %v4582
        %v4609 = vpack.c.b16 %v4587, %v4585
        %v4610 = vpack.c.b16 %v4588, %v4586
        %v4611 = vpack.c.b16 %v4591, %v4589
        %v4612 = vpack.c.b16 %v4592, %v4590
        %v4613 = vpack.c.b16 %v4595, %v4593
        %v4614 = vpack.c.b16 %v4596, %v4594
        %v4615 = vpack.c.b16 %v4599, %v4597
        %v4616 = vpack.c.b16 %v4600, %v4598
        %4633 = vmatprep.subr.bf16.mxu0 %v4602
        %4634 = vmatpush1.bf16.msra.mxu0 %v4601
        %4635 = vmatprep.subr.bf16.mxu0 %v4604
        %4636 = vmatpush1.bf16.msra.mxu0 %v4603
        %4637 = vmatprep.subr.bf16.mxu0 %v4606
        %4638 = vmatpush1.bf16.msra.mxu0 %v4605
        %4639 = vmatprep.subr.bf16.mxu0 %v4608
        %4640 = vmatpush1.bf16.msra.mxu0 %v4607
        %4641 = vmatprep.subr.bf16.mxu0 %v4610
        %4642 = vmatpush1.bf16.msra.mxu0 %v4609
        %4643 = vmatprep.subr.bf16.mxu0 %v4612
        %4644 = vmatpush1.bf16.msra.mxu0 %v4611
        %4645 = vmatprep.subr.bf16.mxu0 %v4614
        %4646 = vmatpush1.bf16.msra.mxu0 %v4613
        %4647 = vmatprep.subr.bf16.mxu0 %v4616
        %4648 = vmatpush1.bf16.msra.mxu0 %v4615
        %4649 = vmatprep.subr.bf16.mxu0 0
        %4650 = vmatpush1.bf16.msra.mxu0 0
        %4651 = vmatprep.subr.bf16.mxu0 0
        %4652 = vmatpush1.bf16.msra.mxu0 0
        %4653 = vmatprep.subr.bf16.mxu0 0
        %4654 = vmatpush1.bf16.msra.mxu0 0
        %4655 = vmatprep.subr.bf16.mxu0 0
        %4656 = vmatpush1.bf16.msra.mxu0 0
        %4657 = vmatprep.subr.bf16.mxu0 0
        %4658 = vmatpush1.bf16.msra.mxu0 0
        %4659 = vmatprep.subr.bf16.mxu0 0
        %4660 = vmatpush1.bf16.msra.mxu0 0
        %4661 = vmatprep.subr.bf16.mxu0 0
        %4662 = vmatpush1.bf16.msra.mxu0 0
        %4663 = vmatprep.subr.bf16.mxu0 0
        %4664 = vmatpush1.bf16.msra.mxu0 0
        %4665 = vmatprep.mubr.bf16.mxu0 0
        %4666 = vmatmul.mubr.bf16.gmra.mrb[0].mxu0 %v4536
        %v4667 = vpop.f32.mrb[0].mxu0
        %v4668 = vadd.f32 0.0, %v4667
        %v4669 = vpop.f32.mrb[0].mxu0
        %v4670 = vadd.f32 0.0, %v4669
        %v4671 = vpop.f32.mrb[0].mxu0
        %v4672 = vpop.f32.mrb[0].mxu0
        %4673 = vdwg.mxu0
        %v4674 = vld [vmem:[#allocation56] sm:$0x3]
        %v4676 = vlaneseq
        %v4677 = vshrl.u32 %v4676, 7
        %v4678 = vsub.s32 0, %v4677
        %v4679 = vrot.slane %v4674, %v4678
        %v4680 = vlaneseq
        %v4681 = vshrl.u32 %v4680, 7
        %v4682 = vsub.s32 1, %v4681
        %v4683 = vrot.slane %v4674, %v4682
        %v4686 = vmul.f32 %v4668, %v4679
        %v4687 = vmul.f32 %v4670, %v4683
        %v4688 = vld [vmem:[#allocation57] sm:$0x3]
        %v4690 = vlaneseq
        %v4691 = vshrl.u32 %v4690, 7
        %v4692 = vsub.s32 0, %v4691
        %v4693 = vrot.slane %v4688, %v4692
        %v4694 = vlaneseq
        %v4695 = vshrl.u32 %v4694, 7
        %v4696 = vsub.s32 1, %v4695
        %v4697 = vrot.slane %v4688, %v4696
        %v4700 = vadd.f32 %v4686, %v4693
        %v4701 = vadd.f32 %v4687, %v4697
        %s4702 = scalar_lea.vmem [#allocation8], 5
        %v4703 = vld [vmem:[%s4702] ss:$2 sm:$0xf]
        %4704 = vst [vmem:[#allocation11] sm:$0xf] %v4703
        %s4705 = scalar_lea.vmem [#allocation8], 6
        %v4706 = vld [vmem:[%s4705] ss:$2 sm:$0xf]
        %4707 = vst [vmem:[#allocation11 + $0x8] sm:$0xf] %v4706
        %s4708 = scalar_lea.vmem [#allocation8], 7
        %v4709 = vld [vmem:[%s4708] ss:$2 sm:$0xf]
        %4710 = vst [vmem:[#allocation11 + $0x10] sm:$0xf] %v4709
        %v4711 = vld [vmem:[%s4534] ss:$2 sm:$0xf]
        %4712 = vst [vmem:[#allocation11 + $0x18] sm:$0xf] %v4711
        %s4713 = scalar_lea.vmem [#allocation8], 9
        %v4714 = vld [vmem:[%s4713] ss:$2 sm:$0xf]
        %4715 = vst [vmem:[#allocation11 + $0x20] sm:$0xf] %v4714
        %s4716 = scalar_lea.vmem [#allocation8], 10
        %v4717 = vld [vmem:[%s4716] ss:$2 sm:$0xf]
        %4718 = vst [vmem:[#allocation11 + $0x28] sm:$0xf] %v4717
        %s4719 = scalar_lea.vmem [#allocation8], 11
        %v4720 = vld [vmem:[%s4719] ss:$2 sm:$0xf]
        %4721 = vst [vmem:[#allocation11 + $0x30] sm:$0xf] %v4720
        %v4722 = vld [vmem:[#allocation11] sm:$0xf]
        %v4723 = vld [vmem:[#allocation11 + $0x8] sm:$0xf]
        %v4724 = vld [vmem:[#allocation11 + $0x10] sm:$0xf]
        %v4725 = vld [vmem:[#allocation11 + $0x18] sm:$0xf]
        %v4726 = vld [vmem:[#allocation11 + $0x20] sm:$0xf]
        %v4727 = vld [vmem:[#allocation11 + $0x28] sm:$0xf]
        %v4728 = vld [vmem:[#allocation11 + $0x30] sm:$0xf]
        %v4729 = vpack.c.bf16 %v4722, %v4722
        %v4730 = vpack.c.bf16 %v4723, %v4723
        %v4731 = vpack.c.bf16 %v4724, %v4724
        %v4732 = vpack.c.bf16 %v4725, %v4725
        %v4733 = vpack.c.bf16 %v4726, %v4726
        %v4734 = vpack.c.bf16 %v4727, %v4727
        %v4735 = vpack.c.bf16 %v4728, %v4728
        %v4736 = vld [vmem:[%s61] sm:$0xff]
        %v4737 = vld [vmem:[%s61 + $0x8] sm:$0xff]
        %v4738 = vld [vmem:[%s61 + $0x10] sm:$0xff]
        %v4739 = vld [vmem:[%s61 + $0x18] sm:$0xff]
        %v4740 = vld [vmem:[%s61 + $0x20] sm:$0xff]
        %v4741 = vld [vmem:[%s61 + $0x28] sm:$0xff]
        %v4742 = vld [vmem:[%s61 + $0x30] sm:$0xff]
        %v4743 = vld [vmem:[%s61 + $0x38] sm:$0xff]
        %v4744 = vld [vmem:[%s61 + $0x40] sm:$0xff]
        %v4745 = vld [vmem:[%s61 + $0x48] sm:$0xff]
        %v4746 = vld [vmem:[%s61 + $0x50] sm:$0xff]
        %v4747 = vld [vmem:[%s61 + $0x58] sm:$0xff]
        %v4748 = vld [vmem:[%s61 + $0x60] sm:$0xff]
        %v4749 = vld [vmem:[%s61 + $0x68] sm:$0xff]
        %v4750 = vld [vmem:[%s61 + $0x70] sm:$0xff]
        %v4751 = vld [vmem:[%s61 + $0x78] sm:$0xff]
        %v4752 = vld [vmem:[%s61 + $0x80] sm:$0xff]
        %v4753 = vld [vmem:[%s61 + $0x88] sm:$0xff]
        %v4754 = vld [vmem:[%s61 + $0x90] sm:$0xff]
        %v4755 = vld [vmem:[%s61 + $0x98] sm:$0xff]
        %v4756 = vld [vmem:[%s61 + $0xa0] sm:$0xff]
        %v4757 = vld [vmem:[%s61 + $0xa8] sm:$0xff]
        %v4758 = vld [vmem:[%s61 + $0xb0] sm:$0xff]
        %v4759 = vld [vmem:[%s61 + $0xb8] sm:$0xff]
        %v4760 = vld [vmem:[%s61 + $0xc0] sm:$0xff]
        %v4761 = vld [vmem:[%s61 + $0xc8] sm:$0xff]
        %v4762 = vld [vmem:[%s61 + $0xd0] sm:$0xff]
        %v4763 = vld [vmem:[%s61 + $0xd8] sm:$0xff]
        %v4764 = vld [vmem:[%s61 + $0xe0] sm:$0xff]
        %v4765 = vld [vmem:[%s61 + $0xe8] sm:$0xff]
        %v4766 = vld [vmem:[%s61 + $0xf0] sm:$0xff]
        %v4767 = vld [vmem:[%s61 + $0xf8] sm:$0xff]
        %v4768 = vld [vmem:[%s61 + $0x100] sm:$0xff]
        %v4769 = vld [vmem:[%s61 + $0x108] sm:$0xff]
        %v4770 = vld [vmem:[%s61 + $0x110] sm:$0xff]
        %v4771 = vld [vmem:[%s61 + $0x118] sm:$0xff]
        %v4772 = vld [vmem:[%s61 + $0x120] sm:$0xff]
        %v4773 = vld [vmem:[%s61 + $0x128] sm:$0xff]
        %v4774 = vld [vmem:[%s61 + $0x130] sm:$0xff]
        %v4775 = vld [vmem:[%s61 + $0x138] sm:$0xff]
        %v4776 = vld [vmem:[%s61 + $0x140] sm:$0xff]
        %v4777 = vld [vmem:[%s61 + $0x148] sm:$0xff]
        %v4778 = vld [vmem:[%s61 + $0x150] sm:$0xff]
        %v4779 = vld [vmem:[%s61 + $0x158] sm:$0xff]
        %v4780 = vld [vmem:[%s61 + $0x160] sm:$0xff]
        %v4781 = vld [vmem:[%s61 + $0x168] sm:$0xff]
        %v4782 = vld [vmem:[%s61 + $0x170] sm:$0xff]
        %v4783 = vld [vmem:[%s61 + $0x178] sm:$0xff]
        %v4784 = vld [vmem:[%s61 + $0x180] sm:$0xff]
        %v4785 = vld [vmem:[%s61 + $0x188] sm:$0xff]
        %v4786 = vld [vmem:[%s61 + $0x190] sm:$0xff]
        %v4787 = vld [vmem:[%s61 + $0x198] sm:$0xff]
        %v4788 = vld [vmem:[%s61 + $0x1a0] sm:$0xff]
        %v4789 = vld [vmem:[%s61 + $0x1a8] sm:$0xff]
        %v4790 = vld [vmem:[%s61 + $0x1b0] sm:$0xff]
        %v4791 = vld [vmem:[%s61 + $0x1b8] sm:$0xff]
        %v4792 = vld [vmem:[%s61 + $0x1c0] sm:$0xff]
        %v4793 = vld [vmem:[%s61 + $0x1c8] sm:$0xff]
        %v4794 = vld [vmem:[%s61 + $0x1d0] sm:$0xff]
        %v4795 = vld [vmem:[%s61 + $0x1d8] sm:$0xff]
        %v4796 = vld [vmem:[%s61 + $0x1e0] sm:$0xff]
        %v4797 = vld [vmem:[%s61 + $0x1e8] sm:$0xff]
        %v4798 = vld [vmem:[%s61 + $0x1f0] sm:$0xff]
        %v4799 = vld [vmem:[%s61 + $0x1f8] sm:$0xff]
        %v4800 = vld [vmem:[%s61 + $0x200] sm:$0xff]
        %v4801 = vld [vmem:[%s61 + $0x208] sm:$0xff]
        %v4802 = vld [vmem:[%s61 + $0x210] sm:$0xff]
        %v4803 = vld [vmem:[%s61 + $0x218] sm:$0xff]
        %v4804 = vld [vmem:[%s61 + $0x220] sm:$0xff]
        %v4805 = vld [vmem:[%s61 + $0x228] sm:$0xff]
        %v4806 = vld [vmem:[%s61 + $0x230] sm:$0xff]
        %v4807 = vld [vmem:[%s61 + $0x238] sm:$0xff]
        %v4808 = vld [vmem:[%s61 + $0x240] sm:$0xff]
        %v4809 = vld [vmem:[%s61 + $0x248] sm:$0xff]
        %v4810 = vld [vmem:[%s61 + $0x250] sm:$0xff]
        %v4811 = vld [vmem:[%s61 + $0x258] sm:$0xff]
        %v4812 = vld [vmem:[%s61 + $0x260] sm:$0xff]
        %v4813 = vld [vmem:[%s61 + $0x268] sm:$0xff]
        %v4814 = vld [vmem:[%s61 + $0x270] sm:$0xff]
        %v4815 = vld [vmem:[%s61 + $0x278] sm:$0xff]
        %v4816 = vld [vmem:[%s61 + $0x280] sm:$0xff]
        %v4817 = vld [vmem:[%s61 + $0x288] sm:$0xff]
        %v4818 = vld [vmem:[%s61 + $0x290] sm:$0xff]
        %v4819 = vld [vmem:[%s61 + $0x298] sm:$0xff]
        %v4820 = vld [vmem:[%s61 + $0x2a0] sm:$0xff]
        %v4821 = vld [vmem:[%s61 + $0x2a8] sm:$0xff]
        %v4822 = vld [vmem:[%s61 + $0x2b0] sm:$0xff]
        %v4823 = vld [vmem:[%s61 + $0x2b8] sm:$0xff]
        %v4824 = vld [vmem:[%s61 + $0x2c0] sm:$0xff]
        %v4825 = vld [vmem:[%s61 + $0x2c8] sm:$0xff]
        %v4826 = vld [vmem:[%s61 + $0x2d0] sm:$0xff]
        %v4827 = vld [vmem:[%s61 + $0x2d8] sm:$0xff]
        %v4828 = vld [vmem:[%s61 + $0x2e0] sm:$0xff]
        %v4829 = vld [vmem:[%s61 + $0x2e8] sm:$0xff]
        %v4830 = vld [vmem:[%s61 + $0x2f0] sm:$0xff]
        %v4831 = vld [vmem:[%s61 + $0x2f8] sm:$0xff]
        %v4832 = vld [vmem:[%s61 + $0x300] sm:$0xff]
        %v4833 = vld [vmem:[%s61 + $0x308] sm:$0xff]
        %v4834 = vld [vmem:[%s61 + $0x310] sm:$0xff]
        %v4835 = vld [vmem:[%s61 + $0x318] sm:$0xff]
        %v4836 = vld [vmem:[%s61 + $0x320] sm:$0xff]
        %v4837 = vld [vmem:[%s61 + $0x328] sm:$0xff]
        %v4838 = vld [vmem:[%s61 + $0x330] sm:$0xff]
        %v4839 = vld [vmem:[%s61 + $0x338] sm:$0xff]
        %v4840 = vld [vmem:[%s61 + $0x340] sm:$0xff]
        %v4841 = vld [vmem:[%s61 + $0x348] sm:$0xff]
        %v4842 = vld [vmem:[%s61 + $0x350] sm:$0xff]
        %v4843 = vld [vmem:[%s61 + $0x358] sm:$0xff]
        %v4844 = vld [vmem:[%s61 + $0x360] sm:$0xff]
        %v4845 = vld [vmem:[%s61 + $0x368] sm:$0xff]
        %v4846 = vld [vmem:[%s61 + $0x370] sm:$0xff]
        %v4847 = vld [vmem:[%s61 + $0x378] sm:$0xff]
        %v4960 = vunpack.c.l.b16 %v4736
        %v4961 = vunpack.c.h.b16 %v4736
        %v4962 = vunpack.c.l.b16 %v4737
        %v4963 = vunpack.c.h.b16 %v4737
        %v4964 = vunpack.c.l.b16 %v4738
        %v4965 = vunpack.c.h.b16 %v4738
        %v4966 = vunpack.c.l.b16 %v4739
        %v4967 = vunpack.c.h.b16 %v4739
        %v4968 = vunpack.c.l.b16 %v4740
        %v4969 = vunpack.c.h.b16 %v4740
        %v4970 = vunpack.c.l.b16 %v4741
        %v4971 = vunpack.c.h.b16 %v4741
        %v4972 = vunpack.c.l.b16 %v4742
        %v4973 = vunpack.c.h.b16 %v4742
        %v4974 = vunpack.c.l.b16 %v4743
        %v4975 = vunpack.c.h.b16 %v4743
        %v4976 = vunpack.c.l.b16 %v4744
        %v4977 = vunpack.c.h.b16 %v4744
        %v4978 = vunpack.c.l.b16 %v4745
        %v4979 = vunpack.c.h.b16 %v4745
        %v4980 = vunpack.c.l.b16 %v4746
        %v4981 = vunpack.c.h.b16 %v4746
        %v4982 = vunpack.c.l.b16 %v4747
        %v4983 = vunpack.c.h.b16 %v4747
        %v4984 = vunpack.c.l.b16 %v4748
        %v4985 = vunpack.c.h.b16 %v4748
        %v4986 = vunpack.c.l.b16 %v4749
        %v4987 = vunpack.c.h.b16 %v4749
        %v4988 = vunpack.c.l.b16 %v4750
        %v4989 = vunpack.c.h.b16 %v4750
        %v4990 = vunpack.c.l.b16 %v4751
        %v4991 = vunpack.c.h.b16 %v4751
        %v4992 = vunpack.c.l.b16 %v4752
        %v4993 = vunpack.c.h.b16 %v4752
        %v4994 = vunpack.c.l.b16 %v4753
        %v4995 = vunpack.c.h.b16 %v4753
        %v4996 = vunpack.c.l.b16 %v4754
        %v4997 = vunpack.c.h.b16 %v4754
        %v4998 = vunpack.c.l.b16 %v4755
        %v4999 = vunpack.c.h.b16 %v4755
        %v5000 = vunpack.c.l.b16 %v4756
        %v5001 = vunpack.c.h.b16 %v4756
        %v5002 = vunpack.c.l.b16 %v4757
        %v5003 = vunpack.c.h.b16 %v4757
        %v5004 = vunpack.c.l.b16 %v4758
        %v5005 = vunpack.c.h.b16 %v4758
        %v5006 = vunpack.c.l.b16 %v4759
        %v5007 = vunpack.c.h.b16 %v4759
        %v5008 = vunpack.c.l.b16 %v4760
        %v5009 = vunpack.c.h.b16 %v4760
        %v5010 = vunpack.c.l.b16 %v4761
        %v5011 = vunpack.c.h.b16 %v4761
        %v5012 = vunpack.c.l.b16 %v4762
        %v5013 = vunpack.c.h.b16 %v4762
        %v5014 = vunpack.c.l.b16 %v4763
        %v5015 = vunpack.c.h.b16 %v4763
        %v5016 = vunpack.c.l.b16 %v4764
        %v5017 = vunpack.c.h.b16 %v4764
        %v5018 = vunpack.c.l.b16 %v4765
        %v5019 = vunpack.c.h.b16 %v4765
        %v5020 = vunpack.c.l.b16 %v4766
        %v5021 = vunpack.c.h.b16 %v4766
        %v5022 = vunpack.c.l.b16 %v4767
        %v5023 = vunpack.c.h.b16 %v4767
        %v5024 = vunpack.c.l.b16 %v4768
        %v5025 = vunpack.c.h.b16 %v4768
        %v5026 = vunpack.c.l.b16 %v4769
        %v5027 = vunpack.c.h.b16 %v4769
        %v5028 = vunpack.c.l.b16 %v4770
        %v5029 = vunpack.c.h.b16 %v4770
        %v5030 = vunpack.c.l.b16 %v4771
        %v5031 = vunpack.c.h.b16 %v4771
        %v5032 = vunpack.c.l.b16 %v4772
        %v5033 = vunpack.c.h.b16 %v4772
        %v5034 = vunpack.c.l.b16 %v4773
        %v5035 = vunpack.c.h.b16 %v4773
        %v5036 = vunpack.c.l.b16 %v4774
        %v5037 = vunpack.c.h.b16 %v4774
        %v5038 = vunpack.c.l.b16 %v4775
        %v5039 = vunpack.c.h.b16 %v4775
        %v5040 = vunpack.c.l.b16 %v4776
        %v5041 = vunpack.c.h.b16 %v4776
        %v5042 = vunpack.c.l.b16 %v4777
        %v5043 = vunpack.c.h.b16 %v4777
        %v5044 = vunpack.c.l.b16 %v4778
        %v5045 = vunpack.c.h.b16 %v4778
        %v5046 = vunpack.c.l.b16 %v4779
        %v5047 = vunpack.c.h.b16 %v4779
        %v5048 = vunpack.c.l.b16 %v4780
        %v5049 = vunpack.c.h.b16 %v4780
        %v5050 = vunpack.c.l.b16 %v4781
        %v5051 = vunpack.c.h.b16 %v4781
        %v5052 = vunpack.c.l.b16 %v4782
        %v5053 = vunpack.c.h.b16 %v4782
        %v5054 = vunpack.c.l.b16 %v4783
        %v5055 = vunpack.c.h.b16 %v4783
        %v5056 = vunpack.c.l.b16 %v4784
        %v5057 = vunpack.c.h.b16 %v4784
        %v5058 = vunpack.c.l.b16 %v4785
        %v5059 = vunpack.c.h.b16 %v4785
        %v5060 = vunpack.c.l.b16 %v4786
        %v5061 = vunpack.c.h.b16 %v4786
        %v5062 = vunpack.c.l.b16 %v4787
        %v5063 = vunpack.c.h.b16 %v4787
        %v5064 = vunpack.c.l.b16 %v4788
        %v5065 = vunpack.c.h.b16 %v4788
        %v5066 = vunpack.c.l.b16 %v4789
        %v5067 = vunpack.c.h.b16 %v4789
        %v5068 = vunpack.c.l.b16 %v4790
        %v5069 = vunpack.c.h.b16 %v4790
        %v5070 = vunpack.c.l.b16 %v4791
        %v5071 = vunpack.c.h.b16 %v4791
        %v5072 = vunpack.c.l.b16 %v4792
        %v5073 = vunpack.c.h.b16 %v4792
        %v5074 = vunpack.c.l.b16 %v4793
        %v5075 = vunpack.c.h.b16 %v4793
        %v5076 = vunpack.c.l.b16 %v4794
        %v5077 = vunpack.c.h.b16 %v4794
        %v5078 = vunpack.c.l.b16 %v4795
        %v5079 = vunpack.c.h.b16 %v4795
        %v5080 = vunpack.c.l.b16 %v4796
        %v5081 = vunpack.c.h.b16 %v4796
        %v5082 = vunpack.c.l.b16 %v4797
        %v5083 = vunpack.c.h.b16 %v4797
        %v5084 = vunpack.c.l.b16 %v4798
        %v5085 = vunpack.c.h.b16 %v4798
        %v5086 = vunpack.c.l.b16 %v4799
        %v5087 = vunpack.c.h.b16 %v4799
        %v5088 = vunpack.c.l.b16 %v4800
        %v5089 = vunpack.c.h.b16 %v4800
        %v5090 = vunpack.c.l.b16 %v4801
        %v5091 = vunpack.c.h.b16 %v4801
        %v5092 = vunpack.c.l.b16 %v4802
        %v5093 = vunpack.c.h.b16 %v4802
        %v5094 = vunpack.c.l.b16 %v4803
        %v5095 = vunpack.c.h.b16 %v4803
        %v5096 = vunpack.c.l.b16 %v4804
        %v5097 = vunpack.c.h.b16 %v4804
        %v5098 = vunpack.c.l.b16 %v4805
        %v5099 = vunpack.c.h.b16 %v4805
        %v5100 = vunpack.c.l.b16 %v4806
        %v5101 = vunpack.c.h.b16 %v4806
        %v5102 = vunpack.c.l.b16 %v4807
        %v5103 = vunpack.c.h.b16 %v4807
        %v5104 = vunpack.c.l.b16 %v4808
        %v5105 = vunpack.c.h.b16 %v4808
        %v5106 = vunpack.c.l.b16 %v4809
        %v5107 = vunpack.c.h.b16 %v4809
        %v5108 = vunpack.c.l.b16 %v4810
        %v5109 = vunpack.c.h.b16 %v4810
        %v5110 = vunpack.c.l.b16 %v4811
        %v5111 = vunpack.c.h.b16 %v4811
        %v5112 = vunpack.c.l.b16 %v4812
        %v5113 = vunpack.c.h.b16 %v4812
        %v5114 = vunpack.c.l.b16 %v4813
        %v5115 = vunpack.c.h.b16 %v4813
        %v5116 = vunpack.c.l.b16 %v4814
        %v5117 = vunpack.c.h.b16 %v4814
        %v5118 = vunpack.c.l.b16 %v4815
        %v5119 = vunpack.c.h.b16 %v4815
        %v5120 = vunpack.c.l.b16 %v4816
        %v5121 = vunpack.c.h.b16 %v4816
        %v5122 = vunpack.c.l.b16 %v4817
        %v5123 = vunpack.c.h.b16 %v4817
        %v5124 = vunpack.c.l.b16 %v4818
        %v5125 = vunpack.c.h.b16 %v4818
        %v5126 = vunpack.c.l.b16 %v4819
        %v5127 = vunpack.c.h.b16 %v4819
        %v5128 = vunpack.c.l.b16 %v4820
        %v5129 = vunpack.c.h.b16 %v4820
        %v5130 = vunpack.c.l.b16 %v4821
        %v5131 = vunpack.c.h.b16 %v4821
        %v5132 = vunpack.c.l.b16 %v4822
        %v5133 = vunpack.c.h.b16 %v4822
        %v5134 = vunpack.c.l.b16 %v4823
        %v5135 = vunpack.c.h.b16 %v4823
        %v5136 = vunpack.c.l.b16 %v4824
        %v5137 = vunpack.c.h.b16 %v4824
        %v5138 = vunpack.c.l.b16 %v4825
        %v5139 = vunpack.c.h.b16 %v4825
        %v5140 = vunpack.c.l.b16 %v4826
        %v5141 = vunpack.c.h.b16 %v4826
        %v5142 = vunpack.c.l.b16 %v4827
        %v5143 = vunpack.c.h.b16 %v4827
        %v5144 = vunpack.c.l.b16 %v4828
        %v5145 = vunpack.c.h.b16 %v4828
        %v5146 = vunpack.c.l.b16 %v4829
        %v5147 = vunpack.c.h.b16 %v4829
        %v5148 = vunpack.c.l.b16 %v4830
        %v5149 = vunpack.c.h.b16 %v4830
        %v5150 = vunpack.c.l.b16 %v4831
        %v5151 = vunpack.c.h.b16 %v4831
        %v5152 = vunpack.c.l.b16 %v4832
        %v5153 = vunpack.c.h.b16 %v4832
        %v5154 = vunpack.c.l.b16 %v4833
        %v5155 = vunpack.c.h.b16 %v4833
        %v5156 = vunpack.c.l.b16 %v4834
        %v5157 = vunpack.c.h.b16 %v4834
        %v5158 = vunpack.c.l.b16 %v4835
        %v5159 = vunpack.c.h.b16 %v4835
        %v5160 = vunpack.c.l.b16 %v4836
        %v5161 = vunpack.c.h.b16 %v4836
        %v5162 = vunpack.c.l.b16 %v4837
        %v5163 = vunpack.c.h.b16 %v4837
        %v5164 = vunpack.c.l.b16 %v4838
        %v5165 = vunpack.c.h.b16 %v4838
        %v5166 = vunpack.c.l.b16 %v4839
        %v5167 = vunpack.c.h.b16 %v4839
        %v5168 = vunpack.c.l.b16 %v4840
        %v5169 = vunpack.c.h.b16 %v4840
        %v5170 = vunpack.c.l.b16 %v4841
        %v5171 = vunpack.c.h.b16 %v4841
        %v5172 = vunpack.c.l.b16 %v4842
        %v5173 = vunpack.c.h.b16 %v4842
        %v5174 = vunpack.c.l.b16 %v4843
        %v5175 = vunpack.c.h.b16 %v4843
        %v5176 = vunpack.c.l.b16 %v4844
        %v5177 = vunpack.c.h.b16 %v4844
        %v5178 = vunpack.c.l.b16 %v4845
        %v5179 = vunpack.c.h.b16 %v4845
        %v5180 = vunpack.c.l.b16 %v4846
        %v5181 = vunpack.c.h.b16 %v4846
        %v5182 = vunpack.c.l.b16 %v4847
        %v5183 = vunpack.c.h.b16 %v4847
        %v5184 = vpack.c.b16 %v4962, %v4960
        %v5185 = vpack.c.b16 %v4963, %v4961
        %v5186 = vpack.c.b16 %v4966, %v4964
        %v5187 = vpack.c.b16 %v4967, %v4965
        %v5188 = vpack.c.b16 %v4970, %v4968
        %v5189 = vpack.c.b16 %v4971, %v4969
        %v5190 = vpack.c.b16 %v4974, %v4972
        %v5191 = vpack.c.b16 %v4975, %v4973
        %v5192 = vpack.c.b16 %v4978, %v4976
        %v5193 = vpack.c.b16 %v4979, %v4977
        %v5194 = vpack.c.b16 %v4982, %v4980
        %v5195 = vpack.c.b16 %v4983, %v4981
        %v5196 = vpack.c.b16 %v4986, %v4984
        %v5197 = vpack.c.b16 %v4987, %v4985
        %v5198 = vpack.c.b16 %v4990, %v4988
        %v5199 = vpack.c.b16 %v4991, %v4989
        %v5200 = vpack.c.b16 %v4994, %v4992
        %v5201 = vpack.c.b16 %v4995, %v4993
        %v5202 = vpack.c.b16 %v4998, %v4996
        %v5203 = vpack.c.b16 %v4999, %v4997
        %v5204 = vpack.c.b16 %v5002, %v5000
        %v5205 = vpack.c.b16 %v5003, %v5001
        %v5206 = vpack.c.b16 %v5006, %v5004
        %v5207 = vpack.c.b16 %v5007, %v5005
        %v5208 = vpack.c.b16 %v5010, %v5008
        %v5209 = vpack.c.b16 %v5011, %v5009
        %v5210 = vpack.c.b16 %v5014, %v5012
        %v5211 = vpack.c.b16 %v5015, %v5013
        %v5212 = vpack.c.b16 %v5018, %v5016
        %v5213 = vpack.c.b16 %v5019, %v5017
        %v5214 = vpack.c.b16 %v5022, %v5020
        %v5215 = vpack.c.b16 %v5023, %v5021
        %v5216 = vpack.c.b16 %v5026, %v5024
        %v5217 = vpack.c.b16 %v5027, %v5025
        %v5218 = vpack.c.b16 %v5030, %v5028
        %v5219 = vpack.c.b16 %v5031, %v5029
        %v5220 = vpack.c.b16 %v5034, %v5032
        %v5221 = vpack.c.b16 %v5035, %v5033
        %v5222 = vpack.c.b16 %v5038, %v5036
        %v5223 = vpack.c.b16 %v5039, %v5037
        %v5224 = vpack.c.b16 %v5042, %v5040
        %v5225 = vpack.c.b16 %v5043, %v5041
        %v5226 = vpack.c.b16 %v5046, %v5044
        %v5227 = vpack.c.b16 %v5047, %v5045
        %v5228 = vpack.c.b16 %v5050, %v5048
        %v5229 = vpack.c.b16 %v5051, %v5049
        %v5230 = vpack.c.b16 %v5054, %v5052
        %v5231 = vpack.c.b16 %v5055, %v5053
        %v5232 = vpack.c.b16 %v5058, %v5056
        %v5233 = vpack.c.b16 %v5059, %v5057
        %v5234 = vpack.c.b16 %v5062, %v5060
        %v5235 = vpack.c.b16 %v5063, %v5061
        %v5236 = vpack.c.b16 %v5066, %v5064
        %v5237 = vpack.c.b16 %v5067, %v5065
        %v5238 = vpack.c.b16 %v5070, %v5068
        %v5239 = vpack.c.b16 %v5071, %v5069
        %v5240 = vpack.c.b16 %v5074, %v5072
        %v5241 = vpack.c.b16 %v5075, %v5073
        %v5242 = vpack.c.b16 %v5078, %v5076
        %v5243 = vpack.c.b16 %v5079, %v5077
        %v5244 = vpack.c.b16 %v5082, %v5080
        %v5245 = vpack.c.b16 %v5083, %v5081
        %v5246 = vpack.c.b16 %v5086, %v5084
        %v5247 = vpack.c.b16 %v5087, %v5085
        %v5248 = vpack.c.b16 %v5090, %v5088
        %v5249 = vpack.c.b16 %v5091, %v5089
        %v5250 = vpack.c.b16 %v5094, %v5092
        %v5251 = vpack.c.b16 %v5095, %v5093
        %v5252 = vpack.c.b16 %v5098, %v5096
        %v5253 = vpack.c.b16 %v5099, %v5097
        %v5254 = vpack.c.b16 %v5102, %v5100
        %v5255 = vpack.c.b16 %v5103, %v5101
        %v5256 = vpack.c.b16 %v5106, %v5104
        %v5257 = vpack.c.b16 %v5107, %v5105
        %v5258 = vpack.c.b16 %v5110, %v5108
        %v5259 = vpack.c.b16 %v5111, %v5109
        %v5260 = vpack.c.b16 %v5114, %v5112
        %v5261 = vpack.c.b16 %v5115, %v5113
        %v5262 = vpack.c.b16 %v5118, %v5116
        %v5263 = vpack.c.b16 %v5119, %v5117
        %v5264 = vpack.c.b16 %v5122, %v5120
        %v5265 = vpack.c.b16 %v5123, %v5121
        %v5266 = vpack.c.b16 %v5126, %v5124
        %v5267 = vpack.c.b16 %v5127, %v5125
        %v5268 = vpack.c.b16 %v5130, %v5128
        %v5269 = vpack.c.b16 %v5131, %v5129
        %v5270 = vpack.c.b16 %v5134, %v5132
        %v5271 = vpack.c.b16 %v5135, %v5133
        %v5272 = vpack.c.b16 %v5138, %v5136
        %v5273 = vpack.c.b16 %v5139, %v5137
        %v5274 = vpack.c.b16 %v5142, %v5140
        %v5275 = vpack.c.b16 %v5143, %v5141
        %v5276 = vpack.c.b16 %v5146, %v5144
        %v5277 = vpack.c.b16 %v5147, %v5145
        %v5278 = vpack.c.b16 %v5150, %v5148
        %v5279 = vpack.c.b16 %v5151, %v5149
        %v5280 = vpack.c.b16 %v5154, %v5152
        %v5281 = vpack.c.b16 %v5155, %v5153
        %v5282 = vpack.c.b16 %v5158, %v5156
        %v5283 = vpack.c.b16 %v5159, %v5157
        %v5284 = vpack.c.b16 %v5162, %v5160
        %v5285 = vpack.c.b16 %v5163, %v5161
        %v5286 = vpack.c.b16 %v5166, %v5164
        %v5287 = vpack.c.b16 %v5167, %v5165
        %v5288 = vpack.c.b16 %v5170, %v5168
        %v5289 = vpack.c.b16 %v5171, %v5169
        %v5290 = vpack.c.b16 %v5174, %v5172
        %v5291 = vpack.c.b16 %v5175, %v5173
        %v5292 = vpack.c.b16 %v5178, %v5176
        %v5293 = vpack.c.b16 %v5179, %v5177
        %v5294 = vpack.c.b16 %v5182, %v5180
        %v5295 = vpack.c.b16 %v5183, %v5181
        %5408 = vmatprep.subr.bf16.mxu0 %v5185
        %5409 = vmatpush1.bf16.msra.mxu0 %v5184
        %5410 = vmatprep.subr.bf16.mxu0 %v5187
        %5411 = vmatpush1.bf16.msra.mxu0 %v5186
        %5412 = vmatprep.subr.bf16.mxu0 %v5189
        %5413 = vmatpush1.bf16.msra.mxu0 %v5188
        %5414 = vmatprep.subr.bf16.mxu0 %v5191
        %5415 = vmatpush1.bf16.msra.mxu0 %v5190
        %5416 = vmatprep.subr.bf16.mxu0 %v5193
        %5417 = vmatpush1.bf16.msra.mxu0 %v5192
        %5418 = vmatprep.subr.bf16.mxu0 %v5195
        %5419 = vmatpush1.bf16.msra.mxu0 %v5194
        %5420 = vmatprep.subr.bf16.mxu0 %v5197
        %5421 = vmatpush1.bf16.msra.mxu0 %v5196
        %5422 = vmatprep.subr.bf16.mxu0 %v5199
        %5423 = vmatpush1.bf16.msra.mxu0 %v5198
        %5424 = vmatprep.subr.bf16.mxu0 %v5201
        %5425 = vmatpush1.bf16.msra.mxu0 %v5200
        %5426 = vmatprep.subr.bf16.mxu0 %v5203
        %5427 = vmatpush1.bf16.msra.mxu0 %v5202
        %5428 = vmatprep.subr.bf16.mxu0 %v5205
        %5429 = vmatpush1.bf16.msra.mxu0 %v5204
        %5430 = vmatprep.subr.bf16.mxu0 %v5207
        %5431 = vmatpush1.bf16.msra.mxu0 %v5206
        %5432 = vmatprep.subr.bf16.mxu0 %v5209
        %5433 = vmatpush1.bf16.msra.mxu0 %v5208
        %5434 = vmatprep.subr.bf16.mxu0 %v5211
        %5435 = vmatpush1.bf16.msra.mxu0 %v5210
        %5436 = vmatprep.subr.bf16.mxu0 %v5213
        %5437 = vmatpush1.bf16.msra.mxu0 %v5212
        %5438 = vmatprep.subr.bf16.mxu0 %v5215
        %5439 = vmatpush1.bf16.msra.mxu0 %v5214
        %5440 = vmatprep.mubr.bf16.mxu0 %v4730
        %5441 = vmatmul.mubr.bf16.gmra.mrb[0].mxu0 %v4729
        %v5442 = vpop.f32.mrb[0].mxu0
        %v5443 = vadd.f32 0.0, %v5442
        %v5444 = vpop.f32.mrb[0].mxu0
        %v5445 = vadd.f32 0.0, %v5444
        %v5446 = vpop.f32.mrb[0].mxu0
        %v5447 = vpop.f32.mrb[0].mxu0
        %5448 = vdwg.mxu0
        %5449 = vmatprep.subr.bf16.mxu0 %v5217
        %5450 = vmatpush1.bf16.msra.mxu0 %v5216
        %5451 = vmatprep.subr.bf16.mxu0 %v5219
        %5452 = vmatpush1.bf16.msra.mxu0 %v5218
        %5453 = vmatprep.subr.bf16.mxu0 %v5221
        %5454 = vmatpush1.bf16.msra.mxu0 %v5220
        %5455 = vmatprep.subr.bf16.mxu0 %v5223
        %5456 = vmatpush1.bf16.msra.mxu0 %v5222
        %5457 = vmatprep.subr.bf16.mxu0 %v5225
        %5458 = vmatpush1.bf16.msra.mxu0 %v5224
        %5459 = vmatprep.subr.bf16.mxu0 %v5227
        %5460 = vmatpush1.bf16.msra.mxu0 %v5226
        %5461 = vmatprep.subr.bf16.mxu0 %v5229
        %5462 = vmatpush1.bf16.msra.mxu0 %v5228
        %5463 = vmatprep.subr.bf16.mxu0 %v5231
        %5464 = vmatpush1.bf16.msra.mxu0 %v5230
        %5465 = vmatprep.subr.bf16.mxu0 %v5233
        %5466 = vmatpush1.bf16.msra.mxu0 %v5232
        %5467 = vmatprep.subr.bf16.mxu0 %v5235
        %5468 = vmatpush1.bf16.msra.mxu0 %v5234
        %5469 = vmatprep.subr.bf16.mxu0 %v5237
        %5470 = vmatpush1.bf16.msra.mxu0 %v5236
        %5471 = vmatprep.subr.bf16.mxu0 %v5239
        %5472 = vmatpush1.bf16.msra.mxu0 %v5238
        %5473 = vmatprep.subr.bf16.mxu0 %v5241
        %5474 = vmatpush1.bf16.msra.mxu0 %v5240
        %5475 = vmatprep.subr.bf16.mxu0 %v5243
        %5476 = vmatpush1.bf16.msra.mxu0 %v5242
        %5477 = vmatprep.subr.bf16.mxu0 %v5245
        %5478 = vmatpush1.bf16.msra.mxu0 %v5244
        %5479 = vmatprep.subr.bf16.mxu0 %v5247
        %5480 = vmatpush1.bf16.msra.mxu0 %v5246
        %5481 = vmatprep.mubr.bf16.mxu0 %v4732
        %5482 = vmatmul.mubr.bf16.gmra.mrb[0].mxu0 %v4731
        %v5483 = vpop.f32.mrb[0].mxu0
        %v5484 = vadd.f32 %v5443, %v5483
        %v5485 = vpop.f32.mrb[0].mxu0
        %v5486 = vadd.f32 %v5445, %v5485
        %v5487 = vpop.f32.mrb[0].mxu0
        %v5488 = vpop.f32.mrb[0].mxu0
        %5489 = vdwg.mxu0
        %5490 = vmatprep.subr.bf16.mxu0 %v5249
        %5491 = vmatpush1.bf16.msra.mxu0 %v5248
        %5492 = vmatprep.subr.bf16.mxu0 %v5251
        %5493 = vmatpush1.bf16.msra.mxu0 %v5250
        %5494 = vmatprep.subr.bf16.mxu0 %v5253
        %5495 = vmatpush1.bf16.msra.mxu0 %v5252
        %5496 = vmatprep.subr.bf16.mxu0 %v5255
        %5497 = vmatpush1.bf16.msra.mxu0 %v5254
        %5498 = vmatprep.subr.bf16.mxu0 %v5257
        %5499 = vmatpush1.bf16.msra.mxu0 %v5256
        %5500 = vmatprep.subr.bf16.mxu0 %v5259
        %5501 = vmatpush1.bf16.msra.mxu0 %v5258
        %5502 = vmatprep.subr.bf16.mxu0 %v5261
        %5503 = vmatpush1.bf16.msra.mxu0 %v5260
        %5504 = vmatprep.subr.bf16.mxu0 %v5263
        %5505 = vmatpush1.bf16.msra.mxu0 %v5262
        %5506 = vmatprep.subr.bf16.mxu0 %v5265
        %5507 = vmatpush1.bf16.msra.mxu0 %v5264
        %5508 = vmatprep.subr.bf16.mxu0 %v5267
        %5509 = vmatpush1.bf16.msra.mxu0 %v5266
        %5510 = vmatprep.subr.bf16.mxu0 %v5269
        %5511 = vmatpush1.bf16.msra.mxu0 %v5268
        %5512 = vmatprep.subr.bf16.mxu0 %v5271
        %5513 = vmatpush1.bf16.msra.mxu0 %v5270
        %5514 = vmatprep.subr.bf16.mxu0 %v5273
        %5515 = vmatpush1.bf16.msra.mxu0 %v5272
        %5516 = vmatprep.subr.bf16.mxu0 %v5275
        %5517 = vmatpush1.bf16.msra.mxu0 %v5274
        %5518 = vmatprep.subr.bf16.mxu0 %v5277
        %5519 = vmatpush1.bf16.msra.mxu0 %v5276
        %5520 = vmatprep.subr.bf16.mxu0 %v5279
        %5521 = vmatpush1.bf16.msra.mxu0 %v5278
        %5522 = vmatprep.mubr.bf16.mxu0 %v4734
        %5523 = vmatmul.mubr.bf16.gmra.mrb[0].mxu0 %v4733
        %v5524 = vpop.f32.mrb[0].mxu0
        %v5525 = vadd.f32 %v5484, %v5524
        %v5526 = vpop.f32.mrb[0].mxu0
        %v5527 = vadd.f32 %v5486, %v5526
        %v5528 = vpop.f32.mrb[0].mxu0
        %v5529 = vpop.f32.mrb[0].mxu0
        %5530 = vdwg.mxu0
        %5531 = vmatprep.subr.bf16.mxu0 %v5281
        %5532 = vmatpush1.bf16.msra.mxu0 %v5280
        %5533 = vmatprep.subr.bf16.mxu0 %v5283
        %5534 = vmatpush1.bf16.msra.mxu0 %v5282
        %5535 = vmatprep.subr.bf16.mxu0 %v5285
        %5536 = vmatpush1.bf16.msra.mxu0 %v5284
        %5537 = vmatprep.subr.bf16.mxu0 %v5287
        %5538 = vmatpush1.bf16.msra.mxu0 %v5286
        %5539 = vmatprep.subr.bf16.mxu0 %v5289
        %5540 = vmatpush1.bf16.msra.mxu0 %v5288
        %5541 = vmatprep.subr.bf16.mxu0 %v5291
        %5542 = vmatpush1.bf16.msra.mxu0 %v5290
        %5543 = vmatprep.subr.bf16.mxu0 %v5293
        %5544 = vmatpush1.bf16.msra.mxu0 %v5292
        %5545 = vmatprep.subr.bf16.mxu0 %v5295
        %5546 = vmatpush1.bf16.msra.mxu0 %v5294
        %5547 = vmatprep.subr.bf16.mxu0 0
        %5548 = vmatpush1.bf16.msra.mxu0 0
        %5549 = vmatprep.subr.bf16.mxu0 0
        %5550 = vmatpush1.bf16.msra.mxu0 0
        %5551 = vmatprep.subr.bf16.mxu0 0
        %5552 = vmatpush1.bf16.msra.mxu0 0
        %5553 = vmatprep.subr.bf16.mxu0 0
        %5554 = vmatpush1.bf16.msra.mxu0 0
        %5555 = vmatprep.subr.bf16.mxu0 0
        %5556 = vmatpush1.bf16.msra.mxu0 0
        %5557 = vmatprep.subr.bf16.mxu0 0
        %5558 = vmatpush1.bf16.msra.mxu0 0
        %5559 = vmatprep.subr.bf16.mxu0 0
        %5560 = vmatpush1.bf16.msra.mxu0 0
        %5561 = vmatprep.subr.bf16.mxu0 0
        %5562 = vmatpush1.bf16.msra.mxu0 0
        %5563 = vmatprep.mubr.bf16.mxu0 0
        %5564 = vmatmul.mubr.bf16.gmra.mrb[0].mxu0 %v4735
        %v5565 = vpop.f32.mrb[0].mxu0
        %v5566 = vadd.f32 %v5525, %v5565
        %v5567 = vpop.f32.mrb[0].mxu0
        %v5568 = vadd.f32 %v5527, %v5567
        %v5569 = vpop.f32.mrb[0].mxu0
        %v5570 = vpop.f32.mrb[0].mxu0
        %5571 = vdwg.mxu0
        %v5572 = vld [vmem:[#allocation47] sm:$0x3]
        %v5574 = vlaneseq
        %v5575 = vshrl.u32 %v5574, 7
        %v5576 = vsub.s32 0, %v5575
        %v5577 = vrot.slane %v5572, %v5576
        %v5578 = vlaneseq
        %v5579 = vshrl.u32 %v5578, 7
        %v5580 = vsub.s32 1, %v5579
        %v5581 = vrot.slane %v5572, %v5580
        %v5584 = vmul.f32 %v5566, %v5577
        %v5585 = vmul.f32 %v5568, %v5581
        %v5586 = vld [vmem:[#allocation48] sm:$0x3]
        %v5588 = vlaneseq
        %v5589 = vshrl.u32 %v5588, 7
        %v5590 = vsub.s32 0, %v5589
        %v5591 = vrot.slane %v5586, %v5590
        %v5592 = vlaneseq
        %v5593 = vshrl.u32 %v5592, 7
        %v5594 = vsub.s32 1, %v5593
        %v5595 = vrot.slane %v5586, %v5594
        %v5598 = vadd.f32 %v5584, %v5591
        %v5599 = vadd.f32 %v5585, %v5595
        %v5600 = vmax.f32 %v5598, 0.0
        %v5601 = vmax.f32 %v5599, 0.0
        %5602 = vst [vmem:[#allocation9 + $0x10] sm:$0xf] %v5600
        %5603 = vst [vmem:[#allocation9 + $0x18] sm:$0xf] %v5601
        %v5604 = vld [vmem:[#allocation9] sm:$0xe0]
        %v5605 = vld [vmem:[#allocation9 + $0x8] sm:$0xe0]
        %v5606 = vld [vmem:[#allocation9 + $0x10] sm:$0x1]
        %v5607 = vld [vmem:[#allocation9 + $0x18] sm:$0x1]
        %vm5612 = vcmask 1042432
        %v5613 = vrot.slane %v5604, 5
        %v5614 = vrot.slane %v5606, 5
        %v5615 = vsel %vm5612, %v5613, %v5614
        %v5616 = vrot.slane %v5605, 5
        %v5617 = vrot.slane %v5607, 5
        %v5618 = vsel %vm5612, %v5616, %v5617
        %5621 = vst [vmem:[#allocation11] sm:$0xf] %v5615
        %5622 = vst [vmem:[#allocation11 + $0x8] sm:$0xf] %v5618
        %v5623 = vld [vmem:[#allocation9] sm:$0xc0]
        %v5624 = vld [vmem:[#allocation9 + $0x8] sm:$0xc0]
        %v5625 = vld [vmem:[#allocation9 + $0x10] sm:$0x3]
        %v5626 = vld [vmem:[#allocation9 + $0x18] sm:$0x3]
        %v5631 = vrot.slane %v5623, 6
        %v5632 = vrot.slane %v5625, 6
        %v5633 = vsel %vm4508, %v5631, %v5632
        %v5634 = vrot.slane %v5624, 6
        %v5635 = vrot.slane %v5626, 6
        %v5636 = vsel %vm4508, %v5634, %v5635
        %5639 = vst [vmem:[#allocation11 + $0x10] sm:$0xf] %v5633
        %5640 = vst [vmem:[#allocation11 + $0x18] sm:$0xf] %v5636
        %v5641 = vld [vmem:[#allocation9] sm:$0x80]
        %v5642 = vld [vmem:[#allocation9 + $0x8] sm:$0x80]
        %v5643 = vld [vmem:[#allocation9 + $0x10] sm:$0x7]
        %v5644 = vld [vmem:[#allocation9 + $0x18] sm:$0x7]
        %vm5649 = vcmask 1040384
        %v5650 = vrot.slane %v5641, 7
        %v5651 = vrot.slane %v5643, 7
        %v5652 = vsel %vm5649, %v5650, %v5651
        %v5653 = vrot.slane %v5642, 7
        %v5654 = vrot.slane %v5644, 7
        %v5655 = vsel %vm5649, %v5653, %v5654
        %5658 = vst [vmem:[#allocation11 + $0x20] sm:$0xf] %v5652
        %5659 = vst [vmem:[#allocation11 + $0x28] sm:$0xf] %v5655
        %v5660 = vld [vmem:[#allocation9 + $0x10] sm:$0xf]
        %v5661 = vld [vmem:[#allocation9 + $0x18] sm:$0xf]
        %5662 = vst [vmem:[#allocation11 + $0x30] sm:$0xf] %v5660
        %5663 = vst [vmem:[#allocation11 + $0x38] sm:$0xf] %v5661
        %v5664 = vld [vmem:[#allocation9 + $0x10] sm:$0x1e]
        %v5665 = vld [vmem:[#allocation9 + $0x18] sm:$0x1e]
        %v5668 = vrot.slane %v5664, 1
        %v5669 = vrot.slane %v5665, 1
        %5672 = vst [vmem:[#allocation11 + $0x40] sm:$0xf] %v5668
        %5673 = vst [vmem:[#allocation11 + $0x48] sm:$0xf] %v5669
        %v5674 = vld [vmem:[#allocation9 + $0x10] sm:$0x3c]
        %v5675 = vld [vmem:[#allocation9 + $0x18] sm:$0x3c]
        %v5678 = vrot.slane %v5674, 2
        %v5679 = vrot.slane %v5675, 2
        %5682 = vst [vmem:[#allocation11 + $0x50] sm:$0xf] %v5678
        %5683 = vst [vmem:[#allocation11 + $0x58] sm:$0xf] %v5679
        %v5684 = vld [vmem:[#allocation9 + $0x10] sm:$0x78]
        %v5685 = vld [vmem:[#allocation9 + $0x18] sm:$0x78]
        %v5688 = vrot.slane %v5684, 3
        %v5689 = vrot.slane %v5685, 3
        %5692 = vst [vmem:[#allocation11 + $0x60] sm:$0xf] %v5688
        %5693 = vst [vmem:[#allocation11 + $0x68] sm:$0xf] %v5689
        %v5694 = vld [vmem:[#allocation11] sm:$0xf]
        %v5695 = vld [vmem:[#allocation11 + $0x8] sm:$0xf]
        %v5696 = vld [vmem:[#allocation11 + $0x10] sm:$0xf]
        %v5697 = vld [vmem:[#allocation11 + $0x18] sm:$0xf]
        %v5698 = vld [vmem:[#allocation11 + $0x20] sm:$0xf]
        %v5699 = vld [vmem:[#allocation11 + $0x28] sm:$0xf]
        %v5700 = vld [vmem:[#allocation11 + $0x30] sm:$0xf]
        %v5701 = vld [vmem:[#allocation11 + $0x38] sm:$0xf]
        %v5702 = vld [vmem:[#allocation11 + $0x40] sm:$0xf]
        %v5703 = vld [vmem:[#allocation11 + $0x48] sm:$0xf]
        %v5704 = vld [vmem:[#allocation11 + $0x50] sm:$0xf]
        %v5705 = vld [vmem:[#allocation11 + $0x58] sm:$0xf]
        %v5706 = vld [vmem:[#allocation11 + $0x60] sm:$0xf]
        %v5707 = vld [vmem:[#allocation11 + $0x68] sm:$0xf]
        %v5708 = vpack.c.bf16 %v5694, %v5694
        %v5709 = vpack.c.bf16 %v5695, %v5695
        %v5710 = vpack.c.bf16 %v5696, %v5696
        %v5711 = vpack.c.bf16 %v5697, %v5697
        %v5712 = vpack.c.bf16 %v5698, %v5698
        %v5713 = vpack.c.bf16 %v5699, %v5699
        %v5714 = vpack.c.bf16 %v5700, %v5700
        %v5715 = vpack.c.bf16 %v5701, %v5701
        %v5716 = vpack.c.bf16 %v5702, %v5702
        %v5717 = vpack.c.bf16 %v5703, %v5703
        %v5718 = vpack.c.bf16 %v5704, %v5704
        %v5719 = vpack.c.bf16 %v5705, %v5705
        %v5720 = vpack.c.bf16 %v5706, %v5706
        %v5721 = vpack.c.bf16 %v5707, %v5707
        %v5722 = vld [vmem:[#allocation50] sm:$0xff]
        %v5723 = vld [vmem:[#allocation50 + $0x8] sm:$0xff]
        %v5724 = vld [vmem:[#allocation50 + $0x10] sm:$0xff]
        %v5725 = vld [vmem:[#allocation50 + $0x18] sm:$0xff]
        %v5726 = vld [vmem:[#allocation50 + $0x20] sm:$0xff]
        %v5727 = vld [vmem:[#allocation50 + $0x28] sm:$0xff]
        %v5728 = vld [vmem:[#allocation50 + $0x30] sm:$0xff]
        %v5729 = vld [vmem:[#allocation50 + $0x38] sm:$0xff]
        %v5730 = vld [vmem:[#allocation50 + $0x40] sm:$0xff]
        %v5731 = vld [vmem:[#allocation50 + $0x48] sm:$0xff]
        %v5732 = vld [vmem:[#allocation50 + $0x50] sm:$0xff]
        %v5733 = vld [vmem:[#allocation50 + $0x58] sm:$0xff]
        %v5734 = vld [vmem:[#allocation50 + $0x60] sm:$0xff]
        %v5735 = vld [vmem:[#allocation50 + $0x68] sm:$0xff]
        %v5736 = vld [vmem:[#allocation50 + $0x70] sm:$0xff]
        %v5737 = vld [vmem:[#allocation50 + $0x78] sm:$0xff]
        %v5738 = vld [vmem:[#allocation50 + $0x80] sm:$0xff]
        %v5739 = vld [vmem:[#allocation50 + $0x88] sm:$0xff]
        %v5740 = vld [vmem:[#allocation50 + $0x90] sm:$0xff]
        %v5741 = vld [vmem:[#allocation50 + $0x98] sm:$0xff]
        %v5742 = vld [vmem:[#allocation50 + $0xa0] sm:$0xff]
        %v5743 = vld [vmem:[#allocation50 + $0xa8] sm:$0xff]
        %v5744 = vld [vmem:[#allocation50 + $0xb0] sm:$0xff]
        %v5745 = vld [vmem:[#allocation50 + $0xb8] sm:$0xff]
        %v5746 = vld [vmem:[#allocation50 + $0xc0] sm:$0xff]
        %v5747 = vld [vmem:[#allocation50 + $0xc8] sm:$0xff]
        %v5748 = vld [vmem:[#allocation50 + $0xd0] sm:$0xff]
        %v5749 = vld [vmem:[#allocation50 + $0xd8] sm:$0xff]
        %v5750 = vld [vmem:[#allocation50 + $0xe0] sm:$0xff]
        %v5751 = vld [vmem:[#allocation50 + $0xe8] sm:$0xff]
        %v5752 = vld [vmem:[#allocation50 + $0xf0] sm:$0xff]
        %v5753 = vld [vmem:[#allocation50 + $0xf8] sm:$0xff]
        %v5754 = vld [vmem:[#allocation50 + $0x100] sm:$0xff]
        %v5755 = vld [vmem:[#allocation50 + $0x108] sm:$0xff]
        %v5756 = vld [vmem:[#allocation50 + $0x110] sm:$0xff]
        %v5757 = vld [vmem:[#allocation50 + $0x118] sm:$0xff]
        %v5758 = vld [vmem:[#allocation50 + $0x120] sm:$0xff]
        %v5759 = vld [vmem:[#allocation50 + $0x128] sm:$0xff]
        %v5760 = vld [vmem:[#allocation50 + $0x130] sm:$0xff]
        %v5761 = vld [vmem:[#allocation50 + $0x138] sm:$0xff]
        %v5762 = vld [vmem:[#allocation50 + $0x140] sm:$0xff]
        %v5763 = vld [vmem:[#allocation50 + $0x148] sm:$0xff]
        %v5764 = vld [vmem:[#allocation50 + $0x150] sm:$0xff]
        %v5765 = vld [vmem:[#allocation50 + $0x158] sm:$0xff]
        %v5766 = vld [vmem:[#allocation50 + $0x160] sm:$0xff]
        %v5767 = vld [vmem:[#allocation50 + $0x168] sm:$0xff]
        %v5768 = vld [vmem:[#allocation50 + $0x170] sm:$0xff]
        %v5769 = vld [vmem:[#allocation50 + $0x178] sm:$0xff]
        %v5770 = vld [vmem:[#allocation50 + $0x180] sm:$0xff]
        %v5771 = vld [vmem:[#allocation50 + $0x188] sm:$0xff]
        %v5772 = vld [vmem:[#allocation50 + $0x190] sm:$0xff]
        %v5773 = vld [vmem:[#allocation50 + $0x198] sm:$0xff]
        %v5774 = vld [vmem:[#allocation50 + $0x1a0] sm:$0xff]
        %v5775 = vld [vmem:[#allocation50 + $0x1a8] sm:$0xff]
        %v5776 = vld [vmem:[#allocation50 + $0x1b0] sm:$0xff]
        %v5777 = vld [vmem:[#allocation50 + $0x1b8] sm:$0xff]
        %v5778 = vld [vmem:[#allocation50 + $0x1c0] sm:$0xff]
        %v5779 = vld [vmem:[#allocation50 + $0x1c8] sm:$0xff]
        %v5780 = vld [vmem:[#allocation50 + $0x1d0] sm:$0xff]
        %v5781 = vld [vmem:[#allocation50 + $0x1d8] sm:$0xff]
        %v5782 = vld [vmem:[#allocation50 + $0x1e0] sm:$0xff]
        %v5783 = vld [vmem:[#allocation50 + $0x1e8] sm:$0xff]
        %v5784 = vld [vmem:[#allocation50 + $0x1f0] sm:$0xff]
        %v5785 = vld [vmem:[#allocation50 + $0x1f8] sm:$0xff]
        %v5786 = vld [vmem:[#allocation50 + $0x200] sm:$0xff]
        %v5787 = vld [vmem:[#allocation50 + $0x208] sm:$0xff]
        %v5788 = vld [vmem:[#allocation50 + $0x210] sm:$0xff]
        %v5789 = vld [vmem:[#allocation50 + $0x218] sm:$0xff]
        %v5790 = vld [vmem:[#allocation50 + $0x220] sm:$0xff]
        %v5791 = vld [vmem:[#allocation50 + $0x228] sm:$0xff]
        %v5792 = vld [vmem:[#allocation50 + $0x230] sm:$0xff]
        %v5793 = vld [vmem:[#allocation50 + $0x238] sm:$0xff]
        %v5794 = vld [vmem:[#allocation50 + $0x240] sm:$0xff]
        %v5795 = vld [vmem:[#allocation50 + $0x248] sm:$0xff]
        %v5796 = vld [vmem:[#allocation50 + $0x250] sm:$0xff]
        %v5797 = vld [vmem:[#allocation50 + $0x258] sm:$0xff]
        %v5798 = vld [vmem:[#allocation50 + $0x260] sm:$0xff]
        %v5799 = vld [vmem:[#allocation50 + $0x268] sm:$0xff]
        %v5800 = vld [vmem:[#allocation50 + $0x270] sm:$0xff]
        %v5801 = vld [vmem:[#allocation50 + $0x278] sm:$0xff]
        %v5802 = vld [vmem:[#allocation50 + $0x280] sm:$0xff]
        %v5803 = vld [vmem:[#allocation50 + $0x288] sm:$0xff]
        %v5804 = vld [vmem:[#allocation50 + $0x290] sm:$0xff]
        %v5805 = vld [vmem:[#allocation50 + $0x298] sm:$0xff]
        %v5806 = vld [vmem:[#allocation50 + $0x2a0] sm:$0xff]
        %v5807 = vld [vmem:[#allocation50 + $0x2a8] sm:$0xff]
        %v5808 = vld [vmem:[#allocation50 + $0x2b0] sm:$0xff]
        %v5809 = vld [vmem:[#allocation50 + $0x2b8] sm:$0xff]
        %v5810 = vld [vmem:[#allocation50 + $0x2c0] sm:$0xff]
        %v5811 = vld [vmem:[#allocation50 + $0x2c8] sm:$0xff]
        %v5812 = vld [vmem:[#allocation50 + $0x2d0] sm:$0xff]
        %v5813 = vld [vmem:[#allocation50 + $0x2d8] sm:$0xff]
        %v5814 = vld [vmem:[#allocation50 + $0x2e0] sm:$0xff]
        %v5815 = vld [vmem:[#allocation50 + $0x2e8] sm:$0xff]
        %v5816 = vld [vmem:[#allocation50 + $0x2f0] sm:$0xff]
        %v5817 = vld [vmem:[#allocation50 + $0x2f8] sm:$0xff]
        %v5818 = vld [vmem:[#allocation50 + $0x300] sm:$0xff]
        %v5819 = vld [vmem:[#allocation50 + $0x308] sm:$0xff]
        %v5820 = vld [vmem:[#allocation50 + $0x310] sm:$0xff]
        %v5821 = vld [vmem:[#allocation50 + $0x318] sm:$0xff]
        %v5822 = vld [vmem:[#allocation50 + $0x320] sm:$0xff]
        %v5823 = vld [vmem:[#allocation50 + $0x328] sm:$0xff]
        %v5824 = vld [vmem:[#allocation50 + $0x330] sm:$0xff]
        %v5825 = vld [vmem:[#allocation50 + $0x338] sm:$0xff]
        %v5826 = vld [vmem:[#allocation50 + $0x340] sm:$0xff]
        %v5827 = vld [vmem:[#allocation50 + $0x348] sm:$0xff]
        %v5828 = vld [vmem:[#allocation50 + $0x350] sm:$0xff]
        %v5829 = vld [vmem:[#allocation50 + $0x358] sm:$0xff]
        %v5830 = vld [vmem:[#allocation50 + $0x360] sm:$0xff]
        %v5831 = vld [vmem:[#allocation50 + $0x368] sm:$0xff]
        %v5832 = vld [vmem:[#allocation50 + $0x370] sm:$0xff]
        %v5833 = vld [vmem:[#allocation50 + $0x378] sm:$0xff]
        %v5834 = vld [vmem:[#allocation50 + $0x380] sm:$0xff]
        %v5835 = vld [vmem:[#allocation50 + $0x388] sm:$0xff]
        %v5836 = vld [vmem:[#allocation50 + $0x390] sm:$0xff]
        %v5837 = vld [vmem:[#allocation50 + $0x398] sm:$0xff]
        %v5838 = vld [vmem:[#allocation50 + $0x3a0] sm:$0xff]
        %v5839 = vld [vmem:[#allocation50 + $0x3a8] sm:$0xff]
        %v5840 = vld [vmem:[#allocation50 + $0x3b0] sm:$0xff]
        %v5841 = vld [vmem:[#allocation50 + $0x3b8] sm:$0xff]
        %v5842 = vld [vmem:[#allocation50 + $0x3c0] sm:$0xff]
        %v5843 = vld [vmem:[#allocation50 + $0x3c8] sm:$0xff]
        %v5844 = vld [vmem:[#allocation50 + $0x3d0] sm:$0xff]
        %v5845 = vld [vmem:[#allocation50 + $0x3d8] sm:$0xff]
        %v5846 = vld [vmem:[#allocation50 + $0x3e0] sm:$0xff]
        %v5847 = vld [vmem:[#allocation50 + $0x3e8] sm:$0xff]
        %v5848 = vld [vmem:[#allocation50 + $0x3f0] sm:$0xff]
        %v5849 = vld [vmem:[#allocation50 + $0x3f8] sm:$0xff]
        %v5850 = vld [vmem:[#allocation50 + $0x400] sm:$0xff]
        %v5851 = vld [vmem:[#allocation50 + $0x408] sm:$0xff]
        %v5852 = vld [vmem:[#allocation50 + $0x410] sm:$0xff]
        %v5853 = vld [vmem:[#allocation50 + $0x418] sm:$0xff]
        %v5854 = vld [vmem:[#allocation50 + $0x420] sm:$0xff]
        %v5855 = vld [vmem:[#allocation50 + $0x428] sm:$0xff]
        %v5856 = vld [vmem:[#allocation50 + $0x430] sm:$0xff]
        %v5857 = vld [vmem:[#allocation50 + $0x438] sm:$0xff]
        %v5858 = vld [vmem:[#allocation50 + $0x440] sm:$0xff]
        %v5859 = vld [vmem:[#allocation50 + $0x448] sm:$0xff]
        %v5860 = vld [vmem:[#allocation50 + $0x450] sm:$0xff]
        %v5861 = vld [vmem:[#allocation50 + $0x458] sm:$0xff]
        %v5862 = vld [vmem:[#allocation50 + $0x460] sm:$0xff]
        %v5863 = vld [vmem:[#allocation50 + $0x468] sm:$0xff]
        %v5864 = vld [vmem:[#allocation50 + $0x470] sm:$0xff]
        %v5865 = vld [vmem:[#allocation50 + $0x478] sm:$0xff]
        %v5866 = vld [vmem:[#allocation50 + $0x480] sm:$0xff]
        %v5867 = vld [vmem:[#allocation50 + $0x488] sm:$0xff]
        %v5868 = vld [vmem:[#allocation50 + $0x490] sm:$0xff]
        %v5869 = vld [vmem:[#allocation50 + $0x498] sm:$0xff]
        %v5870 = vld [vmem:[#allocation50 + $0x4a0] sm:$0xff]
        %v5871 = vld [vmem:[#allocation50 + $0x4a8] sm:$0xff]
        %v5872 = vld [vmem:[#allocation50 + $0x4b0] sm:$0xff]
        %v5873 = vld [vmem:[#allocation50 + $0x4b8] sm:$0xff]
        %v5874 = vld [vmem:[#allocation50 + $0x4c0] sm:$0xff]
        %v5875 = vld [vmem:[#allocation50 + $0x4c8] sm:$0xff]
        %v5876 = vld [vmem:[#allocation50 + $0x4d0] sm:$0xff]
        %v5877 = vld [vmem:[#allocation50 + $0x4d8] sm:$0xff]
        %v5878 = vld [vmem:[#allocation50 + $0x4e0] sm:$0xff]
        %v5879 = vld [vmem:[#allocation50 + $0x4e8] sm:$0xff]
        %v5880 = vld [vmem:[#allocation50 + $0x4f0] sm:$0xff]
        %v5881 = vld [vmem:[#allocation50 + $0x4f8] sm:$0xff]
        %v5882 = vld [vmem:[#allocation50 + $0x500] sm:$0xff]
        %v5883 = vld [vmem:[#allocation50 + $0x508] sm:$0xff]
        %v5884 = vld [vmem:[#allocation50 + $0x510] sm:$0xff]
        %v5885 = vld [vmem:[#allocation50 + $0x518] sm:$0xff]
        %v5886 = vld [vmem:[#allocation50 + $0x520] sm:$0xff]
        %v5887 = vld [vmem:[#allocation50 + $0x528] sm:$0xff]
        %v5888 = vld [vmem:[#allocation50 + $0x530] sm:$0xff]
        %v5889 = vld [vmem:[#allocation50 + $0x538] sm:$0xff]
        %v5890 = vld [vmem:[#allocation50 + $0x540] sm:$0xff]
        %v5891 = vld [vmem:[#allocation50 + $0x548] sm:$0xff]
        %v5892 = vld [vmem:[#allocation50 + $0x550] sm:$0xff]
        %v5893 = vld [vmem:[#allocation50 + $0x558] sm:$0xff]
        %v5894 = vld [vmem:[#allocation50 + $0x560] sm:$0xff]
        %v5895 = vld [vmem:[#allocation50 + $0x568] sm:$0xff]
        %v5896 = vld [vmem:[#allocation50 + $0x570] sm:$0xff]
        %v5897 = vld [vmem:[#allocation50 + $0x578] sm:$0xff]
        %v5898 = vld [vmem:[#allocation50 + $0x580] sm:$0xff]
        %v5899 = vld [vmem:[#allocation50 + $0x588] sm:$0xff]
        %v5900 = vld [vmem:[#allocation50 + $0x590] sm:$0xff]
        %v5901 = vld [vmem:[#allocation50 + $0x598] sm:$0xff]
        %v5902 = vld [vmem:[#allocation50 + $0x5a0] sm:$0xff]
        %v5903 = vld [vmem:[#allocation50 + $0x5a8] sm:$0xff]
        %v5904 = vld [vmem:[#allocation50 + $0x5b0] sm:$0xff]
        %v5905 = vld [vmem:[#allocation50 + $0x5b8] sm:$0xff]
        %v5906 = vld [vmem:[#allocation50 + $0x5c0] sm:$0xff]
        %v5907 = vld [vmem:[#allocation50 + $0x5c8] sm:$0xff]
        %v5908 = vld [vmem:[#allocation50 + $0x5d0] sm:$0xff]
        %v5909 = vld [vmem:[#allocation50 + $0x5d8] sm:$0xff]
        %v5910 = vld [vmem:[#allocation50 + $0x5e0] sm:$0xff]
        %v5911 = vld [vmem:[#allocation50 + $0x5e8] sm:$0xff]
        %v5912 = vld [vmem:[#allocation50 + $0x5f0] sm:$0xff]
        %v5913 = vld [vmem:[#allocation50 + $0x5f8] sm:$0xff]
        %v5914 = vld [vmem:[#allocation50 + $0x600] sm:$0xff]
        %v5915 = vld [vmem:[#allocation50 + $0x608] sm:$0xff]
        %v5916 = vld [vmem:[#allocation50 + $0x610] sm:$0xff]
        %v5917 = vld [vmem:[#allocation50 + $0x618] sm:$0xff]
        %v5918 = vld [vmem:[#allocation50 + $0x620] sm:$0xff]
        %v5919 = vld [vmem:[#allocation50 + $0x628] sm:$0xff]
        %v5920 = vld [vmem:[#allocation50 + $0x630] sm:$0xff]
        %v5921 = vld [vmem:[#allocation50 + $0x638] sm:$0xff]
        %v5922 = vld [vmem:[#allocation50 + $0x640] sm:$0xff]
        %v5923 = vld [vmem:[#allocation50 + $0x648] sm:$0xff]
        %v5924 = vld [vmem:[#allocation50 + $0x650] sm:$0xff]
        %v5925 = vld [vmem:[#allocation50 + $0x658] sm:$0xff]
        %v5926 = vld [vmem:[#allocation50 + $0x660] sm:$0xff]
        %v5927 = vld [vmem:[#allocation50 + $0x668] sm:$0xff]
        %v5928 = vld [vmem:[#allocation50 + $0x670] sm:$0xff]
        %v5929 = vld [vmem:[#allocation50 + $0x678] sm:$0xff]
        %v5930 = vld [vmem:[#allocation50 + $0x680] sm:$0xff]
        %v5931 = vld [vmem:[#allocation50 + $0x688] sm:$0xff]
        %v5932 = vld [vmem:[#allocation50 + $0x690] sm:$0xff]
        %v5933 = vld [vmem:[#allocation50 + $0x698] sm:$0xff]
        %v5934 = vld [vmem:[#allocation50 + $0x6a0] sm:$0xff]
        %v5935 = vld [vmem:[#allocation50 + $0x6a8] sm:$0xff]
        %v5936 = vld [vmem:[#allocation50 + $0x6b0] sm:$0xff]
        %v5937 = vld [vmem:[#allocation50 + $0x6b8] sm:$0xff]
        %v5938 = vld [vmem:[#allocation50 + $0x6c0] sm:$0xff]
        %v5939 = vld [vmem:[#allocation50 + $0x6c8] sm:$0xff]
        %v5940 = vld [vmem:[#allocation50 + $0x6d0] sm:$0xff]
        %v5941 = vld [vmem:[#allocation50 + $0x6d8] sm:$0xff]
        %v5942 = vld [vmem:[#allocation50 + $0x6e0] sm:$0xff]
        %v5943 = vld [vmem:[#allocation50 + $0x6e8] sm:$0xff]
        %v5944 = vld [vmem:[#allocation50 + $0x6f0] sm:$0xff]
        %v5945 = vld [vmem:[#allocation50 + $0x6f8] sm:$0xff]
        %v6170 = vunpack.c.l.b16 %v5722
        %v6171 = vunpack.c.h.b16 %v5722
        %v6172 = vunpack.c.l.b16 %v5723
        %v6173 = vunpack.c.h.b16 %v5723
        %v6174 = vunpack.c.l.b16 %v5724
        %v6175 = vunpack.c.h.b16 %v5724
        %v6176 = vunpack.c.l.b16 %v5725
        %v6177 = vunpack.c.h.b16 %v5725
        %v6178 = vunpack.c.l.b16 %v5726
        %v6179 = vunpack.c.h.b16 %v5726
        %v6180 = vunpack.c.l.b16 %v5727
        %v6181 = vunpack.c.h.b16 %v5727
        %v6182 = vunpack.c.l.b16 %v5728
        %v6183 = vunpack.c.h.b16 %v5728
        %v6184 = vunpack.c.l.b16 %v5729
        %v6185 = vunpack.c.h.b16 %v5729
        %v6186 = vunpack.c.l.b16 %v5730
        %v6187 = vunpack.c.h.b16 %v5730
        %v6188 = vunpack.c.l.b16 %v5731
        %v6189 = vunpack.c.h.b16 %v5731
        %v6190 = vunpack.c.l.b16 %v5732
        %v6191 = vunpack.c.h.b16 %v5732
        %v6192 = vunpack.c.l.b16 %v5733
        %v6193 = vunpack.c.h.b16 %v5733
        %v6194 = vunpack.c.l.b16 %v5734
        %v6195 = vunpack.c.h.b16 %v5734
        %v6196 = vunpack.c.l.b16 %v5735
        %v6197 = vunpack.c.h.b16 %v5735
        %v6198 = vunpack.c.l.b16 %v5736
        %v6199 = vunpack.c.h.b16 %v5736
        %v6200 = vunpack.c.l.b16 %v5737
        %v6201 = vunpack.c.h.b16 %v5737
        %v6202 = vunpack.c.l.b16 %v5738
        %v6203 = vunpack.c.h.b16 %v5738
        %v6204 = vunpack.c.l.b16 %v5739
        %v6205 = vunpack.c.h.b16 %v5739
        %v6206 = vunpack.c.l.b16 %v5740
        %v6207 = vunpack.c.h.b16 %v5740
        %v6208 = vunpack.c.l.b16 %v5741
        %v6209 = vunpack.c.h.b16 %v5741
        %v6210 = vunpack.c.l.b16 %v5742
        %v6211 = vunpack.c.h.b16 %v5742
        %v6212 = vunpack.c.l.b16 %v5743
        %v6213 = vunpack.c.h.b16 %v5743
        %v6214 = vunpack.c.l.b16 %v5744
        %v6215 = vunpack.c.h.b16 %v5744
        %v6216 = vunpack.c.l.b16 %v5745
        %v6217 = vunpack.c.h.b16 %v5745
        %v6218 = vunpack.c.l.b16 %v5746
        %v6219 = vunpack.c.h.b16 %v5746
        %v6220 = vunpack.c.l.b16 %v5747
        %v6221 = vunpack.c.h.b16 %v5747
        %v6222 = vunpack.c.l.b16 %v5748
        %v6223 = vunpack.c.h.b16 %v5748
        %v6224 = vunpack.c.l.b16 %v5749
        %v6225 = vunpack.c.h.b16 %v5749
        %v6226 = vunpack.c.l.b16 %v5750
        %v6227 = vunpack.c.h.b16 %v5750
        %v6228 = vunpack.c.l.b16 %v5751
        %v6229 = vunpack.c.h.b16 %v5751
        %v6230 = vunpack.c.l.b16 %v5752
        %v6231 = vunpack.c.h.b16 %v5752
        %v6232 = vunpack.c.l.b16 %v5753
        %v6233 = vunpack.c.h.b16 %v5753
        %v6234 = vunpack.c.l.b16 %v5754
        %v6235 = vunpack.c.h.b16 %v5754
        %v6236 = vunpack.c.l.b16 %v5755
        %v6237 = vunpack.c.h.b16 %v5755
        %v6238 = vunpack.c.l.b16 %v5756
        %v6239 = vunpack.c.h.b16 %v5756
        %v6240 = vunpack.c.l.b16 %v5757
        %v6241 = vunpack.c.h.b16 %v5757
        %v6242 = vunpack.c.l.b16 %v5758
        %v6243 = vunpack.c.h.b16 %v5758
        %v6244 = vunpack.c.l.b16 %v5759
        %v6245 = vunpack.c.h.b16 %v5759
        %v6246 = vunpack.c.l.b16 %v5760
        %v6247 = vunpack.c.h.b16 %v5760
        %v6248 = vunpack.c.l.b16 %v5761
        %v6249 = vunpack.c.h.b16 %v5761
        %v6250 = vunpack.c.l.b16 %v5762
        %v6251 = vunpack.c.h.b16 %v5762
        %v6252 = vunpack.c.l.b16 %v5763
        %v6253 = vunpack.c.h.b16 %v5763
        %v6254 = vunpack.c.l.b16 %v5764
        %v6255 = vunpack.c.h.b16 %v5764
        %v6256 = vunpack.c.l.b16 %v5765
        %v6257 = vunpack.c.h.b16 %v5765
        %v6258 = vunpack.c.l.b16 %v5766
        %v6259 = vunpack.c.h.b16 %v5766
        %v6260 = vunpack.c.l.b16 %v5767
        %v6261 = vunpack.c.h.b16 %v5767
        %v6262 = vunpack.c.l.b16 %v5768
        %v6263 = vunpack.c.h.b16 %v5768
        %v6264 = vunpack.c.l.b16 %v5769
        %v6265 = vunpack.c.h.b16 %v5769
        %v6266 = vunpack.c.l.b16 %v5770
        %v6267 = vunpack.c.h.b16 %v5770
        %v6268 = vunpack.c.l.b16 %v5771
        %v6269 = vunpack.c.h.b16 %v5771
        %v6270 = vunpack.c.l.b16 %v5772
        %v6271 = vunpack.c.h.b16 %v5772
        %v6272 = vunpack.c.l.b16 %v5773
        %v6273 = vunpack.c.h.b16 %v5773
        %v6274 = vunpack.c.l.b16 %v5774
        %v6275 = vunpack.c.h.b16 %v5774
        %v6276 = vunpack.c.l.b16 %v5775
        %v6277 = vunpack.c.h.b16 %v5775
        %v6278 = vunpack.c.l.b16 %v5776
        %v6279 = vunpack.c.h.b16 %v5776
        %v6280 = vunpack.c.l.b16 %v5777
        %v6281 = vunpack.c.h.b16 %v5777
        %v6282 = vunpack.c.l.b16 %v5778
        %v6283 = vunpack.c.h.b16 %v5778
        %v6284 = vunpack.c.l.b16 %v5779
        %v6285 = vunpack.c.h.b16 %v5779
        %v6286 = vunpack.c.l.b16 %v5780
        %v6287 = vunpack.c.h.b16 %v5780
        %v6288 = vunpack.c.l.b16 %v5781
        %v6289 = vunpack.c.h.b16 %v5781
        %v6290 = vunpack.c.l.b16 %v5782
        %v6291 = vunpack.c.h.b16 %v5782
        %v6292 = vunpack.c.l.b16 %v5783
        %v6293 = vunpack.c.h.b16 %v5783
        %v6294 = vunpack.c.l.b16 %v5784
        %v6295 = vunpack.c.h.b16 %v5784
        %v6296 = vunpack.c.l.b16 %v5785
        %v6297 = vunpack.c.h.b16 %v5785
        %v6298 = vunpack.c.l.b16 %v5786
        %v6299 = vunpack.c.h.b16 %v5786
        %v6300 = vunpack.c.l.b16 %v5787
        %v6301 = vunpack.c.h.b16 %v5787
        %v6302 = vunpack.c.l.b16 %v5788
        %v6303 = vunpack.c.h.b16 %v5788
        %v6304 = vunpack.c.l.b16 %v5789
        %v6305 = vunpack.c.h.b16 %v5789
        %v6306 = vunpack.c.l.b16 %v5790
        %v6307 = vunpack.c.h.b16 %v5790
        %v6308 = vunpack.c.l.b16 %v5791
        %v6309 = vunpack.c.h.b16 %v5791
        %v6310 = vunpack.c.l.b16 %v5792
        %v6311 = vunpack.c.h.b16 %v5792
        %v6312 = vunpack.c.l.b16 %v5793
        %v6313 = vunpack.c.h.b16 %v5793
        %v6314 = vunpack.c.l.b16 %v5794
        %v6315 = vunpack.c.h.b16 %v5794
        %v6316 = vunpack.c.l.b16 %v5795
        %v6317 = vunpack.c.h.b16 %v5795
        %v6318 = vunpack.c.l.b16 %v5796
        %v6319 = vunpack.c.h.b16 %v5796
        %v6320 = vunpack.c.l.b16 %v5797
        %v6321 = vunpack.c.h.b16 %v5797
        %v6322 = vunpack.c.l.b16 %v5798
        %v6323 = vunpack.c.h.b16 %v5798
        %v6324 = vunpack.c.l.b16 %v5799
        %v6325 = vunpack.c.h.b16 %v5799
        %v6326 = vunpack.c.l.b16 %v5800
        %v6327 = vunpack.c.h.b16 %v5800
        %v6328 = vunpack.c.l.b16 %v5801
        %v6329 = vunpack.c.h.b16 %v5801
        %v6330 = vunpack.c.l.b16 %v5802
        %v6331 = vunpack.c.h.b16 %v5802
        %v6332 = vunpack.c.l.b16 %v5803
        %v6333 = vunpack.c.h.b16 %v5803
        %v6334 = vunpack.c.l.b16 %v5804
        %v6335 = vunpack.c.h.b16 %v5804
        %v6336 = vunpack.c.l.b16 %v5805
        %v6337 = vunpack.c.h.b16 %v5805
        %v6338 = vunpack.c.l.b16 %v5806
        %v6339 = vunpack.c.h.b16 %v5806
        %v6340 = vunpack.c.l.b16 %v5807
        %v6341 = vunpack.c.h.b16 %v5807
        %v6342 = vunpack.c.l.b16 %v5808
        %v6343 = vunpack.c.h.b16 %v5808
        %v6344 = vunpack.c.l.b16 %v5809
        %v6345 = vunpack.c.h.b16 %v5809
        %v6346 = vunpack.c.l.b16 %v5810
        %v6347 = vunpack.c.h.b16 %v5810
        %v6348 = vunpack.c.l.b16 %v5811
        %v6349 = vunpack.c.h.b16 %v5811
        %v6350 = vunpack.c.l.b16 %v5812
        %v6351 = vunpack.c.h.b16 %v5812
        %v6352 = vunpack.c.l.b16 %v5813
        %v6353 = vunpack.c.h.b16 %v5813
        %v6354 = vunpack.c.l.b16 %v5814
        %v6355 = vunpack.c.h.b16 %v5814
        %v6356 = vunpack.c.l.b16 %v5815
        %v6357 = vunpack.c.h.b16 %v5815
        %v6358 = vunpack.c.l.b16 %v5816
        %v6359 = vunpack.c.h.b16 %v5816
        %v6360 = vunpack.c.l.b16 %v5817
        %v6361 = vunpack.c.h.b16 %v5817
        %v6362 = vunpack.c.l.b16 %v5818
        %v6363 = vunpack.c.h.b16 %v5818
        %v6364 = vunpack.c.l.b16 %v5819
        %v6365 = vunpack.c.h.b16 %v5819
        %v6366 = vunpack.c.l.b16 %v5820
        %v6367 = vunpack.c.h.b16 %v5820
        %v6368 = vunpack.c.l.b16 %v5821
        %v6369 = vunpack.c.h.b16 %v5821
        %v6370 = vunpack.c.l.b16 %v5822
        %v6371 = vunpack.c.h.b16 %v5822
        %v6372 = vunpack.c.l.b16 %v5823
        %v6373 = vunpack.c.h.b16 %v5823
        %v6374 = vunpack.c.l.b16 %v5824
        %v6375 = vunpack.c.h.b16 %v5824
        %v6376 = vunpack.c.l.b16 %v5825
        %v6377 = vunpack.c.h.b16 %v5825
        %v6378 = vunpack.c.l.b16 %v5826
        %v6379 = vunpack.c.h.b16 %v5826
        %v6380 = vunpack.c.l.b16 %v5827
        %v6381 = vunpack.c.h.b16 %v5827
        %v6382 = vunpack.c.l.b16 %v5828
        %v6383 = vunpack.c.h.b16 %v5828
        %v6384 = vunpack.c.l.b16 %v5829
        %v6385 = vunpack.c.h.b16 %v5829
        %v6386 = vunpack.c.l.b16 %v5830
        %v6387 = vunpack.c.h.b16 %v5830
        %v6388 = vunpack.c.l.b16 %v5831
        %v6389 = vunpack.c.h.b16 %v5831
        %v6390 = vunpack.c.l.b16 %v5832
        %v6391 = vunpack.c.h.b16 %v5832
        %v6392 = vunpack.c.l.b16 %v5833
        %v6393 = vunpack.c.h.b16 %v5833
        %v6394 = vunpack.c.l.b16 %v5834
        %v6395 = vunpack.c.h.b16 %v5834
        %v6396 = vunpack.c.l.b16 %v5835
        %v6397 = vunpack.c.h.b16 %v5835
        %v6398 = vunpack.c.l.b16 %v5836
        %v6399 = vunpack.c.h.b16 %v5836
        %v6400 = vunpack.c.l.b16 %v5837
        %v6401 = vunpack.c.h.b16 %v5837
        %v6402 = vunpack.c.l.b16 %v5838
        %v6403 = vunpack.c.h.b16 %v5838
        %v6404 = vunpack.c.l.b16 %v5839
        %v6405 = vunpack.c.h.b16 %v5839
        %v6406 = vunpack.c.l.b16 %v5840
        %v6407 = vunpack.c.h.b16 %v5840
        %v6408 = vunpack.c.l.b16 %v5841
        %v6409 = vunpack.c.h.b16 %v5841
        %v6410 = vunpack.c.l.b16 %v5842
        %v6411 = vunpack.c.h.b16 %v5842
        %v6412 = vunpack.c.l.b16 %v5843
        %v6413 = vunpack.c.h.b16 %v5843
        %v6414 = vunpack.c.l.b16 %v5844
        %v6415 = vunpack.c.h.b16 %v5844
        %v6416 = vunpack.c.l.b16 %v5845
        %v6417 = vunpack.c.h.b16 %v5845
        %v6418 = vunpack.c.l.b16 %v5846
        %v6419 = vunpack.c.h.b16 %v5846
        %v6420 = vunpack.c.l.b16 %v5847
        %v6421 = vunpack.c.h.b16 %v5847
        %v6422 = vunpack.c.l.b16 %v5848
        %v6423 = vunpack.c.h.b16 %v5848
        %v6424 = vunpack.c.l.b16 %v5849
        %v6425 = vunpack.c.h.b16 %v5849
        %v6426 = vunpack.c.l.b16 %v5850
        %v6427 = vunpack.c.h.b16 %v5850
        %v6428 = vunpack.c.l.b16 %v5851
        %v6429 = vunpack.c.h.b16 %v5851
        %v6430 = vunpack.c.l.b16 %v5852
        %v6431 = vunpack.c.h.b16 %v5852
        %v6432 = vunpack.c.l.b16 %v5853
        %v6433 = vunpack.c.h.b16 %v5853
        %v6434 = vunpack.c.l.b16 %v5854
        %v6435 = vunpack.c.h.b16 %v5854
        %v6436 = vunpack.c.l.b16 %v5855
        %v6437 = vunpack.c.h.b16 %v5855
        %v6438 = vunpack.c.l.b16 %v5856
        %v6439 = vunpack.c.h.b16 %v5856
        %v6440 = vunpack.c.l.b16 %v5857
        %v6441 = vunpack.c.h.b16 %v5857
        %v6442 = vunpack.c.l.b16 %v5858
        %v6443 = vunpack.c.h.b16 %v5858
        %v6444 = vunpack.c.l.b16 %v5859
        %v6445 = vunpack.c.h.b16 %v5859
        %v6446 = vunpack.c.l.b16 %v5860
        %v6447 = vunpack.c.h.b16 %v5860
        %v6448 = vunpack.c.l.b16 %v5861
        %v6449 = vunpack.c.h.b16 %v5861
        %v6450 = vunpack.c.l.b16 %v5862
        %v6451 = vunpack.c.h.b16 %v5862
        %v6452 = vunpack.c.l.b16 %v5863
        %v6453 = vunpack.c.h.b16 %v5863
        %v6454 = vunpack.c.l.b16 %v5864
        %v6455 = vunpack.c.h.b16 %v5864
        %v6456 = vunpack.c.l.b16 %v5865
        %v6457 = vunpack.c.h.b16 %v5865
        %v6458 = vunpack.c.l.b16 %v5866
        %v6459 = vunpack.c.h.b16 %v5866
        %v6460 = vunpack.c.l.b16 %v5867
        %v6461 = vunpack.c.h.b16 %v5867
        %v6462 = vunpack.c.l.b16 %v5868
        %v6463 = vunpack.c.h.b16 %v5868
        %v6464 = vunpack.c.l.b16 %v5869
        %v6465 = vunpack.c.h.b16 %v5869
        %v6466 = vunpack.c.l.b16 %v5870
        %v6467 = vunpack.c.h.b16 %v5870
        %v6468 = vunpack.c.l.b16 %v5871
        %v6469 = vunpack.c.h.b16 %v5871
        %v6470 = vunpack.c.l.b16 %v5872
        %v6471 = vunpack.c.h.b16 %v5872
        %v6472 = vunpack.c.l.b16 %v5873
        %v6473 = vunpack.c.h.b16 %v5873
        %v6474 = vunpack.c.l.b16 %v5874
        %v6475 = vunpack.c.h.b16 %v5874
        %v6476 = vunpack.c.l.b16 %v5875
        %v6477 = vunpack.c.h.b16 %v5875
        %v6478 = vunpack.c.l.b16 %v5876
        %v6479 = vunpack.c.h.b16 %v5876
        %v6480 = vunpack.c.l.b16 %v5877
        %v6481 = vunpack.c.h.b16 %v5877
        %v6482 = vunpack.c.l.b16 %v5878
        %v6483 = vunpack.c.h.b16 %v5878
        %v6484 = vunpack.c.l.b16 %v5879
        %v6485 = vunpack.c.h.b16 %v5879
        %v6486 = vunpack.c.l.b16 %v5880
        %v6487 = vunpack.c.h.b16 %v5880
        %v6488 = vunpack.c.l.b16 %v5881
        %v6489 = vunpack.c.h.b16 %v5881
        %v6490 = vunpack.c.l.b16 %v5882
        %v6491 = vunpack.c.h.b16 %v5882
        %v6492 = vunpack.c.l.b16 %v5883
        %v6493 = vunpack.c.h.b16 %v5883
        %v6494 = vunpack.c.l.b16 %v5884
        %v6495 = vunpack.c.h.b16 %v5884
        %v6496 = vunpack.c.l.b16 %v5885
        %v6497 = vunpack.c.h.b16 %v5885
        %v6498 = vunpack.c.l.b16 %v5886
        %v6499 = vunpack.c.h.b16 %v5886
        %v6500 = vunpack.c.l.b16 %v5887
        %v6501 = vunpack.c.h.b16 %v5887
        %v6502 = vunpack.c.l.b16 %v5888
        %v6503 = vunpack.c.h.b16 %v5888
        %v6504 = vunpack.c.l.b16 %v5889
        %v6505 = vunpack.c.h.b16 %v5889
        %v6506 = vunpack.c.l.b16 %v5890
        %v6507 = vunpack.c.h.b16 %v5890
        %v6508 = vunpack.c.l.b16 %v5891
        %v6509 = vunpack.c.h.b16 %v5891
        %v6510 = vunpack.c.l.b16 %v5892
        %v6511 = vunpack.c.h.b16 %v5892
        %v6512 = vunpack.c.l.b16 %v5893
        %v6513 = vunpack.c.h.b16 %v5893
        %v6514 = vunpack.c.l.b16 %v5894
        %v6515 = vunpack.c.h.b16 %v5894
        %v6516 = vunpack.c.l.b16 %v5895
        %v6517 = vunpack.c.h.b16 %v5895
        %v6518 = vunpack.c.l.b16 %v5896
        %v6519 = vunpack.c.h.b16 %v5896
        %v6520 = vunpack.c.l.b16 %v5897
        %v6521 = vunpack.c.h.b16 %v5897
        %v6522 = vunpack.c.l.b16 %v5898
        %v6523 = vunpack.c.h.b16 %v5898
        %v6524 = vunpack.c.l.b16 %v5899
        %v6525 = vunpack.c.h.b16 %v5899
        %v6526 = vunpack.c.l.b16 %v5900
        %v6527 = vunpack.c.h.b16 %v5900
        %v6528 = vunpack.c.l.b16 %v5901
        %v6529 = vunpack.c.h.b16 %v5901
        %v6530 = vunpack.c.l.b16 %v5902
        %v6531 = vunpack.c.h.b16 %v5902
        %v6532 = vunpack.c.l.b16 %v5903
        %v6533 = vunpack.c.h.b16 %v5903
        %v6534 = vunpack.c.l.b16 %v5904
        %v6535 = vunpack.c.h.b16 %v5904
        %v6536 = vunpack.c.l.b16 %v5905
        %v6537 = vunpack.c.h.b16 %v5905
        %v6538 = vunpack.c.l.b16 %v5906
        %v6539 = vunpack.c.h.b16 %v5906
        %v6540 = vunpack.c.l.b16 %v5907
        %v6541 = vunpack.c.h.b16 %v5907
        %v6542 = vunpack.c.l.b16 %v5908
        %v6543 = vunpack.c.h.b16 %v5908
        %v6544 = vunpack.c.l.b16 %v5909
        %v6545 = vunpack.c.h.b16 %v5909
        %v6546 = vunpack.c.l.b16 %v5910
        %v6547 = vunpack.c.h.b16 %v5910
        %v6548 = vunpack.c.l.b16 %v5911
        %v6549 = vunpack.c.h.b16 %v5911
        %v6550 = vunpack.c.l.b16 %v5912
        %v6551 = vunpack.c.h.b16 %v5912
        %v6552 = vunpack.c.l.b16 %v5913
        %v6553 = vunpack.c.h.b16 %v5913
        %v6554 = vunpack.c.l.b16 %v5914
        %v6555 = vunpack.c.h.b16 %v5914
        %v6556 = vunpack.c.l.b16 %v5915
        %v6557 = vunpack.c.h.b16 %v5915
        %v6558 = vunpack.c.l.b16 %v5916
        %v6559 = vunpack.c.h.b16 %v5916
        %v6560 = vunpack.c.l.b16 %v5917
        %v6561 = vunpack.c.h.b16 %v5917
        %v6562 = vunpack.c.l.b16 %v5918
        %v6563 = vunpack.c.h.b16 %v5918
        %v6564 = vunpack.c.l.b16 %v5919
        %v6565 = vunpack.c.h.b16 %v5919
        %v6566 = vunpack.c.l.b16 %v5920
        %v6567 = vunpack.c.h.b16 %v5920
        %v6568 = vunpack.c.l.b16 %v5921
        %v6569 = vunpack.c.h.b16 %v5921
        %v6570 = vunpack.c.l.b16 %v5922
        %v6571 = vunpack.c.h.b16 %v5922
        %v6572 = vunpack.c.l.b16 %v5923
        %v6573 = vunpack.c.h.b16 %v5923
        %v6574 = vunpack.c.l.b16 %v5924
        %v6575 = vunpack.c.h.b16 %v5924
        %v6576 = vunpack.c.l.b16 %v5925
        %v6577 = vunpack.c.h.b16 %v5925
        %v6578 = vunpack.c.l.b16 %v5926
        %v6579 = vunpack.c.h.b16 %v5926
        %v6580 = vunpack.c.l.b16 %v5927
        %v6581 = vunpack.c.h.b16 %v5927
        %v6582 = vunpack.c.l.b16 %v5928
        %v6583 = vunpack.c.h.b16 %v5928
        %v6584 = vunpack.c.l.b16 %v5929
        %v6585 = vunpack.c.h.b16 %v5929
        %v6586 = vunpack.c.l.b16 %v5930
        %v6587 = vunpack.c.h.b16 %v5930
        %v6588 = vunpack.c.l.b16 %v5931
        %v6589 = vunpack.c.h.b16 %v5931
        %v6590 = vunpack.c.l.b16 %v5932
        %v6591 = vunpack.c.h.b16 %v5932
        %v6592 = vunpack.c.l.b16 %v5933
        %v6593 = vunpack.c.h.b16 %v5933
        %v6594 = vunpack.c.l.b16 %v5934
        %v6595 = vunpack.c.h.b16 %v5934
        %v6596 = vunpack.c.l.b16 %v5935
        %v6597 = vunpack.c.h.b16 %v5935
        %v6598 = vunpack.c.l.b16 %v5936
        %v6599 = vunpack.c.h.b16 %v5936
        %v6600 = vunpack.c.l.b16 %v5937
        %v6601 = vunpack.c.h.b16 %v5937
        %v6602 = vunpack.c.l.b16 %v5938
        %v6603 = vunpack.c.h.b16 %v5938
        %v6604 = vunpack.c.l.b16 %v5939
        %v6605 = vunpack.c.h.b16 %v5939
        %v6606 = vunpack.c.l.b16 %v5940
        %v6607 = vunpack.c.h.b16 %v5940
        %v6608 = vunpack.c.l.b16 %v5941
        %v6609 = vunpack.c.h.b16 %v5941
        %v6610 = vunpack.c.l.b16 %v5942
        %v6611 = vunpack.c.h.b16 %v5942
        %v6612 = vunpack.c.l.b16 %v5943
        %v6613 = vunpack.c.h.b16 %v5943
        %v6614 = vunpack.c.l.b16 %v5944
        %v6615 = vunpack.c.h.b16 %v5944
        %v6616 = vunpack.c.l.b16 %v5945
        %v6617 = vunpack.c.h.b16 %v5945
        %v6618 = vpack.c.b16 %v6172, %v6170
        %v6619 = vpack.c.b16 %v6173, %v6171
        %v6620 = vpack.c.b16 %v6176, %v6174
        %v6621 = vpack.c.b16 %v6177, %v6175
        %v6622 = vpack.c.b16 %v6180, %v6178
        %v6623 = vpack.c.b16 %v6181, %v6179
        %v6624 = vpack.c.b16 %v6184, %v6182
        %v6625 = vpack.c.b16 %v6185, %v6183
        %v6626 = vpack.c.b16 %v6188, %v6186
        %v6627 = vpack.c.b16 %v6189, %v6187
        %v6628 = vpack.c.b16 %v6192, %v6190
        %v6629 = vpack.c.b16 %v6193, %v6191
        %v6630 = vpack.c.b16 %v6196, %v6194
        %v6631 = vpack.c.b16 %v6197, %v6195
        %v6632 = vpack.c.b16 %v6200, %v6198
        %v6633 = vpack.c.b16 %v6201, %v6199
        %v6634 = vpack.c.b16 %v6204, %v6202
        %v6635 = vpack.c.b16 %v6205, %v6203
        %v6636 = vpack.c.b16 %v6208, %v6206
        %v6637 = vpack.c.b16 %v6209, %v6207
        %v6638 = vpack.c.b16 %v6212, %v6210
        %v6639 = vpack.c.b16 %v6213, %v6211
        %v6640 = vpack.c.b16 %v6216, %v6214
        %v6641 = vpack.c.b16 %v6217, %v6215
        %v6642 = vpack.c.b16 %v6220, %v6218
        %v6643 = vpack.c.b16 %v6221, %v6219
        %v6644 = vpack.c.b16 %v6224, %v6222
        %v6645 = vpack.c.b16 %v6225, %v6223
        %v6646 = vpack.c.b16 %v6228, %v6226
        %v6647 = vpack.c.b16 %v6229, %v6227
        %v6648 = vpack.c.b16 %v6232, %v6230
        %v6649 = vpack.c.b16 %v6233, %v6231
        %v6650 = vpack.c.b16 %v6236, %v6234
        %v6651 = vpack.c.b16 %v6237, %v6235
        %v6652 = vpack.c.b16 %v6240, %v6238
        %v6653 = vpack.c.b16 %v6241, %v6239
        %v6654 = vpack.c.b16 %v6244, %v6242
        %v6655 = vpack.c.b16 %v6245, %v6243
        %v6656 = vpack.c.b16 %v6248, %v6246
        %v6657 = vpack.c.b16 %v6249, %v6247
        %v6658 = vpack.c.b16 %v6252, %v6250
        %v6659 = vpack.c.b16 %v6253, %v6251
        %v6660 = vpack.c.b16 %v6256, %v6254
        %v6661 = vpack.c.b16 %v6257, %v6255
        %v6662 = vpack.c.b16 %v6260, %v6258
        %v6663 = vpack.c.b16 %v6261, %v6259
        %v6664 = vpack.c.b16 %v6264, %v6262
        %v6665 = vpack.c.b16 %v6265, %v6263
        %v6666 = vpack.c.b16 %v6268, %v6266
        %v6667 = vpack.c.b16 %v6269, %v6267
        %v6668 = vpack.c.b16 %v6272, %v6270
        %v6669 = vpack.c.b16 %v6273, %v6271
        %v6670 = vpack.c.b16 %v6276, %v6274
        %v6671 = vpack.c.b16 %v6277, %v6275
        %v6672 = vpack.c.b16 %v6280, %v6278
        %v6673 = vpack.c.b16 %v6281, %v6279
        %v6674 = vpack.c.b16 %v6284, %v6282
        %v6675 = vpack.c.b16 %v6285, %v6283
        %v6676 = vpack.c.b16 %v6288, %v6286
        %v6677 = vpack.c.b16 %v6289, %v6287
        %v6678 = vpack.c.b16 %v6292, %v6290
        %v6679 = vpack.c.b16 %v6293, %v6291
        %v6680 = vpack.c.b16 %v6296, %v6294
        %v6681 = vpack.c.b16 %v6297, %v6295
        %v6682 = vpack.c.b16 %v6300, %v6298
        %v6683 = vpack.c.b16 %v6301, %v6299
        %v6684 = vpack.c.b16 %v6304, %v6302
        %v6685 = vpack.c.b16 %v6305, %v6303
        %v6686 = vpack.c.b16 %v6308, %v6306
        %v6687 = vpack.c.b16 %v6309, %v6307
        %v6688 = vpack.c.b16 %v6312, %v6310
        %v6689 = vpack.c.b16 %v6313, %v6311
        %v6690 = vpack.c.b16 %v6316, %v6314
        %v6691 = vpack.c.b16 %v6317, %v6315
        %v6692 = vpack.c.b16 %v6320, %v6318
        %v6693 = vpack.c.b16 %v6321, %v6319
        %v6694 = vpack.c.b16 %v6324, %v6322
        %v6695 = vpack.c.b16 %v6325, %v6323
        %v6696 = vpack.c.b16 %v6328, %v6326
        %v6697 = vpack.c.b16 %v6329, %v6327
        %v6698 = vpack.c.b16 %v6332, %v6330
        %v6699 = vpack.c.b16 %v6333, %v6331
        %v6700 = vpack.c.b16 %v6336, %v6334
        %v6701 = vpack.c.b16 %v6337, %v6335
        %v6702 = vpack.c.b16 %v6340, %v6338
        %v6703 = vpack.c.b16 %v6341, %v6339
        %v6704 = vpack.c.b16 %v6344, %v6342
        %v6705 = vpack.c.b16 %v6345, %v6343
        %v6706 = vpack.c.b16 %v6348, %v6346
        %v6707 = vpack.c.b16 %v6349, %v6347
        %v6708 = vpack.c.b16 %v6352, %v6350
        %v6709 = vpack.c.b16 %v6353, %v6351
        %v6710 = vpack.c.b16 %v6356, %v6354
        %v6711 = vpack.c.b16 %v6357, %v6355
        %v6712 = vpack.c.b16 %v6360, %v6358
        %v6713 = vpack.c.b16 %v6361, %v6359
        %v6714 = vpack.c.b16 %v6364, %v6362
        %v6715 = vpack.c.b16 %v6365, %v6363
        %v6716 = vpack.c.b16 %v6368, %v6366
        %v6717 = vpack.c.b16 %v6369, %v6367
        %v6718 = vpack.c.b16 %v6372, %v6370
        %v6719 = vpack.c.b16 %v6373, %v6371
        %v6720 = vpack.c.b16 %v6376, %v6374
        %v6721 = vpack.c.b16 %v6377, %v6375
        %v6722 = vpack.c.b16 %v6380, %v6378
        %v6723 = vpack.c.b16 %v6381, %v6379
        %v6724 = vpack.c.b16 %v6384, %v6382
        %v6725 = vpack.c.b16 %v6385, %v6383
        %v6726 = vpack.c.b16 %v6388, %v6386
        %v6727 = vpack.c.b16 %v6389, %v6387
        %v6728 = vpack.c.b16 %v6392, %v6390
        %v6729 = vpack.c.b16 %v6393, %v6391
        %v6730 = vpack.c.b16 %v6396, %v6394
        %v6731 = vpack.c.b16 %v6397, %v6395
        %v6732 = vpack.c.b16 %v6400, %v6398
        %v6733 = vpack.c.b16 %v6401, %v6399
        %v6734 = vpack.c.b16 %v6404, %v6402
        %v6735 = vpack.c.b16 %v6405, %v6403
        %v6736 = vpack.c.b16 %v6408, %v6406
        %v6737 = vpack.c.b16 %v6409, %v6407
        %v6738 = vpack.c.b16 %v6412, %v6410
        %v6739 = vpack.c.b16 %v6413, %v6411
        %v6740 = vpack.c.b16 %v6416, %v6414
        %v6741 = vpack.c.b16 %v6417, %v6415
        %v6742 = vpack.c.b16 %v6420, %v6418
        %v6743 = vpack.c.b16 %v6421, %v6419
        %v6744 = vpack.c.b16 %v6424, %v6422
        %v6745 = vpack.c.b16 %v6425, %v6423
        %v6746 = vpack.c.b16 %v6428, %v6426
        %v6747 = vpack.c.b16 %v6429, %v6427
        %v6748 = vpack.c.b16 %v6432, %v6430
        %v6749 = vpack.c.b16 %v6433, %v6431
        %v6750 = vpack.c.b16 %v6436, %v6434
        %v6751 = vpack.c.b16 %v6437, %v6435
        %v6752 = vpack.c.b16 %v6440, %v6438
        %v6753 = vpack.c.b16 %v6441, %v6439
        %v6754 = vpack.c.b16 %v6444, %v6442
        %v6755 = vpack.c.b16 %v6445, %v6443
        %v6756 = vpack.c.b16 %v6448, %v6446
        %v6757 = vpack.c.b16 %v6449, %v6447
        %v6758 = vpack.c.b16 %v6452, %v6450
        %v6759 = vpack.c.b16 %v6453, %v6451
        %v6760 = vpack.c.b16 %v6456, %v6454
        %v6761 = vpack.c.b16 %v6457, %v6455
        %v6762 = vpack.c.b16 %v6460, %v6458
        %v6763 = vpack.c.b16 %v6461, %v6459
        %v6764 = vpack.c.b16 %v6464, %v6462
        %v6765 = vpack.c.b16 %v6465, %v6463
        %v6766 = vpack.c.b16 %v6468, %v6466
        %v6767 = vpack.c.b16 %v6469, %v6467
        %v6768 = vpack.c.b16 %v6472, %v6470
        %v6769 = vpack.c.b16 %v6473, %v6471
        %v6770 = vpack.c.b16 %v6476, %v6474
        %v6771 = vpack.c.b16 %v6477, %v6475
        %v6772 = vpack.c.b16 %v6480, %v6478
        %v6773 = vpack.c.b16 %v6481, %v6479
        %v6774 = vpack.c.b16 %v6484, %v6482
        %v6775 = vpack.c.b16 %v6485, %v6483
        %v6776 = vpack.c.b16 %v6488, %v6486
        %v6777 = vpack.c.b16 %v6489, %v6487
        %v6778 = vpack.c.b16 %v6492, %v6490
        %v6779 = vpack.c.b16 %v6493, %v6491
        %v6780 = vpack.c.b16 %v6496, %v6494
        %v6781 = vpack.c.b16 %v6497, %v6495
        %v6782 = vpack.c.b16 %v6500, %v6498
        %v6783 = vpack.c.b16 %v6501, %v6499
        %v6784 = vpack.c.b16 %v6504, %v6502
        %v6785 = vpack.c.b16 %v6505, %v6503
        %v6786 = vpack.c.b16 %v6508, %v6506
        %v6787 = vpack.c.b16 %v6509, %v6507
        %v6788 = vpack.c.b16 %v6512, %v6510
        %v6789 = vpack.c.b16 %v6513, %v6511
        %v6790 = vpack.c.b16 %v6516, %v6514
        %v6791 = vpack.c.b16 %v6517, %v6515
        %v6792 = vpack.c.b16 %v6520, %v6518
        %v6793 = vpack.c.b16 %v6521, %v6519
        %v6794 = vpack.c.b16 %v6524, %v6522
        %v6795 = vpack.c.b16 %v6525, %v6523
        %v6796 = vpack.c.b16 %v6528, %v6526
        %v6797 = vpack.c.b16 %v6529, %v6527
        %v6798 = vpack.c.b16 %v6532, %v6530
        %v6799 = vpack.c.b16 %v6533, %v6531
        %v6800 = vpack.c.b16 %v6536, %v6534
        %v6801 = vpack.c.b16 %v6537, %v6535
        %v6802 = vpack.c.b16 %v6540, %v6538
        %v6803 = vpack.c.b16 %v6541, %v6539
        %v6804 = vpack.c.b16 %v6544, %v6542
        %v6805 = vpack.c.b16 %v6545, %v6543
        %v6806 = vpack.c.b16 %v6548, %v6546
        %v6807 = vpack.c.b16 %v6549, %v6547
        %v6808 = vpack.c.b16 %v6552, %v6550
        %v6809 = vpack.c.b16 %v6553, %v6551
        %v6810 = vpack.c.b16 %v6556, %v6554
        %v6811 = vpack.c.b16 %v6557, %v6555
        %v6812 = vpack.c.b16 %v6560, %v6558
        %v6813 = vpack.c.b16 %v6561, %v6559
        %v6814 = vpack.c.b16 %v6564, %v6562
        %v6815 = vpack.c.b16 %v6565, %v6563
        %v6816 = vpack.c.b16 %v6568, %v6566
        %v6817 = vpack.c.b16 %v6569, %v6567
        %v6818 = vpack.c.b16 %v6572, %v6570
        %v6819 = vpack.c.b16 %v6573, %v6571
        %v6820 = vpack.c.b16 %v6576, %v6574
        %v6821 = vpack.c.b16 %v6577, %v6575
        %v6822 = vpack.c.b16 %v6580, %v6578
        %v6823 = vpack.c.b16 %v6581, %v6579
        %v6824 = vpack.c.b16 %v6584, %v6582
        %v6825 = vpack.c.b16 %v6585, %v6583
        %v6826 = vpack.c.b16 %v6588, %v6586
        %v6827 = vpack.c.b16 %v6589, %v6587
        %v6828 = vpack.c.b16 %v6592, %v6590
        %v6829 = vpack.c.b16 %v6593, %v6591
        %v6830 = vpack.c.b16 %v6596, %v6594
        %v6831 = vpack.c.b16 %v6597, %v6595
        %v6832 = vpack.c.b16 %v6600, %v6598
        %v6833 = vpack.c.b16 %v6601, %v6599
        %v6834 = vpack.c.b16 %v6604, %v6602
        %v6835 = vpack.c.b16 %v6605, %v6603
        %v6836 = vpack.c.b16 %v6608, %v6606
        %v6837 = vpack.c.b16 %v6609, %v6607
        %v6838 = vpack.c.b16 %v6612, %v6610
        %v6839 = vpack.c.b16 %v6613, %v6611
        %v6840 = vpack.c.b16 %v6616, %v6614
        %v6841 = vpack.c.b16 %v6617, %v6615
        %7066 = vmatprep.subr.bf16.mxu0 %v6619
        %7067 = vmatpush1.bf16.msra.mxu0 %v6618
        %7068 = vmatprep.subr.bf16.mxu0 %v6621
        %7069 = vmatpush1.bf16.msra.mxu0 %v6620
        %7070 = vmatprep.subr.bf16.mxu0 %v6623
        %7071 = vmatpush1.bf16.msra.mxu0 %v6622
        %7072 = vmatprep.subr.bf16.mxu0 %v6625
        %7073 = vmatpush1.bf16.msra.mxu0 %v6624
        %7074 = vmatprep.subr.bf16.mxu0 %v6627
        %7075 = vmatpush1.bf16.msra.mxu0 %v6626
        %7076 = vmatprep.subr.bf16.mxu0 %v6629
        %7077 = vmatpush1.bf16.msra.mxu0 %v6628
        %7078 = vmatprep.subr.bf16.mxu0 %v6631
        %7079 = vmatpush1.bf16.msra.mxu0 %v6630
        %7080 = vmatprep.subr.bf16.mxu0 %v6633
        %7081 = vmatpush1.bf16.msra.mxu0 %v6632
        %7082 = vmatprep.subr.bf16.mxu0 %v6635
        %7083 = vmatpush1.bf16.msra.mxu0 %v6634
        %7084 = vmatprep.subr.bf16.mxu0 %v6637
        %7085 = vmatpush1.bf16.msra.mxu0 %v6636
        %7086 = vmatprep.subr.bf16.mxu0 %v6639
        %7087 = vmatpush1.bf16.msra.mxu0 %v6638
        %7088 = vmatprep.subr.bf16.mxu0 %v6641
        %7089 = vmatpush1.bf16.msra.mxu0 %v6640
        %7090 = vmatprep.subr.bf16.mxu0 %v6643
        %7091 = vmatpush1.bf16.msra.mxu0 %v6642
        %7092 = vmatprep.subr.bf16.mxu0 %v6645
        %7093 = vmatpush1.bf16.msra.mxu0 %v6644
        %7094 = vmatprep.subr.bf16.mxu0 %v6647
        %7095 = vmatpush1.bf16.msra.mxu0 %v6646
        %7096 = vmatprep.subr.bf16.mxu0 %v6649
        %7097 = vmatpush1.bf16.msra.mxu0 %v6648
        %7098 = vmatprep.mubr.bf16.mxu0 %v5709
        %7099 = vmatmul.mubr.bf16.gmra.mrb[0].mxu0 %v5708
        %v7100 = vpop.f32.mrb[0].mxu0
        %v7101 = vadd.f32 0.0, %v7100
        %v7102 = vpop.f32.mrb[0].mxu0
        %v7103 = vadd.f32 0.0, %v7102
        %v7104 = vpop.f32.mrb[0].mxu0
        %v7105 = vpop.f32.mrb[0].mxu0
        %7106 = vdwg.mxu0
        %7107 = vmatprep.subr.bf16.mxu0 %v6651
        %7108 = vmatpush1.bf16.msra.mxu0 %v6650
        %7109 = vmatprep.subr.bf16.mxu0 %v6653
        %7110 = vmatpush1.bf16.msra.mxu0 %v6652
        %7111 = vmatprep.subr.bf16.mxu0 %v6655
        %7112 = vmatpush1.bf16.msra.mxu0 %v6654
        %7113 = vmatprep.subr.bf16.mxu0 %v6657
        %7114 = vmatpush1.bf16.msra.mxu0 %v6656
        %7115 = vmatprep.subr.bf16.mxu0 %v6659
        %7116 = vmatpush1.bf16.msra.mxu0 %v6658
        %7117 = vmatprep.subr.bf16.mxu0 %v6661
        %7118 = vmatpush1.bf16.msra.mxu0 %v6660
        %7119 = vmatprep.subr.bf16.mxu0 %v6663
        %7120 = vmatpush1.bf16.msra.mxu0 %v6662
        %7121 = vmatprep.subr.bf16.mxu0 %v6665
        %7122 = vmatpush1.bf16.msra.mxu0 %v6664
        %7123 = vmatprep.subr.bf16.mxu0 %v6667
        %7124 = vmatpush1.bf16.msra.mxu0 %v6666
        %7125 = vmatprep.subr.bf16.mxu0 %v6669
        %7126 = vmatpush1.bf16.msra.mxu0 %v6668
        %7127 = vmatprep.subr.bf16.mxu0 %v6671
        %7128 = vmatpush1.bf16.msra.mxu0 %v6670
        %7129 = vmatprep.subr.bf16.mxu0 %v6673
        %7130 = vmatpush1.bf16.msra.mxu0 %v6672
        %7131 = vmatprep.subr.bf16.mxu0 %v6675
        %7132 = vmatpush1.bf16.msra.mxu0 %v6674
        %7133 = vmatprep.subr.bf16.mxu0 %v6677
        %7134 = vmatpush1.bf16.msra.mxu0 %v6676
        %7135 = vmatprep.subr.bf16.mxu0 %v6679
        %7136 = vmatpush1.bf16.msra.mxu0 %v6678
        %7137 = vmatprep.subr.bf16.mxu0 %v6681
        %7138 = vmatpush1.bf16.msra.mxu0 %v6680
        %7139 = vmatprep.mubr.bf16.mxu0 %v5711
        %7140 = vmatmul.mubr.bf16.gmra.mrb[0].mxu0 %v5710
        %v7141 = vpop.f32.mrb[0].mxu0
        %v7142 = vadd.f32 %v7101, %v7141
        %v7143 = vpop.f32.mrb[0].mxu0
        %v7144 = vadd.f32 %v7103, %v7143
        %v7145 = vpop.f32.mrb[0].mxu0
        %v7146 = vpop.f32.mrb[0].mxu0
        %7147 = vdwg.mxu0
        %7148 = vmatprep.subr.bf16.mxu0 %v6683
        %7149 = vmatpush1.bf16.msra.mxu0 %v6682
        %7150 = vmatprep.subr.bf16.mxu0 %v6685
        %7151 = vmatpush1.bf16.msra.mxu0 %v6684
        %7152 = vmatprep.subr.bf16.mxu0 %v6687
        %7153 = vmatpush1.bf16.msra.mxu0 %v6686
        %7154 = vmatprep.subr.bf16.mxu0 %v6689
        %7155 = vmatpush1.bf16.msra.mxu0 %v6688
        %7156 = vmatprep.subr.bf16.mxu0 %v6691
        %7157 = vmatpush1.bf16.msra.mxu0 %v6690
        %7158 = vmatprep.subr.bf16.mxu0 %v6693
        %7159 = vmatpush1.bf16.msra.mxu0 %v6692
        %7160 = vmatprep.subr.bf16.mxu0 %v6695
        %7161 = vmatpush1.bf16.msra.mxu0 %v6694
        %7162 = vmatprep.subr.bf16.mxu0 %v6697
        %7163 = vmatpush1.bf16.msra.mxu0 %v6696
        %7164 = vmatprep.subr.bf16.mxu0 %v6699
        %7165 = vmatpush1.bf16.msra.mxu0 %v6698
        %7166 = vmatprep.subr.bf16.mxu0 %v6701
        %7167 = vmatpush1.bf16.msra.mxu0 %v6700
        %7168 = vmatprep.subr.bf16.mxu0 %v6703
        %7169 = vmatpush1.bf16.msra.mxu0 %v6702
        %7170 = vmatprep.subr.bf16.mxu0 %v6705
        %7171 = vmatpush1.bf16.msra.mxu0 %v6704
        %7172 = vmatprep.subr.bf16.mxu0 %v6707
        %7173 = vmatpush1.bf16.msra.mxu0 %v6706
        %7174 = vmatprep.subr.bf16.mxu0 %v6709
        %7175 = vmatpush1.bf16.msra.mxu0 %v6708
        %7176 = vmatprep.subr.bf16.mxu0 %v6711
        %7177 = vmatpush1.bf16.msra.mxu0 %v6710
        %7178 = vmatprep.subr.bf16.mxu0 %v6713
        %7179 = vmatpush1.bf16.msra.mxu0 %v6712
        %7180 = vmatprep.mubr.bf16.mxu0 %v5713
        %7181 = vmatmul.mubr.bf16.gmra.mrb[0].mxu0 %v5712
        %v7182 = vpop.f32.mrb[0].mxu0
        %v7183 = vadd.f32 %v7142, %v7182
        %v7184 = vpop.f32.mrb[0].mxu0
        %v7185 = vadd.f32 %v7144, %v7184
        %v7186 = vpop.f32.mrb[0].mxu0
        %v7187 = vpop.f32.mrb[0].mxu0
        %7188 = vdwg.mxu0
        %7189 = vmatprep.subr.bf16.mxu0 %v6715
        %7190 = vmatpush1.bf16.msra.mxu0 %v6714
        %7191 = vmatprep.subr.bf16.mxu0 %v6717
        %7192 = vmatpush1.bf16.msra.mxu0 %v6716
        %7193 = vmatprep.subr.bf16.mxu0 %v6719
        %7194 = vmatpush1.bf16.msra.mxu0 %v6718
        %7195 = vmatprep.subr.bf16.mxu0 %v6721
        %7196 = vmatpush1.bf16.msra.mxu0 %v6720
        %7197 = vmatprep.subr.bf16.mxu0 %v6723
        %7198 = vmatpush1.bf16.msra.mxu0 %v6722
        %7199 = vmatprep.subr.bf16.mxu0 %v6725
        %7200 = vmatpush1.bf16.msra.mxu0 %v6724
        %7201 = vmatprep.subr.bf16.mxu0 %v6727
        %7202 = vmatpush1.bf16.msra.mxu0 %v6726
        %7203 = vmatprep.subr.bf16.mxu0 %v6729
        %7204 = vmatpush1.bf16.msra.mxu0 %v6728
        %7205 = vmatprep.subr.bf16.mxu0 %v6731
        %7206 = vmatpush1.bf16.msra.mxu0 %v6730
        %7207 = vmatprep.subr.bf16.mxu0 %v6733
        %7208 = vmatpush1.bf16.msra.mxu0 %v6732
        %7209 = vmatprep.subr.bf16.mxu0 %v6735
        %7210 = vmatpush1.bf16.msra.mxu0 %v6734
        %7211 = vmatprep.subr.bf16.mxu0 %v6737
        %7212 = vmatpush1.bf16.msra.mxu0 %v6736
        %7213 = vmatprep.subr.bf16.mxu0 %v6739
        %7214 = vmatpush1.bf16.msra.mxu0 %v6738
        %7215 = vmatprep.subr.bf16.mxu0 %v6741
        %7216 = vmatpush1.bf16.msra.mxu0 %v6740
        %7217 = vmatprep.subr.bf16.mxu0 %v6743
        %7218 = vmatpush1.bf16.msra.mxu0 %v6742
        %7219 = vmatprep.subr.bf16.mxu0 %v6745
        %7220 = vmatpush1.bf16.msra.mxu0 %v6744
        %7221 = vmatprep.mubr.bf16.mxu0 %v5715
        %7222 = vmatmul.mubr.bf16.gmra.mrb[0].mxu0 %v5714
        %v7223 = vpop.f32.mrb[0].mxu0
        %v7224 = vadd.f32 %v7183, %v7223
        %v7225 = vpop.f32.mrb[0].mxu0
        %v7226 = vadd.f32 %v7185, %v7225
        %v7227 = vpop.f32.mrb[0].mxu0
        %v7228 = vpop.f32.mrb[0].mxu0
        %7229 = vdwg.mxu0
        %7230 = vmatprep.subr.bf16.mxu0 %v6747
        %7231 = vmatpush1.bf16.msra.mxu0 %v6746
        %7232 = vmatprep.subr.bf16.mxu0 %v6749
        %7233 = vmatpush1.bf16.msra.mxu0 %v6748
        %7234 = vmatprep.subr.bf16.mxu0 %v6751
        %7235 = vmatpush1.bf16.msra.mxu0 %v6750
        %7236 = vmatprep.subr.bf16.mxu0 %v6753
        %7237 = vmatpush1.bf16.msra.mxu0 %v6752
        %7238 = vmatprep.subr.bf16.mxu0 %v6755
        %7239 = vmatpush1.bf16.msra.mxu0 %v6754
        %7240 = vmatprep.subr.bf16.mxu0 %v6757
        %7241 = vmatpush1.bf16.msra.mxu0 %v6756
        %7242 = vmatprep.subr.bf16.mxu0 %v6759
        %7243 = vmatpush1.bf16.msra.mxu0 %v6758
        %7244 = vmatprep.subr.bf16.mxu0 %v6761
        %7245 = vmatpush1.bf16.msra.mxu0 %v6760
        %7246 = vmatprep.subr.bf16.mxu0 %v6763
        %7247 = vmatpush1.bf16.msra.mxu0 %v6762
        %7248 = vmatprep.subr.bf16.mxu0 %v6765
        %7249 = vmatpush1.bf16.msra.mxu0 %v6764
        %7250 = vmatprep.subr.bf16.mxu0 %v6767
        %7251 = vmatpush1.bf16.msra.mxu0 %v6766
        %7252 = vmatprep.subr.bf16.mxu0 %v6769
        %7253 = vmatpush1.bf16.msra.mxu0 %v6768
        %7254 = vmatprep.subr.bf16.mxu0 %v6771
        %7255 = vmatpush1.bf16.msra.mxu0 %v6770
        %7256 = vmatprep.subr.bf16.mxu0 %v6773
        %7257 = vmatpush1.bf16.msra.mxu0 %v6772
        %7258 = vmatprep.subr.bf16.mxu0 %v6775
        %7259 = vmatpush1.bf16.msra.mxu0 %v6774
        %7260 = vmatprep.subr.bf16.mxu0 %v6777
        %7261 = vmatpush1.bf16.msra.mxu0 %v6776
        %7262 = vmatprep.mubr.bf16.mxu0 %v5717
        %7263 = vmatmul.mubr.bf16.gmra.mrb[0].mxu0 %v5716
        %v7264 = vpop.f32.mrb[0].mxu0
        %v7265 = vadd.f32 %v7224, %v7264
        %v7266 = vpop.f32.mrb[0].mxu0
        %v7267 = vadd.f32 %v7226, %v7266
        %v7268 = vpop.f32.mrb[0].mxu0
        %v7269 = vpop.f32.mrb[0].mxu0
        %7270 = vdwg.mxu0
        %7271 = vmatprep.subr.bf16.mxu0 %v6779
        %7272 = vmatpush1.bf16.msra.mxu0 %v6778
        %7273 = vmatprep.subr.bf16.mxu0 %v6781
        %7274 = vmatpush1.bf16.msra.mxu0 %v6780
        %7275 = vmatprep.subr.bf16.mxu0 %v6783
        %7276 = vmatpush1.bf16.msra.mxu0 %v6782
        %7277 = vmatprep.subr.bf16.mxu0 %v6785
        %7278 = vmatpush1.bf16.msra.mxu0 %v6784
        %7279 = vmatprep.subr.bf16.mxu0 %v6787
        %7280 = vmatpush1.bf16.msra.mxu0 %v6786
        %7281 = vmatprep.subr.bf16.mxu0 %v6789
        %7282 = vmatpush1.bf16.msra.mxu0 %v6788
        %7283 = vmatprep.subr.bf16.mxu0 %v6791
        %7284 = vmatpush1.bf16.msra.mxu0 %v6790
        %7285 = vmatprep.subr.bf16.mxu0 %v6793
        %7286 = vmatpush1.bf16.msra.mxu0 %v6792
        %7287 = vmatprep.subr.bf16.mxu0 %v6795
        %7288 = vmatpush1.bf16.msra.mxu0 %v6794
        %7289 = vmatprep.subr.bf16.mxu0 %v6797
        %7290 = vmatpush1.bf16.msra.mxu0 %v6796
        %7291 = vmatprep.subr.bf16.mxu0 %v6799
        %7292 = vmatpush1.bf16.msra.mxu0 %v6798
        %7293 = vmatprep.subr.bf16.mxu0 %v6801
        %7294 = vmatpush1.bf16.msra.mxu0 %v6800
        %7295 = vmatprep.subr.bf16.mxu0 %v6803
        %7296 = vmatpush1.bf16.msra.mxu0 %v6802
        %7297 = vmatprep.subr.bf16.mxu0 %v6805
        %7298 = vmatpush1.bf16.msra.mxu0 %v6804
        %7299 = vmatprep.subr.bf16.mxu0 %v6807
        %7300 = vmatpush1.bf16.msra.mxu0 %v6806
        %7301 = vmatprep.subr.bf16.mxu0 %v6809
        %7302 = vmatpush1.bf16.msra.mxu0 %v6808
        %7303 = vmatprep.mubr.bf16.mxu0 %v5719
        %7304 = vmatmul.mubr.bf16.gmra.mrb[0].mxu0 %v5718
        %v7305 = vpop.f32.mrb[0].mxu0
        %v7306 = vadd.f32 %v7265, %v7305
        %v7307 = vpop.f32.mrb[0].mxu0
        %v7308 = vadd.f32 %v7267, %v7307
        %v7309 = vpop.f32.mrb[0].mxu0
        %v7310 = vpop.f32.mrb[0].mxu0
        %7311 = vdwg.mxu0
        %7312 = vmatprep.subr.bf16.mxu0 %v6811
        %7313 = vmatpush1.bf16.msra.mxu0 %v6810
        %7314 = vmatprep.subr.bf16.mxu0 %v6813
        %7315 = vmatpush1.bf16.msra.mxu0 %v6812
        %7316 = vmatprep.subr.bf16.mxu0 %v6815
        %7317 = vmatpush1.bf16.msra.mxu0 %v6814
        %7318 = vmatprep.subr.bf16.mxu0 %v6817
        %7319 = vmatpush1.bf16.msra.mxu0 %v6816
        %7320 = vmatprep.subr.bf16.mxu0 %v6819
        %7321 = vmatpush1.bf16.msra.mxu0 %v6818
        %7322 = vmatprep.subr.bf16.mxu0 %v6821
        %7323 = vmatpush1.bf16.msra.mxu0 %v6820
        %7324 = vmatprep.subr.bf16.mxu0 %v6823
        %7325 = vmatpush1.bf16.msra.mxu0 %v6822
        %7326 = vmatprep.subr.bf16.mxu0 %v6825
        %7327 = vmatpush1.bf16.msra.mxu0 %v6824
        %7328 = vmatprep.subr.bf16.mxu0 %v6827
        %7329 = vmatpush1.bf16.msra.mxu0 %v6826
        %7330 = vmatprep.subr.bf16.mxu0 %v6829
        %7331 = vmatpush1.bf16.msra.mxu0 %v6828
        %7332 = vmatprep.subr.bf16.mxu0 %v6831
        %7333 = vmatpush1.bf16.msra.mxu0 %v6830
        %7334 = vmatprep.subr.bf16.mxu0 %v6833
        %7335 = vmatpush1.bf16.msra.mxu0 %v6832
        %7336 = vmatprep.subr.bf16.mxu0 %v6835
        %7337 = vmatpush1.bf16.msra.mxu0 %v6834
        %7338 = vmatprep.subr.bf16.mxu0 %v6837
        %7339 = vmatpush1.bf16.msra.mxu0 %v6836
        %7340 = vmatprep.subr.bf16.mxu0 %v6839
        %7341 = vmatpush1.bf16.msra.mxu0 %v6838
        %7342 = vmatprep.subr.bf16.mxu0 %v6841
        %7343 = vmatpush1.bf16.msra.mxu0 %v6840
        %7344 = vmatprep.mubr.bf16.mxu0 %v5721
        %7345 = vmatmul.mubr.bf16.gmra.mrb[0].mxu0 %v5720
        %v7346 = vpop.f32.mrb[0].mxu0
        %v7347 = vadd.f32 %v7306, %v7346
        %v7348 = vpop.f32.mrb[0].mxu0
        %v7349 = vadd.f32 %v7308, %v7348
        %v7350 = vpop.f32.mrb[0].mxu0
        %v7351 = vpop.f32.mrb[0].mxu0
        %7352 = vdwg.mxu0
        %v7353 = vld [vmem:[#allocation51] sm:$0x3]
        %v7355 = vlaneseq
        %v7356 = vshrl.u32 %v7355, 7
        %v7357 = vsub.s32 0, %v7356
        %v7358 = vrot.slane %v7353, %v7357
        %v7359 = vlaneseq
        %v7360 = vshrl.u32 %v7359, 7
        %v7361 = vsub.s32 1, %v7360
        %v7362 = vrot.slane %v7353, %v7361
        %v7365 = vmul.f32 %v7347, %v7358
        %v7366 = vmul.f32 %v7349, %v7362
        %v7367 = vld [vmem:[#allocation53] sm:$0x3]
        %v7369 = vlaneseq
        %v7370 = vshrl.u32 %v7369, 7
        %v7371 = vsub.s32 0, %v7370
        %v7372 = vrot.slane %v7367, %v7371
        %v7373 = vlaneseq
        %v7374 = vshrl.u32 %v7373, 7
        %v7375 = vsub.s32 1, %v7374
        %v7376 = vrot.slane %v7367, %v7375
        %v7379 = vadd.f32 %v7365, %v7372
        %v7380 = vadd.f32 %v7366, %v7376
        %v7381 = vsel %vm3125, %v7379, 0.0
        %v7382 = vrot.slane %v7381, 4
        %v7383 = vadd.f32 %v7381, %v7382
        %v7384 = vrot.slane %v7383, 2
        %v7385 = vadd.f32 %v7383, %v7384
        %v7386 = vrot.slane %v7385, 1
        %v7387 = vadd.f32 %v7385, %v7386
        %v7388 = vsel %vm3125, %v7380, 0.0
        %v7389 = vrot.slane %v7388, 4
        %v7390 = vadd.f32 %v7388, %v7389
        %v7391 = vrot.slane %v7390, 2
        %v7392 = vadd.f32 %v7390, %v7391
        %v7393 = vrot.slane %v7392, 1
        %v7394 = vadd.f32 %v7392, %v7393
        %v7395 = vrcp.pop 4.0
        %v7396 = vmul.f32 %v7387, %v7395
        %v7397 = vmul.f32 %v7394, %v7395
        %v7398 = vsel %vm3125, %v7379, -inf
        %v7399 = vrot.slane %v7398, 4
        %v7400 = vmax.f32 %v7398, %v7399
        %v7401 = vrot.slane %v7400, 2
        %v7402 = vmax.f32 %v7400, %v7401
        %v7403 = vrot.slane %v7402, 1
        %v7404 = vmax.f32 %v7402, %v7403
        %v7405 = vsel %vm3125, %v7380, -inf
        %v7406 = vrot.slane %v7405, 4
        %v7407 = vmax.f32 %v7405, %v7406
        %v7408 = vrot.slane %v7407, 2
        %v7409 = vmax.f32 %v7407, %v7408
        %v7410 = vrot.slane %v7409, 1
        %v7411 = vmax.f32 %v7409, %v7410
        %v7412 = vsel %vm3027, %v7396, %v7404
        %v7413 = vsel %vm3027, %v7397, %v7411
        %v7414 = vpack.c.bf16 %v7412, %v7412
        %v7415 = vpack.c.bf16 %v7413, %v7413
        %v7416 = vld [vmem:[%s79] sm:$0xf]
        %v7417 = vld [vmem:[%s79 + $0x4] sm:$0xf]
        %v7418 = vld [vmem:[%s79 + $0x8] sm:$0xf]
        %v7419 = vld [vmem:[%s79 + $0xc] sm:$0xf]
        %v7420 = vld [vmem:[%s79 + $0x10] sm:$0xf]
        %v7421 = vld [vmem:[%s79 + $0x14] sm:$0xf]
        %v7422 = vld [vmem:[%s79 + $0x18] sm:$0xf]
        %v7423 = vld [vmem:[%s79 + $0x1c] sm:$0xf]
        %v7424 = vld [vmem:[%s79 + $0x20] sm:$0xf]
        %v7425 = vld [vmem:[%s79 + $0x24] sm:$0xf]
        %v7426 = vld [vmem:[%s79 + $0x28] sm:$0xf]
        %v7427 = vld [vmem:[%s79 + $0x2c] sm:$0xf]
        %v7428 = vld [vmem:[%s79 + $0x30] sm:$0xf]
        %v7429 = vld [vmem:[%s79 + $0x34] sm:$0xf]
        %v7430 = vld [vmem:[%s79 + $0x38] sm:$0xf]
        %v7431 = vld [vmem:[%s79 + $0x3c] sm:$0xf]
        %v7432 = vld [vmem:[%s79 + $0x40] sm:$0xf]
        %v7433 = vld [vmem:[%s79 + $0x44] sm:$0xf]
        %v7434 = vld [vmem:[%s79 + $0x48] sm:$0xf]
        %v7435 = vld [vmem:[%s79 + $0x4c] sm:$0xf]
        %v7436 = vld [vmem:[%s79 + $0x50] sm:$0xf]
        %v7437 = vld [vmem:[%s79 + $0x54] sm:$0xf]
        %v7438 = vld [vmem:[%s79 + $0x58] sm:$0xf]
        %v7439 = vld [vmem:[%s79 + $0x5c] sm:$0xf]
        %v7440 = vld [vmem:[%s79 + $0x60] sm:$0xf]
        %v7441 = vld [vmem:[%s79 + $0x64] sm:$0xf]
        %v7442 = vld [vmem:[%s79 + $0x68] sm:$0xf]
        %v7443 = vld [vmem:[%s79 + $0x6c] sm:$0xf]
        %v7444 = vld [vmem:[%s79 + $0x70] sm:$0xf]
        %v7445 = vld [vmem:[%s79 + $0x74] sm:$0xf]
        %v7446 = vld [vmem:[%s79 + $0x78] sm:$0xf]
        %v7447 = vld [vmem:[%s79 + $0x7c] sm:$0xf]
        %v7448 = vld [vmem:[#allocation59] sm:$0x1]
        %v7450 = vlaneseq
        %v7451 = vshrl.u32 %v7450, 7
        %v7452 = vsub.s32 0, %v7451
        %v7453 = vrot.slane %v7448, %v7452
        %v7487 = vunpack.c.l.b16 %v7416
        %v7488 = vunpack.c.l.b16 %v7417
        %v7489 = vunpack.c.l.b16 %v7418
        %v7490 = vunpack.c.l.b16 %v7419
        %v7491 = vunpack.c.l.b16 %v7420
        %v7492 = vunpack.c.l.b16 %v7421
        %v7493 = vunpack.c.l.b16 %v7422
        %v7494 = vunpack.c.l.b16 %v7423
        %v7495 = vunpack.c.l.b16 %v7424
        %v7496 = vunpack.c.l.b16 %v7425
        %v7497 = vunpack.c.l.b16 %v7426
        %v7498 = vunpack.c.l.b16 %v7427
        %v7499 = vunpack.c.l.b16 %v7428
        %v7500 = vunpack.c.l.b16 %v7429
        %v7501 = vunpack.c.l.b16 %v7430
        %v7502 = vunpack.c.l.b16 %v7431
        %v7503 = vunpack.c.l.b16 %v7432
        %v7504 = vunpack.c.l.b16 %v7433
        %v7505 = vunpack.c.l.b16 %v7434
        %v7506 = vunpack.c.l.b16 %v7435
        %v7507 = vunpack.c.l.b16 %v7436
        %v7508 = vunpack.c.l.b16 %v7437
        %v7509 = vunpack.c.l.b16 %v7438
        %v7510 = vunpack.c.l.b16 %v7439
        %v7511 = vunpack.c.l.b16 %v7440
        %v7512 = vunpack.c.l.b16 %v7441
        %v7513 = vunpack.c.l.b16 %v7442
        %v7514 = vunpack.c.l.b16 %v7443
        %v7515 = vunpack.c.l.b16 %v7444
        %v7516 = vunpack.c.l.b16 %v7445
        %v7517 = vunpack.c.l.b16 %v7446
        %v7518 = vunpack.c.l.b16 %v7447
        %v7519 = vpack.c.b16 %v7488, %v7487
        %v7520 = vpack.c.b16 %v7490, %v7489
        %v7521 = vpack.c.b16 %v7492, %v7491
        %v7522 = vpack.c.b16 %v7494, %v7493
        %v7523 = vpack.c.b16 %v7496, %v7495
        %v7524 = vpack.c.b16 %v7498, %v7497
        %v7525 = vpack.c.b16 %v7500, %v7499
        %v7526 = vpack.c.b16 %v7502, %v7501
        %v7527 = vpack.c.b16 %v7504, %v7503
        %v7528 = vpack.c.b16 %v7506, %v7505
        %v7529 = vpack.c.b16 %v7508, %v7507
        %v7530 = vpack.c.b16 %v7510, %v7509
        %v7531 = vpack.c.b16 %v7512, %v7511
        %v7532 = vpack.c.b16 %v7514, %v7513
        %v7533 = vpack.c.b16 %v7516, %v7515
        %v7534 = vpack.c.b16 %v7518, %v7517
        %7551 = vmatprep.subr.bf16.mxu0 0
        %7552 = vmatpush1.bf16.msra.mxu0 %v7519
        %7553 = vmatprep.subr.bf16.mxu0 0
        %7554 = vmatpush1.bf16.msra.mxu0 %v7520
        %7555 = vmatprep.subr.bf16.mxu0 0
        %7556 = vmatpush1.bf16.msra.mxu0 %v7521
        %7557 = vmatprep.subr.bf16.mxu0 0
        %7558 = vmatpush1.bf16.msra.mxu0 %v7522
        %7559 = vmatprep.subr.bf16.mxu0 0
        %7560 = vmatpush1.bf16.msra.mxu0 %v7523
        %7561 = vmatprep.subr.bf16.mxu0 0
        %7562 = vmatpush1.bf16.msra.mxu0 %v7524
        %7563 = vmatprep.subr.bf16.mxu0 0
        %7564 = vmatpush1.bf16.msra.mxu0 %v7525
        %7565 = vmatprep.subr.bf16.mxu0 0
        %7566 = vmatpush1.bf16.msra.mxu0 %v7526
        %7567 = vmatprep.subr.bf16.mxu0 0
        %7568 = vmatpush1.bf16.msra.mxu0 %v7527
        %7569 = vmatprep.subr.bf16.mxu0 0
        %7570 = vmatpush1.bf16.msra.mxu0 %v7528
        %7571 = vmatprep.subr.bf16.mxu0 0
        %7572 = vmatpush1.bf16.msra.mxu0 %v7529
        %7573 = vmatprep.subr.bf16.mxu0 0
        %7574 = vmatpush1.bf16.msra.mxu0 %v7530
        %7575 = vmatprep.subr.bf16.mxu0 0
        %7576 = vmatpush1.bf16.msra.mxu0 %v7531
        %7577 = vmatprep.subr.bf16.mxu0 0
        %7578 = vmatpush1.bf16.msra.mxu0 %v7532
        %7579 = vmatprep.subr.bf16.mxu0 0
        %7580 = vmatpush1.bf16.msra.mxu0 %v7533
        %7581 = vmatprep.subr.bf16.mxu0 0
        %7582 = vmatpush1.bf16.msra.mxu0 %v7534
        %7583 = vmatprep.mubr.bf16.mxu0 %v7415
        %7584 = vmatmul.mubr.bf16.gmra.mrb[0].mxu0 %v7414
        %v7585 = vpop.f32.mrb[0].mxu0
        %v7586 = vadd.f32 %v7453, %v7585
        %v7587 = vpop.f32.mrb[0].mxu0
        %v7588 = vpop.f32.mrb[0].mxu0
        %v7589 = vpop.f32.mrb[0].mxu0
        %7590 = vdwg.mxu0
        %v7591 = vmax.f32 %v7586, 0.0
        %v7592 = vpack.c.bf16 %v7591, %v7591
        %v7593 = vld [vmem:[#allocation60] sm:$0xff]
        %v7594 = vld [vmem:[#allocation60 + $0x8] sm:$0xff]
        %v7595 = vld [vmem:[#allocation60 + $0x10] sm:$0xff]
        %v7596 = vld [vmem:[#allocation60 + $0x18] sm:$0xff]
        %v7597 = vld [vmem:[#allocation62] sm:$0x3]
        %v7599 = vlaneseq
        %v7600 = vshrl.u32 %v7599, 7
        %v7601 = vsub.s32 0, %v7600
        %v7602 = vrot.slane %v7597, %v7601
        %v7603 = vlaneseq
        %v7604 = vshrl.u32 %v7603, 7
        %v7605 = vsub.s32 1, %v7604
        %v7606 = vrot.slane %v7597, %v7605
        %v7613 = vunpack.c.l.b16 %v7593
        %v7614 = vunpack.c.h.b16 %v7593
        %v7615 = vunpack.c.l.b16 %v7594
        %v7616 = vunpack.c.h.b16 %v7594
        %v7617 = vunpack.c.l.b16 %v7595
        %v7618 = vunpack.c.h.b16 %v7595
        %v7619 = vunpack.c.l.b16 %v7596
        %v7620 = vunpack.c.h.b16 %v7596
        %v7621 = vpack.c.b16 %v7615, %v7613
        %v7622 = vpack.c.b16 %v7616, %v7614
        %v7623 = vpack.c.b16 %v7619, %v7617
        %v7624 = vpack.c.b16 %v7620, %v7618
        %v7630 = vsel %vm1947, %v7592, 0
        %7632 = vmatprep.subr.bf16.mxu0 %v7622
        %7633 = vmatpush1.bf16.msra.mxu0 %v7621
        %7634 = vmatprep.subr.bf16.mxu0 %v7624
        %7635 = vmatpush1.bf16.msra.mxu0 %v7623
        %7636 = vmatprep.subr.bf16.mxu0 0
        %7637 = vmatpush1.bf16.msra.mxu0 0
        %7638 = vmatprep.subr.bf16.mxu0 0
        %7639 = vmatpush1.bf16.msra.mxu0 0
        %7640 = vmatprep.subr.bf16.mxu0 0
        %7641 = vmatpush1.bf16.msra.mxu0 0
        %7642 = vmatprep.subr.bf16.mxu0 0
        %7643 = vmatpush1.bf16.msra.mxu0 0
        %7644 = vmatprep.subr.bf16.mxu0 0
        %7645 = vmatpush1.bf16.msra.mxu0 0
        %7646 = vmatprep.subr.bf16.mxu0 0
        %7647 = vmatpush1.bf16.msra.mxu0 0
        %7648 = vmatprep.subr.bf16.mxu0 0
        %7649 = vmatpush1.bf16.msra.mxu0 0
        %7650 = vmatprep.subr.bf16.mxu0 0
        %7651 = vmatpush1.bf16.msra.mxu0 0
        %7652 = vmatprep.subr.bf16.mxu0 0
        %7653 = vmatpush1.bf16.msra.mxu0 0
        %7654 = vmatprep.subr.bf16.mxu0 0
        %7655 = vmatpush1.bf16.msra.mxu0 0
        %7656 = vmatprep.subr.bf16.mxu0 0
        %7657 = vmatpush1.bf16.msra.mxu0 0
        %7658 = vmatprep.subr.bf16.mxu0 0
        %7659 = vmatpush1.bf16.msra.mxu0 0
        %7660 = vmatprep.subr.bf16.mxu0 0
        %7661 = vmatpush1.bf16.msra.mxu0 0
        %7662 = vmatprep.subr.bf16.mxu0 0
        %7663 = vmatpush1.bf16.msra.mxu0 0
        %7664 = vmatprep.mubr.bf16.mxu0 0
        %7665 = vmatmul.mubr.bf16.gmra.mrb[0].mxu0 %v7630
        %v7666 = vpop.f32.mrb[0].mxu0
        %v7667 = vadd.f32 %v7602, %v7666
        %v7668 = vpop.f32.mrb[0].mxu0
        %v7669 = vadd.f32 %v7606, %v7668
        %v7670 = vpop.f32.mrb[0].mxu0
        %v7671 = vpop.f32.mrb[0].mxu0
        %7672 = vdwg.mxu0
        %v7673 = vsel %vm4508, %v7667, 0.0
        %v7674 = vrot.slane %v7673, 4
        %v7675 = vadd.f32 %v7673, %v7674
        %v7676 = vrot.slane %v7675, 2
        %v7677 = vadd.f32 %v7675, %v7676
        %v7678 = vrot.slane %v7677, 1
        %v7679 = vadd.f32 %v7677, %v7678
        %v7680 = vsel %vm4508, %v7669, 0.0
        %v7681 = vrot.slane %v7680, 4
        %v7682 = vadd.f32 %v7680, %v7681
        %v7683 = vrot.slane %v7682, 2
        %v7684 = vadd.f32 %v7682, %v7683
        %v7685 = vrot.slane %v7684, 1
        %v7686 = vadd.f32 %v7684, %v7685
        %v7687 = vxor.u32 %v7679, 2147483648
        %v7688 = vxor.u32 %v7686, 2147483648
        %v7689 = vmul.f32 %v7687, 1.442695
        %v7690 = vpow.pop %v7689
        %v7691 = vmul.f32 %v7688, 1.442695
        %v7692 = vpow.pop %v7691
        %v7693 = vadd.f32 %v7690, 1.0
        %v7694 = vadd.f32 %v7692, 1.0
        %v7695 = vrcp.pop %v7693
        %v7696 = vmul.f32 1.0, %v7695
        %v7697 = vrcp.pop %v7694
        %v7698 = vmul.f32 1.0, %v7697
        %v7699 = vmul.f32 %v7379, %v7696
        %v7700 = vmul.f32 %v7380, %v7698
        %v7701 = vsel %vm3125, %v7699, -inf
        %v7702 = vsel %vm3125, %v7700, -inf
        %v7703 = vmax.f32 %v7701, %v7702
        %7704 = vmax.xlane.f32.xlu0 %v7703
        %v7705 = vpop.xlane.xlu0 %7704
        %v7706 = vxor.u32 %v7705, 2147483648
        %v7707 = vmul.f32 %v7706, 1.442695
        %v7708 = vpow.pop %v7707
        %v7709 = vadd.f32 %v7708, 1.0
        %v7710 = vrcp.pop %v7709
        %v7711 = vmul.f32 1.0, %v7710
        %v7712 = vmul.f32 %v7699, %v7711
        %v7713 = vmul.f32 %v7700, %v7711
        %v7714 = vadd.f32 %v7712, %v4700
        %v7715 = vadd.f32 %v7713, %v4701
        %v7718 = vcombine.low %v7714, %v7715
        %7720 = vst [vmem:[%s1712] sm:$0xff] %v7718
        %s7721 = sand.u32 %s1034, 1
        %s7722 = scalar_lea.sflag [#allocation14], %s7721
        %s7723 = sand.u32 %s1034, 1
        %s7724 = smul.addr %s7723, 8
        %s7725 = scalar_lea.vmem [#allocation63], %s7724
        // Predicated region
        $region325: #{backbone_forward.1} parent=191 // pred_check
          %p7726 = pneg %p1044
        $region326: #{backbone_forward.1} parent=191 // pred_check_branch
          %7728 = sbr.rel (%p7726) target = $region328
        $region327: #{backbone_forward.1} parent=191 // pred_region
          %s7730 = ssub.s32 128, 128
          %7731 = vsyncadd %s7722, %s7730
          %s7732 = smul.addr %s118, 2
          %s7733 = smul.addr %s7732, 64
          %s7734 = scalar_lea.hbm %s87, %s7733
          %s7736 = sshll.u32 %s7725, 4
          %s7737 = int_to_ptr.vmem [resolvable:$true] %s7736
          %7739 = dma.vmem_to_hbm [thread:$0]  %s7737, 128, %s7734, %s7722
        $region328: #{backbone_forward.1} parent=191 // pred_fallthru
          _
      $region192: #{backbone_forward.1} parent=5 // pred_fallthru
        _
      %p7740 = scmp.le.s32.totalorder 2, %s113
      // Predicated region
      $region329: #{backbone_forward.1} parent=5 // pred_check
        %p7741 = pneg %p7740
      $region330: #{backbone_forward.1} parent=5 // pred_check_branch
        %7743 = sbr.rel (%p7741) target = $region332
      $region331: #{backbone_forward.1} parent=5 // pred_region
        %s7744 = ssub.s32 %s113, 2
        // Predicated region
        $region333: #{backbone_forward.1} parent=331 // pred_check
          %p7745 = pneg %p1050
        $region334: #{backbone_forward.1} parent=331 // pred_check_branch
          %7747 = sbr.rel (%p7745) target = $region336
        $region335: #{backbone_forward.1} parent=331 // pred_region
          %s7748 = sand.u32 %s1035, 1
          %s7749 = scalar_lea.sflag [#allocation14], %s7748
          %s7750 = sand.u32 %s1035, 1
          %s7751 = smul.addr %s7750, 8
          %s7752 = scalar_lea.vmem [#allocation63], %s7751
          %7753 = dma.done %s7749, 128
        $region336: #{backbone_forward.1} parent=331 // pred_fallthru
          _
      $region332: #{backbone_forward.1} parent=5 // pred_fallthru
        _
    $region6: #{backbone_forward.1} parent=1 // loop_footer
      %s117 = sadd.s32 1, %s113
    $region7: #{backbone_forward.1} parent=1 // loop_footer_branch
      %112 = sbr.rel target = $region3
    $region8: #{backbone_forward.1} parent=1 // loop_exit
      _
    %7754 = vsyncpa [#allocation13], 1
    %s7755 = scalar_lea.sflag [#allocation13], 1
    %7756 = vsyncpa %s7755, 1
    %7757 = vsyncpa [#allocation16], 1
    %7758 = vsyncpa [#allocation19], 1
    %7759 = vsyncpa [#allocation22], 1
    %7760 = vsyncpa [#allocation25], 1
    %7761 = vsyncpa [#allocation28], 1
    %7762 = vsyncpa [#allocation31], 1
    %7763 = vsyncpa [#allocation34], 1
    %7764 = vsyncpa [#allocation37], 1
    %7765 = vsyncpa [#allocation40], 1
    %7766 = vsyncpa [#allocation43], 1
    %7767 = vsyncpa [#allocation46], 1
    %7768 = vsyncpa [#allocation49], 1
    %7769 = vsyncpa [#allocation52], 1
    %7770 = vsyncpa [#allocation55], 1
    %7771 = vsyncpa [#allocation58], 1
    %7772 = vsyncpa [#allocation61], 1
    %7773 = vsyncpa [#allocation14], 1
    %s7774 = scalar_lea.sflag [#allocation14], 1
    %7775 = vsyncpa %s7774, 1

</llo_original>
